<compile_context>
chip_gen: v6e
topology: v6e:2x2x1
jax: 0.10.0
libtpu: 0.0.40
codegen_flags: <defaults>
</compile_context>

<pallas_src>
import jax
import jax.numpy as jnp
from jax.experimental import pallas as pl
from jax.experimental.pallas import tpu as pltpu

EPS = 1e-4          # module default eps
NUM_GROUPS = 4      # GroupNorm groups (real VAE uses 32; scaled for tiny synthetic channels)


# ----------------------- weight folding (hoisted, run once) -----------------------

def _fold_up_weights(w_up, W):
    """ConvTranspose2d(k=2,s=2) weights -> 2 folded matrices (one per output-row parity).

    w_up: torch layout (Cin, Cout, 2, 2).
    Returns (2, W*Cin, 2W*Cout):  U_ki[w*Cin+i, (2w+kj)*Cout+o] = w_up[i, o, ki, kj].
    """
    Cin, Cout = w_up.shape[0], w_up.shape[1]
    W2 = 2 * W
    w2_idx = jnp.arange(W2)
    w_idx = jnp.arange(W)
    kj = jnp.arange(2)
    # sel[k, w, v] = 1 iff v == 2*w + k
    sel = (w2_idx[None, None, :] == (2 * w_idx[None, :, None] + kj[:, None, None])
           ).astype(jnp.float32)
    mats = []
    for ki in range(2):
        wk = w_up[:, :, ki, :].astype(jnp.float32)          # (Cin, Cout, 2)  [i, o, kj]
        m4 = jnp.einsum('iok,kwv->wivo', wk, sel)           # (W, Cin, W2, Cout)
        mats.append(m4.reshape(W * Cin, W2 * Cout))
    return jnp.stack(mats, axis=0)                          # (2, W*Cin, W2*Cout)


def _fold_conv3_weights(w, W2):
    """Conv2d 3x3 'same' weights -> 3 folded block-banded matrices (one per kernel row).

    w: torch layout (Cout, Cin, 3, 3).
    Returns (3, W2*Cin, W2*Cout):  M_ki[u*Cin+c, v*Cout+o] = w[o, c, ki, u-v+1]
    (zero when u-v+1 is outside [0,2]; width zero-padding is implicit).
    """
    Cout, Cin = w.shape[0], w.shape[1]
    u = jnp.arange(W2)          # input column
    v = jnp.arange(W2)          # output column
    kj = jnp.arange(3)
    # sel[k, u, v] = 1 iff u == v + k - 1
    sel = (u[None, :, None] == (v[None, None, :] + kj[:, None, None] - 1)
           ).astype(jnp.float32)
    mats = []
    for ki in range(3):
        wk = w[:, :, ki, :].astype(jnp.float32)             # (Cout, Cin, 3)  [o, c, kj]
        m4 = jnp.einsum('ock,kuv->ucvo', wk, sel)           # (W2, Cin, W2, Cout)
        mats.append(m4.reshape(W2 * Cin, W2 * Cout))
    return jnp.stack(mats, axis=0)                          # (3, W2*Cin, W2*Cout)


def prepare_conv_up(p, H, W, weight_dtype=jnp.bfloat16):
    """One-time parameter folding (call eagerly, outside the jitted forward).

    weight_dtype: storage/MXU dtype of the folded matmul weights (bf16 on
    v6e/v7x; pass jnp.float32 for exact f32 matmuls).  Per-channel vectors and
    GroupNorm constants stay f32 (VPU/EUP math is kept f32 on all generations).
    """
    Cin, Cout = p["w_up"].shape[0], p["w_up"].shape[1]
    assert Cout % NUM_GROUPS == 0
    W2 = 2 * W
    W2C = W2 * Cout
    CW = 2 * W2C

    up2 = _fold_up_weights(p["w_up"], W)                              # (2, W*Cin, W2C)
    # lane-concat: even-row matrix in columns [0:W2C], odd-row matrix in [W2C:CW]
    up_w = jnp.concatenate([up2[0], up2[1]], axis=1).astype(weight_dtype)   # (W*Cin, CW)
    conv_w = jnp.stack([_fold_conv3_weights(p["w1"], W2),
                        _fold_conv3_weights(p["w2"], W2)],
                       axis=0).astype(weight_dtype)                   # (2, 3, W2C, W2C)

    def row(vec):
        # per-column value = vec[col % Cout]  (column order (parity, w2, o), o minor)
        return jnp.tile(vec.astype(jnp.float32), CW // Cout).reshape(1, CW)

    vecs = jnp.concatenate([row(p["b_up"]),
                            row(p["gamma1"]), row(p["beta1"]), row(p["b1"]),
                            row(p["gamma2"]), row(p["beta2"]), row(p["b2"])],
                           axis=0)                                    # (7, CW)

    ch = jnp.arange(W2C) % Cout
    grp = ch // (Cout // NUM_GROUPS)
    gmask = (grp[None, :] == jnp.arange(NUM_GROUPS)[:, None]).astype(jnp.float32)  # (G, W2C)

    return {"up_w": up_w, "conv_w": conv_w, "vecs": vecs,
            "gmask": gmask, "gmask_t": gmask.T}


# ----------------------- fused Pallas kernel -----------------------

def _make_convup_kernel(B, H, W2C, G, cnt, eps):
    BH = B * H
    inv_cnt = 1.0 / cnt
    f32 = jnp.float32

    def kernel(x_ref, upw_ref, convw_ref, vec_ref, gm_ref, gmT_ref,
               sel_ref, selT_ref, o_ref):
        # --- VMEM-resident constants ---
        v = vec_ref[...]                     # (7, 2*W2C) f32
        gm = gm_ref[...]                     # (G, W2C)
        gmT = gmT_ref[...]                   # (W2C, G)
        sel = sel_ref[...]                   # (B, 2*BH)  per-sample row selector
        selT = selT_ref[...]                 # (2*BH, B)
        b_up = v[0:1]                                            # (1, 2*W2C)
        g1, be1, b1 = v[1:2, :W2C], v[2:3, :W2C], v[3:4, :W2C]
        g2, be2, b2 = v[4:5, :W2C], v[5:6, :W2C], v[6:7, :W2C]

        # per-sample boundary masks for the 3x3 row shifts (hoisted, reused twice)
        ridx = jax.lax.broadcasted_iota(jnp.int32, (BH, W2C), 0) % H
        first_row = ridx == 0
        last_row = ridx == (H - 1)

        def shift_down(a):   # out[r] = a[r-1] within each sample; each sample's row 0 -> 0
            return jnp.where(first_row, 0.0, jnp.roll(a, 1, axis=0))

        def shift_up(a):     # out[r] = a[r+1] within each sample; each sample's row H-1 -> 0
            return jnp.where(last_row, 0.0, jnp.roll(a, -1, axis=0))

        def mmw(a, w):       # MXU matmul vs folded (possibly bf16) weights, f32 accumulate
            return jnp.dot(a.astype(w.dtype), w, preferred_element_type=f32)

        def mmf(a, b):       # small f32 stats matmuls (ride the otherwise idle MXU)
            return jnp.dot(a, b, preferred_element_type=f32)

        # ---- ConvTranspose2d(k=2, s=2): one matmul, lane-concat even|odd output rows ----
        x2 = x_ref[...].astype(f32).reshape(BH, x_ref.shape[-1])   # (B*H, W*Cin)
        y_cat = mmw(x2, upw_ref[...]) + b_up                       # (B*H, 2*W2C)  [skip]

        # even|odd lane halves -> row-stacked slab (even rows on top) for GN / conv work
        ys = jnp.concatenate([y_cat[:, :W2C], y_cat[:, W2C:]], axis=0)   # (2*BH, W2C)

        # ---- fused GroupNorm + SiLU: per-(sample, group) two-pass stats via tiny dots ----
        def gn_silu(a, gamma, beta):
            colsum = mmf(sel, a)                                   # (B, W2C)
            mean = mmf(colsum, gmT) * inv_cnt                      # (B, G)
            mean_rows = mmf(selT, mmf(mean, gm))                   # (2*BH, W2C)
            d = a - mean_rows
            var = mmf(mmf(sel, d * d), gmT) * inv_cnt              # (B, G)
            inv_rows = mmf(selT, mmf(jax.lax.rsqrt(var + eps), gm))
            z = d * inv_rows * gamma + beta
            return z * jax.nn.sigmoid(z)

        # ---- Conv3x3 'same': 3 folded block-banded matmuls over the merged slab ----
        def conv3(a, layer, bias):
            p0 = mmw(a, convw_ref[layer, 0])
            p1 = mmw(a, convw_ref[layer, 1])
            p2 = mmw(a, convw_ref[layer, 2])
            # even-out rows: sd(odd@m0) + even@m1 + odd@m2 ; odd-out: even@m0 + odd@m1 + su(even@m2)
            t0 = jnp.concatenate([shift_down(p0[BH:]), p0[:BH]], axis=0)
            t2 = jnp.concatenate([p2[BH:], shift_up(p2[:BH])], axis=0)
            return t0 + p1 + t2 + bias

        h = gn_silu(ys, g1, be1)
        h = conv3(h, 0, b1)
        h = gn_silu(h, g2, be2)
        h = conv3(h, 1, b2)

        out_slab = ys + h                                          # identity skip
        out_cat = jnp.concatenate([out_slab[:BH], out_slab[BH:]], axis=1)   # (B*H, 2*W2C)
        o_ref[...] = out_cat.reshape(o_ref.shape).astype(o_ref.dtype)

    return kernel


def _pick_block_b(n, h, target_m=256):
    """Largest batch tile dividing N with conv-matmul M (= 2*Bt*H) <= target_m.

    target_m=256 saturates the v6e/v7x MXU; use 128 when tuning for v5e.
    """
    cands = [d for d in range(1, n + 1) if n % d == 0 and 2 * d * h <= target_m]
    return max(cands) if cands else 1


def conv_up_forward(x_nchw, prep):
    N, Cin, H, W = x_nchw.shape
    up_w, conv_w, vecs = prep["up_w"], prep["conv_w"], prep["vecs"]
    gmask, gmask_t = prep["gmask"], prep["gmask_t"]
    W2 = 2 * W
    W2C = conv_w.shape[-1]
    CW = 2 * W2C
    Cout = W2C // W2
    G = gmask.shape[0]
    WCin = W * Cin

    Bt = _pick_block_b(N, H)                      # rows folded into the matmul M dimension
    BH = Bt * H
    cnt = float(2 * H * W2 * (Cout // G))         # elements per (sample, group) in GroupNorm

    # NCHW -> folded per-row layout (N, H, W*Cin)
    x3 = jnp.transpose(x_nchw, (0, 2, 3, 1)).reshape(N, H, WCin)

    # per-sample row selectors for the batched GroupNorm stats (tiny)
    r = jnp.arange(2 * BH)
    sel = ((r[None, :] % BH) // H == jnp.arange(Bt)[:, None]).astype(jnp.float32)  # (Bt, 2BH)
    sel_t = sel.T                                                                  # (2BH, Bt)

    kernel = _make_convup_kernel(Bt, H, W2C, G, cnt, EPS)
    resident = pl.BlockSpec(memory_space=pltpu.MemorySpace.VMEM)   # grid-invariant, single-buffered
    out = pl.pallas_call(
        kernel,
        out_shape=jax.ShapeDtypeStruct((N, H, CW), x_nchw.dtype),
        grid=(N // Bt,),
        in_specs=[
            pl.BlockSpec((Bt, H, WCin), lambda n: (n, 0, 0)),
            resident,    # folded up-conv weights   (W*Cin, 2*W2C)
            resident,    # folded conv3x3 weights   (2, 3, W2C, W2C)
            resident,    # bias / gamma / beta rows (7, 2*W2C)
            resident,    # group mask               (G, W2C)
            resident,    # group mask^T             (W2C, G)
            resident,    # per-sample row selector  (Bt, 2*Bt*H)
            resident,    # selector^T               (2*Bt*H, Bt)
        ],
        out_specs=pl.BlockSpec((Bt, H, CW), lambda n: (n, 0, 0)),
        compiler_params=pltpu.CompilerParams(
            dimension_semantics=("parallel",),
            vmem_limit_bytes=64 * 1024 * 1024),   # re-budget per generation (64 MiB cap on v7x)
    )(x3, up_w, conv_w, vecs, gmask, gmask_t, sel, sel_t)

    # (N, H, 2*W2C) with even|odd lane slabs is row-major identical to
    # (N, 2H, 2W, Cout) with interleaved output rows -> free reshape (no stack / copy).
    y = out.reshape(N, 2 * H, 2 * W, Cout)
    # TODO(synk): drop this transpose if the consumer accepts NHWC (saves one HBM pass).
    return jnp.transpose(y, (0, 3, 1, 2))


# ----------------------- pure-JAX reference (for correctness check) -----------------------

def _gn_silu_ref(x, gamma, beta, G, eps):
    N, H, W, C = x.shape
    xg = x.reshape(N, H, W, G, C // G)
    mean = xg.mean(axis=(1, 2, 4), keepdims=True)
    var = ((xg - mean) ** 2).mean(axis=(1, 2, 4), keepdims=True)
    xn = ((xg - mean) / jnp.sqrt(var + eps)).reshape(N, H, W, C)
    y = xn * gamma.reshape(1, 1, 1, C) + beta.reshape(1, 1, 1, C)
    return y * jax.nn.sigmoid(y)


def _conv3x3_ref(x, w, b):
    N, H, W, C = x.shape
    xp = jnp.pad(x, ((0, 0), (1, 1), (1, 1), (0, 0)))
    out = jnp.zeros((N, H, W, w.shape[0]), jnp.float32)
    for ki in range(3):
        for kj in range(3):
            out = out + jnp.einsum('nhwc,oc->nhwo',
                                   xp[:, ki:ki + H, kj:kj + W, :], w[:, :, ki, kj])
    return out + b.reshape(1, 1, 1, -1)


def conv_up_reference(x_nchw, p):
    x = jnp.transpose(x_nchw, (0, 2, 3, 1))
    N, H, W, Cin = x.shape
    Cout = p["b_up"].shape[0]
    t = jnp.einsum('nhwi,iokl->nhkwlo', x, p["w_up"])       # (N,H,2,W,2,Cout)
    y = t.reshape(N, 2 * H, 2 * W, Cout) + p["b_up"].reshape(1, 1, 1, Cout)
    skip = y
    h = _gn_silu_ref(y, p["gamma1"], p["beta1"], NUM_GROUPS, EPS)
    h = _conv3x3_ref(h, p["w1"], p["b1"])
    h = _gn_silu_ref(h, p["gamma2"], p["beta2"], NUM_GROUPS, EPS)
    h = _conv3x3_ref(h, p["w2"], p["b2"])
    out = skip + h
    return jnp.transpose(out, (0, 3, 1, 2))


# ----------------------- main -----------------------

if __name__ == "__main__":
    key = jax.random.PRNGKey(0)
    ks = jax.random.split(key, 11)
    # N=16 with B_tile=8 (auto-picked) -> conv matmul M = 2*B_tile*H = 256 and a 2-step grid.
    N, Cin, Cout, Hs = 16, 4, 8, 16
    x = jax.random.normal(ks[0], (N, Cin, Hs, Hs), jnp.float32)
    params = {
        "w_up": 0.1 * jax.random.normal(ks[1], (Cin, Cout, 2, 2), jnp.float32),
        "b_up": 0.02 * jax.random.normal(ks[2], (Cout,), jnp.float32),
        "gamma1": 1.0 + 0.1 * jax.random.normal(ks[3], (Cout,), jnp.float32),
        "beta1": 0.1 * jax.random.normal(ks[4], (Cout,), jnp.float32),
        "w1": 0.1 * jax.random.normal(ks[5], (Cout, Cout, 3, 3), jnp.float32),
        "b1": 0.02 * jax.random.normal(ks[6], (Cout,), jnp.float32),
        "gamma2": 1.0 + 0.1 * jax.random.normal(ks[7], (Cout,), jnp.float32),
        "beta2": 0.1 * jax.random.normal(ks[8], (Cout,), jnp.float32),
        "w2": 0.1 * jax.random.normal(ks[9], (Cout, Cout, 3, 3), jnp.float32),
        "b2": 0.02 * jax.random.normal(ks[10], (Cout,), jnp.float32),
    }

    ref = jax.block_until_ready(conv_up_reference(x, params))
    fwd = jax.jit(conv_up_forward)

    # (1) strict structural / numerical check with f32 folded weights
    prep_f32 = jax.tree_util.tree_map(
        jax.block_until_ready, prepare_conv_up(params, Hs, Hs, weight_dtype=jnp.float32))
    out_f32 = jax.block_until_ready(fwd(x, prep_f32))
    assert out_f32.shape == (N, Cout, 2 * Hs, 2 * Hs), out_f32.shape
    err_f32 = float(jnp.max(jnp.abs(out_f32 - ref)))
    assert err_f32 < 5e-3, f"f32 max abs err {err_f32}"

    # (2) bf16 MXU-operand path (production config on v6e/v7x); f32 accumulation,
    #     so only operand-rounding error vs the f32 reference is expected.
    prep_bf16 = jax.tree_util.tree_map(
        jax.block_until_ready, prepare_conv_up(params, Hs, Hs, weight_dtype=jnp.bfloat16))
    out_bf16 = jax.block_until_ready(fwd(x, prep_bf16))
    assert bool(jnp.all(jnp.isfinite(out_bf16)))
    err_bf16 = float(jnp.max(jnp.abs(out_bf16 - ref)))
    assert err_bf16 < 2e-1, f"bf16 max abs err {err_bf16}"

    print("KERNEL_OK")
</pallas_src>

<mosaic_0001>
module attributes {stable_mosaic.version = 11 : i64} {
  func.func @kernel(%arg0: i32, %arg1: memref<8x16x64xf32, #tpu.memory_space<vmem>>, %arg2: memref<64x512xf32, #tpu.memory_space<vmem>>, %arg3: memref<2x3x256x256xf32, #tpu.memory_space<vmem>>, %arg4: memref<7x512xf32, #tpu.memory_space<vmem>>, %arg5: memref<4x256xf32, #tpu.memory_space<vmem>>, %arg6: memref<256x4xf32, #tpu.memory_space<vmem>>, %arg7: memref<8x256xf32, #tpu.memory_space<vmem>>, %arg8: memref<256x8xf32, #tpu.memory_space<vmem>>, %arg9: memref<8x16x512xf32, #tpu.memory_space<vmem>>) attributes {dimension_semantics = [#tpu.dimension_semantics<parallel>], iteration_bounds = array<i64: 2>, scalar_prefetch = 0 : i64, scratch_operands = 0 : i64, tpu.core_type = #tpu.core_type<tc>, window_params = [{transform_indices = @transform_0, window_bounds = array<i64: 8, 16, 64>}, {pipeline_mode = #tpu.pipeline_mode<synchronous>, transform_indices = @transform_1, window_bounds = array<i64: 64, 512>}, {pipeline_mode = #tpu.pipeline_mode<synchronous>, transform_indices = @transform_2, window_bounds = array<i64: 2, 3, 256, 256>}, {pipeline_mode = #tpu.pipeline_mode<synchronous>, transform_indices = @transform_3, window_bounds = array<i64: 7, 512>}, {pipeline_mode = #tpu.pipeline_mode<synchronous>, transform_indices = @transform_4, window_bounds = array<i64: 4, 256>}, {pipeline_mode = #tpu.pipeline_mode<synchronous>, transform_indices = @transform_5, window_bounds = array<i64: 256, 4>}, {pipeline_mode = #tpu.pipeline_mode<synchronous>, transform_indices = @transform_6, window_bounds = array<i64: 8, 256>}, {pipeline_mode = #tpu.pipeline_mode<synchronous>, transform_indices = @transform_7, window_bounds = array<i64: 256, 8>}, {transform_indices = @transform_8, window_bounds = array<i64: 8, 16, 512>}]} {
    %c0 = arith.constant 0 : index
    %c0_0 = arith.constant 0 : index
    %0 = vector.load %arg4[%c0, %c0_0] : memref<7x512xf32, #tpu.memory_space<vmem>>, vector<7x512xf32>
    %c0_1 = arith.constant 0 : index
    %c0_2 = arith.constant 0 : index
    %1 = vector.load %arg5[%c0_1, %c0_2] : memref<4x256xf32, #tpu.memory_space<vmem>>, vector<4x256xf32>
    %c0_3 = arith.constant 0 : index
    %c0_4 = arith.constant 0 : index
    %2 = vector.load %arg6[%c0_3, %c0_4] : memref<256x4xf32, #tpu.memory_space<vmem>>, vector<256x4xf32>
    %c0_5 = arith.constant 0 : index
    %c0_6 = arith.constant 0 : index
    %3 = vector.load %arg7[%c0_5, %c0_6] : memref<8x256xf32, #tpu.memory_space<vmem>>, vector<8x256xf32>
    %c0_7 = arith.constant 0 : index
    %c0_8 = arith.constant 0 : index
    %4 = vector.load %arg8[%c0_7, %c0_8] : memref<256x8xf32, #tpu.memory_space<vmem>>, vector<256x8xf32>
    %5 = vector.extract_strided_slice %0 {offsets = [0, 0], sizes = [1, 512], strides = [1, 1]} : vector<7x512xf32> to vector<1x512xf32>
    %6 = vector.extract_strided_slice %0 {offsets = [1, 0], sizes = [1, 256], strides = [1, 1]} : vector<7x512xf32> to vector<1x256xf32>
    %7 = vector.extract_strided_slice %0 {offsets = [2, 0], sizes = [1, 256], strides = [1, 1]} : vector<7x512xf32> to vector<1x256xf32>
    %8 = vector.extract_strided_slice %0 {offsets = [3, 0], sizes = [1, 256], strides = [1, 1]} : vector<7x512xf32> to vector<1x256xf32>
    %9 = vector.extract_strided_slice %0 {offsets = [4, 0], sizes = [1, 256], strides = [1, 1]} : vector<7x512xf32> to vector<1x256xf32>
    %10 = vector.extract_strided_slice %0 {offsets = [5, 0], sizes = [1, 256], strides = [1, 1]} : vector<7x512xf32> to vector<1x256xf32>
    %11 = vector.extract_strided_slice %0 {offsets = [6, 0], sizes = [1, 256], strides = [1, 1]} : vector<7x512xf32> to vector<1x256xf32>
    %12 = tpu.iota {dimensions = array<i32: 0>} : vector<128x256xi32>
    %c16_i32 = arith.constant 16 : i32
    %c0_i32 = arith.constant 0 : i32
    %13 = arith.cmpi eq, %c16_i32, %c0_i32 : i32
    %c1_i32 = arith.constant 1 : i32
    %14 = arith.select %13, %c1_i32, %c16_i32 : i32
    %15 = vector.broadcast %14 : i32 to vector<128x256xi32>
    %16 = arith.remsi %12, %15 : vector<128x256xi32>
    %c0_i32_9 = arith.constant 0 : i32
    %17 = vector.broadcast %c0_i32_9 : i32 to vector<128x256xi32>
    %18 = arith.cmpi ne, %16, %17 : vector<128x256xi32>
    %c0_i32_10 = arith.constant 0 : i32
    %19 = vector.broadcast %c0_i32_10 : i32 to vector<128x256xi32>
    %20 = arith.cmpi slt, %16, %19 : vector<128x256xi32>
    %c0_i32_11 = arith.constant 0 : i32
    %21 = arith.cmpi slt, %14, %c0_i32_11 : i32
    %22 = vector.broadcast %21 : i1 to vector<128x256xi1>
    %23 = vector.broadcast %22 : vector<128x256xi1> to vector<128x256xi1>
    %24 = arith.xori %20, %23 : vector<128x256xi1>
    %25 = arith.andi %24, %18 : vector<128x256xi1>
    %26 = vector.broadcast %14 : i32 to vector<128x256xi32>
    %27 = arith.addi %16, %26 : vector<128x256xi32>
    %28 = arith.select %25, %27, %16 : vector<128x256xi1>, vector<128x256xi32>
    %c0_i32_12 = arith.constant 0 : i32
    %29 = vector.broadcast %c0_i32_12 : i32 to vector<128x256xi32>
    %30 = arith.cmpi eq, %28, %29 : vector<128x256xi32>
    %c15_i32 = arith.constant 15 : i32
    %31 = vector.broadcast %c15_i32 : i32 to vector<128x256xi32>
    %32 = arith.cmpi eq, %28, %31 : vector<128x256xi32>
    %c0_13 = arith.constant 0 : index
    %c0_14 = arith.constant 0 : index
    %c0_15 = arith.constant 0 : index
    %33 = vector.load %arg1[%c0_13, %c0_14, %c0_15] : memref<8x16x64xf32, #tpu.memory_space<vmem>>, vector<8x16x64xf32>
    %34 = vector.shape_cast %33 : vector<8x16x64xf32> to vector<128x64xf32>
    %c0_16 = arith.constant 0 : index
    %c0_17 = arith.constant 0 : index
    %35 = vector.load %arg2[%c0_16, %c0_17] : memref<64x512xf32, #tpu.memory_space<vmem>>, vector<64x512xf32>
    %cst = arith.constant dense<0.000000e+00> : vector<128x512xf32>
    %36 = tpu.matmul %34, %35, %cst {dimension_numbers = #tpu.dot_dimension_numbers<[1], [0], [0], [1], [0, 0, 1, 1], [], []>} : vector<128x64xf32>, vector<64x512xf32>, vector<128x512xf32> -> vector<128x512xf32>
    %37 = vector.broadcast %5 : vector<1x512xf32> to vector<128x512xf32>
    %38 = arith.addf %36, %37 : vector<128x512xf32>
    %39 = vector.extract_strided_slice %38 {offsets = [0, 0], sizes = [128, 256], strides = [1, 1]} : vector<128x512xf32> to vector<128x256xf32>
    %40 = vector.extract_strided_slice %38 {offsets = [0, 256], sizes = [128, 256], strides = [1, 1]} : vector<128x512xf32> to vector<128x256xf32>
    %41 = tpu.concatenate %39, %40 in 0 : vector<128x256xf32>, vector<128x256xf32> -> vector<256x256xf32>
    %cst_18 = arith.constant dense<0.000000e+00> : vector<8x256xf32>
    %42 = tpu.matmul %3, %41, %cst_18 {dimension_numbers = #tpu.dot_dimension_numbers<[1], [0], [0], [1], [0, 0, 1, 1], [], []>} : vector<8x256xf32>, vector<256x256xf32>, vector<8x256xf32> -> vector<8x256xf32>
    %cst_19 = arith.constant dense<0.000000e+00> : vector<8x4xf32>
    %43 = tpu.matmul %42, %2, %cst_19 {dimension_numbers = #tpu.dot_dimension_numbers<[1], [0], [0], [1], [0, 0, 1, 1], [], []>} : vector<8x256xf32>, vector<256x4xf32>, vector<8x4xf32> -> vector<8x4xf32>
    %cst_20 = arith.constant 4.8828125E-4 : f32
    %44 = vector.broadcast %cst_20 : f32 to vector<8x4xf32>
    %45 = arith.mulf %43, %44 : vector<8x4xf32>
    %cst_21 = arith.constant dense<0.000000e+00> : vector<8x256xf32>
    %46 = tpu.matmul %45, %1, %cst_21 {dimension_numbers = #tpu.dot_dimension_numbers<[1], [0], [0], [1], [0, 0, 1, 1], [], []>} : vector<8x4xf32>, vector<4x256xf32>, vector<8x256xf32> -> vector<8x256xf32>
    %cst_22 = arith.constant dense<0.000000e+00> : vector<256x256xf32>
    %47 = tpu.matmul %4, %46, %cst_22 {dimension_numbers = #tpu.dot_dimension_numbers<[1], [0], [0], [1], [0, 0, 1, 1], [], []>} : vector<256x8xf32>, vector<8x256xf32>, vector<256x256xf32> -> vector<256x256xf32>
    %48 = arith.subf %41, %47 : vector<256x256xf32>
    %49 = arith.mulf %48, %48 : vector<256x256xf32>
    %cst_23 = arith.constant dense<0.000000e+00> : vector<8x256xf32>
    %50 = tpu.matmul %3, %49, %cst_23 {dimension_numbers = #tpu.dot_dimension_numbers<[1], [0], [0], [1], [0, 0, 1, 1], [], []>} : vector<8x256xf32>, vector<256x256xf32>, vector<8x256xf32> -> vector<8x256xf32>
    %cst_24 = arith.constant dense<0.000000e+00> : vector<8x4xf32>
    %51 = tpu.matmul %50, %2, %cst_24 {dimension_numbers = #tpu.dot_dimension_numbers<[1], [0], [0], [1], [0, 0, 1, 1], [], []>} : vector<8x256xf32>, vector<256x4xf32>, vector<8x4xf32> -> vector<8x4xf32>
    %cst_25 = arith.constant 4.8828125E-4 : f32
    %52 = vector.broadcast %cst_25 : f32 to vector<8x4xf32>
    %53 = arith.mulf %51, %52 : vector<8x4xf32>
    %cst_26 = arith.constant 9.99999974E-5 : f32
    %54 = vector.broadcast %cst_26 : f32 to vector<8x4xf32>
    %55 = arith.addf %53, %54 : vector<8x4xf32>
    %56 = math.rsqrt %55 : vector<8x4xf32>
    %cst_27 = arith.constant dense<0.000000e+00> : vector<8x256xf32>
    %57 = tpu.matmul %56, %1, %cst_27 {dimension_numbers = #tpu.dot_dimension_numbers<[1], [0], [0], [1], [0, 0, 1, 1], [], []>} : vector<8x4xf32>, vector<4x256xf32>, vector<8x256xf32> -> vector<8x256xf32>
    %cst_28 = arith.constant dense<0.000000e+00> : vector<256x256xf32>
    %58 = tpu.matmul %4, %57, %cst_28 {dimension_numbers = #tpu.dot_dimension_numbers<[1], [0], [0], [1], [0, 0, 1, 1], [], []>} : vector<256x8xf32>, vector<8x256xf32>, vector<256x256xf32> -> vector<256x256xf32>
    %59 = arith.mulf %48, %58 : vector<256x256xf32>
    %60 = vector.broadcast %6 : vector<1x256xf32> to vector<256x256xf32>
    %61 = arith.mulf %59, %60 : vector<256x256xf32>
    %62 = vector.broadcast %7 : vector<1x256xf32> to vector<256x256xf32>
    %63 = arith.addf %61, %62 : vector<256x256xf32>
    %64 = arith.negf %63 : vector<256x256xf32>
    %65 = math.exp %64 : vector<256x256xf32>
    %cst_29 = arith.constant 1.000000e+00 : f32
    %66 = vector.broadcast %cst_29 : f32 to vector<256x256xf32>
    %67 = arith.addf %66, %65 : vector<256x256xf32>
    %68 = arith.divf %66, %67 : vector<256x256xf32>
    %69 = arith.mulf %63, %68 : vector<256x256xf32>
    %c0_30 = arith.constant 0 : index
    %c0_31 = arith.constant 0 : index
    %c0_32 = arith.constant 0 : index
    %c0_33 = arith.constant 0 : index
    %70 = vector.load %arg3[%c0_30, %c0_31, %c0_32, %c0_33] : memref<2x3x256x256xf32, #tpu.memory_space<vmem>>, vector<1x1x256x256xf32>
    %71 = vector.shape_cast %70 : vector<1x1x256x256xf32> to vector<256x256xf32>
    %cst_34 = arith.constant dense<0.000000e+00> : vector<256x256xf32>
    %72 = tpu.matmul %69, %71, %cst_34 {dimension_numbers = #tpu.dot_dimension_numbers<[1], [0], [0], [1], [0, 0, 1, 1], [], []>} : vector<256x256xf32>, vector<256x256xf32>, vector<256x256xf32> -> vector<256x256xf32>
    %c0_35 = arith.constant 0 : index
    %c1 = arith.constant 1 : index
    %c0_36 = arith.constant 0 : index
    %c0_37 = arith.constant 0 : index
    %73 = vector.load %arg3[%c0_35, %c1, %c0_36, %c0_37] : memref<2x3x256x256xf32, #tpu.memory_space<vmem>>, vector<1x1x256x256xf32>
    %74 = vector.shape_cast %73 : vector<1x1x256x256xf32> to vector<256x256xf32>
    %cst_38 = arith.constant dense<0.000000e+00> : vector<256x256xf32>
    %75 = tpu.matmul %69, %74, %cst_38 {dimension_numbers = #tpu.dot_dimension_numbers<[1], [0], [0], [1], [0, 0, 1, 1], [], []>} : vector<256x256xf32>, vector<256x256xf32>, vector<256x256xf32> -> vector<256x256xf32>
    %c0_39 = arith.constant 0 : index
    %c2 = arith.constant 2 : index
    %c0_40 = arith.constant 0 : index
    %c0_41 = arith.constant 0 : index
    %76 = vector.load %arg3[%c0_39, %c2, %c0_40, %c0_41] : memref<2x3x256x256xf32, #tpu.memory_space<vmem>>, vector<1x1x256x256xf32>
    %77 = vector.shape_cast %76 : vector<1x1x256x256xf32> to vector<256x256xf32>
    %cst_42 = arith.constant dense<0.000000e+00> : vector<256x256xf32>
    %78 = tpu.matmul %69, %77, %cst_42 {dimension_numbers = #tpu.dot_dimension_numbers<[1], [0], [0], [1], [0, 0, 1, 1], [], []>} : vector<256x256xf32>, vector<256x256xf32>, vector<256x256xf32> -> vector<256x256xf32>
    %79 = vector.extract_strided_slice %72 {offsets = [128, 0], sizes = [128, 256], strides = [1, 1]} : vector<256x256xf32> to vector<128x256xf32>
    %80 = vector.extract_strided_slice %79 {offsets = [127, 0], sizes = [1, 256], strides = [1, 1]} : vector<128x256xf32> to vector<1x256xf32>
    %81 = vector.extract_strided_slice %79 {offsets = [0, 0], sizes = [127, 256], strides = [1, 1]} : vector<128x256xf32> to vector<127x256xf32>
    %82 = tpu.concatenate %80, %81 in 0 : vector<1x256xf32>, vector<127x256xf32> -> vector<128x256xf32>
    %cst_43 = arith.constant 0.000000e+00 : f32
    %83 = vector.broadcast %cst_43 : f32 to vector<128x256xf32>
    %84 = arith.select %30, %83, %82 : vector<128x256xi1>, vector<128x256xf32>
    %85 = vector.extract_strided_slice %72 {offsets = [0, 0], sizes = [128, 256], strides = [1, 1]} : vector<256x256xf32> to vector<128x256xf32>
    %86 = tpu.concatenate %84, %85 in 0 : vector<128x256xf32>, vector<128x256xf32> -> vector<256x256xf32>
    %87 = vector.extract_strided_slice %78 {offsets = [128, 0], sizes = [128, 256], strides = [1, 1]} : vector<256x256xf32> to vector<128x256xf32>
    %88 = vector.extract_strided_slice %78 {offsets = [0, 0], sizes = [128, 256], strides = [1, 1]} : vector<256x256xf32> to vector<128x256xf32>
    %89 = vector.extract_strided_slice %88 {offsets = [1, 0], sizes = [127, 256], strides = [1, 1]} : vector<128x256xf32> to vector<127x256xf32>
    %90 = vector.extract_strided_slice %88 {offsets = [0, 0], sizes = [1, 256], strides = [1, 1]} : vector<128x256xf32> to vector<1x256xf32>
    %91 = tpu.concatenate %89, %90 in 0 : vector<127x256xf32>, vector<1x256xf32> -> vector<128x256xf32>
    %cst_44 = arith.constant 0.000000e+00 : f32
    %92 = vector.broadcast %cst_44 : f32 to vector<128x256xf32>
    %93 = arith.select %32, %92, %91 : vector<128x256xi1>, vector<128x256xf32>
    %94 = tpu.concatenate %87, %93 in 0 : vector<128x256xf32>, vector<128x256xf32> -> vector<256x256xf32>
    %95 = arith.addf %86, %75 : vector<256x256xf32>
    %96 = arith.addf %95, %94 : vector<256x256xf32>
    %97 = vector.broadcast %8 : vector<1x256xf32> to vector<256x256xf32>
    %98 = arith.addf %96, %97 : vector<256x256xf32>
    %cst_45 = arith.constant dense<0.000000e+00> : vector<8x256xf32>
    %99 = tpu.matmul %3, %98, %cst_45 {dimension_numbers = #tpu.dot_dimension_numbers<[1], [0], [0], [1], [0, 0, 1, 1], [], []>} : vector<8x256xf32>, vector<256x256xf32>, vector<8x256xf32> -> vector<8x256xf32>
    %cst_46 = arith.constant dense<0.000000e+00> : vector<8x4xf32>
    %100 = tpu.matmul %99, %2, %cst_46 {dimension_numbers = #tpu.dot_dimension_numbers<[1], [0], [0], [1], [0, 0, 1, 1], [], []>} : vector<8x256xf32>, vector<256x4xf32>, vector<8x4xf32> -> vector<8x4xf32>
    %cst_47 = arith.constant 4.8828125E-4 : f32
    %101 = vector.broadcast %cst_47 : f32 to vector<8x4xf32>
    %102 = arith.mulf %100, %101 : vector<8x4xf32>
    %cst_48 = arith.constant dense<0.000000e+00> : vector<8x256xf32>
    %103 = tpu.matmul %102, %1, %cst_48 {dimension_numbers = #tpu.dot_dimension_numbers<[1], [0], [0], [1], [0, 0, 1, 1], [], []>} : vector<8x4xf32>, vector<4x256xf32>, vector<8x256xf32> -> vector<8x256xf32>
    %cst_49 = arith.constant dense<0.000000e+00> : vector<256x256xf32>
    %104 = tpu.matmul %4, %103, %cst_49 {dimension_numbers = #tpu.dot_dimension_numbers<[1], [0], [0], [1], [0, 0, 1, 1], [], []>} : vector<256x8xf32>, vector<8x256xf32>, vector<256x256xf32> -> vector<256x256xf32>
    %105 = arith.subf %98, %104 : vector<256x256xf32>
    %106 = arith.mulf %105, %105 : vector<256x256xf32>
    %cst_50 = arith.constant dense<0.000000e+00> : vector<8x256xf32>
    %107 = tpu.matmul %3, %106, %cst_50 {dimension_numbers = #tpu.dot_dimension_numbers<[1], [0], [0], [1], [0, 0, 1, 1], [], []>} : vector<8x256xf32>, vector<256x256xf32>, vector<8x256xf32> -> vector<8x256xf32>
    %cst_51 = arith.constant dense<0.000000e+00> : vector<8x4xf32>
    %108 = tpu.matmul %107, %2, %cst_51 {dimension_numbers = #tpu.dot_dimension_numbers<[1], [0], [0], [1], [0, 0, 1, 1], [], []>} : vector<8x256xf32>, vector<256x4xf32>, vector<8x4xf32> -> vector<8x4xf32>
    %cst_52 = arith.constant 4.8828125E-4 : f32
    %109 = vector.broadcast %cst_52 : f32 to vector<8x4xf32>
    %110 = arith.mulf %108, %109 : vector<8x4xf32>
    %cst_53 = arith.constant 9.99999974E-5 : f32
    %111 = vector.broadcast %cst_53 : f32 to vector<8x4xf32>
    %112 = arith.addf %110, %111 : vector<8x4xf32>
    %113 = math.rsqrt %112 : vector<8x4xf32>
    %cst_54 = arith.constant dense<0.000000e+00> : vector<8x256xf32>
    %114 = tpu.matmul %113, %1, %cst_54 {dimension_numbers = #tpu.dot_dimension_numbers<[1], [0], [0], [1], [0, 0, 1, 1], [], []>} : vector<8x4xf32>, vector<4x256xf32>, vector<8x256xf32> -> vector<8x256xf32>
    %cst_55 = arith.constant dense<0.000000e+00> : vector<256x256xf32>
    %115 = tpu.matmul %4, %114, %cst_55 {dimension_numbers = #tpu.dot_dimension_numbers<[1], [0], [0], [1], [0, 0, 1, 1], [], []>} : vector<256x8xf32>, vector<8x256xf32>, vector<256x256xf32> -> vector<256x256xf32>
    %116 = arith.mulf %105, %115 : vector<256x256xf32>
    %117 = vector.broadcast %9 : vector<1x256xf32> to vector<256x256xf32>
    %118 = arith.mulf %116, %117 : vector<256x256xf32>
    %119 = vector.broadcast %10 : vector<1x256xf32> to vector<256x256xf32>
    %120 = arith.addf %118, %119 : vector<256x256xf32>
    %121 = arith.negf %120 : vector<256x256xf32>
    %122 = math.exp %121 : vector<256x256xf32>
    %cst_56 = arith.constant 1.000000e+00 : f32
    %123 = vector.broadcast %cst_56 : f32 to vector<256x256xf32>
    %124 = arith.addf %123, %122 : vector<256x256xf32>
    %125 = arith.divf %123, %124 : vector<256x256xf32>
    %126 = arith.mulf %120, %125 : vector<256x256xf32>
    %c1_57 = arith.constant 1 : index
    %c0_58 = arith.constant 0 : index
    %c0_59 = arith.constant 0 : index
    %c0_60 = arith.constant 0 : index
    %127 = vector.load %arg3[%c1_57, %c0_58, %c0_59, %c0_60] : memref<2x3x256x256xf32, #tpu.memory_space<vmem>>, vector<1x1x256x256xf32>
    %128 = vector.shape_cast %127 : vector<1x1x256x256xf32> to vector<256x256xf32>
    %cst_61 = arith.constant dense<0.000000e+00> : vector<256x256xf32>
    %129 = tpu.matmul %126, %128, %cst_61 {dimension_numbers = #tpu.dot_dimension_numbers<[1], [0], [0], [1], [0, 0, 1, 1], [], []>} : vector<256x256xf32>, vector<256x256xf32>, vector<256x256xf32> -> vector<256x256xf32>
    %c1_62 = arith.constant 1 : index
    %c1_63 = arith.constant 1 : index
    %c0_64 = arith.constant 0 : index
    %c0_65 = arith.constant 0 : index
    %130 = vector.load %arg3[%c1_62, %c1_63, %c0_64, %c0_65] : memref<2x3x256x256xf32, #tpu.memory_space<vmem>>, vector<1x1x256x256xf32>
    %131 = vector.shape_cast %130 : vector<1x1x256x256xf32> to vector<256x256xf32>
    %cst_66 = arith.constant dense<0.000000e+00> : vector<256x256xf32>
    %132 = tpu.matmul %126, %131, %cst_66 {dimension_numbers = #tpu.dot_dimension_numbers<[1], [0], [0], [1], [0, 0, 1, 1], [], []>} : vector<256x256xf32>, vector<256x256xf32>, vector<256x256xf32> -> vector<256x256xf32>
    %c1_67 = arith.constant 1 : index
    %c2_68 = arith.constant 2 : index
    %c0_69 = arith.constant 0 : index
    %c0_70 = arith.constant 0 : index
    %133 = vector.load %arg3[%c1_67, %c2_68, %c0_69, %c0_70] : memref<2x3x256x256xf32, #tpu.memory_space<vmem>>, vector<1x1x256x256xf32>
    %134 = vector.shape_cast %133 : vector<1x1x256x256xf32> to vector<256x256xf32>
    %cst_71 = arith.constant dense<0.000000e+00> : vector<256x256xf32>
    %135 = tpu.matmul %126, %134, %cst_71 {dimension_numbers = #tpu.dot_dimension_numbers<[1], [0], [0], [1], [0, 0, 1, 1], [], []>} : vector<256x256xf32>, vector<256x256xf32>, vector<256x256xf32> -> vector<256x256xf32>
    %136 = vector.extract_strided_slice %129 {offsets = [128, 0], sizes = [128, 256], strides = [1, 1]} : vector<256x256xf32> to vector<128x256xf32>
    %137 = vector.extract_strided_slice %136 {offsets = [127, 0], sizes = [1, 256], strides = [1, 1]} : vector<128x256xf32> to vector<1x256xf32>
    %138 = vector.extract_strided_slice %136 {offsets = [0, 0], sizes = [127, 256], strides = [1, 1]} : vector<128x256xf32> to vector<127x256xf32>
    %139 = tpu.concatenate %137, %138 in 0 : vector<1x256xf32>, vector<127x256xf32> -> vector<128x256xf32>
    %cst_72 = arith.constant 0.000000e+00 : f32
    %140 = vector.broadcast %cst_72 : f32 to vector<128x256xf32>
    %141 = arith.select %30, %140, %139 : vector<128x256xi1>, vector<128x256xf32>
    %142 = vector.extract_strided_slice %129 {offsets = [0, 0], sizes = [128, 256], strides = [1, 1]} : vector<256x256xf32> to vector<128x256xf32>
    %143 = tpu.concatenate %141, %142 in 0 : vector<128x256xf32>, vector<128x256xf32> -> vector<256x256xf32>
    %144 = vector.extract_strided_slice %135 {offsets = [128, 0], sizes = [128, 256], strides = [1, 1]} : vector<256x256xf32> to vector<128x256xf32>
    %145 = vector.extract_strided_slice %135 {offsets = [0, 0], sizes = [128, 256], strides = [1, 1]} : vector<256x256xf32> to vector<128x256xf32>
    %146 = vector.extract_strided_slice %145 {offsets = [1, 0], sizes = [127, 256], strides = [1, 1]} : vector<128x256xf32> to vector<127x256xf32>
    %147 = vector.extract_strided_slice %145 {offsets = [0, 0], sizes = [1, 256], strides = [1, 1]} : vector<128x256xf32> to vector<1x256xf32>
    %148 = tpu.concatenate %146, %147 in 0 : vector<127x256xf32>, vector<1x256xf32> -> vector<128x256xf32>
    %cst_73 = arith.constant 0.000000e+00 : f32
    %149 = vector.broadcast %cst_73 : f32 to vector<128x256xf32>
    %150 = arith.select %32, %149, %148 : vector<128x256xi1>, vector<128x256xf32>
    %151 = tpu.concatenate %144, %150 in 0 : vector<128x256xf32>, vector<128x256xf32> -> vector<256x256xf32>
    %152 = arith.addf %143, %132 : vector<256x256xf32>
    %153 = arith.addf %152, %151 : vector<256x256xf32>
    %154 = vector.broadcast %11 : vector<1x256xf32> to vector<256x256xf32>
    %155 = arith.addf %153, %154 : vector<256x256xf32>
    %156 = arith.addf %41, %155 : vector<256x256xf32>
    %157 = vector.extract_strided_slice %156 {offsets = [0, 0], sizes = [128, 256], strides = [1, 1]} : vector<256x256xf32> to vector<128x256xf32>
    %158 = vector.extract_strided_slice %156 {offsets = [128, 0], sizes = [128, 256], strides = [1, 1]} : vector<256x256xf32> to vector<128x256xf32>
    %159 = tpu.concatenate %157, %158 in 1 : vector<128x256xf32>, vector<128x256xf32> -> vector<128x512xf32>
    %160 = vector.shape_cast %159 : vector<128x512xf32> to vector<8x16x512xf32>
    %c0_74 = arith.constant 0 : index
    %c0_75 = arith.constant 0 : index
    %c0_76 = arith.constant 0 : index
    %161 = vector.load %arg9[%c0_74, %c0_75, %c0_76] : memref<8x16x512xf32, #tpu.memory_space<vmem>>, vector<8x16x512xf32>
    tpu.vector_store %arg9[%c0_74, %c0_75, %c0_76], %160 {strides = array<i32>} : memref<8x16x512xf32, #tpu.memory_space<vmem>>, vector<8x16x512xf32>,
    return
  }
  func.func @transform_0(%arg0: i32) -> (i32, i32, i32) {
    %c0_i32 = arith.constant 0 : i32
    %c0_i32_0 = arith.constant 0 : i32
    %c0_i32_1 = arith.constant 0 : i32
    return %arg0, %c0_i32, %c0_i32_0 : i32, i32, i32
  }
  func.func @transform_1(%arg0: i32) -> (i32, i32) {
    %c0_i32 = arith.constant 0 : i32
    %c0_i32_0 = arith.constant 0 : i32
    %c0_i32_1 = arith.constant 0 : i32
    return %c0_i32, %c0_i32_0 : i32, i32
  }
  func.func @transform_2(%arg0: i32) -> (i32, i32, i32, i32) {
    %c0_i32 = arith.constant 0 : i32
    %c0_i32_0 = arith.constant 0 : i32
    %c0_i32_1 = arith.constant 0 : i32
    %c0_i32_2 = arith.constant 0 : i32
    %c0_i32_3 = arith.constant 0 : i32
    return %c0_i32, %c0_i32_0, %c0_i32_1, %c0_i32_2 : i32, i32, i32, i32
  }
  func.func @transform_3(%arg0: i32) -> (i32, i32) {
    %c0_i32 = arith.constant 0 : i32
    %c0_i32_0 = arith.constant 0 : i32
    %c0_i32_1 = arith.constant 0 : i32
    return %c0_i32, %c0_i32_0 : i32, i32
  }
  func.func @transform_4(%arg0: i32) -> (i32, i32) {
    %c0_i32 = arith.constant 0 : i32
    %c0_i32_0 = arith.constant 0 : i32
    %c0_i32_1 = arith.constant 0 : i32
    return %c0_i32, %c0_i32_0 : i32, i32
  }
  func.func @transform_5(%arg0: i32) -> (i32, i32) {
    %c0_i32 = arith.constant 0 : i32
    %c0_i32_0 = arith.constant 0 : i32
    %c0_i32_1 = arith.constant 0 : i32
    return %c0_i32, %c0_i32_0 : i32, i32
  }
  func.func @transform_6(%arg0: i32) -> (i32, i32) {
    %c0_i32 = arith.constant 0 : i32
    %c0_i32_0 = arith.constant 0 : i32
    %c0_i32_1 = arith.constant 0 : i32
    return %c0_i32, %c0_i32_0 : i32, i32
  }
  func.func @transform_7(%arg0: i32) -> (i32, i32) {
    %c0_i32 = arith.constant 0 : i32
    %c0_i32_0 = arith.constant 0 : i32
    %c0_i32_1 = arith.constant 0 : i32
    return %c0_i32, %c0_i32_0 : i32, i32
  }
  func.func @transform_8(%arg0: i32) -> (i32, i32, i32) {
    %c0_i32 = arith.constant 0 : i32
    %c0_i32_0 = arith.constant 0 : i32
    %c0_i32_1 = arith.constant 0 : i32
    return %arg0, %c0_i32, %c0_i32_0 : i32, i32, i32
  }
}

</mosaic_0001>

<llo_original>
// kernel: conv_up_forward.1
$region0: #{conv_up_forward.1}
  #allocation0 [shape = 'u32[]', space=smem, size = 0x4, offset = 0x4, fixed_abs, tag = 'smem constant byte address 0x4 - core index']
  #allocation1 [shape = 'u32[144,128]{1,0:T(1,128)}', space=vmem, size = 0x12000, scoped, tag = 'internal scratch']
  %s0 = inlined_call_operand.vmem [shape: f32[16,16,64], index: 0, kind: input, shape index: {}]
  %s1 = inlined_call_operand.vmem [shape: f32[64,512], index: 1, kind: input, shape index: {}]
  %s2 = inlined_call_operand.vmem [shape: f32[2,3,256,256], index: 2, kind: input, shape index: {}]
  %s3 = inlined_call_operand.hbm [shape: f32[7,512], index: 3, kind: input, shape index: {}]
  %s4 = inlined_call_operand.hbm [shape: f32[4,256], index: 4, kind: input, shape index: {}]
  %s5 = inlined_call_operand.vmem [shape: f32[256,4], index: 5, kind: input, shape index: {}]
  %s6 = inlined_call_operand.vmem [shape: f32[8,256], index: 6, kind: input, shape index: {}]
  %s7 = inlined_call_operand.vmem [shape: f32[256,8], index: 7, kind: input, shape index: {}]
  %s8 = inlined_call_operand.vmem [shape: f32[16,16,512], index: 8, kind: output, shape index: {}]
  %s9 = sld [smem:[#allocation0]]
  $region73: #{conv_up_forward.1} parent=0
    _
  %s11 = ssub.s32 1, %s9
  %s12 = scalar_select 0, %s11, %s9
  $region1: #{conv_up_forward.1} parent=0
    #allocation2 [shape = 'u8[16384]{0}', space=vmem, size = 0x4000, scoped, tag = 'input window, operand 3, single buffered']
    #allocation3 [shape = 's32[2]{0}', space=sflag, size = 0x8, scoped, tag = 'scoped memory for conv_up_forward.1']
    #allocation4 [shape = 'u8[4096]{0}', space=vmem, size = 0x1000, scoped, tag = 'input window, operand 4, single buffered']
    #allocation5 [shape = 's32[1]{0}', space=sflag, size = 0x4, scoped, tag = 'scoped memory for conv_up_forward.1']
    %13 = vsyncpa [#allocation3], 0
    %14 = vsyncpa [#allocation5], 0
    loop: start=0, step=1, limit=4
    $region2: #{conv_up_forward.1} parent=1 // loop_pre_header
      _
    $region3: #{conv_up_forward.1} parent=1 // loop_header
      %s16 = sphi 0, %s20
      %p17 = scmp.ge.s32.totalorder %s16, 4
      %s26 = sphi 0, %s28
      %s29 = sphi 0, %s26
      %s30 = sphi 0, %s29
      %s46 = sphi 0, %s30
      %s50 = sphi 0, %s50
      %s52 = sphi 0, %s50
      %s53 = sphi 0, %s52
      %s67 = sphi 0, %s53
      %s71 = sphi 0, %s71
      %s73 = sphi 0, %s71
      %s74 = sphi 0, %s73
      %s88 = sphi 0, %s74
      %s92 = sphi 0, %s92
      %s94 = sphi 0, %s92
      %s95 = sphi 0, %s94
      %s109 = sphi 0, %s95
      %s113 = sphi 0, %s113
      %s115 = sphi 0, %s113
      %s116 = sphi 0, %s115
      %s130 = sphi 0, %s116
      %s134 = sphi 0, %s134
      %s136 = sphi 0, %s134
      %s137 = sphi 0, %s136
      %s151 = sphi 0, %s137
      %s155 = sphi 0, %s155
      %s157 = sphi 0, %s155
      %s158 = sphi 0, %s157
      %s172 = sphi 0, %s158
      %s176 = sphi 0, %s176
      %s178 = sphi 0, %s176
      %s179 = sphi 0, %s178
      %s193 = sphi 0, %s179
      %s199 = sphi 0, %s201
      %s202 = sphi 0, %s199
      %s203 = sphi 0, %s202
      %s219 = sphi 0, %s203
    $region4: #{conv_up_forward.1} parent=1 // loop_header_branch
      %19 = sbr.rel (%p17) target = $region8
    $region5: #{conv_up_forward.1} parent=1 // loop_body
      %s21 = ssub.s32 %s16, 1
      %s22 = ssub.s32 %s16, 2
      %s23 = sadd.s32 %s16, 1
      %s24 = ssub.s32 %s16, %s23
      %p25 = scmp.eq.s32.totalorder %s24, 0
      %s27 = sadd.s32 %s26, 1
      %s28 = scalar_select %p25, %s26, %s27
      %p31 = pneg %p25
      %p32 = scmp.eq.s32.totalorder %s16, 1
      %p33 = por %p31, %p32
      %p34 = scmp.ne.s32.totalorder %s26, %s29
      %p35 = scmp.eq.s32.totalorder %s16, 0
      %p36 = por %p34, %p35
      %p37 = scmp.ne.s32.totalorder %s26, %s29
      %p38 = scmp.eq.s32.totalorder %s21, 1
      %p39 = por %p37, %p38
      %p40 = scmp.ne.s32.totalorder %s29, %s30
      %p41 = scmp.eq.s32.totalorder %s21, 0
      %p42 = por %p40, %p41
      %p43 = scmp.ne.s32.totalorder %s29, %s30
      %p44 = scmp.eq.s32.totalorder %s22, 1
      %p45 = por %p43, %p44
      %p47 = scmp.ne.s32.totalorder %s30, %s46
      %p48 = scmp.eq.s32.totalorder %s22, 0
      %p49 = por %p47, %p48
      %s51 = sadd.s32 %s50, 1
      %p54 = scmp.eq.s32.totalorder %s16, 1
      %p55 = scmp.ne.s32.totalorder %s50, %s52
      %p56 = scmp.eq.s32.totalorder %s16, 0
      %p57 = por %p55, %p56
      %p58 = scmp.ne.s32.totalorder %s50, %s52
      %p59 = scmp.eq.s32.totalorder %s21, 1
      %p60 = por %p58, %p59
      %p61 = scmp.ne.s32.totalorder %s52, %s53
      %p62 = scmp.eq.s32.totalorder %s21, 0
      %p63 = por %p61, %p62
      %p64 = scmp.ne.s32.totalorder %s52, %s53
      %p65 = scmp.eq.s32.totalorder %s22, 1
      %p66 = por %p64, %p65
      %p68 = scmp.ne.s32.totalorder %s53, %s67
      %p69 = scmp.eq.s32.totalorder %s22, 0
      %p70 = por %p68, %p69
      %s72 = sadd.s32 %s71, 1
      %p75 = scmp.eq.s32.totalorder %s16, 1
      %p76 = scmp.ne.s32.totalorder %s71, %s73
      %p77 = scmp.eq.s32.totalorder %s16, 0
      %p78 = por %p76, %p77
      %p79 = scmp.ne.s32.totalorder %s71, %s73
      %p80 = scmp.eq.s32.totalorder %s21, 1
      %p81 = por %p79, %p80
      %p82 = scmp.ne.s32.totalorder %s73, %s74
      %p83 = scmp.eq.s32.totalorder %s21, 0
      %p84 = por %p82, %p83
      %p85 = scmp.ne.s32.totalorder %s73, %s74
      %p86 = scmp.eq.s32.totalorder %s22, 1
      %p87 = por %p85, %p86
      %p89 = scmp.ne.s32.totalorder %s74, %s88
      %p90 = scmp.eq.s32.totalorder %s22, 0
      %p91 = por %p89, %p90
      %s93 = sadd.s32 %s92, 1
      %p96 = scmp.eq.s32.totalorder %s16, 1
      %p97 = scmp.ne.s32.totalorder %s92, %s94
      %p98 = scmp.eq.s32.totalorder %s16, 0
      %p99 = por %p97, %p98
      %p100 = scmp.ne.s32.totalorder %s92, %s94
      %p101 = scmp.eq.s32.totalorder %s21, 1
      %p102 = por %p100, %p101
      %p103 = scmp.ne.s32.totalorder %s94, %s95
      %p104 = scmp.eq.s32.totalorder %s21, 0
      %p105 = por %p103, %p104
      %p106 = scmp.ne.s32.totalorder %s94, %s95
      %p107 = scmp.eq.s32.totalorder %s22, 1
      %p108 = por %p106, %p107
      %p110 = scmp.ne.s32.totalorder %s95, %s109
      %p111 = scmp.eq.s32.totalorder %s22, 0
      %p112 = por %p110, %p111
      %s114 = sadd.s32 %s113, 1
      %p117 = scmp.eq.s32.totalorder %s16, 1
      %p118 = scmp.ne.s32.totalorder %s113, %s115
      %p119 = scmp.eq.s32.totalorder %s16, 0
      %p120 = por %p118, %p119
      %p121 = scmp.ne.s32.totalorder %s113, %s115
      %p122 = scmp.eq.s32.totalorder %s21, 1
      %p123 = por %p121, %p122
      %p124 = scmp.ne.s32.totalorder %s115, %s116
      %p125 = scmp.eq.s32.totalorder %s21, 0
      %p126 = por %p124, %p125
      %p127 = scmp.ne.s32.totalorder %s115, %s116
      %p128 = scmp.eq.s32.totalorder %s22, 1
      %p129 = por %p127, %p128
      %p131 = scmp.ne.s32.totalorder %s116, %s130
      %p132 = scmp.eq.s32.totalorder %s22, 0
      %p133 = por %p131, %p132
      %s135 = sadd.s32 %s134, 1
      %p138 = scmp.eq.s32.totalorder %s16, 1
      %p139 = scmp.ne.s32.totalorder %s134, %s136
      %p140 = scmp.eq.s32.totalorder %s16, 0
      %p141 = por %p139, %p140
      %p142 = scmp.ne.s32.totalorder %s134, %s136
      %p143 = scmp.eq.s32.totalorder %s21, 1
      %p144 = por %p142, %p143
      %p145 = scmp.ne.s32.totalorder %s136, %s137
      %p146 = scmp.eq.s32.totalorder %s21, 0
      %p147 = por %p145, %p146
      %p148 = scmp.ne.s32.totalorder %s136, %s137
      %p149 = scmp.eq.s32.totalorder %s22, 1
      %p150 = por %p148, %p149
      %p152 = scmp.ne.s32.totalorder %s137, %s151
      %p153 = scmp.eq.s32.totalorder %s22, 0
      %p154 = por %p152, %p153
      %s156 = sadd.s32 %s155, 1
      %p159 = scmp.eq.s32.totalorder %s16, 1
      %p160 = scmp.ne.s32.totalorder %s155, %s157
      %p161 = scmp.eq.s32.totalorder %s16, 0
      %p162 = por %p160, %p161
      %p163 = scmp.ne.s32.totalorder %s155, %s157
      %p164 = scmp.eq.s32.totalorder %s21, 1
      %p165 = por %p163, %p164
      %p166 = scmp.ne.s32.totalorder %s157, %s158
      %p167 = scmp.eq.s32.totalorder %s21, 0
      %p168 = por %p166, %p167
      %p169 = scmp.ne.s32.totalorder %s157, %s158
      %p170 = scmp.eq.s32.totalorder %s22, 1
      %p171 = por %p169, %p170
      %p173 = scmp.ne.s32.totalorder %s158, %s172
      %p174 = scmp.eq.s32.totalorder %s22, 0
      %p175 = por %p173, %p174
      %s177 = sadd.s32 %s176, 1
      %p180 = scmp.eq.s32.totalorder %s16, 1
      %p181 = scmp.ne.s32.totalorder %s176, %s178
      %p182 = scmp.eq.s32.totalorder %s16, 0
      %p183 = por %p181, %p182
      %p184 = scmp.ne.s32.totalorder %s176, %s178
      %p185 = scmp.eq.s32.totalorder %s21, 1
      %p186 = por %p184, %p185
      %p187 = scmp.ne.s32.totalorder %s178, %s179
      %p188 = scmp.eq.s32.totalorder %s21, 0
      %p189 = por %p187, %p188
      %p190 = scmp.ne.s32.totalorder %s178, %s179
      %p191 = scmp.eq.s32.totalorder %s22, 1
      %p192 = por %p190, %p191
      %p194 = scmp.ne.s32.totalorder %s179, %s193
      %p195 = scmp.eq.s32.totalorder %s22, 0
      %p196 = por %p194, %p195
      %s197 = ssub.s32 %s16, %s23
      %p198 = scmp.eq.s32.totalorder %s197, 0
      %s200 = sadd.s32 %s199, 1
      %s201 = scalar_select %p198, %s199, %s200
      %p204 = pneg %p198
      %p205 = scmp.eq.s32.totalorder %s16, 1
      %p206 = por %p204, %p205
      %p207 = scmp.ne.s32.totalorder %s199, %s202
      %p208 = scmp.eq.s32.totalorder %s16, 0
      %p209 = por %p207, %p208
      %p210 = scmp.ne.s32.totalorder %s199, %s202
      %p211 = scmp.eq.s32.totalorder %s21, 1
      %p212 = por %p210, %p211
      %p213 = scmp.ne.s32.totalorder %s202, %s203
      %p214 = scmp.eq.s32.totalorder %s21, 0
      %p215 = por %p213, %p214
      %p216 = scmp.ne.s32.totalorder %s202, %s203
      %p217 = scmp.eq.s32.totalorder %s22, 1
      %p218 = por %p216, %p217
      %p220 = scmp.ne.s32.totalorder %s203, %s219
      %p221 = scmp.eq.s32.totalorder %s22, 0
      %p222 = por %p220, %p221
      %p223 = scmp.le.s32.totalorder 1, %s16
      %p224 = scmp.lt.s32.totalorder %s16, 3
      %p225 = pnand %p223, %p224
      %p226 = pneg %p225
      // Predicated region
      $region9: #{conv_up_forward.1} parent=5 // pred_check
        _
      $region10: #{conv_up_forward.1} parent=5 // pred_check_branch
        %228 = sbr.rel (%p225) target = $region12
      $region11: #{conv_up_forward.1} parent=5 // pred_region
        %s229 = ssub.s32 %s16, 1
        // Predicated region
        $region13: #{conv_up_forward.1} parent=11 // pred_check
          %p230 = pneg %p63
        $region14: #{conv_up_forward.1} parent=11 // pred_check_branch
          %232 = sbr.rel (%p230) target = $region16
        $region15: #{conv_up_forward.1} parent=11 // pred_region
          _
        $region16: #{conv_up_forward.1} parent=11 // pred_fallthru
          _
        // Predicated region
        $region17: #{conv_up_forward.1} parent=11 // pred_check
          %p233 = pneg %p84
        $region18: #{conv_up_forward.1} parent=11 // pred_check_branch
          %235 = sbr.rel (%p233) target = $region20
        $region19: #{conv_up_forward.1} parent=11 // pred_region
          _
        $region20: #{conv_up_forward.1} parent=11 // pred_fallthru
          _
        // Predicated region
        $region21: #{conv_up_forward.1} parent=11 // pred_check
          %p236 = pneg %p105
        $region22: #{conv_up_forward.1} parent=11 // pred_check_branch
          %238 = sbr.rel (%p236) target = $region24
        $region23: #{conv_up_forward.1} parent=11 // pred_region
          %s240 = ssub.s32 512, 512
          %241 = vsyncadd [#allocation3], %s240
          %s243 = sshll.u32 [#allocation2], 4
          %s244 = int_to_ptr.vmem [resolvable:$true] %s243
          %246 = dma.hbm_to_vmem [thread:$0]  %s3, 512, %s244, [#allocation3]
        $region24: #{conv_up_forward.1} parent=11 // pred_fallthru
          _
        // Predicated region
        $region25: #{conv_up_forward.1} parent=11 // pred_check
          %p247 = pneg %p126
        $region26: #{conv_up_forward.1} parent=11 // pred_check_branch
          %249 = sbr.rel (%p247) target = $region28
        $region27: #{conv_up_forward.1} parent=11 // pred_region
          %s251 = ssub.s32 128, 128
          %252 = vsyncadd [#allocation5], %s251
          %s254 = sshll.u32 [#allocation4], 4
          %s255 = int_to_ptr.vmem [resolvable:$true] %s254
          %257 = dma.hbm_to_vmem [thread:$0]  %s4, 128, %s255, [#allocation5]
        $region28: #{conv_up_forward.1} parent=11 // pred_fallthru
          _
        // Predicated region
        $region29: #{conv_up_forward.1} parent=11 // pred_check
          %p258 = pneg %p147
        $region30: #{conv_up_forward.1} parent=11 // pred_check_branch
          %260 = sbr.rel (%p258) target = $region32
        $region31: #{conv_up_forward.1} parent=11 // pred_region
          _
        $region32: #{conv_up_forward.1} parent=11 // pred_fallthru
          _
        // Predicated region
        $region33: #{conv_up_forward.1} parent=11 // pred_check
          %p261 = pneg %p168
        $region34: #{conv_up_forward.1} parent=11 // pred_check_branch
          %263 = sbr.rel (%p261) target = $region36
        $region35: #{conv_up_forward.1} parent=11 // pred_region
          _
        $region36: #{conv_up_forward.1} parent=11 // pred_fallthru
          _
        // Predicated region
        $region37: #{conv_up_forward.1} parent=11 // pred_check
          %p264 = pneg %p189
        $region38: #{conv_up_forward.1} parent=11 // pred_check_branch
          %266 = sbr.rel (%p264) target = $region40
        $region39: #{conv_up_forward.1} parent=11 // pred_region
          _
        $region40: #{conv_up_forward.1} parent=11 // pred_fallthru
          _
      $region12: #{conv_up_forward.1} parent=5 // pred_fallthru
        _
      %p267 = scmp.lt.s32.totalorder %s16, 2
      // Predicated region
      $region41: #{conv_up_forward.1} parent=5 // pred_check
        %p268 = pneg %p267
      $region42: #{conv_up_forward.1} parent=5 // pred_check_branch
        %270 = sbr.rel (%p268) target = $region44
      $region43: #{conv_up_forward.1} parent=5 // pred_region
        // Predicated region
        $region45: #{conv_up_forward.1} parent=43 // pred_check
          %p271 = pneg %p36
        $region46: #{conv_up_forward.1} parent=43 // pred_check_branch
          %273 = sbr.rel (%p271) target = $region48
        $region47: #{conv_up_forward.1} parent=43 // pred_region
          %s274 = smul.u32 8, %s16
          %p275 = scmp.lt.s32.totalorder %s274, 15
          %s276 = scalar_select %p275, %s274, 15
          %s277 = smul.addr %s276, 2
          %s278 = smul.addr %s277, 8
          %s279 = scalar_lea.vmem %s0, %s278
          %s280 = smul.u32 8, %s16
        $region48: #{conv_up_forward.1} parent=43 // pred_fallthru
          _
      $region44: #{conv_up_forward.1} parent=5 // pred_fallthru
        _
      %p281 = scmp.le.s32.totalorder 1, %s16
      %p282 = scmp.lt.s32.totalorder %s16, 3
      %p283 = pnand %p281, %p282
      %p284 = pneg %p283
      // Predicated region
      $region49: #{conv_up_forward.1} parent=5 // pred_check
        _
      $region50: #{conv_up_forward.1} parent=5 // pred_check_branch
        %286 = sbr.rel (%p283) target = $region52
      $region51: #{conv_up_forward.1} parent=5 // pred_region
        %s287 = ssub.s32 %s16, 1
        // Predicated region
        $region53: #{conv_up_forward.1} parent=51 // pred_check
          %p288 = pneg %p105
        $region54: #{conv_up_forward.1} parent=51 // pred_check_branch
          %290 = sbr.rel (%p288) target = $region56
        $region55: #{conv_up_forward.1} parent=51 // pred_region
          %291 = dma.done [#allocation3], 512
        $region56: #{conv_up_forward.1} parent=51 // pred_fallthru
          _
        // Predicated region
        $region57: #{conv_up_forward.1} parent=51 // pred_check
          %p292 = pneg %p126
        $region58: #{conv_up_forward.1} parent=51 // pred_check_branch
          %294 = sbr.rel (%p292) target = $region60
        $region59: #{conv_up_forward.1} parent=51 // pred_region
          %295 = dma.done [#allocation5], 128
        $region60: #{conv_up_forward.1} parent=51 // pred_fallthru
          _
        %s296 = smul.u32 8, %s21
        %p297 = scmp.lt.s32.totalorder %s296, 15
        %s298 = scalar_select %p297, %s296, 15
        %s299 = smul.addr %s298, 2
        %s300 = smul.addr %s299, 8
        %s301 = scalar_lea.vmem %s0, %s300
        %p302 = pneg %p42
        %p303 = pneg %p39
        %p304 = pneg %p63
        %p305 = pneg %p60
        %p306 = pneg %p84
        %p307 = pneg %p81
        %p308 = pneg %p105
        %p309 = pneg %p102
        %p310 = pneg %p126
        %p311 = pneg %p123
        %p312 = pneg %p147
        %p313 = pneg %p144
        %p314 = pneg %p168
        %p315 = pneg %p165
        %p316 = pneg %p189
        %p317 = pneg %p186
        %p318 = pneg %p215
        %p319 = pneg %p212
        %s320 = smul.u32 8, %s21
        %p321 = scmp.lt.s32.totalorder %s320, 15
        %s322 = scalar_select %p321, %s320, 15
        %s323 = smul.addr %s322, 8
        %s324 = smul.addr %s323, 8
        %s325 = scalar_lea.vmem %s8, %s324
        %s326 = smul.u32 8, %s21
        %p327 = scmp.lt.s32.totalorder %s326, 15
        %s328 = scalar_select %p327, %s326, 15
        %s329 = smul.addr %s328, 2
        %s330 = smul.addr %s329, 8
        %s331 = scalar_lea.vmem %s0, %s330
        %s332 = smul.u32 8, %s21
        %s333 = smul.u32 8, %s21
        %p334 = scmp.lt.s32.totalorder %s333, 15
        %s335 = scalar_select %p334, %s333, 15
        %s336 = smul.addr %s335, 8
        %s337 = smul.addr %s336, 8
        %s338 = scalar_lea.vmem %s8, %s337
        %s339 = smul.u32 8, %s21
        %v340 = vld [vmem:[#allocation2] sm:$0x7f]
        %v341 = vld [vmem:[#allocation2 + $0x8] sm:$0x7f]
        %v342 = vld [vmem:[#allocation2 + $0x10] sm:$0x7f]
        %v343 = vld [vmem:[#allocation2 + $0x18] sm:$0x7f]
        %v344 = vld [vmem:[#allocation4] sm:$0xff]
        %v345 = vld [vmem:[%s5] sm:$0xff]
        %v346 = vld [vmem:[%s5 + $0x8] sm:$0xff]
        %v347 = vld [vmem:[%s5 + $0x10] sm:$0xff]
        %v348 = vld [vmem:[%s5 + $0x18] sm:$0xff]
        %v349 = vld [vmem:[%s5 + $0x20] sm:$0xff]
        %v350 = vld [vmem:[%s5 + $0x28] sm:$0xff]
        %v351 = vld [vmem:[%s5 + $0x30] sm:$0xff]
        %v352 = vld [vmem:[%s5 + $0x38] sm:$0xff]
        %v353 = vld [vmem:[%s5 + $0x40] sm:$0xff]
        %v354 = vld [vmem:[%s5 + $0x48] sm:$0xff]
        %v355 = vld [vmem:[%s5 + $0x50] sm:$0xff]
        %v356 = vld [vmem:[%s5 + $0x58] sm:$0xff]
        %v357 = vld [vmem:[%s5 + $0x60] sm:$0xff]
        %v358 = vld [vmem:[%s5 + $0x68] sm:$0xff]
        %v359 = vld [vmem:[%s5 + $0x70] sm:$0xff]
        %v360 = vld [vmem:[%s5 + $0x78] sm:$0xff]
        %v361 = vld [vmem:[%s5 + $0x80] sm:$0xff]
        %v362 = vld [vmem:[%s5 + $0x88] sm:$0xff]
        %v363 = vld [vmem:[%s5 + $0x90] sm:$0xff]
        %v364 = vld [vmem:[%s5 + $0x98] sm:$0xff]
        %v365 = vld [vmem:[%s5 + $0xa0] sm:$0xff]
        %v366 = vld [vmem:[%s5 + $0xa8] sm:$0xff]
        %v367 = vld [vmem:[%s5 + $0xb0] sm:$0xff]
        %v368 = vld [vmem:[%s5 + $0xb8] sm:$0xff]
        %v369 = vld [vmem:[%s5 + $0xc0] sm:$0xff]
        %v370 = vld [vmem:[%s5 + $0xc8] sm:$0xff]
        %v371 = vld [vmem:[%s5 + $0xd0] sm:$0xff]
        %v372 = vld [vmem:[%s5 + $0xd8] sm:$0xff]
        %v373 = vld [vmem:[%s5 + $0xe0] sm:$0xff]
        %v374 = vld [vmem:[%s5 + $0xe8] sm:$0xff]
        %v375 = vld [vmem:[%s5 + $0xf0] sm:$0xff]
        %v376 = vld [vmem:[%s5 + $0xf8] sm:$0xff]
        %v377 = vld [vmem:[%s6] sm:$0xff]
        %v378 = vld [vmem:[%s6 + $0x8] sm:$0xff]
        %v379 = vld [vmem:[%s7] sm:$0xff]
        %v380 = vld [vmem:[%s7 + $0x8] sm:$0xff]
        %v381 = vld [vmem:[%s7 + $0x10] sm:$0xff]
        %v382 = vld [vmem:[%s7 + $0x18] sm:$0xff]
        %v383 = vld [vmem:[%s7 + $0x20] sm:$0xff]
        %v384 = vld [vmem:[%s7 + $0x28] sm:$0xff]
        %v385 = vld [vmem:[%s7 + $0x30] sm:$0xff]
        %v386 = vld [vmem:[%s7 + $0x38] sm:$0xff]
        %v387 = vld [vmem:[%s7 + $0x40] sm:$0xff]
        %v388 = vld [vmem:[%s7 + $0x48] sm:$0xff]
        %v389 = vld [vmem:[%s7 + $0x50] sm:$0xff]
        %v390 = vld [vmem:[%s7 + $0x58] sm:$0xff]
        %v391 = vld [vmem:[%s7 + $0x60] sm:$0xff]
        %v392 = vld [vmem:[%s7 + $0x68] sm:$0xff]
        %v393 = vld [vmem:[%s7 + $0x70] sm:$0xff]
        %v394 = vld [vmem:[%s7 + $0x78] sm:$0xff]
        %v395 = vld [vmem:[%s7 + $0x80] sm:$0xff]
        %v396 = vld [vmem:[%s7 + $0x88] sm:$0xff]
        %v397 = vld [vmem:[%s7 + $0x90] sm:$0xff]
        %v398 = vld [vmem:[%s7 + $0x98] sm:$0xff]
        %v399 = vld [vmem:[%s7 + $0xa0] sm:$0xff]
        %v400 = vld [vmem:[%s7 + $0xa8] sm:$0xff]
        %v401 = vld [vmem:[%s7 + $0xb0] sm:$0xff]
        %v402 = vld [vmem:[%s7 + $0xb8] sm:$0xff]
        %v403 = vld [vmem:[%s7 + $0xc0] sm:$0xff]
        %v404 = vld [vmem:[%s7 + $0xc8] sm:$0xff]
        %v405 = vld [vmem:[%s7 + $0xd0] sm:$0xff]
        %v406 = vld [vmem:[%s7 + $0xd8] sm:$0xff]
        %v407 = vld [vmem:[%s7 + $0xe0] sm:$0xff]
        %v408 = vld [vmem:[%s7 + $0xe8] sm:$0xff]
        %v409 = vld [vmem:[%s7 + $0xf0] sm:$0xff]
        %v410 = vld [vmem:[%s7 + $0xf8] sm:$0xff]
        %v411 = vlaneseq
        %v412 = vshrl.u32 %v411, 7
        %v413 = vadd.s32 %v412, 8
        %v414 = vadd.s32 %v412, 16
        %v415 = vadd.s32 %v412, 24
        %v416 = vadd.s32 %v412, 32
        %v417 = vadd.s32 %v412, 40
        %v418 = vadd.s32 %v412, 48
        %v419 = vadd.s32 %v412, 56
        %v420 = vadd.s32 %v412, 64
        %v421 = vadd.s32 %v412, 72
        %v422 = vadd.s32 %v412, 80
        %v423 = vadd.s32 %v412, 88
        %v424 = vadd.s32 %v412, 96
        %v425 = vadd.s32 %v412, 104
        %v426 = vadd.s32 %v412, 112
        %v427 = vadd.s32 %v412, 120
        %vm428 = vcmp.lt.s32.totalorder %v412, 0
        %v429 = vsub.s32 0, %v412
        %v430 = vsel %vm428, %v429, %v412
        %v431 = vshrl.u32 %v430, 4
        %v432 = vand.u32 %v430, 15
        %v433 = vsub.s32 0, %v432
        %v434 = vsel %vm428, %v433, %v432
        %vm435 = vcmp.lt.s32.totalorder %v413, 0
        %v436 = vsub.s32 0, %v413
        %v437 = vsel %vm435, %v436, %v413
        %v438 = vshrl.u32 %v437, 4
        %v439 = vand.u32 %v437, 15
        %v440 = vsub.s32 0, %v439
        %v441 = vsel %vm435, %v440, %v439
        %vm442 = vcmp.lt.s32.totalorder %v414, 0
        %v443 = vsub.s32 0, %v414
        %v444 = vsel %vm442, %v443, %v414
        %v445 = vshrl.u32 %v444, 4
        %v446 = vand.u32 %v444, 15
        %v447 = vsub.s32 0, %v446
        %v448 = vsel %vm442, %v447, %v446
        %vm449 = vcmp.lt.s32.totalorder %v415, 0
        %v450 = vsub.s32 0, %v415
        %v451 = vsel %vm449, %v450, %v415
        %v452 = vshrl.u32 %v451, 4
        %v453 = vand.u32 %v451, 15
        %v454 = vsub.s32 0, %v453
        %v455 = vsel %vm449, %v454, %v453
        %vm456 = vcmp.lt.s32.totalorder %v416, 0
        %v457 = vsub.s32 0, %v416
        %v458 = vsel %vm456, %v457, %v416
        %v459 = vshrl.u32 %v458, 4
        %v460 = vand.u32 %v458, 15
        %v461 = vsub.s32 0, %v460
        %v462 = vsel %vm456, %v461, %v460
        %vm463 = vcmp.lt.s32.totalorder %v417, 0
        %v464 = vsub.s32 0, %v417
        %v465 = vsel %vm463, %v464, %v417
        %v466 = vshrl.u32 %v465, 4
        %v467 = vand.u32 %v465, 15
        %v468 = vsub.s32 0, %v467
        %v469 = vsel %vm463, %v468, %v467
        %vm470 = vcmp.lt.s32.totalorder %v418, 0
        %v471 = vsub.s32 0, %v418
        %v472 = vsel %vm470, %v471, %v418
        %v473 = vshrl.u32 %v472, 4
        %v474 = vand.u32 %v472, 15
        %v475 = vsub.s32 0, %v474
        %v476 = vsel %vm470, %v475, %v474
        %vm477 = vcmp.lt.s32.totalorder %v419, 0
        %v478 = vsub.s32 0, %v419
        %v479 = vsel %vm477, %v478, %v419
        %v480 = vshrl.u32 %v479, 4
        %v481 = vand.u32 %v479, 15
        %v482 = vsub.s32 0, %v481
        %v483 = vsel %vm477, %v482, %v481
        %vm484 = vcmp.lt.s32.totalorder %v420, 0
        %v485 = vsub.s32 0, %v420
        %v486 = vsel %vm484, %v485, %v420
        %v487 = vshrl.u32 %v486, 4
        %v488 = vand.u32 %v486, 15
        %v489 = vsub.s32 0, %v488
        %v490 = vsel %vm484, %v489, %v488
        %vm491 = vcmp.lt.s32.totalorder %v421, 0
        %v492 = vsub.s32 0, %v421
        %v493 = vsel %vm491, %v492, %v421
        %v494 = vshrl.u32 %v493, 4
        %v495 = vand.u32 %v493, 15
        %v496 = vsub.s32 0, %v495
        %v497 = vsel %vm491, %v496, %v495
        %vm498 = vcmp.lt.s32.totalorder %v422, 0
        %v499 = vsub.s32 0, %v422
        %v500 = vsel %vm498, %v499, %v422
        %v501 = vshrl.u32 %v500, 4
        %v502 = vand.u32 %v500, 15
        %v503 = vsub.s32 0, %v502
        %v504 = vsel %vm498, %v503, %v502
        %vm505 = vcmp.lt.s32.totalorder %v423, 0
        %v506 = vsub.s32 0, %v423
        %v507 = vsel %vm505, %v506, %v423
        %v508 = vshrl.u32 %v507, 4
        %v509 = vand.u32 %v507, 15
        %v510 = vsub.s32 0, %v509
        %v511 = vsel %vm505, %v510, %v509
        %vm512 = vcmp.lt.s32.totalorder %v424, 0
        %v513 = vsub.s32 0, %v424
        %v514 = vsel %vm512, %v513, %v424
        %v515 = vshrl.u32 %v514, 4
        %v516 = vand.u32 %v514, 15
        %v517 = vsub.s32 0, %v516
        %v518 = vsel %vm512, %v517, %v516
        %vm519 = vcmp.lt.s32.totalorder %v425, 0
        %v520 = vsub.s32 0, %v425
        %v521 = vsel %vm519, %v520, %v425
        %v522 = vshrl.u32 %v521, 4
        %v523 = vand.u32 %v521, 15
        %v524 = vsub.s32 0, %v523
        %v525 = vsel %vm519, %v524, %v523
        %vm526 = vcmp.lt.s32.totalorder %v426, 0
        %v527 = vsub.s32 0, %v426
        %v528 = vsel %vm526, %v527, %v426
        %v529 = vshrl.u32 %v528, 4
        %v530 = vand.u32 %v528, 15
        %v531 = vsub.s32 0, %v530
        %v532 = vsel %vm526, %v531, %v530
        %vm533 = vcmp.lt.s32.totalorder %v427, 0
        %v534 = vsub.s32 0, %v427
        %v535 = vsel %vm533, %v534, %v427
        %v536 = vshrl.u32 %v535, 4
        %v537 = vand.u32 %v535, 15
        %v538 = vsub.s32 0, %v537
        %v539 = vsel %vm533, %v538, %v537
        %vm540 = vcmp.ne.s32.totalorder %v434, 0
        %vm541 = vcmp.ne.s32.totalorder %v441, 0
        %vm542 = vcmp.ne.s32.totalorder %v448, 0
        %vm543 = vcmp.ne.s32.totalorder %v455, 0
        %vm544 = vcmp.ne.s32.totalorder %v462, 0
        %vm545 = vcmp.ne.s32.totalorder %v469, 0
        %vm546 = vcmp.ne.s32.totalorder %v476, 0
        %vm547 = vcmp.ne.s32.totalorder %v483, 0
        %vm548 = vcmp.ne.s32.totalorder %v490, 0
        %vm549 = vcmp.ne.s32.totalorder %v497, 0
        %vm550 = vcmp.ne.s32.totalorder %v504, 0
        %vm551 = vcmp.ne.s32.totalorder %v511, 0
        %vm552 = vcmp.ne.s32.totalorder %v518, 0
        %vm553 = vcmp.ne.s32.totalorder %v525, 0
        %vm554 = vcmp.ne.s32.totalorder %v532, 0
        %vm555 = vcmp.ne.s32.totalorder %v539, 0
        %vm556 = vcmp.lt.s32.totalorder %v434, 0
        %vm557 = vcmp.lt.s32.totalorder %v441, 0
        %vm558 = vcmp.lt.s32.totalorder %v448, 0
        %vm559 = vcmp.lt.s32.totalorder %v455, 0
        %vm560 = vcmp.lt.s32.totalorder %v462, 0
        %vm561 = vcmp.lt.s32.totalorder %v469, 0
        %vm562 = vcmp.lt.s32.totalorder %v476, 0
        %vm563 = vcmp.lt.s32.totalorder %v483, 0
        %vm564 = vcmp.lt.s32.totalorder %v490, 0
        %vm565 = vcmp.lt.s32.totalorder %v497, 0
        %vm566 = vcmp.lt.s32.totalorder %v504, 0
        %vm567 = vcmp.lt.s32.totalorder %v511, 0
        %vm568 = vcmp.lt.s32.totalorder %v518, 0
        %vm569 = vcmp.lt.s32.totalorder %v525, 0
        %vm570 = vcmp.lt.s32.totalorder %v532, 0
        %vm571 = vcmp.lt.s32.totalorder %v539, 0
        %vm572 = vmand %vm556, %vm540
        %vm573 = vmand %vm557, %vm541
        %vm574 = vmand %vm558, %vm542
        %vm575 = vmand %vm559, %vm543
        %vm576 = vmand %vm560, %vm544
        %vm577 = vmand %vm561, %vm545
        %vm578 = vmand %vm562, %vm546
        %vm579 = vmand %vm563, %vm547
        %vm580 = vmand %vm564, %vm548
        %vm581 = vmand %vm565, %vm549
        %vm582 = vmand %vm566, %vm550
        %vm583 = vmand %vm567, %vm551
        %vm584 = vmand %vm568, %vm552
        %vm585 = vmand %vm569, %vm553
        %vm586 = vmand %vm570, %vm554
        %vm587 = vmand %vm571, %vm555
        %v588 = vadd.s32 %v434, 16
        %v589 = vadd.s32 %v441, 16
        %v590 = vadd.s32 %v448, 16
        %v591 = vadd.s32 %v455, 16
        %v592 = vadd.s32 %v462, 16
        %v593 = vadd.s32 %v469, 16
        %v594 = vadd.s32 %v476, 16
        %v595 = vadd.s32 %v483, 16
        %v596 = vadd.s32 %v490, 16
        %v597 = vadd.s32 %v497, 16
        %v598 = vadd.s32 %v504, 16
        %v599 = vadd.s32 %v511, 16
        %v600 = vadd.s32 %v518, 16
        %v601 = vadd.s32 %v525, 16
        %v602 = vadd.s32 %v532, 16
        %v603 = vadd.s32 %v539, 16
        %v604 = vsel %vm572, %v588, %v434
        %v605 = vsel %vm573, %v589, %v441
        %v606 = vsel %vm574, %v590, %v448
        %v607 = vsel %vm575, %v591, %v455
        %v608 = vsel %vm576, %v592, %v462
        %v609 = vsel %vm577, %v593, %v469
        %v610 = vsel %vm578, %v594, %v476
        %v611 = vsel %vm579, %v595, %v483
        %v612 = vsel %vm580, %v596, %v490
        %v613 = vsel %vm581, %v597, %v497
        %v614 = vsel %vm582, %v598, %v504
        %v615 = vsel %vm583, %v599, %v511
        %v616 = vsel %vm584, %v600, %v518
        %v617 = vsel %vm585, %v601, %v525
        %v618 = vsel %vm586, %v602, %v532
        %v619 = vsel %vm587, %v603, %v539
        %vm620 = vcmp.eq.s32.totalorder %v604, 0
        %vm621 = vcmp.eq.s32.totalorder %v605, 0
        %vm622 = vcmp.eq.s32.totalorder %v606, 0
        %vm623 = vcmp.eq.s32.totalorder %v607, 0
        %vm624 = vcmp.eq.s32.totalorder %v608, 0
        %vm625 = vcmp.eq.s32.totalorder %v609, 0
        %vm626 = vcmp.eq.s32.totalorder %v610, 0
        %vm627 = vcmp.eq.s32.totalorder %v611, 0
        %vm628 = vcmp.eq.s32.totalorder %v612, 0
        %vm629 = vcmp.eq.s32.totalorder %v613, 0
        %vm630 = vcmp.eq.s32.totalorder %v614, 0
        %vm631 = vcmp.eq.s32.totalorder %v615, 0
        %vm632 = vcmp.eq.s32.totalorder %v616, 0
        %vm633 = vcmp.eq.s32.totalorder %v617, 0
        %vm634 = vcmp.eq.s32.totalorder %v618, 0
        %vm635 = vcmp.eq.s32.totalorder %v619, 0
        %vm636 = vcmp.eq.s32.totalorder %v604, 15
        %vm637 = vcmp.eq.s32.totalorder %v605, 15
        %vm638 = vcmp.eq.s32.totalorder %v606, 15
        %vm639 = vcmp.eq.s32.totalorder %v607, 15
        %vm640 = vcmp.eq.s32.totalorder %v608, 15
        %vm641 = vcmp.eq.s32.totalorder %v609, 15
        %vm642 = vcmp.eq.s32.totalorder %v610, 15
        %vm643 = vcmp.eq.s32.totalorder %v611, 15
        %vm644 = vcmp.eq.s32.totalorder %v612, 15
        %vm645 = vcmp.eq.s32.totalorder %v613, 15
        %vm646 = vcmp.eq.s32.totalorder %v614, 15
        %vm647 = vcmp.eq.s32.totalorder %v615, 15
        %vm648 = vcmp.eq.s32.totalorder %v616, 15
        %vm649 = vcmp.eq.s32.totalorder %v617, 15
        %vm650 = vcmp.eq.s32.totalorder %v618, 15
        %vm651 = vcmp.eq.s32.totalorder %v619, 15
        %v652 = vld [vmem:[%s331] sm:$0xff]
        %v653 = vld [vmem:[%s331 + $0x8] sm:$0xff]
        %v654 = vld [vmem:[%s331 + $0x10] sm:$0xff]
        %v655 = vld [vmem:[%s331 + $0x18] sm:$0xff]
        %v656 = vld [vmem:[%s331 + $0x20] sm:$0xff]
        %v657 = vld [vmem:[%s331 + $0x28] sm:$0xff]
        %v658 = vld [vmem:[%s331 + $0x30] sm:$0xff]
        %v659 = vld [vmem:[%s331 + $0x38] sm:$0xff]
        %v660 = vld [vmem:[%s331 + $0x40] sm:$0xff]
        %v661 = vld [vmem:[%s331 + $0x48] sm:$0xff]
        %v662 = vld [vmem:[%s331 + $0x50] sm:$0xff]
        %v663 = vld [vmem:[%s331 + $0x58] sm:$0xff]
        %v664 = vld [vmem:[%s331 + $0x60] sm:$0xff]
        %v665 = vld [vmem:[%s331 + $0x68] sm:$0xff]
        %v666 = vld [vmem:[%s331 + $0x70] sm:$0xff]
        %v667 = vld [vmem:[%s331 + $0x78] sm:$0xff]
        %v668 = vld [vmem:[%s1] sm:$0xff]
        %v669 = vld [vmem:[%s1 + $0x8] sm:$0xff]
        %v670 = vld [vmem:[%s1 + $0x10] sm:$0xff]
        %v671 = vld [vmem:[%s1 + $0x18] sm:$0xff]
        %v672 = vld [vmem:[%s1 + $0x20] sm:$0xff]
        %v673 = vld [vmem:[%s1 + $0x28] sm:$0xff]
        %v674 = vld [vmem:[%s1 + $0x30] sm:$0xff]
        %v675 = vld [vmem:[%s1 + $0x38] sm:$0xff]
        %v676 = vld [vmem:[%s1 + $0x40] sm:$0xff]
        %v677 = vld [vmem:[%s1 + $0x48] sm:$0xff]
        %v678 = vld [vmem:[%s1 + $0x50] sm:$0xff]
        %v679 = vld [vmem:[%s1 + $0x58] sm:$0xff]
        %v680 = vld [vmem:[%s1 + $0x60] sm:$0xff]
        %v681 = vld [vmem:[%s1 + $0x68] sm:$0xff]
        %v682 = vld [vmem:[%s1 + $0x70] sm:$0xff]
        %v683 = vld [vmem:[%s1 + $0x78] sm:$0xff]
        %v684 = vld [vmem:[%s1 + $0x80] sm:$0xff]
        %v685 = vld [vmem:[%s1 + $0x88] sm:$0xff]
        %v686 = vld [vmem:[%s1 + $0x90] sm:$0xff]
        %v687 = vld [vmem:[%s1 + $0x98] sm:$0xff]
        %v688 = vld [vmem:[%s1 + $0xa0] sm:$0xff]
        %v689 = vld [vmem:[%s1 + $0xa8] sm:$0xff]
        %v690 = vld [vmem:[%s1 + $0xb0] sm:$0xff]
        %v691 = vld [vmem:[%s1 + $0xb8] sm:$0xff]
        %v692 = vld [vmem:[%s1 + $0xc0] sm:$0xff]
        %v693 = vld [vmem:[%s1 + $0xc8] sm:$0xff]
        %v694 = vld [vmem:[%s1 + $0xd0] sm:$0xff]
        %v695 = vld [vmem:[%s1 + $0xd8] sm:$0xff]
        %v696 = vld [vmem:[%s1 + $0xe0] sm:$0xff]
        %v697 = vld [vmem:[%s1 + $0xe8] sm:$0xff]
        %v698 = vld [vmem:[%s1 + $0xf0] sm:$0xff]
        %v699 = vld [vmem:[%s1 + $0xf8] sm:$0xff]
        %v700 = vlaneseq
        %v701 = vshrl.u32 %v700, 7
        %v702 = vsub.s32 0, %v701
        %v703 = vrot.slane %v340, %v702
        %v704 = vlaneseq
        %v705 = vshrl.u32 %v704, 7
        %v706 = vsub.s32 0, %v705
        %v707 = vrot.slane %v341, %v706
        %v708 = vlaneseq
        %v709 = vshrl.u32 %v708, 7
        %v710 = vsub.s32 0, %v709
        %v711 = vrot.slane %v342, %v710
        %v712 = vlaneseq
        %v713 = vshrl.u32 %v712, 7
        %v714 = vsub.s32 0, %v713
        %v715 = vrot.slane %v343, %v714
        %vm716 = vcmask 523264
        %v718 = vsel %vm716, %v652, 0
        %v721 = vsel %vm716, %v653, 0
        %v724 = vsel %vm716, %v654, 0
        %v727 = vsel %vm716, %v655, 0
        %v730 = vsel %vm716, %v656, 0
        %v733 = vsel %vm716, %v657, 0
        %v736 = vsel %vm716, %v658, 0
        %v739 = vsel %vm716, %v659, 0
        %v742 = vsel %vm716, %v660, 0
        %v745 = vsel %vm716, %v661, 0
        %v748 = vsel %vm716, %v662, 0
        %v751 = vsel %vm716, %v663, 0
        %v754 = vsel %vm716, %v664, 0
        %v757 = vsel %vm716, %v665, 0
        %v760 = vsel %vm716, %v666, 0
        %v763 = vsel %vm716, %v667, 0
        %765 = vmatprep.subr.mxu0 0.0
        %766 = vmatpush1.msra.mxu0 0.0
        %767 = vmatprep.subr.mxu0 0.0
        %768 = vmatpush1.msra.mxu0 0.0
        %769 = vmatprep.subr.mxu0 0.0
        %770 = vmatpush1.msra.mxu0 0.0
        %771 = vmatprep.subr.mxu0 0.0
        %772 = vmatpush1.msra.mxu0 0.0
        %773 = vmatprep.subr.mxu0 0.0
        %774 = vmatpush1.msra.mxu0 0.0
        %775 = vmatprep.subr.mxu0 0.0
        %776 = vmatpush1.msra.mxu0 0.0
        %777 = vmatprep.subr.mxu0 0.0
        %778 = vmatpush1.msra.mxu0 0.0
        %779 = vmatprep.subr.mxu0 0.0
        %780 = vmatpush1.msra.mxu0 0.0
        %781 = vmatprep.subr.mxu0 %v697
        %782 = vmatpush1.msra.mxu0 %v696
        %783 = vmatprep.subr.mxu0 %v693
        %784 = vmatpush1.msra.mxu0 %v692
        %785 = vmatprep.subr.mxu0 %v689
        %786 = vmatpush1.msra.mxu0 %v688
        %787 = vmatprep.subr.mxu0 %v685
        %788 = vmatpush1.msra.mxu0 %v684
        %789 = vmatprep.subr.mxu0 %v681
        %790 = vmatpush1.msra.mxu0 %v680
        %791 = vmatprep.subr.mxu0 %v677
        %792 = vmatpush1.msra.mxu0 %v676
        %793 = vmatprep.subr.mxu0 %v673
        %794 = vmatpush1.msra.mxu0 %v672
        %795 = vmatprep.subr.mxu0 %v669
        %796 = vmatpush1.msra.mxu0 %v668
        %797 = vmatprep.subr.mxu0 0.0
        %798 = vmatpush2.msra.mxu0 0.0
        %799 = vmatprep.subr.mxu0 0.0
        %800 = vmatpush2.msra.mxu0 0.0
        %801 = vmatprep.subr.mxu0 0.0
        %802 = vmatpush2.msra.mxu0 0.0
        %803 = vmatprep.subr.mxu0 0.0
        %804 = vmatpush2.msra.mxu0 0.0
        %805 = vmatprep.subr.mxu0 0.0
        %806 = vmatpush2.msra.mxu0 0.0
        %807 = vmatprep.subr.mxu0 0.0
        %808 = vmatpush2.msra.mxu0 0.0
        %809 = vmatprep.subr.mxu0 0.0
        %810 = vmatpush2.msra.mxu0 0.0
        %811 = vmatprep.subr.mxu0 0.0
        %812 = vmatpush2.msra.mxu0 0.0
        %813 = vmatprep.subr.mxu0 0.0
        %814 = vmatpush2.msra.mxu0 0.0
        %815 = vmatprep.subr.mxu0 0.0
        %816 = vmatpush2.msra.mxu0 0.0
        %817 = vmatprep.subr.mxu0 0.0
        %818 = vmatpush2.msra.mxu0 0.0
        %819 = vmatprep.subr.mxu0 0.0
        %820 = vmatpush2.msra.mxu0 0.0
        %821 = vmatprep.subr.mxu0 0.0
        %822 = vmatpush2.msra.mxu0 0.0
        %823 = vmatprep.subr.mxu0 0.0
        %824 = vmatpush2.msra.mxu0 0.0
        %825 = vmatprep.subr.mxu0 0.0
        %826 = vmatpush2.msra.mxu0 0.0
        %827 = vmatprep.subr.mxu0 0.0
        %828 = vmatpush2.msra.mxu0 0.0
        %829 = vmatprep.mubr.f32.mxu0 0.0
        %830 = vmatmul.mubr.f32.gmra.mxu0 %v718
        %v831 = vpop.f32.mrf.mxu0
        %v832 = vadd.f32 %v703, %v831
        %v833 = vpop.f32.mrf.mxu0
        %v834 = vadd.f32 %v707, %v833
        %835 = vmatprep.mubr.f32.mxu0 0.0
        %836 = vmatmul.mubr.f32.gmra.mxu0 %v721
        %v837 = vpop.f32.mrf.mxu0
        %v838 = vadd.f32 %v703, %v837
        %v839 = vpop.f32.mrf.mxu0
        %v840 = vadd.f32 %v707, %v839
        %841 = vmatprep.mubr.f32.mxu0 0.0
        %842 = vmatmul.mubr.f32.gmra.mxu0 %v724
        %v843 = vpop.f32.mrf.mxu0
        %v844 = vadd.f32 %v703, %v843
        %v845 = vpop.f32.mrf.mxu0
        %v846 = vadd.f32 %v707, %v845
        %847 = vmatprep.mubr.f32.mxu0 0.0
        %848 = vmatmul.mubr.f32.gmra.mxu0 %v727
        %v849 = vpop.f32.mrf.mxu0
        %v850 = vadd.f32 %v703, %v849
        %v851 = vpop.f32.mrf.mxu0
        %v852 = vadd.f32 %v707, %v851
        %853 = vmatprep.mubr.f32.mxu0 0.0
        %854 = vmatmul.mubr.f32.gmra.mxu0 %v730
        %v855 = vpop.f32.mrf.mxu0
        %v856 = vadd.f32 %v703, %v855
        %v857 = vpop.f32.mrf.mxu0
        %v858 = vadd.f32 %v707, %v857
        %859 = vmatprep.mubr.f32.mxu0 0.0
        %860 = vmatmul.mubr.f32.gmra.mxu0 %v733
        %v861 = vpop.f32.mrf.mxu0
        %v862 = vadd.f32 %v703, %v861
        %v863 = vpop.f32.mrf.mxu0
        %v864 = vadd.f32 %v707, %v863
        %865 = vmatprep.mubr.f32.mxu0 0.0
        %866 = vmatmul.mubr.f32.gmra.mxu0 %v736
        %v867 = vpop.f32.mrf.mxu0
        %v868 = vadd.f32 %v703, %v867
        %v869 = vpop.f32.mrf.mxu0
        %v870 = vadd.f32 %v707, %v869
        %871 = vmatprep.mubr.f32.mxu0 0.0
        %872 = vmatmul.mubr.f32.gmra.mxu0 %v739
        %v873 = vpop.f32.mrf.mxu0
        %v874 = vadd.f32 %v703, %v873
        %v875 = vpop.f32.mrf.mxu0
        %v876 = vadd.f32 %v707, %v875
        %877 = vmatprep.mubr.f32.mxu0 0.0
        %878 = vmatmul.mubr.f32.gmra.mxu0 %v742
        %v879 = vpop.f32.mrf.mxu0
        %v880 = vadd.f32 %v703, %v879
        %v881 = vpop.f32.mrf.mxu0
        %v882 = vadd.f32 %v707, %v881
        %883 = vmatprep.mubr.f32.mxu0 0.0
        %884 = vmatmul.mubr.f32.gmra.mxu0 %v745
        %v885 = vpop.f32.mrf.mxu0
        %v886 = vadd.f32 %v703, %v885
        %v887 = vpop.f32.mrf.mxu0
        %v888 = vadd.f32 %v707, %v887
        %889 = vmatprep.mubr.f32.mxu0 0.0
        %890 = vmatmul.mubr.f32.gmra.mxu0 %v748
        %v891 = vpop.f32.mrf.mxu0
        %v892 = vadd.f32 %v703, %v891
        %v893 = vpop.f32.mrf.mxu0
        %v894 = vadd.f32 %v707, %v893
        %895 = vmatprep.mubr.f32.mxu0 0.0
        %896 = vmatmul.mubr.f32.gmra.mxu0 %v751
        %v897 = vpop.f32.mrf.mxu0
        %v898 = vadd.f32 %v703, %v897
        %v899 = vpop.f32.mrf.mxu0
        %v900 = vadd.f32 %v707, %v899
        %901 = vmatprep.mubr.f32.mxu0 0.0
        %902 = vmatmul.mubr.f32.gmra.mxu0 %v754
        %v903 = vpop.f32.mrf.mxu0
        %v904 = vadd.f32 %v703, %v903
        %v905 = vpop.f32.mrf.mxu0
        %v906 = vadd.f32 %v707, %v905
        %907 = vmatprep.mubr.f32.mxu0 0.0
        %908 = vmatmul.mubr.f32.gmra.mxu0 %v757
        %v909 = vpop.f32.mrf.mxu0
        %v910 = vadd.f32 %v703, %v909
        %v911 = vpop.f32.mrf.mxu0
        %v912 = vadd.f32 %v707, %v911
        %913 = vmatprep.mubr.f32.mxu0 0.0
        %914 = vmatmul.mubr.f32.gmra.mxu0 %v760
        %v915 = vpop.f32.mrf.mxu0
        %v916 = vadd.f32 %v703, %v915
        %v917 = vpop.f32.mrf.mxu0
        %v918 = vadd.f32 %v707, %v917
        %919 = vmatprep.mubr.f32.mxu0 0.0
        %920 = vmatmul.mubr.f32.gmra.mxu0 %v763
        %v921 = vpop.f32.mrf.mxu0
        %v922 = vadd.f32 %v703, %v921
        %v923 = vpop.f32.mrf.mxu0
        %v924 = vadd.f32 %v707, %v923
        %925 = vdwg.mxu0
        %926 = vmatprep.subr.mxu0 0.0
        %927 = vmatpush1.msra.mxu0 0.0
        %928 = vmatprep.subr.mxu0 0.0
        %929 = vmatpush1.msra.mxu0 0.0
        %930 = vmatprep.subr.mxu0 0.0
        %931 = vmatpush1.msra.mxu0 0.0
        %932 = vmatprep.subr.mxu0 0.0
        %933 = vmatpush1.msra.mxu0 0.0
        %934 = vmatprep.subr.mxu0 0.0
        %935 = vmatpush1.msra.mxu0 0.0
        %936 = vmatprep.subr.mxu0 0.0
        %937 = vmatpush1.msra.mxu0 0.0
        %938 = vmatprep.subr.mxu0 0.0
        %939 = vmatpush1.msra.mxu0 0.0
        %940 = vmatprep.subr.mxu0 0.0
        %941 = vmatpush1.msra.mxu0 0.0
        %942 = vmatprep.subr.mxu0 %v699
        %943 = vmatpush1.msra.mxu0 %v698
        %944 = vmatprep.subr.mxu0 %v695
        %945 = vmatpush1.msra.mxu0 %v694
        %946 = vmatprep.subr.mxu0 %v691
        %947 = vmatpush1.msra.mxu0 %v690
        %948 = vmatprep.subr.mxu0 %v687
        %949 = vmatpush1.msra.mxu0 %v686
        %950 = vmatprep.subr.mxu0 %v683
        %951 = vmatpush1.msra.mxu0 %v682
        %952 = vmatprep.subr.mxu0 %v679
        %953 = vmatpush1.msra.mxu0 %v678
        %954 = vmatprep.subr.mxu0 %v675
        %955 = vmatpush1.msra.mxu0 %v674
        %956 = vmatprep.subr.mxu0 %v671
        %957 = vmatpush1.msra.mxu0 %v670
        %958 = vmatprep.subr.mxu0 0.0
        %959 = vmatpush2.msra.mxu0 0.0
        %960 = vmatprep.subr.mxu0 0.0
        %961 = vmatpush2.msra.mxu0 0.0
        %962 = vmatprep.subr.mxu0 0.0
        %963 = vmatpush2.msra.mxu0 0.0
        %964 = vmatprep.subr.mxu0 0.0
        %965 = vmatpush2.msra.mxu0 0.0
        %966 = vmatprep.subr.mxu0 0.0
        %967 = vmatpush2.msra.mxu0 0.0
        %968 = vmatprep.subr.mxu0 0.0
        %969 = vmatpush2.msra.mxu0 0.0
        %970 = vmatprep.subr.mxu0 0.0
        %971 = vmatpush2.msra.mxu0 0.0
        %972 = vmatprep.subr.mxu0 0.0
        %973 = vmatpush2.msra.mxu0 0.0
        %974 = vmatprep.subr.mxu0 0.0
        %975 = vmatpush2.msra.mxu0 0.0
        %976 = vmatprep.subr.mxu0 0.0
        %977 = vmatpush2.msra.mxu0 0.0
        %978 = vmatprep.subr.mxu0 0.0
        %979 = vmatpush2.msra.mxu0 0.0
        %980 = vmatprep.subr.mxu0 0.0
        %981 = vmatpush2.msra.mxu0 0.0
        %982 = vmatprep.subr.mxu0 0.0
        %983 = vmatpush2.msra.mxu0 0.0
        %984 = vmatprep.subr.mxu0 0.0
        %985 = vmatpush2.msra.mxu0 0.0
        %986 = vmatprep.subr.mxu0 0.0
        %987 = vmatpush2.msra.mxu0 0.0
        %988 = vmatprep.subr.mxu0 0.0
        %989 = vmatpush2.msra.mxu0 0.0
        %990 = vmatprep.mubr.f32.mxu0 0.0
        %991 = vmatmul.mubr.f32.gmra.mxu0 %v718
        %v992 = vpop.f32.mrf.mxu0
        %v993 = vadd.f32 %v711, %v992
        %v994 = vpop.f32.mrf.mxu0
        %v995 = vadd.f32 %v715, %v994
        %996 = vmatprep.mubr.f32.mxu0 0.0
        %997 = vmatmul.mubr.f32.gmra.mxu0 %v721
        %v998 = vpop.f32.mrf.mxu0
        %v999 = vadd.f32 %v711, %v998
        %v1000 = vpop.f32.mrf.mxu0
        %v1001 = vadd.f32 %v715, %v1000
        %1002 = vmatprep.mubr.f32.mxu0 0.0
        %1003 = vmatmul.mubr.f32.gmra.mxu0 %v724
        %v1004 = vpop.f32.mrf.mxu0
        %v1005 = vadd.f32 %v711, %v1004
        %v1006 = vpop.f32.mrf.mxu0
        %v1007 = vadd.f32 %v715, %v1006
        %1008 = vmatprep.mubr.f32.mxu0 0.0
        %1009 = vmatmul.mubr.f32.gmra.mxu0 %v727
        %v1010 = vpop.f32.mrf.mxu0
        %v1011 = vadd.f32 %v711, %v1010
        %v1012 = vpop.f32.mrf.mxu0
        %v1013 = vadd.f32 %v715, %v1012
        %1014 = vmatprep.mubr.f32.mxu0 0.0
        %1015 = vmatmul.mubr.f32.gmra.mxu0 %v730
        %v1016 = vpop.f32.mrf.mxu0
        %v1017 = vadd.f32 %v711, %v1016
        %v1018 = vpop.f32.mrf.mxu0
        %v1019 = vadd.f32 %v715, %v1018
        %1020 = vmatprep.mubr.f32.mxu0 0.0
        %1021 = vmatmul.mubr.f32.gmra.mxu0 %v733
        %v1022 = vpop.f32.mrf.mxu0
        %v1023 = vadd.f32 %v711, %v1022
        %v1024 = vpop.f32.mrf.mxu0
        %v1025 = vadd.f32 %v715, %v1024
        %1026 = vmatprep.mubr.f32.mxu0 0.0
        %1027 = vmatmul.mubr.f32.gmra.mxu0 %v736
        %v1028 = vpop.f32.mrf.mxu0
        %v1029 = vadd.f32 %v711, %v1028
        %v1030 = vpop.f32.mrf.mxu0
        %v1031 = vadd.f32 %v715, %v1030
        %1032 = vmatprep.mubr.f32.mxu0 0.0
        %1033 = vmatmul.mubr.f32.gmra.mxu0 %v739
        %v1034 = vpop.f32.mrf.mxu0
        %v1035 = vadd.f32 %v711, %v1034
        %v1036 = vpop.f32.mrf.mxu0
        %v1037 = vadd.f32 %v715, %v1036
        %1038 = vmatprep.mubr.f32.mxu0 0.0
        %1039 = vmatmul.mubr.f32.gmra.mxu0 %v742
        %v1040 = vpop.f32.mrf.mxu0
        %v1041 = vadd.f32 %v711, %v1040
        %v1042 = vpop.f32.mrf.mxu0
        %v1043 = vadd.f32 %v715, %v1042
        %1044 = vmatprep.mubr.f32.mxu0 0.0
        %1045 = vmatmul.mubr.f32.gmra.mxu0 %v745
        %v1046 = vpop.f32.mrf.mxu0
        %v1047 = vadd.f32 %v711, %v1046
        %v1048 = vpop.f32.mrf.mxu0
        %v1049 = vadd.f32 %v715, %v1048
        %1050 = vmatprep.mubr.f32.mxu0 0.0
        %1051 = vmatmul.mubr.f32.gmra.mxu0 %v748
        %v1052 = vpop.f32.mrf.mxu0
        %v1053 = vadd.f32 %v711, %v1052
        %v1054 = vpop.f32.mrf.mxu0
        %v1055 = vadd.f32 %v715, %v1054
        %1056 = vmatprep.mubr.f32.mxu0 0.0
        %1057 = vmatmul.mubr.f32.gmra.mxu0 %v751
        %v1058 = vpop.f32.mrf.mxu0
        %v1059 = vadd.f32 %v711, %v1058
        %v1060 = vpop.f32.mrf.mxu0
        %v1061 = vadd.f32 %v715, %v1060
        %1062 = vmatprep.mubr.f32.mxu0 0.0
        %1063 = vmatmul.mubr.f32.gmra.mxu0 %v754
        %v1064 = vpop.f32.mrf.mxu0
        %v1065 = vadd.f32 %v711, %v1064
        %v1066 = vpop.f32.mrf.mxu0
        %v1067 = vadd.f32 %v715, %v1066
        %1068 = vmatprep.mubr.f32.mxu0 0.0
        %1069 = vmatmul.mubr.f32.gmra.mxu0 %v757
        %v1070 = vpop.f32.mrf.mxu0
        %v1071 = vadd.f32 %v711, %v1070
        %v1072 = vpop.f32.mrf.mxu0
        %v1073 = vadd.f32 %v715, %v1072
        %1074 = vmatprep.mubr.f32.mxu0 0.0
        %1075 = vmatmul.mubr.f32.gmra.mxu0 %v760
        %v1076 = vpop.f32.mrf.mxu0
        %v1077 = vadd.f32 %v711, %v1076
        %v1078 = vpop.f32.mrf.mxu0
        %v1079 = vadd.f32 %v715, %v1078
        %1080 = vmatprep.mubr.f32.mxu0 0.0
        %1081 = vmatmul.mubr.f32.gmra.mxu0 %v763
        %v1082 = vpop.f32.mrf.mxu0
        %v1083 = vadd.f32 %v711, %v1082
        %v1084 = vpop.f32.mrf.mxu0
        %v1085 = vadd.f32 %v715, %v1084
        %1086 = vdwg.mxu0
        %1087 = vmatprep.subr.mxu0 %v924
        %1088 = vmatpush1.msra.mxu0 %v922
        %1089 = vmatprep.subr.mxu0 %v918
        %1090 = vmatpush1.msra.mxu0 %v916
        %1091 = vmatprep.subr.mxu0 %v912
        %1092 = vmatpush1.msra.mxu0 %v910
        %1093 = vmatprep.subr.mxu0 %v906
        %1094 = vmatpush1.msra.mxu0 %v904
        %1095 = vmatprep.subr.mxu0 %v900
        %1096 = vmatpush1.msra.mxu0 %v898
        %1097 = vmatprep.subr.mxu0 %v894
        %1098 = vmatpush1.msra.mxu0 %v892
        %1099 = vmatprep.subr.mxu0 %v888
        %1100 = vmatpush1.msra.mxu0 %v886
        %1101 = vmatprep.subr.mxu0 %v882
        %1102 = vmatpush1.msra.mxu0 %v880
        %1103 = vmatprep.subr.mxu0 %v876
        %1104 = vmatpush1.msra.mxu0 %v874
        %1105 = vmatprep.subr.mxu0 %v870
        %1106 = vmatpush1.msra.mxu0 %v868
        %1107 = vmatprep.subr.mxu0 %v864
        %1108 = vmatpush1.msra.mxu0 %v862
        %1109 = vmatprep.subr.mxu0 %v858
        %1110 = vmatpush1.msra.mxu0 %v856
        %1111 = vmatprep.subr.mxu0 %v852
        %1112 = vmatpush1.msra.mxu0 %v850
        %1113 = vmatprep.subr.mxu0 %v846
        %1114 = vmatpush1.msra.mxu0 %v844
        %1115 = vmatprep.subr.mxu0 %v840
        %1116 = vmatpush1.msra.mxu0 %v838
        %1117 = vmatprep.subr.mxu0 %v834
        %1118 = vmatpush1.msra.mxu0 %v832
        %1119 = vmatprep.subr.mxu0 %v1085
        %1120 = vmatpush2.msra.mxu0 %v1083
        %1121 = vmatprep.subr.mxu0 %v1079
        %1122 = vmatpush2.msra.mxu0 %v1077
        %1123 = vmatprep.subr.mxu0 %v1073
        %1124 = vmatpush2.msra.mxu0 %v1071
        %1125 = vmatprep.subr.mxu0 %v1067
        %1126 = vmatpush2.msra.mxu0 %v1065
        %1127 = vmatprep.subr.mxu0 %v1061
        %1128 = vmatpush2.msra.mxu0 %v1059
        %1129 = vmatprep.subr.mxu0 %v1055
        %1130 = vmatpush2.msra.mxu0 %v1053
        %1131 = vmatprep.subr.mxu0 %v1049
        %1132 = vmatpush2.msra.mxu0 %v1047
        %1133 = vmatprep.subr.mxu0 %v1043
        %1134 = vmatpush2.msra.mxu0 %v1041
        %1135 = vmatprep.subr.mxu0 %v1037
        %1136 = vmatpush2.msra.mxu0 %v1035
        %1137 = vmatprep.subr.mxu0 %v1031
        %1138 = vmatpush2.msra.mxu0 %v1029
        %1139 = vmatprep.subr.mxu0 %v1025
        %1140 = vmatpush2.msra.mxu0 %v1023
        %1141 = vmatprep.subr.mxu0 %v1019
        %1142 = vmatpush2.msra.mxu0 %v1017
        %1143 = vmatprep.subr.mxu0 %v1013
        %1144 = vmatpush2.msra.mxu0 %v1011
        %1145 = vmatprep.subr.mxu0 %v1007
        %1146 = vmatpush2.msra.mxu0 %v1005
        %1147 = vmatprep.subr.mxu0 %v1001
        %1148 = vmatpush2.msra.mxu0 %v999
        %1149 = vmatprep.subr.mxu0 %v995
        %1150 = vmatpush2.msra.mxu0 %v993
        %1151 = vmatprep.mubr.f32.mxu0 %v378
        %1152 = vmatmul.mubr.f32.gmra.mxu0 %v377
        %v1153 = vpop.f32.mrf.mxu0
        %v1154 = vadd.f32 0.0, %v1153
        %v1155 = vpop.f32.mrf.mxu0
        %v1156 = vadd.f32 0.0, %v1155
        %1157 = vdwg.mxu0
        %1158 = vmatprep.subr.mxu0 0.0
        %1159 = vmatpush1.msra.mxu0 %v360
        %1160 = vmatprep.subr.mxu0 0.0
        %1161 = vmatpush1.msra.mxu0 %v359
        %1162 = vmatprep.subr.mxu0 0.0
        %1163 = vmatpush1.msra.mxu0 %v358
        %1164 = vmatprep.subr.mxu0 0.0
        %1165 = vmatpush1.msra.mxu0 %v357
        %1166 = vmatprep.subr.mxu0 0.0
        %1167 = vmatpush1.msra.mxu0 %v356
        %1168 = vmatprep.subr.mxu0 0.0
        %1169 = vmatpush1.msra.mxu0 %v355
        %1170 = vmatprep.subr.mxu0 0.0
        %1171 = vmatpush1.msra.mxu0 %v354
        %1172 = vmatprep.subr.mxu0 0.0
        %1173 = vmatpush1.msra.mxu0 %v353
        %1174 = vmatprep.subr.mxu0 0.0
        %1175 = vmatpush1.msra.mxu0 %v352
        %1176 = vmatprep.subr.mxu0 0.0
        %1177 = vmatpush1.msra.mxu0 %v351
        %1178 = vmatprep.subr.mxu0 0.0
        %1179 = vmatpush1.msra.mxu0 %v350
        %1180 = vmatprep.subr.mxu0 0.0
        %1181 = vmatpush1.msra.mxu0 %v349
        %1182 = vmatprep.subr.mxu0 0.0
        %1183 = vmatpush1.msra.mxu0 %v348
        %1184 = vmatprep.subr.mxu0 0.0
        %1185 = vmatpush1.msra.mxu0 %v347
        %1186 = vmatprep.subr.mxu0 0.0
        %1187 = vmatpush1.msra.mxu0 %v346
        %1188 = vmatprep.subr.mxu0 0.0
        %1189 = vmatpush1.msra.mxu0 %v345
        %1190 = vmatprep.subr.mxu0 0.0
        %1191 = vmatpush2.msra.mxu0 %v376
        %1192 = vmatprep.subr.mxu0 0.0
        %1193 = vmatpush2.msra.mxu0 %v375
        %1194 = vmatprep.subr.mxu0 0.0
        %1195 = vmatpush2.msra.mxu0 %v374
        %1196 = vmatprep.subr.mxu0 0.0
        %1197 = vmatpush2.msra.mxu0 %v373
        %1198 = vmatprep.subr.mxu0 0.0
        %1199 = vmatpush2.msra.mxu0 %v372
        %1200 = vmatprep.subr.mxu0 0.0
        %1201 = vmatpush2.msra.mxu0 %v371
        %1202 = vmatprep.subr.mxu0 0.0
        %1203 = vmatpush2.msra.mxu0 %v370
        %1204 = vmatprep.subr.mxu0 0.0
        %1205 = vmatpush2.msra.mxu0 %v369
        %1206 = vmatprep.subr.mxu0 0.0
        %1207 = vmatpush2.msra.mxu0 %v368
        %1208 = vmatprep.subr.mxu0 0.0
        %1209 = vmatpush2.msra.mxu0 %v367
        %1210 = vmatprep.subr.mxu0 0.0
        %1211 = vmatpush2.msra.mxu0 %v366
        %1212 = vmatprep.subr.mxu0 0.0
        %1213 = vmatpush2.msra.mxu0 %v365
        %1214 = vmatprep.subr.mxu0 0.0
        %1215 = vmatpush2.msra.mxu0 %v364
        %1216 = vmatprep.subr.mxu0 0.0
        %1217 = vmatpush2.msra.mxu0 %v363
        %1218 = vmatprep.subr.mxu0 0.0
        %1219 = vmatpush2.msra.mxu0 %v362
        %1220 = vmatprep.subr.mxu0 0.0
        %1221 = vmatpush2.msra.mxu0 %v361
        %1222 = vmatprep.mubr.f32.mxu0 %v1156
        %1223 = vmatmul.mubr.f32.gmra.mxu0 %v1154
        %v1224 = vpop.f32.mrf.mxu0
        %v1225 = vadd.f32 0.0, %v1224
        %v1226 = vpop.f32.mrf.mxu0
        %1227 = vdwg.mxu0
        %v1228 = vmul.f32 %v1225, 0.00048828125
        %v1230 = vcombine.high %v344, %v344
        %vm1231 = vcmask 31744
        %v1233 = vsel %vm1231, %v1228, 0
        %vm1235 = vcmask 1043456
        %v1236 = vsel %vm1235, %v344, 0
        %v1238 = vsel %vm1235, %v1230, 0
        %1240 = vmatprep.subr.mxu0 0.0
        %1241 = vmatpush1.msra.mxu0 0.0
        %1242 = vmatprep.subr.mxu0 0.0
        %1243 = vmatpush1.msra.mxu0 0.0
        %1244 = vmatprep.subr.mxu0 0.0
        %1245 = vmatpush1.msra.mxu0 0.0
        %1246 = vmatprep.subr.mxu0 0.0
        %1247 = vmatpush1.msra.mxu0 0.0
        %1248 = vmatprep.subr.mxu0 0.0
        %1249 = vmatpush1.msra.mxu0 0.0
        %1250 = vmatprep.subr.mxu0 0.0
        %1251 = vmatpush1.msra.mxu0 0.0
        %1252 = vmatprep.subr.mxu0 0.0
        %1253 = vmatpush1.msra.mxu0 0.0
        %1254 = vmatprep.subr.mxu0 0.0
        %1255 = vmatpush1.msra.mxu0 0.0
        %1256 = vmatprep.subr.mxu0 0.0
        %1257 = vmatpush1.msra.mxu0 0.0
        %1258 = vmatprep.subr.mxu0 0.0
        %1259 = vmatpush1.msra.mxu0 0.0
        %1260 = vmatprep.subr.mxu0 0.0
        %1261 = vmatpush1.msra.mxu0 0.0
        %1262 = vmatprep.subr.mxu0 0.0
        %1263 = vmatpush1.msra.mxu0 0.0
        %1264 = vmatprep.subr.mxu0 0.0
        %1265 = vmatpush1.msra.mxu0 0.0
        %1266 = vmatprep.subr.mxu0 0.0
        %1267 = vmatpush1.msra.mxu0 0.0
        %1268 = vmatprep.subr.mxu0 0.0
        %1269 = vmatpush1.msra.mxu0 0.0
        %1270 = vmatprep.subr.mxu0 %v1238
        %1271 = vmatpush1.msra.mxu0 %v1236
        %1272 = vmatprep.subr.mxu0 0.0
        %1273 = vmatpush2.msra.mxu0 0.0
        %1274 = vmatprep.subr.mxu0 0.0
        %1275 = vmatpush2.msra.mxu0 0.0
        %1276 = vmatprep.subr.mxu0 0.0
        %1277 = vmatpush2.msra.mxu0 0.0
        %1278 = vmatprep.subr.mxu0 0.0
        %1279 = vmatpush2.msra.mxu0 0.0
        %1280 = vmatprep.subr.mxu0 0.0
        %1281 = vmatpush2.msra.mxu0 0.0
        %1282 = vmatprep.subr.mxu0 0.0
        %1283 = vmatpush2.msra.mxu0 0.0
        %1284 = vmatprep.subr.mxu0 0.0
        %1285 = vmatpush2.msra.mxu0 0.0
        %1286 = vmatprep.subr.mxu0 0.0
        %1287 = vmatpush2.msra.mxu0 0.0
        %1288 = vmatprep.subr.mxu0 0.0
        %1289 = vmatpush2.msra.mxu0 0.0
        %1290 = vmatprep.subr.mxu0 0.0
        %1291 = vmatpush2.msra.mxu0 0.0
        %1292 = vmatprep.subr.mxu0 0.0
        %1293 = vmatpush2.msra.mxu0 0.0
        %1294 = vmatprep.subr.mxu0 0.0
        %1295 = vmatpush2.msra.mxu0 0.0
        %1296 = vmatprep.subr.mxu0 0.0
        %1297 = vmatpush2.msra.mxu0 0.0
        %1298 = vmatprep.subr.mxu0 0.0
        %1299 = vmatpush2.msra.mxu0 0.0
        %1300 = vmatprep.subr.mxu0 0.0
        %1301 = vmatpush2.msra.mxu0 0.0
        %1302 = vmatprep.subr.mxu0 0.0
        %1303 = vmatpush2.msra.mxu0 0.0
        %1304 = vmatprep.mubr.f32.mxu0 0.0
        %1305 = vmatmul.mubr.f32.gmra.mxu0 %v1233
        %v1306 = vpop.f32.mrf.mxu0
        %v1307 = vadd.f32 0.0, %v1306
        %v1308 = vpop.f32.mrf.mxu0
        %v1309 = vadd.f32 0.0, %v1308
        %1310 = vdwg.mxu0
        %vm1311 = vcmask 64512
        %v1313 = vsel %vm1311, %v379, 0
        %v1316 = vsel %vm1311, %v380, 0
        %v1319 = vsel %vm1311, %v381, 0
        %v1322 = vsel %vm1311, %v382, 0
        %v1325 = vsel %vm1311, %v383, 0
        %v1328 = vsel %vm1311, %v384, 0
        %v1331 = vsel %vm1311, %v385, 0
        %v1334 = vsel %vm1311, %v386, 0
        %v1337 = vsel %vm1311, %v387, 0
        %v1340 = vsel %vm1311, %v388, 0
        %v1343 = vsel %vm1311, %v389, 0
        %v1346 = vsel %vm1311, %v390, 0
        %v1349 = vsel %vm1311, %v391, 0
        %v1352 = vsel %vm1311, %v392, 0
        %v1355 = vsel %vm1311, %v393, 0
        %v1358 = vsel %vm1311, %v394, 0
        %v1361 = vsel %vm1311, %v395, 0
        %v1364 = vsel %vm1311, %v396, 0
        %v1367 = vsel %vm1311, %v397, 0
        %v1370 = vsel %vm1311, %v398, 0
        %v1373 = vsel %vm1311, %v399, 0
        %v1376 = vsel %vm1311, %v400, 0
        %v1379 = vsel %vm1311, %v401, 0
        %v1382 = vsel %vm1311, %v402, 0
        %v1385 = vsel %vm1311, %v403, 0
        %v1388 = vsel %vm1311, %v404, 0
        %v1391 = vsel %vm1311, %v405, 0
        %v1394 = vsel %vm1311, %v406, 0
        %v1397 = vsel %vm1311, %v407, 0
        %v1400 = vsel %vm1311, %v408, 0
        %v1403 = vsel %vm1311, %v409, 0
        %v1406 = vsel %vm1311, %v410, 0
        %1408 = vmatprep.subr.mxu0 0.0
        %1409 = vmatpush1.msra.mxu0 0.0
        %1410 = vmatprep.subr.mxu0 0.0
        %1411 = vmatpush1.msra.mxu0 0.0
        %1412 = vmatprep.subr.mxu0 0.0
        %1413 = vmatpush1.msra.mxu0 0.0
        %1414 = vmatprep.subr.mxu0 0.0
        %1415 = vmatpush1.msra.mxu0 0.0
        %1416 = vmatprep.subr.mxu0 0.0
        %1417 = vmatpush1.msra.mxu0 0.0
        %1418 = vmatprep.subr.mxu0 0.0
        %1419 = vmatpush1.msra.mxu0 0.0
        %1420 = vmatprep.subr.mxu0 0.0
        %1421 = vmatpush1.msra.mxu0 0.0
        %1422 = vmatprep.subr.mxu0 0.0
        %1423 = vmatpush1.msra.mxu0 0.0
        %1424 = vmatprep.subr.mxu0 0.0
        %1425 = vmatpush1.msra.mxu0 0.0
        %1426 = vmatprep.subr.mxu0 0.0
        %1427 = vmatpush1.msra.mxu0 0.0
        %1428 = vmatprep.subr.mxu0 0.0
        %1429 = vmatpush1.msra.mxu0 0.0
        %1430 = vmatprep.subr.mxu0 0.0
        %1431 = vmatpush1.msra.mxu0 0.0
        %1432 = vmatprep.subr.mxu0 0.0
        %1433 = vmatpush1.msra.mxu0 0.0
        %1434 = vmatprep.subr.mxu0 0.0
        %1435 = vmatpush1.msra.mxu0 0.0
        %1436 = vmatprep.subr.mxu0 0.0
        %1437 = vmatpush1.msra.mxu0 0.0
        %1438 = vmatprep.subr.mxu0 %v1309
        %1439 = vmatpush1.msra.mxu0 %v1307
        %1440 = vmatprep.subr.mxu0 0.0
        %1441 = vmatpush2.msra.mxu0 0.0
        %1442 = vmatprep.subr.mxu0 0.0
        %1443 = vmatpush2.msra.mxu0 0.0
        %1444 = vmatprep.subr.mxu0 0.0
        %1445 = vmatpush2.msra.mxu0 0.0
        %1446 = vmatprep.subr.mxu0 0.0
        %1447 = vmatpush2.msra.mxu0 0.0
        %1448 = vmatprep.subr.mxu0 0.0
        %1449 = vmatpush2.msra.mxu0 0.0
        %1450 = vmatprep.subr.mxu0 0.0
        %1451 = vmatpush2.msra.mxu0 0.0
        %1452 = vmatprep.subr.mxu0 0.0
        %1453 = vmatpush2.msra.mxu0 0.0
        %1454 = vmatprep.subr.mxu0 0.0
        %1455 = vmatpush2.msra.mxu0 0.0
        %1456 = vmatprep.subr.mxu0 0.0
        %1457 = vmatpush2.msra.mxu0 0.0
        %1458 = vmatprep.subr.mxu0 0.0
        %1459 = vmatpush2.msra.mxu0 0.0
        %1460 = vmatprep.subr.mxu0 0.0
        %1461 = vmatpush2.msra.mxu0 0.0
        %1462 = vmatprep.subr.mxu0 0.0
        %1463 = vmatpush2.msra.mxu0 0.0
        %1464 = vmatprep.subr.mxu0 0.0
        %1465 = vmatpush2.msra.mxu0 0.0
        %1466 = vmatprep.subr.mxu0 0.0
        %1467 = vmatpush2.msra.mxu0 0.0
        %1468 = vmatprep.subr.mxu0 0.0
        %1469 = vmatpush2.msra.mxu0 0.0
        %1470 = vmatprep.subr.mxu0 0.0
        %1471 = vmatpush2.msra.mxu0 0.0
        %1472 = vmatprep.mubr.f32.mxu0 0.0
        %1473 = vmatmul.mubr.f32.gmra.mxu0 %v1313
        %v1474 = vpop.f32.mrf.mxu0
        %v1475 = vadd.f32 0.0, %v1474
        %v1476 = vpop.f32.mrf.mxu0
        %v1477 = vadd.f32 0.0, %v1476
        %1478 = vmatprep.mubr.f32.mxu0 0.0
        %1479 = vmatmul.mubr.f32.gmra.mxu0 %v1316
        %v1480 = vpop.f32.mrf.mxu0
        %v1481 = vadd.f32 0.0, %v1480
        %v1482 = vpop.f32.mrf.mxu0
        %v1483 = vadd.f32 0.0, %v1482
        %1484 = vmatprep.mubr.f32.mxu0 0.0
        %1485 = vmatmul.mubr.f32.gmra.mxu0 %v1319
        %v1486 = vpop.f32.mrf.mxu0
        %v1487 = vadd.f32 0.0, %v1486
        %v1488 = vpop.f32.mrf.mxu0
        %v1489 = vadd.f32 0.0, %v1488
        %1490 = vmatprep.mubr.f32.mxu0 0.0
        %1491 = vmatmul.mubr.f32.gmra.mxu0 %v1322
        %v1492 = vpop.f32.mrf.mxu0
        %v1493 = vadd.f32 0.0, %v1492
        %v1494 = vpop.f32.mrf.mxu0
        %v1495 = vadd.f32 0.0, %v1494
        %1496 = vmatprep.mubr.f32.mxu0 0.0
        %1497 = vmatmul.mubr.f32.gmra.mxu0 %v1325
        %v1498 = vpop.f32.mrf.mxu0
        %v1499 = vadd.f32 0.0, %v1498
        %v1500 = vpop.f32.mrf.mxu0
        %v1501 = vadd.f32 0.0, %v1500
        %1502 = vmatprep.mubr.f32.mxu0 0.0
        %1503 = vmatmul.mubr.f32.gmra.mxu0 %v1328
        %v1504 = vpop.f32.mrf.mxu0
        %v1505 = vadd.f32 0.0, %v1504
        %v1506 = vpop.f32.mrf.mxu0
        %v1507 = vadd.f32 0.0, %v1506
        %1508 = vmatprep.mubr.f32.mxu0 0.0
        %1509 = vmatmul.mubr.f32.gmra.mxu0 %v1331
        %v1510 = vpop.f32.mrf.mxu0
        %v1511 = vadd.f32 0.0, %v1510
        %v1512 = vpop.f32.mrf.mxu0
        %v1513 = vadd.f32 0.0, %v1512
        %1514 = vmatprep.mubr.f32.mxu0 0.0
        %1515 = vmatmul.mubr.f32.gmra.mxu0 %v1334
        %v1516 = vpop.f32.mrf.mxu0
        %v1517 = vadd.f32 0.0, %v1516
        %v1518 = vpop.f32.mrf.mxu0
        %v1519 = vadd.f32 0.0, %v1518
        %1520 = vmatprep.mubr.f32.mxu0 0.0
        %1521 = vmatmul.mubr.f32.gmra.mxu0 %v1337
        %v1522 = vpop.f32.mrf.mxu0
        %v1523 = vadd.f32 0.0, %v1522
        %v1524 = vpop.f32.mrf.mxu0
        %v1525 = vadd.f32 0.0, %v1524
        %1526 = vmatprep.mubr.f32.mxu0 0.0
        %1527 = vmatmul.mubr.f32.gmra.mxu0 %v1340
        %v1528 = vpop.f32.mrf.mxu0
        %v1529 = vadd.f32 0.0, %v1528
        %v1530 = vpop.f32.mrf.mxu0
        %v1531 = vadd.f32 0.0, %v1530
        %1532 = vmatprep.mubr.f32.mxu0 0.0
        %1533 = vmatmul.mubr.f32.gmra.mxu0 %v1343
        %v1534 = vpop.f32.mrf.mxu0
        %v1535 = vadd.f32 0.0, %v1534
        %v1536 = vpop.f32.mrf.mxu0
        %v1537 = vadd.f32 0.0, %v1536
        %1538 = vmatprep.mubr.f32.mxu0 0.0
        %1539 = vmatmul.mubr.f32.gmra.mxu0 %v1346
        %v1540 = vpop.f32.mrf.mxu0
        %v1541 = vadd.f32 0.0, %v1540
        %v1542 = vpop.f32.mrf.mxu0
        %v1543 = vadd.f32 0.0, %v1542
        %1544 = vmatprep.mubr.f32.mxu0 0.0
        %1545 = vmatmul.mubr.f32.gmra.mxu0 %v1349
        %v1546 = vpop.f32.mrf.mxu0
        %v1547 = vadd.f32 0.0, %v1546
        %v1548 = vpop.f32.mrf.mxu0
        %v1549 = vadd.f32 0.0, %v1548
        %1550 = vmatprep.mubr.f32.mxu0 0.0
        %1551 = vmatmul.mubr.f32.gmra.mxu0 %v1352
        %v1552 = vpop.f32.mrf.mxu0
        %v1553 = vadd.f32 0.0, %v1552
        %v1554 = vpop.f32.mrf.mxu0
        %v1555 = vadd.f32 0.0, %v1554
        %1556 = vmatprep.mubr.f32.mxu0 0.0
        %1557 = vmatmul.mubr.f32.gmra.mxu0 %v1355
        %v1558 = vpop.f32.mrf.mxu0
        %v1559 = vadd.f32 0.0, %v1558
        %v1560 = vpop.f32.mrf.mxu0
        %v1561 = vadd.f32 0.0, %v1560
        %1562 = vmatprep.mubr.f32.mxu0 0.0
        %1563 = vmatmul.mubr.f32.gmra.mxu0 %v1358
        %v1564 = vpop.f32.mrf.mxu0
        %v1565 = vadd.f32 0.0, %v1564
        %v1566 = vpop.f32.mrf.mxu0
        %v1567 = vadd.f32 0.0, %v1566
        %1568 = vmatprep.mubr.f32.mxu0 0.0
        %1569 = vmatmul.mubr.f32.gmra.mxu0 %v1361
        %v1570 = vpop.f32.mrf.mxu0
        %v1571 = vadd.f32 0.0, %v1570
        %v1572 = vpop.f32.mrf.mxu0
        %v1573 = vadd.f32 0.0, %v1572
        %1574 = vmatprep.mubr.f32.mxu0 0.0
        %1575 = vmatmul.mubr.f32.gmra.mxu0 %v1364
        %v1576 = vpop.f32.mrf.mxu0
        %v1577 = vadd.f32 0.0, %v1576
        %v1578 = vpop.f32.mrf.mxu0
        %v1579 = vadd.f32 0.0, %v1578
        %1580 = vmatprep.mubr.f32.mxu0 0.0
        %1581 = vmatmul.mubr.f32.gmra.mxu0 %v1367
        %v1582 = vpop.f32.mrf.mxu0
        %v1583 = vadd.f32 0.0, %v1582
        %v1584 = vpop.f32.mrf.mxu0
        %v1585 = vadd.f32 0.0, %v1584
        %1586 = vmatprep.mubr.f32.mxu0 0.0
        %1587 = vmatmul.mubr.f32.gmra.mxu0 %v1370
        %v1588 = vpop.f32.mrf.mxu0
        %v1589 = vadd.f32 0.0, %v1588
        %v1590 = vpop.f32.mrf.mxu0
        %v1591 = vadd.f32 0.0, %v1590
        %1592 = vmatprep.mubr.f32.mxu0 0.0
        %1593 = vmatmul.mubr.f32.gmra.mxu0 %v1373
        %v1594 = vpop.f32.mrf.mxu0
        %v1595 = vadd.f32 0.0, %v1594
        %v1596 = vpop.f32.mrf.mxu0
        %v1597 = vadd.f32 0.0, %v1596
        %1598 = vmatprep.mubr.f32.mxu0 0.0
        %1599 = vmatmul.mubr.f32.gmra.mxu0 %v1376
        %v1600 = vpop.f32.mrf.mxu0
        %v1601 = vadd.f32 0.0, %v1600
        %v1602 = vpop.f32.mrf.mxu0
        %v1603 = vadd.f32 0.0, %v1602
        %1604 = vmatprep.mubr.f32.mxu0 0.0
        %1605 = vmatmul.mubr.f32.gmra.mxu0 %v1379
        %v1606 = vpop.f32.mrf.mxu0
        %v1607 = vadd.f32 0.0, %v1606
        %v1608 = vpop.f32.mrf.mxu0
        %v1609 = vadd.f32 0.0, %v1608
        %1610 = vmatprep.mubr.f32.mxu0 0.0
        %1611 = vmatmul.mubr.f32.gmra.mxu0 %v1382
        %v1612 = vpop.f32.mrf.mxu0
        %v1613 = vadd.f32 0.0, %v1612
        %v1614 = vpop.f32.mrf.mxu0
        %v1615 = vadd.f32 0.0, %v1614
        %1616 = vmatprep.mubr.f32.mxu0 0.0
        %1617 = vmatmul.mubr.f32.gmra.mxu0 %v1385
        %v1618 = vpop.f32.mrf.mxu0
        %v1619 = vadd.f32 0.0, %v1618
        %v1620 = vpop.f32.mrf.mxu0
        %v1621 = vadd.f32 0.0, %v1620
        %1622 = vmatprep.mubr.f32.mxu0 0.0
        %1623 = vmatmul.mubr.f32.gmra.mxu0 %v1388
        %v1624 = vpop.f32.mrf.mxu0
        %v1625 = vadd.f32 0.0, %v1624
        %v1626 = vpop.f32.mrf.mxu0
        %v1627 = vadd.f32 0.0, %v1626
        %1628 = vmatprep.mubr.f32.mxu0 0.0
        %1629 = vmatmul.mubr.f32.gmra.mxu0 %v1391
        %v1630 = vpop.f32.mrf.mxu0
        %v1631 = vadd.f32 0.0, %v1630
        %v1632 = vpop.f32.mrf.mxu0
        %v1633 = vadd.f32 0.0, %v1632
        %1634 = vmatprep.mubr.f32.mxu0 0.0
        %1635 = vmatmul.mubr.f32.gmra.mxu0 %v1394
        %v1636 = vpop.f32.mrf.mxu0
        %v1637 = vadd.f32 0.0, %v1636
        %v1638 = vpop.f32.mrf.mxu0
        %v1639 = vadd.f32 0.0, %v1638
        %1640 = vmatprep.mubr.f32.mxu0 0.0
        %1641 = vmatmul.mubr.f32.gmra.mxu0 %v1397
        %v1642 = vpop.f32.mrf.mxu0
        %v1643 = vadd.f32 0.0, %v1642
        %v1644 = vpop.f32.mrf.mxu0
        %v1645 = vadd.f32 0.0, %v1644
        %1646 = vmatprep.mubr.f32.mxu0 0.0
        %1647 = vmatmul.mubr.f32.gmra.mxu0 %v1400
        %v1648 = vpop.f32.mrf.mxu0
        %v1649 = vadd.f32 0.0, %v1648
        %v1650 = vpop.f32.mrf.mxu0
        %v1651 = vadd.f32 0.0, %v1650
        %1652 = vmatprep.mubr.f32.mxu0 0.0
        %1653 = vmatmul.mubr.f32.gmra.mxu0 %v1403
        %v1654 = vpop.f32.mrf.mxu0
        %v1655 = vadd.f32 0.0, %v1654
        %v1656 = vpop.f32.mrf.mxu0
        %v1657 = vadd.f32 0.0, %v1656
        %1658 = vmatprep.mubr.f32.mxu0 0.0
        %1659 = vmatmul.mubr.f32.gmra.mxu0 %v1406
        %v1660 = vpop.f32.mrf.mxu0
        %v1661 = vadd.f32 0.0, %v1660
        %v1662 = vpop.f32.mrf.mxu0
        %v1663 = vadd.f32 0.0, %v1662
        %1664 = vdwg.mxu0
        %v1665 = vsub.f32 %v832, %v1475
        %v1666 = vsub.f32 %v834, %v1477
        %v1667 = vsub.f32 %v838, %v1481
        %v1668 = vsub.f32 %v840, %v1483
        %v1669 = vsub.f32 %v844, %v1487
        %v1670 = vsub.f32 %v846, %v1489
        %v1671 = vsub.f32 %v850, %v1493
        %v1672 = vsub.f32 %v852, %v1495
        %v1673 = vsub.f32 %v856, %v1499
        %v1674 = vsub.f32 %v858, %v1501
        %v1675 = vsub.f32 %v862, %v1505
        %v1676 = vsub.f32 %v864, %v1507
        %v1677 = vsub.f32 %v868, %v1511
        %v1678 = vsub.f32 %v870, %v1513
        %v1679 = vsub.f32 %v874, %v1517
        %v1680 = vsub.f32 %v876, %v1519
        %v1681 = vsub.f32 %v880, %v1523
        %v1682 = vsub.f32 %v882, %v1525
        %v1683 = vsub.f32 %v886, %v1529
        %v1684 = vsub.f32 %v888, %v1531
        %v1685 = vsub.f32 %v892, %v1535
        %v1686 = vsub.f32 %v894, %v1537
        %v1687 = vsub.f32 %v898, %v1541
        %v1688 = vsub.f32 %v900, %v1543
        %v1689 = vsub.f32 %v904, %v1547
        %v1690 = vsub.f32 %v906, %v1549
        %v1691 = vsub.f32 %v910, %v1553
        %v1692 = vsub.f32 %v912, %v1555
        %v1693 = vsub.f32 %v916, %v1559
        %v1694 = vsub.f32 %v918, %v1561
        %v1695 = vsub.f32 %v922, %v1565
        %v1696 = vsub.f32 %v924, %v1567
        %v1697 = vsub.f32 %v993, %v1571
        %v1698 = vsub.f32 %v995, %v1573
        %v1699 = vsub.f32 %v999, %v1577
        %v1700 = vsub.f32 %v1001, %v1579
        %v1701 = vsub.f32 %v1005, %v1583
        %v1702 = vsub.f32 %v1007, %v1585
        %v1703 = vsub.f32 %v1011, %v1589
        %v1704 = vsub.f32 %v1013, %v1591
        %v1705 = vsub.f32 %v1017, %v1595
        %v1706 = vsub.f32 %v1019, %v1597
        %v1707 = vsub.f32 %v1023, %v1601
        %v1708 = vsub.f32 %v1025, %v1603
        %v1709 = vsub.f32 %v1029, %v1607
        %v1710 = vsub.f32 %v1031, %v1609
        %v1711 = vsub.f32 %v1035, %v1613
        %v1712 = vsub.f32 %v1037, %v1615
        %v1713 = vsub.f32 %v1041, %v1619
        %v1714 = vsub.f32 %v1043, %v1621
        %v1715 = vsub.f32 %v1047, %v1625
        %v1716 = vsub.f32 %v1049, %v1627
        %v1717 = vsub.f32 %v1053, %v1631
        %v1718 = vsub.f32 %v1055, %v1633
        %v1719 = vsub.f32 %v1059, %v1637
        %v1720 = vsub.f32 %v1061, %v1639
        %v1721 = vsub.f32 %v1065, %v1643
        %v1722 = vsub.f32 %v1067, %v1645
        %v1723 = vsub.f32 %v1071, %v1649
        %v1724 = vsub.f32 %v1073, %v1651
        %v1725 = vsub.f32 %v1077, %v1655
        %v1726 = vsub.f32 %v1079, %v1657
        %v1727 = vsub.f32 %v1083, %v1661
        %v1728 = vsub.f32 %v1085, %v1663
        %v1729 = vmul.f32 %v1665, %v1665
        %v1730 = vmul.f32 %v1666, %v1666
        %v1731 = vmul.f32 %v1667, %v1667
        %v1732 = vmul.f32 %v1668, %v1668
        %v1733 = vmul.f32 %v1669, %v1669
        %v1734 = vmul.f32 %v1670, %v1670
        %v1735 = vmul.f32 %v1671, %v1671
        %v1736 = vmul.f32 %v1672, %v1672
        %v1737 = vmul.f32 %v1673, %v1673
        %v1738 = vmul.f32 %v1674, %v1674
        %v1739 = vmul.f32 %v1675, %v1675
        %v1740 = vmul.f32 %v1676, %v1676
        %v1741 = vmul.f32 %v1677, %v1677
        %v1742 = vmul.f32 %v1678, %v1678
        %v1743 = vmul.f32 %v1679, %v1679
        %v1744 = vmul.f32 %v1680, %v1680
        %v1745 = vmul.f32 %v1681, %v1681
        %v1746 = vmul.f32 %v1682, %v1682
        %v1747 = vmul.f32 %v1683, %v1683
        %v1748 = vmul.f32 %v1684, %v1684
        %v1749 = vmul.f32 %v1685, %v1685
        %v1750 = vmul.f32 %v1686, %v1686
        %v1751 = vmul.f32 %v1687, %v1687
        %v1752 = vmul.f32 %v1688, %v1688
        %v1753 = vmul.f32 %v1689, %v1689
        %v1754 = vmul.f32 %v1690, %v1690
        %v1755 = vmul.f32 %v1691, %v1691
        %v1756 = vmul.f32 %v1692, %v1692
        %v1757 = vmul.f32 %v1693, %v1693
        %v1758 = vmul.f32 %v1694, %v1694
        %v1759 = vmul.f32 %v1695, %v1695
        %v1760 = vmul.f32 %v1696, %v1696
        %v1761 = vmul.f32 %v1697, %v1697
        %v1762 = vmul.f32 %v1698, %v1698
        %v1763 = vmul.f32 %v1699, %v1699
        %v1764 = vmul.f32 %v1700, %v1700
        %v1765 = vmul.f32 %v1701, %v1701
        %v1766 = vmul.f32 %v1702, %v1702
        %v1767 = vmul.f32 %v1703, %v1703
        %v1768 = vmul.f32 %v1704, %v1704
        %v1769 = vmul.f32 %v1705, %v1705
        %v1770 = vmul.f32 %v1706, %v1706
        %v1771 = vmul.f32 %v1707, %v1707
        %v1772 = vmul.f32 %v1708, %v1708
        %v1773 = vmul.f32 %v1709, %v1709
        %v1774 = vmul.f32 %v1710, %v1710
        %v1775 = vmul.f32 %v1711, %v1711
        %v1776 = vmul.f32 %v1712, %v1712
        %v1777 = vmul.f32 %v1713, %v1713
        %v1778 = vmul.f32 %v1714, %v1714
        %v1779 = vmul.f32 %v1715, %v1715
        %v1780 = vmul.f32 %v1716, %v1716
        %v1781 = vmul.f32 %v1717, %v1717
        %v1782 = vmul.f32 %v1718, %v1718
        %v1783 = vmul.f32 %v1719, %v1719
        %v1784 = vmul.f32 %v1720, %v1720
        %v1785 = vmul.f32 %v1721, %v1721
        %v1786 = vmul.f32 %v1722, %v1722
        %v1787 = vmul.f32 %v1723, %v1723
        %v1788 = vmul.f32 %v1724, %v1724
        %v1789 = vmul.f32 %v1725, %v1725
        %v1790 = vmul.f32 %v1726, %v1726
        %v1791 = vmul.f32 %v1727, %v1727
        %v1792 = vmul.f32 %v1728, %v1728
        %1793 = vmatprep.subr.mxu0 %v1760
        %1794 = vmatpush1.msra.mxu0 %v1759
        %1795 = vmatprep.subr.mxu0 %v1758
        %1796 = vmatpush1.msra.mxu0 %v1757
        %1797 = vmatprep.subr.mxu0 %v1756
        %1798 = vmatpush1.msra.mxu0 %v1755
        %1799 = vmatprep.subr.mxu0 %v1754
        %1800 = vmatpush1.msra.mxu0 %v1753
        %1801 = vmatprep.subr.mxu0 %v1752
        %1802 = vmatpush1.msra.mxu0 %v1751
        %1803 = vmatprep.subr.mxu0 %v1750
        %1804 = vmatpush1.msra.mxu0 %v1749
        %1805 = vmatprep.subr.mxu0 %v1748
        %1806 = vmatpush1.msra.mxu0 %v1747
        %1807 = vmatprep.subr.mxu0 %v1746
        %1808 = vmatpush1.msra.mxu0 %v1745
        %1809 = vmatprep.subr.mxu0 %v1744
        %1810 = vmatpush1.msra.mxu0 %v1743
        %1811 = vmatprep.subr.mxu0 %v1742
        %1812 = vmatpush1.msra.mxu0 %v1741
        %1813 = vmatprep.subr.mxu0 %v1740
        %1814 = vmatpush1.msra.mxu0 %v1739
        %1815 = vmatprep.subr.mxu0 %v1738
        %1816 = vmatpush1.msra.mxu0 %v1737
        %1817 = vmatprep.subr.mxu0 %v1736
        %1818 = vmatpush1.msra.mxu0 %v1735
        %1819 = vmatprep.subr.mxu0 %v1734
        %1820 = vmatpush1.msra.mxu0 %v1733
        %1821 = vmatprep.subr.mxu0 %v1732
        %1822 = vmatpush1.msra.mxu0 %v1731
        %1823 = vmatprep.subr.mxu0 %v1730
        %1824 = vmatpush1.msra.mxu0 %v1729
        %1825 = vmatprep.subr.mxu0 %v1792
        %1826 = vmatpush2.msra.mxu0 %v1791
        %1827 = vmatprep.subr.mxu0 %v1790
        %1828 = vmatpush2.msra.mxu0 %v1789
        %1829 = vmatprep.subr.mxu0 %v1788
        %1830 = vmatpush2.msra.mxu0 %v1787
        %1831 = vmatprep.subr.mxu0 %v1786
        %1832 = vmatpush2.msra.mxu0 %v1785
        %1833 = vmatprep.subr.mxu0 %v1784
        %1834 = vmatpush2.msra.mxu0 %v1783
        %1835 = vmatprep.subr.mxu0 %v1782
        %1836 = vmatpush2.msra.mxu0 %v1781
        %1837 = vmatprep.subr.mxu0 %v1780
        %1838 = vmatpush2.msra.mxu0 %v1779
        %1839 = vmatprep.subr.mxu0 %v1778
        %1840 = vmatpush2.msra.mxu0 %v1777
        %1841 = vmatprep.subr.mxu0 %v1776
        %1842 = vmatpush2.msra.mxu0 %v1775
        %1843 = vmatprep.subr.mxu0 %v1774
        %1844 = vmatpush2.msra.mxu0 %v1773
        %1845 = vmatprep.subr.mxu0 %v1772
        %1846 = vmatpush2.msra.mxu0 %v1771
        %1847 = vmatprep.subr.mxu0 %v1770
        %1848 = vmatpush2.msra.mxu0 %v1769
        %1849 = vmatprep.subr.mxu0 %v1768
        %1850 = vmatpush2.msra.mxu0 %v1767
        %1851 = vmatprep.subr.mxu0 %v1766
        %1852 = vmatpush2.msra.mxu0 %v1765
        %1853 = vmatprep.subr.mxu0 %v1764
        %1854 = vmatpush2.msra.mxu0 %v1763
        %1855 = vmatprep.subr.mxu0 %v1762
        %1856 = vmatpush2.msra.mxu0 %v1761
        %1857 = vmatprep.mubr.f32.mxu0 %v378
        %1858 = vmatmul.mubr.f32.gmra.mxu0 %v377
        %v1859 = vpop.f32.mrf.mxu0
        %v1860 = vadd.f32 0.0, %v1859
        %v1861 = vpop.f32.mrf.mxu0
        %v1862 = vadd.f32 0.0, %v1861
        %1863 = vdwg.mxu0
        %1864 = vmatprep.subr.mxu0 0.0
        %1865 = vmatpush1.msra.mxu0 %v360
        %1866 = vmatprep.subr.mxu0 0.0
        %1867 = vmatpush1.msra.mxu0 %v359
        %1868 = vmatprep.subr.mxu0 0.0
        %1869 = vmatpush1.msra.mxu0 %v358
        %1870 = vmatprep.subr.mxu0 0.0
        %1871 = vmatpush1.msra.mxu0 %v357
        %1872 = vmatprep.subr.mxu0 0.0
        %1873 = vmatpush1.msra.mxu0 %v356
        %1874 = vmatprep.subr.mxu0 0.0
        %1875 = vmatpush1.msra.mxu0 %v355
        %1876 = vmatprep.subr.mxu0 0.0
        %1877 = vmatpush1.msra.mxu0 %v354
        %1878 = vmatprep.subr.mxu0 0.0
        %1879 = vmatpush1.msra.mxu0 %v353
        %1880 = vmatprep.subr.mxu0 0.0
        %1881 = vmatpush1.msra.mxu0 %v352
        %1882 = vmatprep.subr.mxu0 0.0
        %1883 = vmatpush1.msra.mxu0 %v351
        %1884 = vmatprep.subr.mxu0 0.0
        %1885 = vmatpush1.msra.mxu0 %v350
        %1886 = vmatprep.subr.mxu0 0.0
        %1887 = vmatpush1.msra.mxu0 %v349
        %1888 = vmatprep.subr.mxu0 0.0
        %1889 = vmatpush1.msra.mxu0 %v348
        %1890 = vmatprep.subr.mxu0 0.0
        %1891 = vmatpush1.msra.mxu0 %v347
        %1892 = vmatprep.subr.mxu0 0.0
        %1893 = vmatpush1.msra.mxu0 %v346
        %1894 = vmatprep.subr.mxu0 0.0
        %1895 = vmatpush1.msra.mxu0 %v345
        %1896 = vmatprep.subr.mxu0 0.0
        %1897 = vmatpush2.msra.mxu0 %v376
        %1898 = vmatprep.subr.mxu0 0.0
        %1899 = vmatpush2.msra.mxu0 %v375
        %1900 = vmatprep.subr.mxu0 0.0
        %1901 = vmatpush2.msra.mxu0 %v374
        %1902 = vmatprep.subr.mxu0 0.0
        %1903 = vmatpush2.msra.mxu0 %v373
        %1904 = vmatprep.subr.mxu0 0.0
        %1905 = vmatpush2.msra.mxu0 %v372
        %1906 = vmatprep.subr.mxu0 0.0
        %1907 = vmatpush2.msra.mxu0 %v371
        %1908 = vmatprep.subr.mxu0 0.0
        %1909 = vmatpush2.msra.mxu0 %v370
        %1910 = vmatprep.subr.mxu0 0.0
        %1911 = vmatpush2.msra.mxu0 %v369
        %1912 = vmatprep.subr.mxu0 0.0
        %1913 = vmatpush2.msra.mxu0 %v368
        %1914 = vmatprep.subr.mxu0 0.0
        %1915 = vmatpush2.msra.mxu0 %v367
        %1916 = vmatprep.subr.mxu0 0.0
        %1917 = vmatpush2.msra.mxu0 %v366
        %1918 = vmatprep.subr.mxu0 0.0
        %1919 = vmatpush2.msra.mxu0 %v365
        %1920 = vmatprep.subr.mxu0 0.0
        %1921 = vmatpush2.msra.mxu0 %v364
        %1922 = vmatprep.subr.mxu0 0.0
        %1923 = vmatpush2.msra.mxu0 %v363
        %1924 = vmatprep.subr.mxu0 0.0
        %1925 = vmatpush2.msra.mxu0 %v362
        %1926 = vmatprep.subr.mxu0 0.0
        %1927 = vmatpush2.msra.mxu0 %v361
        %1928 = vmatprep.mubr.f32.mxu0 %v1862
        %1929 = vmatmul.mubr.f32.gmra.mxu0 %v1860
        %v1930 = vpop.f32.mrf.mxu0
        %v1931 = vadd.f32 0.0, %v1930
        %v1932 = vpop.f32.mrf.mxu0
        %1933 = vdwg.mxu0
        %v1934 = vmul.f32 %v1931, 0.00048828125
        %v1935 = vadd.f32 %v1934, 0.0001
        %v1936 = vrsqrt.pop %v1935
        %v1938 = vsel %vm1231, %v1936, 0
        %1940 = vmatprep.subr.mxu0 0.0
        %1941 = vmatpush1.msra.mxu0 0.0
        %1942 = vmatprep.subr.mxu0 0.0
        %1943 = vmatpush1.msra.mxu0 0.0
        %1944 = vmatprep.subr.mxu0 0.0
        %1945 = vmatpush1.msra.mxu0 0.0
        %1946 = vmatprep.subr.mxu0 0.0
        %1947 = vmatpush1.msra.mxu0 0.0
        %1948 = vmatprep.subr.mxu0 0.0
        %1949 = vmatpush1.msra.mxu0 0.0
        %1950 = vmatprep.subr.mxu0 0.0
        %1951 = vmatpush1.msra.mxu0 0.0
        %1952 = vmatprep.subr.mxu0 0.0
        %1953 = vmatpush1.msra.mxu0 0.0
        %1954 = vmatprep.subr.mxu0 0.0
        %1955 = vmatpush1.msra.mxu0 0.0
        %1956 = vmatprep.subr.mxu0 0.0
        %1957 = vmatpush1.msra.mxu0 0.0
        %1958 = vmatprep.subr.mxu0 0.0
        %1959 = vmatpush1.msra.mxu0 0.0
        %1960 = vmatprep.subr.mxu0 0.0
        %1961 = vmatpush1.msra.mxu0 0.0
        %1962 = vmatprep.subr.mxu0 0.0
        %1963 = vmatpush1.msra.mxu0 0.0
        %1964 = vmatprep.subr.mxu0 0.0
        %1965 = vmatpush1.msra.mxu0 0.0
        %1966 = vmatprep.subr.mxu0 0.0
        %1967 = vmatpush1.msra.mxu0 0.0
        %1968 = vmatprep.subr.mxu0 0.0
        %1969 = vmatpush1.msra.mxu0 0.0
        %1970 = vmatprep.subr.mxu0 %v1238
        %1971 = vmatpush1.msra.mxu0 %v1236
        %1972 = vmatprep.subr.mxu0 0.0
        %1973 = vmatpush2.msra.mxu0 0.0
        %1974 = vmatprep.subr.mxu0 0.0
        %1975 = vmatpush2.msra.mxu0 0.0
        %1976 = vmatprep.subr.mxu0 0.0
        %1977 = vmatpush2.msra.mxu0 0.0
        %1978 = vmatprep.subr.mxu0 0.0
        %1979 = vmatpush2.msra.mxu0 0.0
        %1980 = vmatprep.subr.mxu0 0.0
        %1981 = vmatpush2.msra.mxu0 0.0
        %1982 = vmatprep.subr.mxu0 0.0
        %1983 = vmatpush2.msra.mxu0 0.0
        %1984 = vmatprep.subr.mxu0 0.0
        %1985 = vmatpush2.msra.mxu0 0.0
        %1986 = vmatprep.subr.mxu0 0.0
        %1987 = vmatpush2.msra.mxu0 0.0
        %1988 = vmatprep.subr.mxu0 0.0
        %1989 = vmatpush2.msra.mxu0 0.0
        %1990 = vmatprep.subr.mxu0 0.0
        %1991 = vmatpush2.msra.mxu0 0.0
        %1992 = vmatprep.subr.mxu0 0.0
        %1993 = vmatpush2.msra.mxu0 0.0
        %1994 = vmatprep.subr.mxu0 0.0
        %1995 = vmatpush2.msra.mxu0 0.0
        %1996 = vmatprep.subr.mxu0 0.0
        %1997 = vmatpush2.msra.mxu0 0.0
        %1998 = vmatprep.subr.mxu0 0.0
        %1999 = vmatpush2.msra.mxu0 0.0
        %2000 = vmatprep.subr.mxu0 0.0
        %2001 = vmatpush2.msra.mxu0 0.0
        %2002 = vmatprep.subr.mxu0 0.0
        %2003 = vmatpush2.msra.mxu0 0.0
        %2004 = vmatprep.mubr.f32.mxu0 0.0
        %2005 = vmatmul.mubr.f32.gmra.mxu0 %v1938
        %v2006 = vpop.f32.mrf.mxu0
        %v2007 = vadd.f32 0.0, %v2006
        %v2008 = vpop.f32.mrf.mxu0
        %v2009 = vadd.f32 0.0, %v2008
        %2010 = vdwg.mxu0
        %2011 = vmatprep.subr.mxu0 0.0
        %2012 = vmatpush1.msra.mxu0 0.0
        %2013 = vmatprep.subr.mxu0 0.0
        %2014 = vmatpush1.msra.mxu0 0.0
        %2015 = vmatprep.subr.mxu0 0.0
        %2016 = vmatpush1.msra.mxu0 0.0
        %2017 = vmatprep.subr.mxu0 0.0
        %2018 = vmatpush1.msra.mxu0 0.0
        %2019 = vmatprep.subr.mxu0 0.0
        %2020 = vmatpush1.msra.mxu0 0.0
        %2021 = vmatprep.subr.mxu0 0.0
        %2022 = vmatpush1.msra.mxu0 0.0
        %2023 = vmatprep.subr.mxu0 0.0
        %2024 = vmatpush1.msra.mxu0 0.0
        %2025 = vmatprep.subr.mxu0 0.0
        %2026 = vmatpush1.msra.mxu0 0.0
        %2027 = vmatprep.subr.mxu0 0.0
        %2028 = vmatpush1.msra.mxu0 0.0
        %2029 = vmatprep.subr.mxu0 0.0
        %2030 = vmatpush1.msra.mxu0 0.0
        %2031 = vmatprep.subr.mxu0 0.0
        %2032 = vmatpush1.msra.mxu0 0.0
        %2033 = vmatprep.subr.mxu0 0.0
        %2034 = vmatpush1.msra.mxu0 0.0
        %2035 = vmatprep.subr.mxu0 0.0
        %2036 = vmatpush1.msra.mxu0 0.0
        %2037 = vmatprep.subr.mxu0 0.0
        %2038 = vmatpush1.msra.mxu0 0.0
        %2039 = vmatprep.subr.mxu0 0.0
        %2040 = vmatpush1.msra.mxu0 0.0
        %2041 = vmatprep.subr.mxu0 %v2009
        %2042 = vmatpush1.msra.mxu0 %v2007
        %2043 = vmatprep.subr.mxu0 0.0
        %2044 = vmatpush2.msra.mxu0 0.0
        %2045 = vmatprep.subr.mxu0 0.0
        %2046 = vmatpush2.msra.mxu0 0.0
        %2047 = vmatprep.subr.mxu0 0.0
        %2048 = vmatpush2.msra.mxu0 0.0
        %2049 = vmatprep.subr.mxu0 0.0
        %2050 = vmatpush2.msra.mxu0 0.0
        %2051 = vmatprep.subr.mxu0 0.0
        %2052 = vmatpush2.msra.mxu0 0.0
        %2053 = vmatprep.subr.mxu0 0.0
        %2054 = vmatpush2.msra.mxu0 0.0
        %2055 = vmatprep.subr.mxu0 0.0
        %2056 = vmatpush2.msra.mxu0 0.0
        %2057 = vmatprep.subr.mxu0 0.0
        %2058 = vmatpush2.msra.mxu0 0.0
        %2059 = vmatprep.subr.mxu0 0.0
        %2060 = vmatpush2.msra.mxu0 0.0
        %2061 = vmatprep.subr.mxu0 0.0
        %2062 = vmatpush2.msra.mxu0 0.0
        %2063 = vmatprep.subr.mxu0 0.0
        %2064 = vmatpush2.msra.mxu0 0.0
        %2065 = vmatprep.subr.mxu0 0.0
        %2066 = vmatpush2.msra.mxu0 0.0
        %2067 = vmatprep.subr.mxu0 0.0
        %2068 = vmatpush2.msra.mxu0 0.0
        %2069 = vmatprep.subr.mxu0 0.0
        %2070 = vmatpush2.msra.mxu0 0.0
        %2071 = vmatprep.subr.mxu0 0.0
        %2072 = vmatpush2.msra.mxu0 0.0
        %2073 = vmatprep.subr.mxu0 0.0
        %2074 = vmatpush2.msra.mxu0 0.0
        %2075 = vmatprep.mubr.f32.mxu0 0.0
        %2076 = vmatmul.mubr.f32.gmra.mxu0 %v1313
        %v2077 = vpop.f32.mrf.mxu0
        %v2078 = vadd.f32 0.0, %v2077
        %v2079 = vpop.f32.mrf.mxu0
        %v2080 = vadd.f32 0.0, %v2079
        %2081 = vmatprep.mubr.f32.mxu0 0.0
        %2082 = vmatmul.mubr.f32.gmra.mxu0 %v1316
        %v2083 = vpop.f32.mrf.mxu0
        %v2084 = vadd.f32 0.0, %v2083
        %v2085 = vpop.f32.mrf.mxu0
        %v2086 = vadd.f32 0.0, %v2085
        %2087 = vmatprep.mubr.f32.mxu0 0.0
        %2088 = vmatmul.mubr.f32.gmra.mxu0 %v1319
        %v2089 = vpop.f32.mrf.mxu0
        %v2090 = vadd.f32 0.0, %v2089
        %v2091 = vpop.f32.mrf.mxu0
        %v2092 = vadd.f32 0.0, %v2091
        %2093 = vmatprep.mubr.f32.mxu0 0.0
        %2094 = vmatmul.mubr.f32.gmra.mxu0 %v1322
        %v2095 = vpop.f32.mrf.mxu0
        %v2096 = vadd.f32 0.0, %v2095
        %v2097 = vpop.f32.mrf.mxu0
        %v2098 = vadd.f32 0.0, %v2097
        %2099 = vmatprep.mubr.f32.mxu0 0.0
        %2100 = vmatmul.mubr.f32.gmra.mxu0 %v1325
        %v2101 = vpop.f32.mrf.mxu0
        %v2102 = vadd.f32 0.0, %v2101
        %v2103 = vpop.f32.mrf.mxu0
        %v2104 = vadd.f32 0.0, %v2103
        %2105 = vmatprep.mubr.f32.mxu0 0.0
        %2106 = vmatmul.mubr.f32.gmra.mxu0 %v1328
        %v2107 = vpop.f32.mrf.mxu0
        %v2108 = vadd.f32 0.0, %v2107
        %v2109 = vpop.f32.mrf.mxu0
        %v2110 = vadd.f32 0.0, %v2109
        %2111 = vmatprep.mubr.f32.mxu0 0.0
        %2112 = vmatmul.mubr.f32.gmra.mxu0 %v1331
        %v2113 = vpop.f32.mrf.mxu0
        %v2114 = vadd.f32 0.0, %v2113
        %v2115 = vpop.f32.mrf.mxu0
        %v2116 = vadd.f32 0.0, %v2115
        %2117 = vmatprep.mubr.f32.mxu0 0.0
        %2118 = vmatmul.mubr.f32.gmra.mxu0 %v1334
        %v2119 = vpop.f32.mrf.mxu0
        %v2120 = vadd.f32 0.0, %v2119
        %v2121 = vpop.f32.mrf.mxu0
        %v2122 = vadd.f32 0.0, %v2121
        %2123 = vmatprep.mubr.f32.mxu0 0.0
        %2124 = vmatmul.mubr.f32.gmra.mxu0 %v1337
        %v2125 = vpop.f32.mrf.mxu0
        %v2126 = vadd.f32 0.0, %v2125
        %v2127 = vpop.f32.mrf.mxu0
        %v2128 = vadd.f32 0.0, %v2127
        %2129 = vmatprep.mubr.f32.mxu0 0.0
        %2130 = vmatmul.mubr.f32.gmra.mxu0 %v1340
        %v2131 = vpop.f32.mrf.mxu0
        %v2132 = vadd.f32 0.0, %v2131
        %v2133 = vpop.f32.mrf.mxu0
        %v2134 = vadd.f32 0.0, %v2133
        %2135 = vmatprep.mubr.f32.mxu0 0.0
        %2136 = vmatmul.mubr.f32.gmra.mxu0 %v1343
        %v2137 = vpop.f32.mrf.mxu0
        %v2138 = vadd.f32 0.0, %v2137
        %v2139 = vpop.f32.mrf.mxu0
        %v2140 = vadd.f32 0.0, %v2139
        %2141 = vmatprep.mubr.f32.mxu0 0.0
        %2142 = vmatmul.mubr.f32.gmra.mxu0 %v1346
        %v2143 = vpop.f32.mrf.mxu0
        %v2144 = vadd.f32 0.0, %v2143
        %v2145 = vpop.f32.mrf.mxu0
        %v2146 = vadd.f32 0.0, %v2145
        %2147 = vmatprep.mubr.f32.mxu0 0.0
        %2148 = vmatmul.mubr.f32.gmra.mxu0 %v1349
        %v2149 = vpop.f32.mrf.mxu0
        %v2150 = vadd.f32 0.0, %v2149
        %v2151 = vpop.f32.mrf.mxu0
        %v2152 = vadd.f32 0.0, %v2151
        %2153 = vmatprep.mubr.f32.mxu0 0.0
        %2154 = vmatmul.mubr.f32.gmra.mxu0 %v1352
        %v2155 = vpop.f32.mrf.mxu0
        %v2156 = vadd.f32 0.0, %v2155
        %v2157 = vpop.f32.mrf.mxu0
        %v2158 = vadd.f32 0.0, %v2157
        %2159 = vmatprep.mubr.f32.mxu0 0.0
        %2160 = vmatmul.mubr.f32.gmra.mxu0 %v1355
        %v2161 = vpop.f32.mrf.mxu0
        %v2162 = vadd.f32 0.0, %v2161
        %v2163 = vpop.f32.mrf.mxu0
        %v2164 = vadd.f32 0.0, %v2163
        %2165 = vmatprep.mubr.f32.mxu0 0.0
        %2166 = vmatmul.mubr.f32.gmra.mxu0 %v1358
        %v2167 = vpop.f32.mrf.mxu0
        %v2168 = vadd.f32 0.0, %v2167
        %v2169 = vpop.f32.mrf.mxu0
        %v2170 = vadd.f32 0.0, %v2169
        %2171 = vmatprep.mubr.f32.mxu0 0.0
        %2172 = vmatmul.mubr.f32.gmra.mxu0 %v1361
        %v2173 = vpop.f32.mrf.mxu0
        %v2174 = vadd.f32 0.0, %v2173
        %v2175 = vpop.f32.mrf.mxu0
        %v2176 = vadd.f32 0.0, %v2175
        %2177 = vmatprep.mubr.f32.mxu0 0.0
        %2178 = vmatmul.mubr.f32.gmra.mxu0 %v1364
        %v2179 = vpop.f32.mrf.mxu0
        %v2180 = vadd.f32 0.0, %v2179
        %v2181 = vpop.f32.mrf.mxu0
        %v2182 = vadd.f32 0.0, %v2181
        %2183 = vmatprep.mubr.f32.mxu0 0.0
        %2184 = vmatmul.mubr.f32.gmra.mxu0 %v1367
        %v2185 = vpop.f32.mrf.mxu0
        %v2186 = vadd.f32 0.0, %v2185
        %v2187 = vpop.f32.mrf.mxu0
        %v2188 = vadd.f32 0.0, %v2187
        %2189 = vmatprep.mubr.f32.mxu0 0.0
        %2190 = vmatmul.mubr.f32.gmra.mxu0 %v1370
        %v2191 = vpop.f32.mrf.mxu0
        %v2192 = vadd.f32 0.0, %v2191
        %v2193 = vpop.f32.mrf.mxu0
        %v2194 = vadd.f32 0.0, %v2193
        %2195 = vmatprep.mubr.f32.mxu0 0.0
        %2196 = vmatmul.mubr.f32.gmra.mxu0 %v1373
        %v2197 = vpop.f32.mrf.mxu0
        %v2198 = vadd.f32 0.0, %v2197
        %v2199 = vpop.f32.mrf.mxu0
        %v2200 = vadd.f32 0.0, %v2199
        %2201 = vmatprep.mubr.f32.mxu0 0.0
        %2202 = vmatmul.mubr.f32.gmra.mxu0 %v1376
        %v2203 = vpop.f32.mrf.mxu0
        %v2204 = vadd.f32 0.0, %v2203
        %v2205 = vpop.f32.mrf.mxu0
        %v2206 = vadd.f32 0.0, %v2205
        %2207 = vmatprep.mubr.f32.mxu0 0.0
        %2208 = vmatmul.mubr.f32.gmra.mxu0 %v1379
        %v2209 = vpop.f32.mrf.mxu0
        %v2210 = vadd.f32 0.0, %v2209
        %v2211 = vpop.f32.mrf.mxu0
        %v2212 = vadd.f32 0.0, %v2211
        %2213 = vmatprep.mubr.f32.mxu0 0.0
        %2214 = vmatmul.mubr.f32.gmra.mxu0 %v1382
        %v2215 = vpop.f32.mrf.mxu0
        %v2216 = vadd.f32 0.0, %v2215
        %v2217 = vpop.f32.mrf.mxu0
        %v2218 = vadd.f32 0.0, %v2217
        %2219 = vmatprep.mubr.f32.mxu0 0.0
        %2220 = vmatmul.mubr.f32.gmra.mxu0 %v1385
        %v2221 = vpop.f32.mrf.mxu0
        %v2222 = vadd.f32 0.0, %v2221
        %v2223 = vpop.f32.mrf.mxu0
        %v2224 = vadd.f32 0.0, %v2223
        %2225 = vmatprep.mubr.f32.mxu0 0.0
        %2226 = vmatmul.mubr.f32.gmra.mxu0 %v1388
        %v2227 = vpop.f32.mrf.mxu0
        %v2228 = vadd.f32 0.0, %v2227
        %v2229 = vpop.f32.mrf.mxu0
        %v2230 = vadd.f32 0.0, %v2229
        %2231 = vmatprep.mubr.f32.mxu0 0.0
        %2232 = vmatmul.mubr.f32.gmra.mxu0 %v1391
        %v2233 = vpop.f32.mrf.mxu0
        %v2234 = vadd.f32 0.0, %v2233
        %v2235 = vpop.f32.mrf.mxu0
        %v2236 = vadd.f32 0.0, %v2235
        %2237 = vmatprep.mubr.f32.mxu0 0.0
        %2238 = vmatmul.mubr.f32.gmra.mxu0 %v1394
        %v2239 = vpop.f32.mrf.mxu0
        %v2240 = vadd.f32 0.0, %v2239
        %v2241 = vpop.f32.mrf.mxu0
        %v2242 = vadd.f32 0.0, %v2241
        %2243 = vmatprep.mubr.f32.mxu0 0.0
        %2244 = vmatmul.mubr.f32.gmra.mxu0 %v1397
        %v2245 = vpop.f32.mrf.mxu0
        %v2246 = vadd.f32 0.0, %v2245
        %v2247 = vpop.f32.mrf.mxu0
        %v2248 = vadd.f32 0.0, %v2247
        %2249 = vmatprep.mubr.f32.mxu0 0.0
        %2250 = vmatmul.mubr.f32.gmra.mxu0 %v1400
        %v2251 = vpop.f32.mrf.mxu0
        %v2252 = vadd.f32 0.0, %v2251
        %v2253 = vpop.f32.mrf.mxu0
        %v2254 = vadd.f32 0.0, %v2253
        %2255 = vmatprep.mubr.f32.mxu0 0.0
        %2256 = vmatmul.mubr.f32.gmra.mxu0 %v1403
        %v2257 = vpop.f32.mrf.mxu0
        %v2258 = vadd.f32 0.0, %v2257
        %v2259 = vpop.f32.mrf.mxu0
        %v2260 = vadd.f32 0.0, %v2259
        %2261 = vmatprep.mubr.f32.mxu0 0.0
        %2262 = vmatmul.mubr.f32.gmra.mxu0 %v1406
        %v2263 = vpop.f32.mrf.mxu0
        %v2264 = vadd.f32 0.0, %v2263
        %v2265 = vpop.f32.mrf.mxu0
        %v2266 = vadd.f32 0.0, %v2265
        %2267 = vdwg.mxu0
        %v2268 = vmul.f32 %v1665, %v2078
        %v2269 = vmul.f32 %v1666, %v2080
        %v2270 = vmul.f32 %v1667, %v2084
        %v2271 = vmul.f32 %v1668, %v2086
        %v2272 = vmul.f32 %v1669, %v2090
        %v2273 = vmul.f32 %v1670, %v2092
        %v2274 = vmul.f32 %v1671, %v2096
        %v2275 = vmul.f32 %v1672, %v2098
        %v2276 = vmul.f32 %v1673, %v2102
        %v2277 = vmul.f32 %v1674, %v2104
        %v2278 = vmul.f32 %v1675, %v2108
        %v2279 = vmul.f32 %v1676, %v2110
        %v2280 = vmul.f32 %v1677, %v2114
        %v2281 = vmul.f32 %v1678, %v2116
        %v2282 = vmul.f32 %v1679, %v2120
        %v2283 = vmul.f32 %v1680, %v2122
        %v2284 = vmul.f32 %v1681, %v2126
        %v2285 = vmul.f32 %v1682, %v2128
        %v2286 = vmul.f32 %v1683, %v2132
        %v2287 = vmul.f32 %v1684, %v2134
        %v2288 = vmul.f32 %v1685, %v2138
        %v2289 = vmul.f32 %v1686, %v2140
        %v2290 = vmul.f32 %v1687, %v2144
        %v2291 = vmul.f32 %v1688, %v2146
        %v2292 = vmul.f32 %v1689, %v2150
        %v2293 = vmul.f32 %v1690, %v2152
        %v2294 = vmul.f32 %v1691, %v2156
        %v2295 = vmul.f32 %v1692, %v2158
        %v2296 = vmul.f32 %v1693, %v2162
        %v2297 = vmul.f32 %v1694, %v2164
        %v2298 = vmul.f32 %v1695, %v2168
        %v2299 = vmul.f32 %v1696, %v2170
        %v2300 = vmul.f32 %v1697, %v2174
        %v2301 = vmul.f32 %v1698, %v2176
        %v2302 = vmul.f32 %v1699, %v2180
        %v2303 = vmul.f32 %v1700, %v2182
        %v2304 = vmul.f32 %v1701, %v2186
        %v2305 = vmul.f32 %v1702, %v2188
        %v2306 = vmul.f32 %v1703, %v2192
        %v2307 = vmul.f32 %v1704, %v2194
        %v2308 = vmul.f32 %v1705, %v2198
        %v2309 = vmul.f32 %v1706, %v2200
        %v2310 = vmul.f32 %v1707, %v2204
        %v2311 = vmul.f32 %v1708, %v2206
        %v2312 = vmul.f32 %v1709, %v2210
        %v2313 = vmul.f32 %v1710, %v2212
        %v2314 = vmul.f32 %v1711, %v2216
        %v2315 = vmul.f32 %v1712, %v2218
        %v2316 = vmul.f32 %v1713, %v2222
        %v2317 = vmul.f32 %v1714, %v2224
        %v2318 = vmul.f32 %v1715, %v2228
        %v2319 = vmul.f32 %v1716, %v2230
        %v2320 = vmul.f32 %v1717, %v2234
        %v2321 = vmul.f32 %v1718, %v2236
        %v2322 = vmul.f32 %v1719, %v2240
        %v2323 = vmul.f32 %v1720, %v2242
        %v2324 = vmul.f32 %v1721, %v2246
        %v2325 = vmul.f32 %v1722, %v2248
        %v2326 = vmul.f32 %v1723, %v2252
        %v2327 = vmul.f32 %v1724, %v2254
        %v2328 = vmul.f32 %v1725, %v2258
        %v2329 = vmul.f32 %v1726, %v2260
        %v2330 = vmul.f32 %v1727, %v2264
        %v2331 = vmul.f32 %v1728, %v2266
        %v2332 = vlaneseq
        %v2333 = vshrl.u32 %v2332, 7
        %v2334 = vsub.s32 1, %v2333
        %v2335 = vrot.slane %v340, %v2334
        %v2336 = vlaneseq
        %v2337 = vshrl.u32 %v2336, 7
        %v2338 = vsub.s32 1, %v2337
        %v2339 = vrot.slane %v341, %v2338
        %v2340 = vmul.f32 %v2268, %v2335
        %v2341 = vmul.f32 %v2269, %v2339
        %v2342 = vmul.f32 %v2270, %v2335
        %v2343 = vmul.f32 %v2271, %v2339
        %v2344 = vmul.f32 %v2272, %v2335
        %v2345 = vmul.f32 %v2273, %v2339
        %v2346 = vmul.f32 %v2274, %v2335
        %v2347 = vmul.f32 %v2275, %v2339
        %v2348 = vmul.f32 %v2276, %v2335
        %v2349 = vmul.f32 %v2277, %v2339
        %v2350 = vmul.f32 %v2278, %v2335
        %v2351 = vmul.f32 %v2279, %v2339
        %v2352 = vmul.f32 %v2280, %v2335
        %v2353 = vmul.f32 %v2281, %v2339
        %v2354 = vmul.f32 %v2282, %v2335
        %v2355 = vmul.f32 %v2283, %v2339
        %v2356 = vmul.f32 %v2284, %v2335
        %v2357 = vmul.f32 %v2285, %v2339
        %v2358 = vmul.f32 %v2286, %v2335
        %v2359 = vmul.f32 %v2287, %v2339
        %v2360 = vmul.f32 %v2288, %v2335
        %v2361 = vmul.f32 %v2289, %v2339
        %v2362 = vmul.f32 %v2290, %v2335
        %v2363 = vmul.f32 %v2291, %v2339
        %v2364 = vmul.f32 %v2292, %v2335
        %v2365 = vmul.f32 %v2293, %v2339
        %v2366 = vmul.f32 %v2294, %v2335
        %v2367 = vmul.f32 %v2295, %v2339
        %v2368 = vmul.f32 %v2296, %v2335
        %v2369 = vmul.f32 %v2297, %v2339
        %v2370 = vmul.f32 %v2298, %v2335
        %v2371 = vmul.f32 %v2299, %v2339
        %v2372 = vmul.f32 %v2300, %v2335
        %v2373 = vmul.f32 %v2301, %v2339
        %v2374 = vmul.f32 %v2302, %v2335
        %v2375 = vmul.f32 %v2303, %v2339
        %v2376 = vmul.f32 %v2304, %v2335
        %v2377 = vmul.f32 %v2305, %v2339
        %v2378 = vmul.f32 %v2306, %v2335
        %v2379 = vmul.f32 %v2307, %v2339
        %v2380 = vmul.f32 %v2308, %v2335
        %v2381 = vmul.f32 %v2309, %v2339
        %v2382 = vmul.f32 %v2310, %v2335
        %v2383 = vmul.f32 %v2311, %v2339
        %v2384 = vmul.f32 %v2312, %v2335
        %v2385 = vmul.f32 %v2313, %v2339
        %v2386 = vmul.f32 %v2314, %v2335
        %v2387 = vmul.f32 %v2315, %v2339
        %v2388 = vmul.f32 %v2316, %v2335
        %v2389 = vmul.f32 %v2317, %v2339
        %v2390 = vmul.f32 %v2318, %v2335
        %v2391 = vmul.f32 %v2319, %v2339
        %v2392 = vmul.f32 %v2320, %v2335
        %v2393 = vmul.f32 %v2321, %v2339
        %v2394 = vmul.f32 %v2322, %v2335
        %v2395 = vmul.f32 %v2323, %v2339
        %v2396 = vmul.f32 %v2324, %v2335
        %v2397 = vmul.f32 %v2325, %v2339
        %v2398 = vmul.f32 %v2326, %v2335
        %v2399 = vmul.f32 %v2327, %v2339
        %v2400 = vmul.f32 %v2328, %v2335
        %v2401 = vmul.f32 %v2329, %v2339
        %v2402 = vmul.f32 %v2330, %v2335
        %v2403 = vmul.f32 %v2331, %v2339
        %v2404 = vlaneseq
        %v2405 = vshrl.u32 %v2404, 7
        %v2406 = vsub.s32 2, %v2405
        %v2407 = vrot.slane %v340, %v2406
        %v2408 = vlaneseq
        %v2409 = vshrl.u32 %v2408, 7
        %v2410 = vsub.s32 2, %v2409
        %v2411 = vrot.slane %v341, %v2410
        %v2412 = vadd.f32 %v2340, %v2407
        %v2413 = vadd.f32 %v2341, %v2411
        %v2414 = vadd.f32 %v2342, %v2407
        %v2415 = vadd.f32 %v2343, %v2411
        %v2416 = vadd.f32 %v2344, %v2407
        %v2417 = vadd.f32 %v2345, %v2411
        %v2418 = vadd.f32 %v2346, %v2407
        %v2419 = vadd.f32 %v2347, %v2411
        %v2420 = vadd.f32 %v2348, %v2407
        %v2421 = vadd.f32 %v2349, %v2411
        %v2422 = vadd.f32 %v2350, %v2407
        %v2423 = vadd.f32 %v2351, %v2411
        %v2424 = vadd.f32 %v2352, %v2407
        %v2425 = vadd.f32 %v2353, %v2411
        %v2426 = vadd.f32 %v2354, %v2407
        %v2427 = vadd.f32 %v2355, %v2411
        %v2428 = vadd.f32 %v2356, %v2407
        %v2429 = vadd.f32 %v2357, %v2411
        %v2430 = vadd.f32 %v2358, %v2407
        %v2431 = vadd.f32 %v2359, %v2411
        %v2432 = vadd.f32 %v2360, %v2407
        %v2433 = vadd.f32 %v2361, %v2411
        %v2434 = vadd.f32 %v2362, %v2407
        %v2435 = vadd.f32 %v2363, %v2411
        %v2436 = vadd.f32 %v2364, %v2407
        %v2437 = vadd.f32 %v2365, %v2411
        %v2438 = vadd.f32 %v2366, %v2407
        %v2439 = vadd.f32 %v2367, %v2411
        %v2440 = vadd.f32 %v2368, %v2407
        %v2441 = vadd.f32 %v2369, %v2411
        %v2442 = vadd.f32 %v2370, %v2407
        %v2443 = vadd.f32 %v2371, %v2411
        %v2444 = vadd.f32 %v2372, %v2407
        %v2445 = vadd.f32 %v2373, %v2411
        %v2446 = vadd.f32 %v2374, %v2407
        %v2447 = vadd.f32 %v2375, %v2411
        %v2448 = vadd.f32 %v2376, %v2407
        %v2449 = vadd.f32 %v2377, %v2411
        %v2450 = vadd.f32 %v2378, %v2407
        %v2451 = vadd.f32 %v2379, %v2411
        %v2452 = vadd.f32 %v2380, %v2407
        %v2453 = vadd.f32 %v2381, %v2411
        %v2454 = vadd.f32 %v2382, %v2407
        %v2455 = vadd.f32 %v2383, %v2411
        %v2456 = vadd.f32 %v2384, %v2407
        %v2457 = vadd.f32 %v2385, %v2411
        %v2458 = vadd.f32 %v2386, %v2407
        %v2459 = vadd.f32 %v2387, %v2411
        %v2460 = vadd.f32 %v2388, %v2407
        %v2461 = vadd.f32 %v2389, %v2411
        %v2462 = vadd.f32 %v2390, %v2407
        %v2463 = vadd.f32 %v2391, %v2411
        %v2464 = vadd.f32 %v2392, %v2407
        %v2465 = vadd.f32 %v2393, %v2411
        %v2466 = vadd.f32 %v2394, %v2407
        %v2467 = vadd.f32 %v2395, %v2411
        %v2468 = vadd.f32 %v2396, %v2407
        %v2469 = vadd.f32 %v2397, %v2411
        %v2470 = vadd.f32 %v2398, %v2407
        %v2471 = vadd.f32 %v2399, %v2411
        %v2472 = vadd.f32 %v2400, %v2407
        %v2473 = vadd.f32 %v2401, %v2411
        %v2474 = vadd.f32 %v2402, %v2407
        %v2475 = vadd.f32 %v2403, %v2411
        %v2476 = vxor.u32 %v2412, 2147483648
        %v2477 = vxor.u32 %v2413, 2147483648
        %v2478 = vxor.u32 %v2414, 2147483648
        %v2479 = vxor.u32 %v2415, 2147483648
        %v2480 = vxor.u32 %v2416, 2147483648
        %v2481 = vxor.u32 %v2417, 2147483648
        %v2482 = vxor.u32 %v2418, 2147483648
        %v2483 = vxor.u32 %v2419, 2147483648
        %v2484 = vxor.u32 %v2420, 2147483648
        %v2485 = vxor.u32 %v2421, 2147483648
        %v2486 = vxor.u32 %v2422, 2147483648
        %v2487 = vxor.u32 %v2423, 2147483648
        %v2488 = vxor.u32 %v2424, 2147483648
        %v2489 = vxor.u32 %v2425, 2147483648
        %v2490 = vxor.u32 %v2426, 2147483648
        %v2491 = vxor.u32 %v2427, 2147483648
        %v2492 = vxor.u32 %v2428, 2147483648
        %v2493 = vxor.u32 %v2429, 2147483648
        %v2494 = vxor.u32 %v2430, 2147483648
        %v2495 = vxor.u32 %v2431, 2147483648
        %v2496 = vxor.u32 %v2432, 2147483648
        %v2497 = vxor.u32 %v2433, 2147483648
        %v2498 = vxor.u32 %v2434, 2147483648
        %v2499 = vxor.u32 %v2435, 2147483648
        %v2500 = vxor.u32 %v2436, 2147483648
        %v2501 = vxor.u32 %v2437, 2147483648
        %v2502 = vxor.u32 %v2438, 2147483648
        %v2503 = vxor.u32 %v2439, 2147483648
        %v2504 = vxor.u32 %v2440, 2147483648
        %v2505 = vxor.u32 %v2441, 2147483648
        %v2506 = vxor.u32 %v2442, 2147483648
        %v2507 = vxor.u32 %v2443, 2147483648
        %v2508 = vxor.u32 %v2444, 2147483648
        %v2509 = vxor.u32 %v2445, 2147483648
        %v2510 = vxor.u32 %v2446, 2147483648
        %v2511 = vxor.u32 %v2447, 2147483648
        %v2512 = vxor.u32 %v2448, 2147483648
        %v2513 = vxor.u32 %v2449, 2147483648
        %v2514 = vxor.u32 %v2450, 2147483648
        %v2515 = vxor.u32 %v2451, 2147483648
        %v2516 = vxor.u32 %v2452, 2147483648
        %v2517 = vxor.u32 %v2453, 2147483648
        %v2518 = vxor.u32 %v2454, 2147483648
        %v2519 = vxor.u32 %v2455, 2147483648
        %v2520 = vxor.u32 %v2456, 2147483648
        %v2521 = vxor.u32 %v2457, 2147483648
        %v2522 = vxor.u32 %v2458, 2147483648
        %v2523 = vxor.u32 %v2459, 2147483648
        %v2524 = vxor.u32 %v2460, 2147483648
        %v2525 = vxor.u32 %v2461, 2147483648
        %v2526 = vxor.u32 %v2462, 2147483648
        %v2527 = vxor.u32 %v2463, 2147483648
        %v2528 = vxor.u32 %v2464, 2147483648
        %v2529 = vxor.u32 %v2465, 2147483648
        %v2530 = vxor.u32 %v2466, 2147483648
        %v2531 = vxor.u32 %v2467, 2147483648
        %v2532 = vxor.u32 %v2468, 2147483648
        %v2533 = vxor.u32 %v2469, 2147483648
        %v2534 = vxor.u32 %v2470, 2147483648
        %v2535 = vxor.u32 %v2471, 2147483648
        %v2536 = vxor.u32 %v2472, 2147483648
        %v2537 = vxor.u32 %v2473, 2147483648
        %v2538 = vxor.u32 %v2474, 2147483648
        %v2539 = vxor.u32 %v2475, 2147483648
        %v2540 = vmul.f32 %v2476, 1.442695
        %v2541 = vpow.pop %v2540
        %v2542 = vmul.f32 %v2477, 1.442695
        %v2543 = vpow.pop %v2542
        %v2544 = vmul.f32 %v2478, 1.442695
        %v2545 = vpow.pop %v2544
        %v2546 = vmul.f32 %v2479, 1.442695
        %v2547 = vpow.pop %v2546
        %v2548 = vmul.f32 %v2480, 1.442695
        %v2549 = vpow.pop %v2548
        %v2550 = vmul.f32 %v2481, 1.442695
        %v2551 = vpow.pop %v2550
        %v2552 = vmul.f32 %v2482, 1.442695
        %v2553 = vpow.pop %v2552
        %v2554 = vmul.f32 %v2483, 1.442695
        %v2555 = vpow.pop %v2554
        %v2556 = vmul.f32 %v2484, 1.442695
        %v2557 = vpow.pop %v2556
        %v2558 = vmul.f32 %v2485, 1.442695
        %v2559 = vpow.pop %v2558
        %v2560 = vmul.f32 %v2486, 1.442695
        %v2561 = vpow.pop %v2560
        %v2562 = vmul.f32 %v2487, 1.442695
        %v2563 = vpow.pop %v2562
        %v2564 = vmul.f32 %v2488, 1.442695
        %v2565 = vpow.pop %v2564
        %v2566 = vmul.f32 %v2489, 1.442695
        %v2567 = vpow.pop %v2566
        %v2568 = vmul.f32 %v2490, 1.442695
        %v2569 = vpow.pop %v2568
        %v2570 = vmul.f32 %v2491, 1.442695
        %v2571 = vpow.pop %v2570
        %v2572 = vmul.f32 %v2492, 1.442695
        %v2573 = vpow.pop %v2572
        %v2574 = vmul.f32 %v2493, 1.442695
        %v2575 = vpow.pop %v2574
        %v2576 = vmul.f32 %v2494, 1.442695
        %v2577 = vpow.pop %v2576
        %v2578 = vmul.f32 %v2495, 1.442695
        %v2579 = vpow.pop %v2578
        %v2580 = vmul.f32 %v2496, 1.442695
        %v2581 = vpow.pop %v2580
        %v2582 = vmul.f32 %v2497, 1.442695
        %v2583 = vpow.pop %v2582
        %v2584 = vmul.f32 %v2498, 1.442695
        %v2585 = vpow.pop %v2584
        %v2586 = vmul.f32 %v2499, 1.442695
        %v2587 = vpow.pop %v2586
        %v2588 = vmul.f32 %v2500, 1.442695
        %v2589 = vpow.pop %v2588
        %v2590 = vmul.f32 %v2501, 1.442695
        %v2591 = vpow.pop %v2590
        %v2592 = vmul.f32 %v2502, 1.442695
        %v2593 = vpow.pop %v2592
        %v2594 = vmul.f32 %v2503, 1.442695
        %v2595 = vpow.pop %v2594
        %v2596 = vmul.f32 %v2504, 1.442695
        %v2597 = vpow.pop %v2596
        %v2598 = vmul.f32 %v2505, 1.442695
        %v2599 = vpow.pop %v2598
        %v2600 = vmul.f32 %v2506, 1.442695
        %v2601 = vpow.pop %v2600
        %v2602 = vmul.f32 %v2507, 1.442695
        %v2603 = vpow.pop %v2602
        %v2604 = vmul.f32 %v2508, 1.442695
        %v2605 = vpow.pop %v2604
        %v2606 = vmul.f32 %v2509, 1.442695
        %v2607 = vpow.pop %v2606
        %v2608 = vmul.f32 %v2510, 1.442695
        %v2609 = vpow.pop %v2608
        %v2610 = vmul.f32 %v2511, 1.442695
        %v2611 = vpow.pop %v2610
        %v2612 = vmul.f32 %v2512, 1.442695
        %v2613 = vpow.pop %v2612
        %v2614 = vmul.f32 %v2513, 1.442695
        %v2615 = vpow.pop %v2614
        %v2616 = vmul.f32 %v2514, 1.442695
        %v2617 = vpow.pop %v2616
        %v2618 = vmul.f32 %v2515, 1.442695
        %v2619 = vpow.pop %v2618
        %v2620 = vmul.f32 %v2516, 1.442695
        %v2621 = vpow.pop %v2620
        %v2622 = vmul.f32 %v2517, 1.442695
        %v2623 = vpow.pop %v2622
        %v2624 = vmul.f32 %v2518, 1.442695
        %v2625 = vpow.pop %v2624
        %v2626 = vmul.f32 %v2519, 1.442695
        %v2627 = vpow.pop %v2626
        %v2628 = vmul.f32 %v2520, 1.442695
        %v2629 = vpow.pop %v2628
        %v2630 = vmul.f32 %v2521, 1.442695
        %v2631 = vpow.pop %v2630
        %v2632 = vmul.f32 %v2522, 1.442695
        %v2633 = vpow.pop %v2632
        %v2634 = vmul.f32 %v2523, 1.442695
        %v2635 = vpow.pop %v2634
        %v2636 = vmul.f32 %v2524, 1.442695
        %v2637 = vpow.pop %v2636
        %v2638 = vmul.f32 %v2525, 1.442695
        %v2639 = vpow.pop %v2638
        %v2640 = vmul.f32 %v2526, 1.442695
        %v2641 = vpow.pop %v2640
        %v2642 = vmul.f32 %v2527, 1.442695
        %v2643 = vpow.pop %v2642
        %v2644 = vmul.f32 %v2528, 1.442695
        %v2645 = vpow.pop %v2644
        %v2646 = vmul.f32 %v2529, 1.442695
        %v2647 = vpow.pop %v2646
        %v2648 = vmul.f32 %v2530, 1.442695
        %v2649 = vpow.pop %v2648
        %v2650 = vmul.f32 %v2531, 1.442695
        %v2651 = vpow.pop %v2650
        %v2652 = vmul.f32 %v2532, 1.442695
        %v2653 = vpow.pop %v2652
        %v2654 = vmul.f32 %v2533, 1.442695
        %v2655 = vpow.pop %v2654
        %v2656 = vmul.f32 %v2534, 1.442695
        %v2657 = vpow.pop %v2656
        %v2658 = vmul.f32 %v2535, 1.442695
        %v2659 = vpow.pop %v2658
        %v2660 = vmul.f32 %v2536, 1.442695
        %v2661 = vpow.pop %v2660
        %v2662 = vmul.f32 %v2537, 1.442695
        %v2663 = vpow.pop %v2662
        %v2664 = vmul.f32 %v2538, 1.442695
        %v2665 = vpow.pop %v2664
        %v2666 = vmul.f32 %v2539, 1.442695
        %v2667 = vpow.pop %v2666
        %v2668 = vadd.f32 %v2541, 1.0
        %v2669 = vadd.f32 %v2543, 1.0
        %v2670 = vadd.f32 %v2545, 1.0
        %v2671 = vadd.f32 %v2547, 1.0
        %v2672 = vadd.f32 %v2549, 1.0
        %v2673 = vadd.f32 %v2551, 1.0
        %v2674 = vadd.f32 %v2553, 1.0
        %v2675 = vadd.f32 %v2555, 1.0
        %v2676 = vadd.f32 %v2557, 1.0
        %v2677 = vadd.f32 %v2559, 1.0
        %v2678 = vadd.f32 %v2561, 1.0
        %v2679 = vadd.f32 %v2563, 1.0
        %v2680 = vadd.f32 %v2565, 1.0
        %v2681 = vadd.f32 %v2567, 1.0
        %v2682 = vadd.f32 %v2569, 1.0
        %v2683 = vadd.f32 %v2571, 1.0
        %v2684 = vadd.f32 %v2573, 1.0
        %v2685 = vadd.f32 %v2575, 1.0
        %v2686 = vadd.f32 %v2577, 1.0
        %v2687 = vadd.f32 %v2579, 1.0
        %v2688 = vadd.f32 %v2581, 1.0
        %v2689 = vadd.f32 %v2583, 1.0
        %v2690 = vadd.f32 %v2585, 1.0
        %v2691 = vadd.f32 %v2587, 1.0
        %v2692 = vadd.f32 %v2589, 1.0
        %v2693 = vadd.f32 %v2591, 1.0
        %v2694 = vadd.f32 %v2593, 1.0
        %v2695 = vadd.f32 %v2595, 1.0
        %v2696 = vadd.f32 %v2597, 1.0
        %v2697 = vadd.f32 %v2599, 1.0
        %v2698 = vadd.f32 %v2601, 1.0
        %v2699 = vadd.f32 %v2603, 1.0
        %v2700 = vadd.f32 %v2605, 1.0
        %v2701 = vadd.f32 %v2607, 1.0
        %v2702 = vadd.f32 %v2609, 1.0
        %v2703 = vadd.f32 %v2611, 1.0
        %v2704 = vadd.f32 %v2613, 1.0
        %v2705 = vadd.f32 %v2615, 1.0
        %v2706 = vadd.f32 %v2617, 1.0
        %v2707 = vadd.f32 %v2619, 1.0
        %v2708 = vadd.f32 %v2621, 1.0
        %v2709 = vadd.f32 %v2623, 1.0
        %v2710 = vadd.f32 %v2625, 1.0
        %v2711 = vadd.f32 %v2627, 1.0
        %v2712 = vadd.f32 %v2629, 1.0
        %v2713 = vadd.f32 %v2631, 1.0
        %v2714 = vadd.f32 %v2633, 1.0
        %v2715 = vadd.f32 %v2635, 1.0
        %v2716 = vadd.f32 %v2637, 1.0
        %v2717 = vadd.f32 %v2639, 1.0
        %v2718 = vadd.f32 %v2641, 1.0
        %v2719 = vadd.f32 %v2643, 1.0
        %v2720 = vadd.f32 %v2645, 1.0
        %v2721 = vadd.f32 %v2647, 1.0
        %v2722 = vadd.f32 %v2649, 1.0
        %v2723 = vadd.f32 %v2651, 1.0
        %v2724 = vadd.f32 %v2653, 1.0
        %v2725 = vadd.f32 %v2655, 1.0
        %v2726 = vadd.f32 %v2657, 1.0
        %v2727 = vadd.f32 %v2659, 1.0
        %v2728 = vadd.f32 %v2661, 1.0
        %v2729 = vadd.f32 %v2663, 1.0
        %v2730 = vadd.f32 %v2665, 1.0
        %v2731 = vadd.f32 %v2667, 1.0
        %v2732 = vrcp.pop %v2668
        %v2733 = vmul.f32 1.0, %v2732
        %v2734 = vrcp.pop %v2669
        %v2735 = vmul.f32 1.0, %v2734
        %v2736 = vrcp.pop %v2670
        %v2737 = vmul.f32 1.0, %v2736
        %v2738 = vrcp.pop %v2671
        %v2739 = vmul.f32 1.0, %v2738
        %v2740 = vrcp.pop %v2672
        %v2741 = vmul.f32 1.0, %v2740
        %v2742 = vrcp.pop %v2673
        %v2743 = vmul.f32 1.0, %v2742
        %v2744 = vrcp.pop %v2674
        %v2745 = vmul.f32 1.0, %v2744
        %v2746 = vrcp.pop %v2675
        %v2747 = vmul.f32 1.0, %v2746
        %v2748 = vrcp.pop %v2676
        %v2749 = vmul.f32 1.0, %v2748
        %v2750 = vrcp.pop %v2677
        %v2751 = vmul.f32 1.0, %v2750
        %v2752 = vrcp.pop %v2678
        %v2753 = vmul.f32 1.0, %v2752
        %v2754 = vrcp.pop %v2679
        %v2755 = vmul.f32 1.0, %v2754
        %v2756 = vrcp.pop %v2680
        %v2757 = vmul.f32 1.0, %v2756
        %v2758 = vrcp.pop %v2681
        %v2759 = vmul.f32 1.0, %v2758
        %v2760 = vrcp.pop %v2682
        %v2761 = vmul.f32 1.0, %v2760
        %v2762 = vrcp.pop %v2683
        %v2763 = vmul.f32 1.0, %v2762
        %v2764 = vrcp.pop %v2684
        %v2765 = vmul.f32 1.0, %v2764
        %v2766 = vrcp.pop %v2685
        %v2767 = vmul.f32 1.0, %v2766
        %v2768 = vrcp.pop %v2686
        %v2769 = vmul.f32 1.0, %v2768
        %v2770 = vrcp.pop %v2687
        %v2771 = vmul.f32 1.0, %v2770
        %v2772 = vrcp.pop %v2688
        %v2773 = vmul.f32 1.0, %v2772
        %v2774 = vrcp.pop %v2689
        %v2775 = vmul.f32 1.0, %v2774
        %v2776 = vrcp.pop %v2690
        %v2777 = vmul.f32 1.0, %v2776
        %v2778 = vrcp.pop %v2691
        %v2779 = vmul.f32 1.0, %v2778
        %v2780 = vrcp.pop %v2692
        %v2781 = vmul.f32 1.0, %v2780
        %v2782 = vrcp.pop %v2693
        %v2783 = vmul.f32 1.0, %v2782
        %v2784 = vrcp.pop %v2694
        %v2785 = vmul.f32 1.0, %v2784
        %v2786 = vrcp.pop %v2695
        %v2787 = vmul.f32 1.0, %v2786
        %v2788 = vrcp.pop %v2696
        %v2789 = vmul.f32 1.0, %v2788
        %v2790 = vrcp.pop %v2697
        %v2791 = vmul.f32 1.0, %v2790
        %v2792 = vrcp.pop %v2698
        %v2793 = vmul.f32 1.0, %v2792
        %v2794 = vrcp.pop %v2699
        %v2795 = vmul.f32 1.0, %v2794
        %v2796 = vrcp.pop %v2700
        %v2797 = vmul.f32 1.0, %v2796
        %v2798 = vrcp.pop %v2701
        %v2799 = vmul.f32 1.0, %v2798
        %v2800 = vrcp.pop %v2702
        %v2801 = vmul.f32 1.0, %v2800
        %v2802 = vrcp.pop %v2703
        %v2803 = vmul.f32 1.0, %v2802
        %v2804 = vrcp.pop %v2704
        %v2805 = vmul.f32 1.0, %v2804
        %v2806 = vrcp.pop %v2705
        %v2807 = vmul.f32 1.0, %v2806
        %v2808 = vrcp.pop %v2706
        %v2809 = vmul.f32 1.0, %v2808
        %v2810 = vrcp.pop %v2707
        %v2811 = vmul.f32 1.0, %v2810
        %v2812 = vrcp.pop %v2708
        %v2813 = vmul.f32 1.0, %v2812
        %v2814 = vrcp.pop %v2709
        %v2815 = vmul.f32 1.0, %v2814
        %v2816 = vrcp.pop %v2710
        %v2817 = vmul.f32 1.0, %v2816
        %v2818 = vrcp.pop %v2711
        %v2819 = vmul.f32 1.0, %v2818
        %v2820 = vrcp.pop %v2712
        %v2821 = vmul.f32 1.0, %v2820
        %v2822 = vrcp.pop %v2713
        %v2823 = vmul.f32 1.0, %v2822
        %v2824 = vrcp.pop %v2714
        %v2825 = vmul.f32 1.0, %v2824
        %v2826 = vrcp.pop %v2715
        %v2827 = vmul.f32 1.0, %v2826
        %v2828 = vrcp.pop %v2716
        %v2829 = vmul.f32 1.0, %v2828
        %v2830 = vrcp.pop %v2717
        %v2831 = vmul.f32 1.0, %v2830
        %v2832 = vrcp.pop %v2718
        %v2833 = vmul.f32 1.0, %v2832
        %v2834 = vrcp.pop %v2719
        %v2835 = vmul.f32 1.0, %v2834
        %v2836 = vrcp.pop %v2720
        %v2837 = vmul.f32 1.0, %v2836
        %v2838 = vrcp.pop %v2721
        %v2839 = vmul.f32 1.0, %v2838
        %v2840 = vrcp.pop %v2722
        %v2841 = vmul.f32 1.0, %v2840
        %v2842 = vrcp.pop %v2723
        %v2843 = vmul.f32 1.0, %v2842
        %v2844 = vrcp.pop %v2724
        %v2845 = vmul.f32 1.0, %v2844
        %v2846 = vrcp.pop %v2725
        %v2847 = vmul.f32 1.0, %v2846
        %v2848 = vrcp.pop %v2726
        %v2849 = vmul.f32 1.0, %v2848
        %v2850 = vrcp.pop %v2727
        %v2851 = vmul.f32 1.0, %v2850
        %v2852 = vrcp.pop %v2728
        %v2853 = vmul.f32 1.0, %v2852
        %v2854 = vrcp.pop %v2729
        %v2855 = vmul.f32 1.0, %v2854
        %v2856 = vrcp.pop %v2730
        %v2857 = vmul.f32 1.0, %v2856
        %v2858 = vrcp.pop %v2731
        %v2859 = vmul.f32 1.0, %v2858
        %v2860 = vmul.f32 %v2412, %v2733
        %v2861 = vmul.f32 %v2413, %v2735
        %v2862 = vmul.f32 %v2414, %v2737
        %v2863 = vmul.f32 %v2415, %v2739
        %v2864 = vmul.f32 %v2416, %v2741
        %v2865 = vmul.f32 %v2417, %v2743
        %v2866 = vmul.f32 %v2418, %v2745
        %v2867 = vmul.f32 %v2419, %v2747
        %v2868 = vmul.f32 %v2420, %v2749
        %v2869 = vmul.f32 %v2421, %v2751
        %v2870 = vmul.f32 %v2422, %v2753
        %v2871 = vmul.f32 %v2423, %v2755
        %v2872 = vmul.f32 %v2424, %v2757
        %v2873 = vmul.f32 %v2425, %v2759
        %v2874 = vmul.f32 %v2426, %v2761
        %v2875 = vmul.f32 %v2427, %v2763
        %v2876 = vmul.f32 %v2428, %v2765
        %v2877 = vmul.f32 %v2429, %v2767
        %v2878 = vmul.f32 %v2430, %v2769
        %v2879 = vmul.f32 %v2431, %v2771
        %v2880 = vmul.f32 %v2432, %v2773
        %v2881 = vmul.f32 %v2433, %v2775
        %v2882 = vmul.f32 %v2434, %v2777
        %v2883 = vmul.f32 %v2435, %v2779
        %v2884 = vmul.f32 %v2436, %v2781
        %v2885 = vmul.f32 %v2437, %v2783
        %v2886 = vmul.f32 %v2438, %v2785
        %v2887 = vmul.f32 %v2439, %v2787
        %v2888 = vmul.f32 %v2440, %v2789
        %v2889 = vmul.f32 %v2441, %v2791
        %v2890 = vmul.f32 %v2442, %v2793
        %v2891 = vmul.f32 %v2443, %v2795
        %v2892 = vmul.f32 %v2444, %v2797
        %v2893 = vmul.f32 %v2445, %v2799
        %v2894 = vmul.f32 %v2446, %v2801
        %v2895 = vmul.f32 %v2447, %v2803
        %v2896 = vmul.f32 %v2448, %v2805
        %v2897 = vmul.f32 %v2449, %v2807
        %v2898 = vmul.f32 %v2450, %v2809
        %v2899 = vmul.f32 %v2451, %v2811
        %v2900 = vmul.f32 %v2452, %v2813
        %v2901 = vmul.f32 %v2453, %v2815
        %v2902 = vmul.f32 %v2454, %v2817
        %v2903 = vmul.f32 %v2455, %v2819
        %v2904 = vmul.f32 %v2456, %v2821
        %v2905 = vmul.f32 %v2457, %v2823
        %v2906 = vmul.f32 %v2458, %v2825
        %v2907 = vmul.f32 %v2459, %v2827
        %v2908 = vmul.f32 %v2460, %v2829
        %v2909 = vmul.f32 %v2461, %v2831
        %v2910 = vmul.f32 %v2462, %v2833
        %v2911 = vmul.f32 %v2463, %v2835
        %v2912 = vmul.f32 %v2464, %v2837
        %v2913 = vmul.f32 %v2465, %v2839
        %v2914 = vmul.f32 %v2466, %v2841
        %v2915 = vmul.f32 %v2467, %v2843
        %v2916 = vmul.f32 %v2468, %v2845
        %v2917 = vmul.f32 %v2469, %v2847
        %v2918 = vmul.f32 %v2470, %v2849
        %v2919 = vmul.f32 %v2471, %v2851
        %v2920 = vmul.f32 %v2472, %v2853
        %v2921 = vmul.f32 %v2473, %v2855
        %v2922 = vmul.f32 %v2474, %v2857
        %v2923 = vmul.f32 %v2475, %v2859
        %v2924 = vld [vmem:[%s2] sm:$0xff]
        %v2925 = vld [vmem:[%s2 + $0x8] sm:$0xff]
        %v2926 = vld [vmem:[%s2 + $0x10] sm:$0xff]
        %v2927 = vld [vmem:[%s2 + $0x18] sm:$0xff]
        %v2928 = vld [vmem:[%s2 + $0x20] sm:$0xff]
        %v2929 = vld [vmem:[%s2 + $0x28] sm:$0xff]
        %v2930 = vld [vmem:[%s2 + $0x30] sm:$0xff]
        %v2931 = vld [vmem:[%s2 + $0x38] sm:$0xff]
        %v2932 = vld [vmem:[%s2 + $0x40] sm:$0xff]
        %v2933 = vld [vmem:[%s2 + $0x48] sm:$0xff]
        %v2934 = vld [vmem:[%s2 + $0x50] sm:$0xff]
        %v2935 = vld [vmem:[%s2 + $0x58] sm:$0xff]
        %v2936 = vld [vmem:[%s2 + $0x60] sm:$0xff]
        %v2937 = vld [vmem:[%s2 + $0x68] sm:$0xff]
        %v2938 = vld [vmem:[%s2 + $0x70] sm:$0xff]
        %v2939 = vld [vmem:[%s2 + $0x78] sm:$0xff]
        %v2940 = vld [vmem:[%s2 + $0x80] sm:$0xff]
        %v2941 = vld [vmem:[%s2 + $0x88] sm:$0xff]
        %v2942 = vld [vmem:[%s2 + $0x90] sm:$0xff]
        %v2943 = vld [vmem:[%s2 + $0x98] sm:$0xff]
        %v2944 = vld [vmem:[%s2 + $0xa0] sm:$0xff]
        %v2945 = vld [vmem:[%s2 + $0xa8] sm:$0xff]
        %v2946 = vld [vmem:[%s2 + $0xb0] sm:$0xff]
        %v2947 = vld [vmem:[%s2 + $0xb8] sm:$0xff]
        %v2948 = vld [vmem:[%s2 + $0xc0] sm:$0xff]
        %v2949 = vld [vmem:[%s2 + $0xc8] sm:$0xff]
        %v2950 = vld [vmem:[%s2 + $0xd0] sm:$0xff]
        %v2951 = vld [vmem:[%s2 + $0xd8] sm:$0xff]
        %v2952 = vld [vmem:[%s2 + $0xe0] sm:$0xff]
        %v2953 = vld [vmem:[%s2 + $0xe8] sm:$0xff]
        %v2954 = vld [vmem:[%s2 + $0xf0] sm:$0xff]
        %v2955 = vld [vmem:[%s2 + $0xf8] sm:$0xff]
        %v2956 = vld [vmem:[%s2 + $0x100] sm:$0xff]
        %v2957 = vld [vmem:[%s2 + $0x108] sm:$0xff]
        %v2958 = vld [vmem:[%s2 + $0x110] sm:$0xff]
        %v2959 = vld [vmem:[%s2 + $0x118] sm:$0xff]
        %v2960 = vld [vmem:[%s2 + $0x120] sm:$0xff]
        %v2961 = vld [vmem:[%s2 + $0x128] sm:$0xff]
        %v2962 = vld [vmem:[%s2 + $0x130] sm:$0xff]
        %v2963 = vld [vmem:[%s2 + $0x138] sm:$0xff]
        %v2964 = vld [vmem:[%s2 + $0x140] sm:$0xff]
        %v2965 = vld [vmem:[%s2 + $0x148] sm:$0xff]
        %v2966 = vld [vmem:[%s2 + $0x150] sm:$0xff]
        %v2967 = vld [vmem:[%s2 + $0x158] sm:$0xff]
        %v2968 = vld [vmem:[%s2 + $0x160] sm:$0xff]
        %v2969 = vld [vmem:[%s2 + $0x168] sm:$0xff]
        %v2970 = vld [vmem:[%s2 + $0x170] sm:$0xff]
        %v2971 = vld [vmem:[%s2 + $0x178] sm:$0xff]
        %v2972 = vld [vmem:[%s2 + $0x180] sm:$0xff]
        %v2973 = vld [vmem:[%s2 + $0x188] sm:$0xff]
        %v2974 = vld [vmem:[%s2 + $0x190] sm:$0xff]
        %v2975 = vld [vmem:[%s2 + $0x198] sm:$0xff]
        %v2976 = vld [vmem:[%s2 + $0x1a0] sm:$0xff]
        %v2977 = vld [vmem:[%s2 + $0x1a8] sm:$0xff]
        %v2978 = vld [vmem:[%s2 + $0x1b0] sm:$0xff]
        %v2979 = vld [vmem:[%s2 + $0x1b8] sm:$0xff]
        %v2980 = vld [vmem:[%s2 + $0x1c0] sm:$0xff]
        %v2981 = vld [vmem:[%s2 + $0x1c8] sm:$0xff]
        %v2982 = vld [vmem:[%s2 + $0x1d0] sm:$0xff]
        %v2983 = vld [vmem:[%s2 + $0x1d8] sm:$0xff]
        %v2984 = vld [vmem:[%s2 + $0x1e0] sm:$0xff]
        %v2985 = vld [vmem:[%s2 + $0x1e8] sm:$0xff]
        %v2986 = vld [vmem:[%s2 + $0x1f0] sm:$0xff]
        %v2987 = vld [vmem:[%s2 + $0x1f8] sm:$0xff]
        %2988 = vmatprep.subr.mxu0 %v2955
        %2989 = vmatpush1.msra.mxu0 %v2954
        %2990 = vmatprep.subr.mxu0 %v2953
        %2991 = vmatpush1.msra.mxu0 %v2952
        %2992 = vmatprep.subr.mxu0 %v2951
        %2993 = vmatpush1.msra.mxu0 %v2950
        %2994 = vmatprep.subr.mxu0 %v2949
        %2995 = vmatpush1.msra.mxu0 %v2948
        %2996 = vmatprep.subr.mxu0 %v2947
        %2997 = vmatpush1.msra.mxu0 %v2946
        %2998 = vmatprep.subr.mxu0 %v2945
        %2999 = vmatpush1.msra.mxu0 %v2944
        %3000 = vmatprep.subr.mxu0 %v2943
        %3001 = vmatpush1.msra.mxu0 %v2942
        %3002 = vmatprep.subr.mxu0 %v2941
        %3003 = vmatpush1.msra.mxu0 %v2940
        %3004 = vmatprep.subr.mxu0 %v2939
        %3005 = vmatpush1.msra.mxu0 %v2938
        %3006 = vmatprep.subr.mxu0 %v2937
        %3007 = vmatpush1.msra.mxu0 %v2936
        %3008 = vmatprep.subr.mxu0 %v2935
        %3009 = vmatpush1.msra.mxu0 %v2934
        %3010 = vmatprep.subr.mxu0 %v2933
        %3011 = vmatpush1.msra.mxu0 %v2932
        %3012 = vmatprep.subr.mxu0 %v2931
        %3013 = vmatpush1.msra.mxu0 %v2930
        %3014 = vmatprep.subr.mxu0 %v2929
        %3015 = vmatpush1.msra.mxu0 %v2928
        %3016 = vmatprep.subr.mxu0 %v2927
        %3017 = vmatpush1.msra.mxu0 %v2926
        %3018 = vmatprep.subr.mxu0 %v2925
        %3019 = vmatpush1.msra.mxu0 %v2924
        %3020 = vmatprep.subr.mxu0 %v2987
        %3021 = vmatpush2.msra.mxu0 %v2986
        %3022 = vmatprep.subr.mxu0 %v2985
        %3023 = vmatpush2.msra.mxu0 %v2984
        %3024 = vmatprep.subr.mxu0 %v2983
        %3025 = vmatpush2.msra.mxu0 %v2982
        %3026 = vmatprep.subr.mxu0 %v2981
        %3027 = vmatpush2.msra.mxu0 %v2980
        %3028 = vmatprep.subr.mxu0 %v2979
        %3029 = vmatpush2.msra.mxu0 %v2978
        %3030 = vmatprep.subr.mxu0 %v2977
        %3031 = vmatpush2.msra.mxu0 %v2976
        %3032 = vmatprep.subr.mxu0 %v2975
        %3033 = vmatpush2.msra.mxu0 %v2974
        %3034 = vmatprep.subr.mxu0 %v2973
        %3035 = vmatpush2.msra.mxu0 %v2972
        %3036 = vmatprep.subr.mxu0 %v2971
        %3037 = vmatpush2.msra.mxu0 %v2970
        %3038 = vmatprep.subr.mxu0 %v2969
        %3039 = vmatpush2.msra.mxu0 %v2968
        %3040 = vmatprep.subr.mxu0 %v2967
        %3041 = vmatpush2.msra.mxu0 %v2966
        %3042 = vmatprep.subr.mxu0 %v2965
        %3043 = vmatpush2.msra.mxu0 %v2964
        %3044 = vmatprep.subr.mxu0 %v2963
        %3045 = vmatpush2.msra.mxu0 %v2962
        %3046 = vmatprep.subr.mxu0 %v2961
        %3047 = vmatpush2.msra.mxu0 %v2960
        %3048 = vmatprep.subr.mxu0 %v2959
        %3049 = vmatpush2.msra.mxu0 %v2958
        %3050 = vmatprep.subr.mxu0 %v2957
        %3051 = vmatpush2.msra.mxu0 %v2956
        %3052 = vmatprep.mubr.f32.mxu0 %v2861
        %3053 = vmatmul.mubr.f32.gmra.mxu0 %v2860
        %v3054 = vpop.f32.mrf.mxu0
        %v3055 = vadd.f32 0.0, %v3054
        %v3056 = vpop.f32.mrf.mxu0
        %v3057 = vadd.f32 0.0, %v3056
        %3058 = vmatprep.mubr.f32.mxu0 %v2863
        %3059 = vmatmul.mubr.f32.gmra.mxu0 %v2862
        %v3060 = vpop.f32.mrf.mxu0
        %v3061 = vadd.f32 0.0, %v3060
        %v3062 = vpop.f32.mrf.mxu0
        %v3063 = vadd.f32 0.0, %v3062
        %3064 = vmatprep.mubr.f32.mxu0 %v2865
        %3065 = vmatmul.mubr.f32.gmra.mxu0 %v2864
        %v3066 = vpop.f32.mrf.mxu0
        %v3067 = vadd.f32 0.0, %v3066
        %v3068 = vpop.f32.mrf.mxu0
        %v3069 = vadd.f32 0.0, %v3068
        %3070 = vmatprep.mubr.f32.mxu0 %v2867
        %3071 = vmatmul.mubr.f32.gmra.mxu0 %v2866
        %v3072 = vpop.f32.mrf.mxu0
        %v3073 = vadd.f32 0.0, %v3072
        %v3074 = vpop.f32.mrf.mxu0
        %v3075 = vadd.f32 0.0, %v3074
        %3076 = vmatprep.mubr.f32.mxu0 %v2869
        %3077 = vmatmul.mubr.f32.gmra.mxu0 %v2868
        %v3078 = vpop.f32.mrf.mxu0
        %v3079 = vadd.f32 0.0, %v3078
        %v3080 = vpop.f32.mrf.mxu0
        %v3081 = vadd.f32 0.0, %v3080
        %3082 = vmatprep.mubr.f32.mxu0 %v2871
        %3083 = vmatmul.mubr.f32.gmra.mxu0 %v2870
        %v3084 = vpop.f32.mrf.mxu0
        %v3085 = vadd.f32 0.0, %v3084
        %v3086 = vpop.f32.mrf.mxu0
        %v3087 = vadd.f32 0.0, %v3086
        %3088 = vmatprep.mubr.f32.mxu0 %v2873
        %3089 = vmatmul.mubr.f32.gmra.mxu0 %v2872
        %v3090 = vpop.f32.mrf.mxu0
        %v3091 = vadd.f32 0.0, %v3090
        %v3092 = vpop.f32.mrf.mxu0
        %v3093 = vadd.f32 0.0, %v3092
        %3094 = vmatprep.mubr.f32.mxu0 %v2875
        %3095 = vmatmul.mubr.f32.gmra.mxu0 %v2874
        %v3096 = vpop.f32.mrf.mxu0
        %v3097 = vadd.f32 0.0, %v3096
        %v3098 = vpop.f32.mrf.mxu0
        %v3099 = vadd.f32 0.0, %v3098
        %3100 = vmatprep.mubr.f32.mxu0 %v2877
        %3101 = vmatmul.mubr.f32.gmra.mxu0 %v2876
        %v3102 = vpop.f32.mrf.mxu0
        %v3103 = vadd.f32 0.0, %v3102
        %v3104 = vpop.f32.mrf.mxu0
        %v3105 = vadd.f32 0.0, %v3104
        %3106 = vmatprep.mubr.f32.mxu0 %v2879
        %3107 = vmatmul.mubr.f32.gmra.mxu0 %v2878
        %v3108 = vpop.f32.mrf.mxu0
        %v3109 = vadd.f32 0.0, %v3108
        %v3110 = vpop.f32.mrf.mxu0
        %v3111 = vadd.f32 0.0, %v3110
        %3112 = vmatprep.mubr.f32.mxu0 %v2881
        %3113 = vmatmul.mubr.f32.gmra.mxu0 %v2880
        %v3114 = vpop.f32.mrf.mxu0
        %v3115 = vadd.f32 0.0, %v3114
        %v3116 = vpop.f32.mrf.mxu0
        %v3117 = vadd.f32 0.0, %v3116
        %3118 = vmatprep.mubr.f32.mxu0 %v2883
        %3119 = vmatmul.mubr.f32.gmra.mxu0 %v2882
        %v3120 = vpop.f32.mrf.mxu0
        %v3121 = vadd.f32 0.0, %v3120
        %v3122 = vpop.f32.mrf.mxu0
        %v3123 = vadd.f32 0.0, %v3122
        %3124 = vmatprep.mubr.f32.mxu0 %v2885
        %3125 = vmatmul.mubr.f32.gmra.mxu0 %v2884
        %v3126 = vpop.f32.mrf.mxu0
        %v3127 = vadd.f32 0.0, %v3126
        %v3128 = vpop.f32.mrf.mxu0
        %v3129 = vadd.f32 0.0, %v3128
        %3130 = vmatprep.mubr.f32.mxu0 %v2887
        %3131 = vmatmul.mubr.f32.gmra.mxu0 %v2886
        %v3132 = vpop.f32.mrf.mxu0
        %v3133 = vadd.f32 0.0, %v3132
        %v3134 = vpop.f32.mrf.mxu0
        %v3135 = vadd.f32 0.0, %v3134
        %3136 = vmatprep.mubr.f32.mxu0 %v2889
        %3137 = vmatmul.mubr.f32.gmra.mxu0 %v2888
        %v3138 = vpop.f32.mrf.mxu0
        %v3139 = vadd.f32 0.0, %v3138
        %v3140 = vpop.f32.mrf.mxu0
        %v3141 = vadd.f32 0.0, %v3140
        %3142 = vmatprep.mubr.f32.mxu0 %v2891
        %3143 = vmatmul.mubr.f32.gmra.mxu0 %v2890
        %v3144 = vpop.f32.mrf.mxu0
        %v3145 = vadd.f32 0.0, %v3144
        %v3146 = vpop.f32.mrf.mxu0
        %v3147 = vadd.f32 0.0, %v3146
        %3148 = vmatprep.mubr.f32.mxu0 %v2893
        %3149 = vmatmul.mubr.f32.gmra.mxu0 %v2892
        %v3150 = vpop.f32.mrf.mxu0
        %v3151 = vadd.f32 0.0, %v3150
        %v3152 = vpop.f32.mrf.mxu0
        %v3153 = vadd.f32 0.0, %v3152
        %3154 = vmatprep.mubr.f32.mxu0 %v2895
        %3155 = vmatmul.mubr.f32.gmra.mxu0 %v2894
        %v3156 = vpop.f32.mrf.mxu0
        %v3157 = vadd.f32 0.0, %v3156
        %v3158 = vpop.f32.mrf.mxu0
        %v3159 = vadd.f32 0.0, %v3158
        %3160 = vmatprep.mubr.f32.mxu0 %v2897
        %3161 = vmatmul.mubr.f32.gmra.mxu0 %v2896
        %v3162 = vpop.f32.mrf.mxu0
        %v3163 = vadd.f32 0.0, %v3162
        %v3164 = vpop.f32.mrf.mxu0
        %v3165 = vadd.f32 0.0, %v3164
        %3166 = vmatprep.mubr.f32.mxu0 %v2899
        %3167 = vmatmul.mubr.f32.gmra.mxu0 %v2898
        %v3168 = vpop.f32.mrf.mxu0
        %v3169 = vadd.f32 0.0, %v3168
        %v3170 = vpop.f32.mrf.mxu0
        %v3171 = vadd.f32 0.0, %v3170
        %3172 = vmatprep.mubr.f32.mxu0 %v2901
        %3173 = vmatmul.mubr.f32.gmra.mxu0 %v2900
        %v3174 = vpop.f32.mrf.mxu0
        %v3175 = vadd.f32 0.0, %v3174
        %v3176 = vpop.f32.mrf.mxu0
        %v3177 = vadd.f32 0.0, %v3176
        %3178 = vmatprep.mubr.f32.mxu0 %v2903
        %3179 = vmatmul.mubr.f32.gmra.mxu0 %v2902
        %v3180 = vpop.f32.mrf.mxu0
        %v3181 = vadd.f32 0.0, %v3180
        %v3182 = vpop.f32.mrf.mxu0
        %v3183 = vadd.f32 0.0, %v3182
        %3184 = vmatprep.mubr.f32.mxu0 %v2905
        %3185 = vmatmul.mubr.f32.gmra.mxu0 %v2904
        %v3186 = vpop.f32.mrf.mxu0
        %v3187 = vadd.f32 0.0, %v3186
        %v3188 = vpop.f32.mrf.mxu0
        %v3189 = vadd.f32 0.0, %v3188
        %3190 = vmatprep.mubr.f32.mxu0 %v2907
        %3191 = vmatmul.mubr.f32.gmra.mxu0 %v2906
        %v3192 = vpop.f32.mrf.mxu0
        %v3193 = vadd.f32 0.0, %v3192
        %v3194 = vpop.f32.mrf.mxu0
        %v3195 = vadd.f32 0.0, %v3194
        %3196 = vmatprep.mubr.f32.mxu0 %v2909
        %3197 = vmatmul.mubr.f32.gmra.mxu0 %v2908
        %v3198 = vpop.f32.mrf.mxu0
        %v3199 = vadd.f32 0.0, %v3198
        %v3200 = vpop.f32.mrf.mxu0
        %v3201 = vadd.f32 0.0, %v3200
        %3202 = vmatprep.mubr.f32.mxu0 %v2911
        %3203 = vmatmul.mubr.f32.gmra.mxu0 %v2910
        %v3204 = vpop.f32.mrf.mxu0
        %v3205 = vadd.f32 0.0, %v3204
        %v3206 = vpop.f32.mrf.mxu0
        %v3207 = vadd.f32 0.0, %v3206
        %3208 = vmatprep.mubr.f32.mxu0 %v2913
        %3209 = vmatmul.mubr.f32.gmra.mxu0 %v2912
        %v3210 = vpop.f32.mrf.mxu0
        %v3211 = vadd.f32 0.0, %v3210
        %v3212 = vpop.f32.mrf.mxu0
        %v3213 = vadd.f32 0.0, %v3212
        %3214 = vmatprep.mubr.f32.mxu0 %v2915
        %3215 = vmatmul.mubr.f32.gmra.mxu0 %v2914
        %v3216 = vpop.f32.mrf.mxu0
        %v3217 = vadd.f32 0.0, %v3216
        %v3218 = vpop.f32.mrf.mxu0
        %v3219 = vadd.f32 0.0, %v3218
        %3220 = vmatprep.mubr.f32.mxu0 %v2917
        %3221 = vmatmul.mubr.f32.gmra.mxu0 %v2916
        %v3222 = vpop.f32.mrf.mxu0
        %v3223 = vadd.f32 0.0, %v3222
        %v3224 = vpop.f32.mrf.mxu0
        %v3225 = vadd.f32 0.0, %v3224
        %3226 = vmatprep.mubr.f32.mxu0 %v2919
        %3227 = vmatmul.mubr.f32.gmra.mxu0 %v2918
        %v3228 = vpop.f32.mrf.mxu0
        %v3229 = vadd.f32 0.0, %v3228
        %v3230 = vpop.f32.mrf.mxu0
        %v3231 = vadd.f32 0.0, %v3230
        %3232 = vmatprep.mubr.f32.mxu0 %v2921
        %3233 = vmatmul.mubr.f32.gmra.mxu0 %v2920
        %v3234 = vpop.f32.mrf.mxu0
        %v3235 = vadd.f32 0.0, %v3234
        %v3236 = vpop.f32.mrf.mxu0
        %v3237 = vadd.f32 0.0, %v3236
        %3238 = vmatprep.mubr.f32.mxu0 %v2923
        %3239 = vmatmul.mubr.f32.gmra.mxu0 %v2922
        %v3240 = vpop.f32.mrf.mxu0
        %v3241 = vadd.f32 0.0, %v3240
        %v3242 = vpop.f32.mrf.mxu0
        %v3243 = vadd.f32 0.0, %v3242
        %3244 = vdwg.mxu0
        %s3245 = scalar_lea.vmem %s2, 512
        %v3246 = vld [vmem:[%s3245] sm:$0xff]
        %v3247 = vld [vmem:[%s3245 + $0x8] sm:$0xff]
        %v3248 = vld [vmem:[%s3245 + $0x10] sm:$0xff]
        %v3249 = vld [vmem:[%s3245 + $0x18] sm:$0xff]
        %v3250 = vld [vmem:[%s3245 + $0x20] sm:$0xff]
        %v3251 = vld [vmem:[%s3245 + $0x28] sm:$0xff]
        %v3252 = vld [vmem:[%s3245 + $0x30] sm:$0xff]
        %v3253 = vld [vmem:[%s3245 + $0x38] sm:$0xff]
        %v3254 = vld [vmem:[%s3245 + $0x40] sm:$0xff]
        %v3255 = vld [vmem:[%s3245 + $0x48] sm:$0xff]
        %v3256 = vld [vmem:[%s3245 + $0x50] sm:$0xff]
        %v3257 = vld [vmem:[%s3245 + $0x58] sm:$0xff]
        %v3258 = vld [vmem:[%s3245 + $0x60] sm:$0xff]
        %v3259 = vld [vmem:[%s3245 + $0x68] sm:$0xff]
        %v3260 = vld [vmem:[%s3245 + $0x70] sm:$0xff]
        %v3261 = vld [vmem:[%s3245 + $0x78] sm:$0xff]
        %v3262 = vld [vmem:[%s3245 + $0x80] sm:$0xff]
        %v3263 = vld [vmem:[%s3245 + $0x88] sm:$0xff]
        %v3264 = vld [vmem:[%s3245 + $0x90] sm:$0xff]
        %v3265 = vld [vmem:[%s3245 + $0x98] sm:$0xff]
        %v3266 = vld [vmem:[%s3245 + $0xa0] sm:$0xff]
        %v3267 = vld [vmem:[%s3245 + $0xa8] sm:$0xff]
        %v3268 = vld [vmem:[%s3245 + $0xb0] sm:$0xff]
        %v3269 = vld [vmem:[%s3245 + $0xb8] sm:$0xff]
        %v3270 = vld [vmem:[%s3245 + $0xc0] sm:$0xff]
        %v3271 = vld [vmem:[%s3245 + $0xc8] sm:$0xff]
        %v3272 = vld [vmem:[%s3245 + $0xd0] sm:$0xff]
        %v3273 = vld [vmem:[%s3245 + $0xd8] sm:$0xff]
        %v3274 = vld [vmem:[%s3245 + $0xe0] sm:$0xff]
        %v3275 = vld [vmem:[%s3245 + $0xe8] sm:$0xff]
        %v3276 = vld [vmem:[%s3245 + $0xf0] sm:$0xff]
        %v3277 = vld [vmem:[%s3245 + $0xf8] sm:$0xff]
        %v3278 = vld [vmem:[%s3245 + $0x100] sm:$0xff]
        %v3279 = vld [vmem:[%s3245 + $0x108] sm:$0xff]
        %v3280 = vld [vmem:[%s3245 + $0x110] sm:$0xff]
        %v3281 = vld [vmem:[%s3245 + $0x118] sm:$0xff]
        %v3282 = vld [vmem:[%s3245 + $0x120] sm:$0xff]
        %v3283 = vld [vmem:[%s3245 + $0x128] sm:$0xff]
        %v3284 = vld [vmem:[%s3245 + $0x130] sm:$0xff]
        %v3285 = vld [vmem:[%s3245 + $0x138] sm:$0xff]
        %v3286 = vld [vmem:[%s3245 + $0x140] sm:$0xff]
        %v3287 = vld [vmem:[%s3245 + $0x148] sm:$0xff]
        %v3288 = vld [vmem:[%s3245 + $0x150] sm:$0xff]
        %v3289 = vld [vmem:[%s3245 + $0x158] sm:$0xff]
        %v3290 = vld [vmem:[%s3245 + $0x160] sm:$0xff]
        %v3291 = vld [vmem:[%s3245 + $0x168] sm:$0xff]
        %v3292 = vld [vmem:[%s3245 + $0x170] sm:$0xff]
        %v3293 = vld [vmem:[%s3245 + $0x178] sm:$0xff]
        %v3294 = vld [vmem:[%s3245 + $0x180] sm:$0xff]
        %v3295 = vld [vmem:[%s3245 + $0x188] sm:$0xff]
        %v3296 = vld [vmem:[%s3245 + $0x190] sm:$0xff]
        %v3297 = vld [vmem:[%s3245 + $0x198] sm:$0xff]
        %v3298 = vld [vmem:[%s3245 + $0x1a0] sm:$0xff]
        %v3299 = vld [vmem:[%s3245 + $0x1a8] sm:$0xff]
        %v3300 = vld [vmem:[%s3245 + $0x1b0] sm:$0xff]
        %v3301 = vld [vmem:[%s3245 + $0x1b8] sm:$0xff]
        %v3302 = vld [vmem:[%s3245 + $0x1c0] sm:$0xff]
        %v3303 = vld [vmem:[%s3245 + $0x1c8] sm:$0xff]
        %v3304 = vld [vmem:[%s3245 + $0x1d0] sm:$0xff]
        %v3305 = vld [vmem:[%s3245 + $0x1d8] sm:$0xff]
        %v3306 = vld [vmem:[%s3245 + $0x1e0] sm:$0xff]
        %v3307 = vld [vmem:[%s3245 + $0x1e8] sm:$0xff]
        %v3308 = vld [vmem:[%s3245 + $0x1f0] sm:$0xff]
        %v3309 = vld [vmem:[%s3245 + $0x1f8] sm:$0xff]
        %3310 = vmatprep.subr.mxu0 %v3277
        %3311 = vmatpush1.msra.mxu0 %v3276
        %3312 = vmatprep.subr.mxu0 %v3275
        %3313 = vmatpush1.msra.mxu0 %v3274
        %3314 = vmatprep.subr.mxu0 %v3273
        %3315 = vmatpush1.msra.mxu0 %v3272
        %3316 = vmatprep.subr.mxu0 %v3271
        %3317 = vmatpush1.msra.mxu0 %v3270
        %3318 = vmatprep.subr.mxu0 %v3269
        %3319 = vmatpush1.msra.mxu0 %v3268
        %3320 = vmatprep.subr.mxu0 %v3267
        %3321 = vmatpush1.msra.mxu0 %v3266
        %3322 = vmatprep.subr.mxu0 %v3265
        %3323 = vmatpush1.msra.mxu0 %v3264
        %3324 = vmatprep.subr.mxu0 %v3263
        %3325 = vmatpush1.msra.mxu0 %v3262
        %3326 = vmatprep.subr.mxu0 %v3261
        %3327 = vmatpush1.msra.mxu0 %v3260
        %3328 = vmatprep.subr.mxu0 %v3259
        %3329 = vmatpush1.msra.mxu0 %v3258
        %3330 = vmatprep.subr.mxu0 %v3257
        %3331 = vmatpush1.msra.mxu0 %v3256
        %3332 = vmatprep.subr.mxu0 %v3255
        %3333 = vmatpush1.msra.mxu0 %v3254
        %3334 = vmatprep.subr.mxu0 %v3253
        %3335 = vmatpush1.msra.mxu0 %v3252
        %3336 = vmatprep.subr.mxu0 %v3251
        %3337 = vmatpush1.msra.mxu0 %v3250
        %3338 = vmatprep.subr.mxu0 %v3249
        %3339 = vmatpush1.msra.mxu0 %v3248
        %3340 = vmatprep.subr.mxu0 %v3247
        %3341 = vmatpush1.msra.mxu0 %v3246
        %3342 = vmatprep.subr.mxu0 %v3309
        %3343 = vmatpush2.msra.mxu0 %v3308
        %3344 = vmatprep.subr.mxu0 %v3307
        %3345 = vmatpush2.msra.mxu0 %v3306
        %3346 = vmatprep.subr.mxu0 %v3305
        %3347 = vmatpush2.msra.mxu0 %v3304
        %3348 = vmatprep.subr.mxu0 %v3303
        %3349 = vmatpush2.msra.mxu0 %v3302
        %3350 = vmatprep.subr.mxu0 %v3301
        %3351 = vmatpush2.msra.mxu0 %v3300
        %3352 = vmatprep.subr.mxu0 %v3299
        %3353 = vmatpush2.msra.mxu0 %v3298
        %3354 = vmatprep.subr.mxu0 %v3297
        %3355 = vmatpush2.msra.mxu0 %v3296
        %3356 = vmatprep.subr.mxu0 %v3295
        %3357 = vmatpush2.msra.mxu0 %v3294
        %3358 = vmatprep.subr.mxu0 %v3293
        %3359 = vmatpush2.msra.mxu0 %v3292
        %3360 = vmatprep.subr.mxu0 %v3291
        %3361 = vmatpush2.msra.mxu0 %v3290
        %3362 = vmatprep.subr.mxu0 %v3289
        %3363 = vmatpush2.msra.mxu0 %v3288
        %3364 = vmatprep.subr.mxu0 %v3287
        %3365 = vmatpush2.msra.mxu0 %v3286
        %3366 = vmatprep.subr.mxu0 %v3285
        %3367 = vmatpush2.msra.mxu0 %v3284
        %3368 = vmatprep.subr.mxu0 %v3283
        %3369 = vmatpush2.msra.mxu0 %v3282
        %3370 = vmatprep.subr.mxu0 %v3281
        %3371 = vmatpush2.msra.mxu0 %v3280
        %3372 = vmatprep.subr.mxu0 %v3279
        %3373 = vmatpush2.msra.mxu0 %v3278
        %3374 = vmatprep.mubr.f32.mxu0 %v2861
        %3375 = vmatmul.mubr.f32.gmra.mxu0 %v2860
        %v3376 = vpop.f32.mrf.mxu0
        %v3377 = vadd.f32 0.0, %v3376
        %v3378 = vpop.f32.mrf.mxu0
        %v3379 = vadd.f32 0.0, %v3378
        %3380 = vmatprep.mubr.f32.mxu0 %v2863
        %3381 = vmatmul.mubr.f32.gmra.mxu0 %v2862
        %v3382 = vpop.f32.mrf.mxu0
        %v3383 = vadd.f32 0.0, %v3382
        %v3384 = vpop.f32.mrf.mxu0
        %v3385 = vadd.f32 0.0, %v3384
        %3386 = vmatprep.mubr.f32.mxu0 %v2865
        %3387 = vmatmul.mubr.f32.gmra.mxu0 %v2864
        %v3388 = vpop.f32.mrf.mxu0
        %v3389 = vadd.f32 0.0, %v3388
        %v3390 = vpop.f32.mrf.mxu0
        %v3391 = vadd.f32 0.0, %v3390
        %3392 = vmatprep.mubr.f32.mxu0 %v2867
        %3393 = vmatmul.mubr.f32.gmra.mxu0 %v2866
        %v3394 = vpop.f32.mrf.mxu0
        %v3395 = vadd.f32 0.0, %v3394
        %v3396 = vpop.f32.mrf.mxu0
        %v3397 = vadd.f32 0.0, %v3396
        %3398 = vmatprep.mubr.f32.mxu0 %v2869
        %3399 = vmatmul.mubr.f32.gmra.mxu0 %v2868
        %v3400 = vpop.f32.mrf.mxu0
        %v3401 = vadd.f32 0.0, %v3400
        %v3402 = vpop.f32.mrf.mxu0
        %v3403 = vadd.f32 0.0, %v3402
        %3404 = vmatprep.mubr.f32.mxu0 %v2871
        %3405 = vmatmul.mubr.f32.gmra.mxu0 %v2870
        %v3406 = vpop.f32.mrf.mxu0
        %v3407 = vadd.f32 0.0, %v3406
        %v3408 = vpop.f32.mrf.mxu0
        %v3409 = vadd.f32 0.0, %v3408
        %3410 = vmatprep.mubr.f32.mxu0 %v2873
        %3411 = vmatmul.mubr.f32.gmra.mxu0 %v2872
        %v3412 = vpop.f32.mrf.mxu0
        %v3413 = vadd.f32 0.0, %v3412
        %v3414 = vpop.f32.mrf.mxu0
        %v3415 = vadd.f32 0.0, %v3414
        %3416 = vmatprep.mubr.f32.mxu0 %v2875
        %3417 = vmatmul.mubr.f32.gmra.mxu0 %v2874
        %v3418 = vpop.f32.mrf.mxu0
        %v3419 = vadd.f32 0.0, %v3418
        %v3420 = vpop.f32.mrf.mxu0
        %v3421 = vadd.f32 0.0, %v3420
        %3422 = vmatprep.mubr.f32.mxu0 %v2877
        %3423 = vmatmul.mubr.f32.gmra.mxu0 %v2876
        %v3424 = vpop.f32.mrf.mxu0
        %v3425 = vadd.f32 0.0, %v3424
        %v3426 = vpop.f32.mrf.mxu0
        %v3427 = vadd.f32 0.0, %v3426
        %3428 = vmatprep.mubr.f32.mxu0 %v2879
        %3429 = vmatmul.mubr.f32.gmra.mxu0 %v2878
        %v3430 = vpop.f32.mrf.mxu0
        %v3431 = vadd.f32 0.0, %v3430
        %v3432 = vpop.f32.mrf.mxu0
        %v3433 = vadd.f32 0.0, %v3432
        %3434 = vmatprep.mubr.f32.mxu0 %v2881
        %3435 = vmatmul.mubr.f32.gmra.mxu0 %v2880
        %v3436 = vpop.f32.mrf.mxu0
        %v3437 = vadd.f32 0.0, %v3436
        %v3438 = vpop.f32.mrf.mxu0
        %v3439 = vadd.f32 0.0, %v3438
        %3440 = vmatprep.mubr.f32.mxu0 %v2883
        %3441 = vmatmul.mubr.f32.gmra.mxu0 %v2882
        %v3442 = vpop.f32.mrf.mxu0
        %v3443 = vadd.f32 0.0, %v3442
        %v3444 = vpop.f32.mrf.mxu0
        %v3445 = vadd.f32 0.0, %v3444
        %3446 = vmatprep.mubr.f32.mxu0 %v2885
        %3447 = vmatmul.mubr.f32.gmra.mxu0 %v2884
        %v3448 = vpop.f32.mrf.mxu0
        %v3449 = vadd.f32 0.0, %v3448
        %v3450 = vpop.f32.mrf.mxu0
        %v3451 = vadd.f32 0.0, %v3450
        %3452 = vmatprep.mubr.f32.mxu0 %v2887
        %3453 = vmatmul.mubr.f32.gmra.mxu0 %v2886
        %v3454 = vpop.f32.mrf.mxu0
        %v3455 = vadd.f32 0.0, %v3454
        %v3456 = vpop.f32.mrf.mxu0
        %v3457 = vadd.f32 0.0, %v3456
        %3458 = vmatprep.mubr.f32.mxu0 %v2889
        %3459 = vmatmul.mubr.f32.gmra.mxu0 %v2888
        %v3460 = vpop.f32.mrf.mxu0
        %v3461 = vadd.f32 0.0, %v3460
        %v3462 = vpop.f32.mrf.mxu0
        %v3463 = vadd.f32 0.0, %v3462
        %3464 = vmatprep.mubr.f32.mxu0 %v2891
        %3465 = vmatmul.mubr.f32.gmra.mxu0 %v2890
        %v3466 = vpop.f32.mrf.mxu0
        %v3467 = vadd.f32 0.0, %v3466
        %v3468 = vpop.f32.mrf.mxu0
        %v3469 = vadd.f32 0.0, %v3468
        %3470 = vmatprep.mubr.f32.mxu0 %v2893
        %3471 = vmatmul.mubr.f32.gmra.mxu0 %v2892
        %v3472 = vpop.f32.mrf.mxu0
        %v3473 = vadd.f32 0.0, %v3472
        %v3474 = vpop.f32.mrf.mxu0
        %v3475 = vadd.f32 0.0, %v3474
        %3476 = vmatprep.mubr.f32.mxu0 %v2895
        %3477 = vmatmul.mubr.f32.gmra.mxu0 %v2894
        %v3478 = vpop.f32.mrf.mxu0
        %v3479 = vadd.f32 0.0, %v3478
        %v3480 = vpop.f32.mrf.mxu0
        %v3481 = vadd.f32 0.0, %v3480
        %3482 = vmatprep.mubr.f32.mxu0 %v2897
        %3483 = vmatmul.mubr.f32.gmra.mxu0 %v2896
        %v3484 = vpop.f32.mrf.mxu0
        %v3485 = vadd.f32 0.0, %v3484
        %v3486 = vpop.f32.mrf.mxu0
        %v3487 = vadd.f32 0.0, %v3486
        %3488 = vmatprep.mubr.f32.mxu0 %v2899
        %3489 = vmatmul.mubr.f32.gmra.mxu0 %v2898
        %v3490 = vpop.f32.mrf.mxu0
        %v3491 = vadd.f32 0.0, %v3490
        %v3492 = vpop.f32.mrf.mxu0
        %v3493 = vadd.f32 0.0, %v3492
        %3494 = vmatprep.mubr.f32.mxu0 %v2901
        %3495 = vmatmul.mubr.f32.gmra.mxu0 %v2900
        %v3496 = vpop.f32.mrf.mxu0
        %v3497 = vadd.f32 0.0, %v3496
        %v3498 = vpop.f32.mrf.mxu0
        %v3499 = vadd.f32 0.0, %v3498
        %3500 = vmatprep.mubr.f32.mxu0 %v2903
        %3501 = vmatmul.mubr.f32.gmra.mxu0 %v2902
        %v3502 = vpop.f32.mrf.mxu0
        %v3503 = vadd.f32 0.0, %v3502
        %v3504 = vpop.f32.mrf.mxu0
        %v3505 = vadd.f32 0.0, %v3504
        %3506 = vmatprep.mubr.f32.mxu0 %v2905
        %3507 = vmatmul.mubr.f32.gmra.mxu0 %v2904
        %v3508 = vpop.f32.mrf.mxu0
        %v3509 = vadd.f32 0.0, %v3508
        %v3510 = vpop.f32.mrf.mxu0
        %v3511 = vadd.f32 0.0, %v3510
        %3512 = vmatprep.mubr.f32.mxu0 %v2907
        %3513 = vmatmul.mubr.f32.gmra.mxu0 %v2906
        %v3514 = vpop.f32.mrf.mxu0
        %v3515 = vadd.f32 0.0, %v3514
        %v3516 = vpop.f32.mrf.mxu0
        %v3517 = vadd.f32 0.0, %v3516
        %3518 = vmatprep.mubr.f32.mxu0 %v2909
        %3519 = vmatmul.mubr.f32.gmra.mxu0 %v2908
        %v3520 = vpop.f32.mrf.mxu0
        %v3521 = vadd.f32 0.0, %v3520
        %v3522 = vpop.f32.mrf.mxu0
        %v3523 = vadd.f32 0.0, %v3522
        %3524 = vmatprep.mubr.f32.mxu0 %v2911
        %3525 = vmatmul.mubr.f32.gmra.mxu0 %v2910
        %v3526 = vpop.f32.mrf.mxu0
        %v3527 = vadd.f32 0.0, %v3526
        %v3528 = vpop.f32.mrf.mxu0
        %v3529 = vadd.f32 0.0, %v3528
        %3530 = vmatprep.mubr.f32.mxu0 %v2913
        %3531 = vmatmul.mubr.f32.gmra.mxu0 %v2912
        %v3532 = vpop.f32.mrf.mxu0
        %v3533 = vadd.f32 0.0, %v3532
        %v3534 = vpop.f32.mrf.mxu0
        %v3535 = vadd.f32 0.0, %v3534
        %3536 = vmatprep.mubr.f32.mxu0 %v2915
        %3537 = vmatmul.mubr.f32.gmra.mxu0 %v2914
        %v3538 = vpop.f32.mrf.mxu0
        %v3539 = vadd.f32 0.0, %v3538
        %v3540 = vpop.f32.mrf.mxu0
        %v3541 = vadd.f32 0.0, %v3540
        %3542 = vmatprep.mubr.f32.mxu0 %v2917
        %3543 = vmatmul.mubr.f32.gmra.mxu0 %v2916
        %v3544 = vpop.f32.mrf.mxu0
        %v3545 = vadd.f32 0.0, %v3544
        %v3546 = vpop.f32.mrf.mxu0
        %v3547 = vadd.f32 0.0, %v3546
        %3548 = vmatprep.mubr.f32.mxu0 %v2919
        %3549 = vmatmul.mubr.f32.gmra.mxu0 %v2918
        %v3550 = vpop.f32.mrf.mxu0
        %v3551 = vadd.f32 0.0, %v3550
        %v3552 = vpop.f32.mrf.mxu0
        %v3553 = vadd.f32 0.0, %v3552
        %3554 = vmatprep.mubr.f32.mxu0 %v2921
        %3555 = vmatmul.mubr.f32.gmra.mxu0 %v2920
        %v3556 = vpop.f32.mrf.mxu0
        %v3557 = vadd.f32 0.0, %v3556
        %v3558 = vpop.f32.mrf.mxu0
        %v3559 = vadd.f32 0.0, %v3558
        %3560 = vmatprep.mubr.f32.mxu0 %v2923
        %3561 = vmatmul.mubr.f32.gmra.mxu0 %v2922
        %v3562 = vpop.f32.mrf.mxu0
        %v3563 = vadd.f32 0.0, %v3562
        %v3564 = vpop.f32.mrf.mxu0
        %v3565 = vadd.f32 0.0, %v3564
        %3566 = vdwg.mxu0
        %s3567 = scalar_lea.vmem %s2, 1024
        %v3568 = vld [vmem:[%s3567] sm:$0xff]
        %v3569 = vld [vmem:[%s3567 + $0x8] sm:$0xff]
        %v3570 = vld [vmem:[%s3567 + $0x10] sm:$0xff]
        %v3571 = vld [vmem:[%s3567 + $0x18] sm:$0xff]
        %v3572 = vld [vmem:[%s3567 + $0x20] sm:$0xff]
        %v3573 = vld [vmem:[%s3567 + $0x28] sm:$0xff]
        %v3574 = vld [vmem:[%s3567 + $0x30] sm:$0xff]
        %v3575 = vld [vmem:[%s3567 + $0x38] sm:$0xff]
        %v3576 = vld [vmem:[%s3567 + $0x40] sm:$0xff]
        %v3577 = vld [vmem:[%s3567 + $0x48] sm:$0xff]
        %v3578 = vld [vmem:[%s3567 + $0x50] sm:$0xff]
        %v3579 = vld [vmem:[%s3567 + $0x58] sm:$0xff]
        %v3580 = vld [vmem:[%s3567 + $0x60] sm:$0xff]
        %v3581 = vld [vmem:[%s3567 + $0x68] sm:$0xff]
        %v3582 = vld [vmem:[%s3567 + $0x70] sm:$0xff]
        %v3583 = vld [vmem:[%s3567 + $0x78] sm:$0xff]
        %v3584 = vld [vmem:[%s3567 + $0x80] sm:$0xff]
        %v3585 = vld [vmem:[%s3567 + $0x88] sm:$0xff]
        %v3586 = vld [vmem:[%s3567 + $0x90] sm:$0xff]
        %v3587 = vld [vmem:[%s3567 + $0x98] sm:$0xff]
        %v3588 = vld [vmem:[%s3567 + $0xa0] sm:$0xff]
        %v3589 = vld [vmem:[%s3567 + $0xa8] sm:$0xff]
        %v3590 = vld [vmem:[%s3567 + $0xb0] sm:$0xff]
        %v3591 = vld [vmem:[%s3567 + $0xb8] sm:$0xff]
        %v3592 = vld [vmem:[%s3567 + $0xc0] sm:$0xff]
        %v3593 = vld [vmem:[%s3567 + $0xc8] sm:$0xff]
        %v3594 = vld [vmem:[%s3567 + $0xd0] sm:$0xff]
        %v3595 = vld [vmem:[%s3567 + $0xd8] sm:$0xff]
        %v3596 = vld [vmem:[%s3567 + $0xe0] sm:$0xff]
        %v3597 = vld [vmem:[%s3567 + $0xe8] sm:$0xff]
        %v3598 = vld [vmem:[%s3567 + $0xf0] sm:$0xff]
        %v3599 = vld [vmem:[%s3567 + $0xf8] sm:$0xff]
        %v3600 = vld [vmem:[%s3567 + $0x100] sm:$0xff]
        %v3601 = vld [vmem:[%s3567 + $0x108] sm:$0xff]
        %v3602 = vld [vmem:[%s3567 + $0x110] sm:$0xff]
        %v3603 = vld [vmem:[%s3567 + $0x118] sm:$0xff]
        %v3604 = vld [vmem:[%s3567 + $0x120] sm:$0xff]
        %v3605 = vld [vmem:[%s3567 + $0x128] sm:$0xff]
        %v3606 = vld [vmem:[%s3567 + $0x130] sm:$0xff]
        %v3607 = vld [vmem:[%s3567 + $0x138] sm:$0xff]
        %v3608 = vld [vmem:[%s3567 + $0x140] sm:$0xff]
        %v3609 = vld [vmem:[%s3567 + $0x148] sm:$0xff]
        %v3610 = vld [vmem:[%s3567 + $0x150] sm:$0xff]
        %v3611 = vld [vmem:[%s3567 + $0x158] sm:$0xff]
        %v3612 = vld [vmem:[%s3567 + $0x160] sm:$0xff]
        %v3613 = vld [vmem:[%s3567 + $0x168] sm:$0xff]
        %v3614 = vld [vmem:[%s3567 + $0x170] sm:$0xff]
        %v3615 = vld [vmem:[%s3567 + $0x178] sm:$0xff]
        %v3616 = vld [vmem:[%s3567 + $0x180] sm:$0xff]
        %v3617 = vld [vmem:[%s3567 + $0x188] sm:$0xff]
        %v3618 = vld [vmem:[%s3567 + $0x190] sm:$0xff]
        %v3619 = vld [vmem:[%s3567 + $0x198] sm:$0xff]
        %v3620 = vld [vmem:[%s3567 + $0x1a0] sm:$0xff]
        %v3621 = vld [vmem:[%s3567 + $0x1a8] sm:$0xff]
        %v3622 = vld [vmem:[%s3567 + $0x1b0] sm:$0xff]
        %v3623 = vld [vmem:[%s3567 + $0x1b8] sm:$0xff]
        %v3624 = vld [vmem:[%s3567 + $0x1c0] sm:$0xff]
        %v3625 = vld [vmem:[%s3567 + $0x1c8] sm:$0xff]
        %v3626 = vld [vmem:[%s3567 + $0x1d0] sm:$0xff]
        %v3627 = vld [vmem:[%s3567 + $0x1d8] sm:$0xff]
        %v3628 = vld [vmem:[%s3567 + $0x1e0] sm:$0xff]
        %v3629 = vld [vmem:[%s3567 + $0x1e8] sm:$0xff]
        %v3630 = vld [vmem:[%s3567 + $0x1f0] sm:$0xff]
        %v3631 = vld [vmem:[%s3567 + $0x1f8] sm:$0xff]
        %3632 = vmatprep.subr.mxu0 %v3599
        %3633 = vmatpush1.msra.mxu0 %v3598
        %3634 = vmatprep.subr.mxu0 %v3597
        %3635 = vmatpush1.msra.mxu0 %v3596
        %3636 = vmatprep.subr.mxu0 %v3595
        %3637 = vmatpush1.msra.mxu0 %v3594
        %3638 = vmatprep.subr.mxu0 %v3593
        %3639 = vmatpush1.msra.mxu0 %v3592
        %3640 = vmatprep.subr.mxu0 %v3591
        %3641 = vmatpush1.msra.mxu0 %v3590
        %3642 = vmatprep.subr.mxu0 %v3589
        %3643 = vmatpush1.msra.mxu0 %v3588
        %3644 = vmatprep.subr.mxu0 %v3587
        %3645 = vmatpush1.msra.mxu0 %v3586
        %3646 = vmatprep.subr.mxu0 %v3585
        %3647 = vmatpush1.msra.mxu0 %v3584
        %3648 = vmatprep.subr.mxu0 %v3583
        %3649 = vmatpush1.msra.mxu0 %v3582
        %3650 = vmatprep.subr.mxu0 %v3581
        %3651 = vmatpush1.msra.mxu0 %v3580
        %3652 = vmatprep.subr.mxu0 %v3579
        %3653 = vmatpush1.msra.mxu0 %v3578
        %3654 = vmatprep.subr.mxu0 %v3577
        %3655 = vmatpush1.msra.mxu0 %v3576
        %3656 = vmatprep.subr.mxu0 %v3575
        %3657 = vmatpush1.msra.mxu0 %v3574
        %3658 = vmatprep.subr.mxu0 %v3573
        %3659 = vmatpush1.msra.mxu0 %v3572
        %3660 = vmatprep.subr.mxu0 %v3571
        %3661 = vmatpush1.msra.mxu0 %v3570
        %3662 = vmatprep.subr.mxu0 %v3569
        %3663 = vmatpush1.msra.mxu0 %v3568
        %3664 = vmatprep.subr.mxu0 %v3631
        %3665 = vmatpush2.msra.mxu0 %v3630
        %3666 = vmatprep.subr.mxu0 %v3629
        %3667 = vmatpush2.msra.mxu0 %v3628
        %3668 = vmatprep.subr.mxu0 %v3627
        %3669 = vmatpush2.msra.mxu0 %v3626
        %3670 = vmatprep.subr.mxu0 %v3625
        %3671 = vmatpush2.msra.mxu0 %v3624
        %3672 = vmatprep.subr.mxu0 %v3623
        %3673 = vmatpush2.msra.mxu0 %v3622
        %3674 = vmatprep.subr.mxu0 %v3621
        %3675 = vmatpush2.msra.mxu0 %v3620
        %3676 = vmatprep.subr.mxu0 %v3619
        %3677 = vmatpush2.msra.mxu0 %v3618
        %3678 = vmatprep.subr.mxu0 %v3617
        %3679 = vmatpush2.msra.mxu0 %v3616
        %3680 = vmatprep.subr.mxu0 %v3615
        %3681 = vmatpush2.msra.mxu0 %v3614
        %3682 = vmatprep.subr.mxu0 %v3613
        %3683 = vmatpush2.msra.mxu0 %v3612
        %3684 = vmatprep.subr.mxu0 %v3611
        %3685 = vmatpush2.msra.mxu0 %v3610
        %3686 = vmatprep.subr.mxu0 %v3609
        %3687 = vmatpush2.msra.mxu0 %v3608
        %3688 = vmatprep.subr.mxu0 %v3607
        %3689 = vmatpush2.msra.mxu0 %v3606
        %3690 = vmatprep.subr.mxu0 %v3605
        %3691 = vmatpush2.msra.mxu0 %v3604
        %3692 = vmatprep.subr.mxu0 %v3603
        %3693 = vmatpush2.msra.mxu0 %v3602
        %3694 = vmatprep.subr.mxu0 %v3601
        %3695 = vmatpush2.msra.mxu0 %v3600
        %3696 = vmatprep.mubr.f32.mxu0 %v2861
        %3697 = vmatmul.mubr.f32.gmra.mxu0 %v2860
        %v3698 = vpop.f32.mrf.mxu0
        %v3699 = vadd.f32 0.0, %v3698
        %v3700 = vpop.f32.mrf.mxu0
        %v3701 = vadd.f32 0.0, %v3700
        %3702 = vmatprep.mubr.f32.mxu0 %v2863
        %3703 = vmatmul.mubr.f32.gmra.mxu0 %v2862
        %v3704 = vpop.f32.mrf.mxu0
        %v3705 = vadd.f32 0.0, %v3704
        %v3706 = vpop.f32.mrf.mxu0
        %v3707 = vadd.f32 0.0, %v3706
        %3708 = vmatprep.mubr.f32.mxu0 %v2865
        %3709 = vmatmul.mubr.f32.gmra.mxu0 %v2864
        %v3710 = vpop.f32.mrf.mxu0
        %v3711 = vadd.f32 0.0, %v3710
        %v3712 = vpop.f32.mrf.mxu0
        %v3713 = vadd.f32 0.0, %v3712
        %3714 = vmatprep.mubr.f32.mxu0 %v2867
        %3715 = vmatmul.mubr.f32.gmra.mxu0 %v2866
        %v3716 = vpop.f32.mrf.mxu0
        %v3717 = vadd.f32 0.0, %v3716
        %v3718 = vpop.f32.mrf.mxu0
        %v3719 = vadd.f32 0.0, %v3718
        %3720 = vmatprep.mubr.f32.mxu0 %v2869
        %3721 = vmatmul.mubr.f32.gmra.mxu0 %v2868
        %v3722 = vpop.f32.mrf.mxu0
        %v3723 = vadd.f32 0.0, %v3722
        %v3724 = vpop.f32.mrf.mxu0
        %v3725 = vadd.f32 0.0, %v3724
        %3726 = vmatprep.mubr.f32.mxu0 %v2871
        %3727 = vmatmul.mubr.f32.gmra.mxu0 %v2870
        %v3728 = vpop.f32.mrf.mxu0
        %v3729 = vadd.f32 0.0, %v3728
        %v3730 = vpop.f32.mrf.mxu0
        %v3731 = vadd.f32 0.0, %v3730
        %3732 = vmatprep.mubr.f32.mxu0 %v2873
        %3733 = vmatmul.mubr.f32.gmra.mxu0 %v2872
        %v3734 = vpop.f32.mrf.mxu0
        %v3735 = vadd.f32 0.0, %v3734
        %v3736 = vpop.f32.mrf.mxu0
        %v3737 = vadd.f32 0.0, %v3736
        %3738 = vmatprep.mubr.f32.mxu0 %v2875
        %3739 = vmatmul.mubr.f32.gmra.mxu0 %v2874
        %v3740 = vpop.f32.mrf.mxu0
        %v3741 = vadd.f32 0.0, %v3740
        %v3742 = vpop.f32.mrf.mxu0
        %v3743 = vadd.f32 0.0, %v3742
        %3744 = vmatprep.mubr.f32.mxu0 %v2877
        %3745 = vmatmul.mubr.f32.gmra.mxu0 %v2876
        %v3746 = vpop.f32.mrf.mxu0
        %v3747 = vadd.f32 0.0, %v3746
        %v3748 = vpop.f32.mrf.mxu0
        %v3749 = vadd.f32 0.0, %v3748
        %3750 = vmatprep.mubr.f32.mxu0 %v2879
        %3751 = vmatmul.mubr.f32.gmra.mxu0 %v2878
        %v3752 = vpop.f32.mrf.mxu0
        %v3753 = vadd.f32 0.0, %v3752
        %v3754 = vpop.f32.mrf.mxu0
        %v3755 = vadd.f32 0.0, %v3754
        %3756 = vmatprep.mubr.f32.mxu0 %v2881
        %3757 = vmatmul.mubr.f32.gmra.mxu0 %v2880
        %v3758 = vpop.f32.mrf.mxu0
        %v3759 = vadd.f32 0.0, %v3758
        %v3760 = vpop.f32.mrf.mxu0
        %v3761 = vadd.f32 0.0, %v3760
        %3762 = vmatprep.mubr.f32.mxu0 %v2883
        %3763 = vmatmul.mubr.f32.gmra.mxu0 %v2882
        %v3764 = vpop.f32.mrf.mxu0
        %v3765 = vadd.f32 0.0, %v3764
        %v3766 = vpop.f32.mrf.mxu0
        %v3767 = vadd.f32 0.0, %v3766
        %3768 = vmatprep.mubr.f32.mxu0 %v2885
        %3769 = vmatmul.mubr.f32.gmra.mxu0 %v2884
        %v3770 = vpop.f32.mrf.mxu0
        %v3771 = vadd.f32 0.0, %v3770
        %v3772 = vpop.f32.mrf.mxu0
        %v3773 = vadd.f32 0.0, %v3772
        %3774 = vmatprep.mubr.f32.mxu0 %v2887
        %3775 = vmatmul.mubr.f32.gmra.mxu0 %v2886
        %v3776 = vpop.f32.mrf.mxu0
        %v3777 = vadd.f32 0.0, %v3776
        %v3778 = vpop.f32.mrf.mxu0
        %v3779 = vadd.f32 0.0, %v3778
        %3780 = vmatprep.mubr.f32.mxu0 %v2889
        %3781 = vmatmul.mubr.f32.gmra.mxu0 %v2888
        %v3782 = vpop.f32.mrf.mxu0
        %v3783 = vadd.f32 0.0, %v3782
        %v3784 = vpop.f32.mrf.mxu0
        %v3785 = vadd.f32 0.0, %v3784
        %3786 = vmatprep.mubr.f32.mxu0 %v2891
        %3787 = vmatmul.mubr.f32.gmra.mxu0 %v2890
        %v3788 = vpop.f32.mrf.mxu0
        %v3789 = vadd.f32 0.0, %v3788
        %v3790 = vpop.f32.mrf.mxu0
        %v3791 = vadd.f32 0.0, %v3790
        %3792 = vmatprep.mubr.f32.mxu0 %v2893
        %3793 = vmatmul.mubr.f32.gmra.mxu0 %v2892
        %v3794 = vpop.f32.mrf.mxu0
        %v3795 = vadd.f32 0.0, %v3794
        %v3796 = vpop.f32.mrf.mxu0
        %v3797 = vadd.f32 0.0, %v3796
        %3798 = vmatprep.mubr.f32.mxu0 %v2895
        %3799 = vmatmul.mubr.f32.gmra.mxu0 %v2894
        %v3800 = vpop.f32.mrf.mxu0
        %v3801 = vadd.f32 0.0, %v3800
        %v3802 = vpop.f32.mrf.mxu0
        %v3803 = vadd.f32 0.0, %v3802
        %3804 = vmatprep.mubr.f32.mxu0 %v2897
        %3805 = vmatmul.mubr.f32.gmra.mxu0 %v2896
        %v3806 = vpop.f32.mrf.mxu0
        %v3807 = vadd.f32 0.0, %v3806
        %v3808 = vpop.f32.mrf.mxu0
        %v3809 = vadd.f32 0.0, %v3808
        %3810 = vmatprep.mubr.f32.mxu0 %v2899
        %3811 = vmatmul.mubr.f32.gmra.mxu0 %v2898
        %v3812 = vpop.f32.mrf.mxu0
        %v3813 = vadd.f32 0.0, %v3812
        %v3814 = vpop.f32.mrf.mxu0
        %v3815 = vadd.f32 0.0, %v3814
        %3816 = vmatprep.mubr.f32.mxu0 %v2901
        %3817 = vmatmul.mubr.f32.gmra.mxu0 %v2900
        %v3818 = vpop.f32.mrf.mxu0
        %v3819 = vadd.f32 0.0, %v3818
        %v3820 = vpop.f32.mrf.mxu0
        %v3821 = vadd.f32 0.0, %v3820
        %3822 = vmatprep.mubr.f32.mxu0 %v2903
        %3823 = vmatmul.mubr.f32.gmra.mxu0 %v2902
        %v3824 = vpop.f32.mrf.mxu0
        %v3825 = vadd.f32 0.0, %v3824
        %v3826 = vpop.f32.mrf.mxu0
        %v3827 = vadd.f32 0.0, %v3826
        %3828 = vmatprep.mubr.f32.mxu0 %v2905
        %3829 = vmatmul.mubr.f32.gmra.mxu0 %v2904
        %v3830 = vpop.f32.mrf.mxu0
        %v3831 = vadd.f32 0.0, %v3830
        %v3832 = vpop.f32.mrf.mxu0
        %v3833 = vadd.f32 0.0, %v3832
        %3834 = vmatprep.mubr.f32.mxu0 %v2907
        %3835 = vmatmul.mubr.f32.gmra.mxu0 %v2906
        %v3836 = vpop.f32.mrf.mxu0
        %v3837 = vadd.f32 0.0, %v3836
        %v3838 = vpop.f32.mrf.mxu0
        %v3839 = vadd.f32 0.0, %v3838
        %3840 = vmatprep.mubr.f32.mxu0 %v2909
        %3841 = vmatmul.mubr.f32.gmra.mxu0 %v2908
        %v3842 = vpop.f32.mrf.mxu0
        %v3843 = vadd.f32 0.0, %v3842
        %v3844 = vpop.f32.mrf.mxu0
        %v3845 = vadd.f32 0.0, %v3844
        %3846 = vmatprep.mubr.f32.mxu0 %v2911
        %3847 = vmatmul.mubr.f32.gmra.mxu0 %v2910
        %v3848 = vpop.f32.mrf.mxu0
        %v3849 = vadd.f32 0.0, %v3848
        %v3850 = vpop.f32.mrf.mxu0
        %v3851 = vadd.f32 0.0, %v3850
        %3852 = vmatprep.mubr.f32.mxu0 %v2913
        %3853 = vmatmul.mubr.f32.gmra.mxu0 %v2912
        %v3854 = vpop.f32.mrf.mxu0
        %v3855 = vadd.f32 0.0, %v3854
        %v3856 = vpop.f32.mrf.mxu0
        %v3857 = vadd.f32 0.0, %v3856
        %3858 = vmatprep.mubr.f32.mxu0 %v2915
        %3859 = vmatmul.mubr.f32.gmra.mxu0 %v2914
        %v3860 = vpop.f32.mrf.mxu0
        %v3861 = vadd.f32 0.0, %v3860
        %v3862 = vpop.f32.mrf.mxu0
        %v3863 = vadd.f32 0.0, %v3862
        %3864 = vmatprep.mubr.f32.mxu0 %v2917
        %3865 = vmatmul.mubr.f32.gmra.mxu0 %v2916
        %v3866 = vpop.f32.mrf.mxu0
        %v3867 = vadd.f32 0.0, %v3866
        %v3868 = vpop.f32.mrf.mxu0
        %v3869 = vadd.f32 0.0, %v3868
        %3870 = vmatprep.mubr.f32.mxu0 %v2919
        %3871 = vmatmul.mubr.f32.gmra.mxu0 %v2918
        %v3872 = vpop.f32.mrf.mxu0
        %v3873 = vadd.f32 0.0, %v3872
        %v3874 = vpop.f32.mrf.mxu0
        %v3875 = vadd.f32 0.0, %v3874
        %3876 = vmatprep.mubr.f32.mxu0 %v2921
        %3877 = vmatmul.mubr.f32.gmra.mxu0 %v2920
        %v3878 = vpop.f32.mrf.mxu0
        %v3879 = vadd.f32 0.0, %v3878
        %v3880 = vpop.f32.mrf.mxu0
        %v3881 = vadd.f32 0.0, %v3880
        %3882 = vmatprep.mubr.f32.mxu0 %v2923
        %3883 = vmatmul.mubr.f32.gmra.mxu0 %v2922
        %v3884 = vpop.f32.mrf.mxu0
        %v3885 = vadd.f32 0.0, %v3884
        %v3886 = vpop.f32.mrf.mxu0
        %v3887 = vadd.f32 0.0, %v3886
        %3888 = vdwg.mxu0
        %v3891 = vrot.slane %v3241, 7
        %v3892 = vrot.slane %v3243, 7
        %vm3925 = vcmask 1040384
        %v3926 = vrot.slane %v3151, 7
        %v3927 = vrot.slane %v3153, 7
        %v3928 = vrot.slane %v3157, 7
        %v3929 = vsel %vm3925, %v3926, %v3928
        %v3930 = vrot.slane %v3159, 7
        %v3931 = vsel %vm3925, %v3927, %v3930
        %v3932 = vrot.slane %v3163, 7
        %v3933 = vsel %vm3925, %v3928, %v3932
        %v3934 = vrot.slane %v3165, 7
        %v3935 = vsel %vm3925, %v3930, %v3934
        %v3936 = vrot.slane %v3169, 7
        %v3937 = vsel %vm3925, %v3932, %v3936
        %v3938 = vrot.slane %v3171, 7
        %v3939 = vsel %vm3925, %v3934, %v3938
        %v3940 = vrot.slane %v3175, 7
        %v3941 = vsel %vm3925, %v3936, %v3940
        %v3942 = vrot.slane %v3177, 7
        %v3943 = vsel %vm3925, %v3938, %v3942
        %v3944 = vrot.slane %v3181, 7
        %v3945 = vsel %vm3925, %v3940, %v3944
        %v3946 = vrot.slane %v3183, 7
        %v3947 = vsel %vm3925, %v3942, %v3946
        %v3948 = vrot.slane %v3187, 7
        %v3949 = vsel %vm3925, %v3944, %v3948
        %v3950 = vrot.slane %v3189, 7
        %v3951 = vsel %vm3925, %v3946, %v3950
        %v3952 = vrot.slane %v3193, 7
        %v3953 = vsel %vm3925, %v3948, %v3952
        %v3954 = vrot.slane %v3195, 7
        %v3955 = vsel %vm3925, %v3950, %v3954
        %v3956 = vrot.slane %v3199, 7
        %v3957 = vsel %vm3925, %v3952, %v3956
        %v3958 = vrot.slane %v3201, 7
        %v3959 = vsel %vm3925, %v3954, %v3958
        %v3960 = vrot.slane %v3205, 7
        %v3961 = vsel %vm3925, %v3956, %v3960
        %v3962 = vrot.slane %v3207, 7
        %v3963 = vsel %vm3925, %v3958, %v3962
        %v3964 = vrot.slane %v3211, 7
        %v3965 = vsel %vm3925, %v3960, %v3964
        %v3966 = vrot.slane %v3213, 7
        %v3967 = vsel %vm3925, %v3962, %v3966
        %v3968 = vrot.slane %v3217, 7
        %v3969 = vsel %vm3925, %v3964, %v3968
        %v3970 = vrot.slane %v3219, 7
        %v3971 = vsel %vm3925, %v3966, %v3970
        %v3972 = vrot.slane %v3223, 7
        %v3973 = vsel %vm3925, %v3968, %v3972
        %v3974 = vrot.slane %v3225, 7
        %v3975 = vsel %vm3925, %v3970, %v3974
        %v3976 = vrot.slane %v3229, 7
        %v3977 = vsel %vm3925, %v3972, %v3976
        %v3978 = vrot.slane %v3231, 7
        %v3979 = vsel %vm3925, %v3974, %v3978
        %v3980 = vrot.slane %v3235, 7
        %v3981 = vsel %vm3925, %v3976, %v3980
        %v3982 = vrot.slane %v3237, 7
        %v3983 = vsel %vm3925, %v3978, %v3982
        %v3984 = vsel %vm3925, %v3980, %v3891
        %v3985 = vsel %vm3925, %v3982, %v3892
        %v4018 = vsel %vm3925, %v3891, %v3926
        %v4019 = vsel %vm3925, %v3892, %v3927
        %v4020 = vsel %vm620, 0.0, %v4018
        %v4021 = vsel %vm620, 0.0, %v4019
        %v4022 = vsel %vm621, 0.0, %v3929
        %v4023 = vsel %vm621, 0.0, %v3931
        %v4024 = vsel %vm622, 0.0, %v3933
        %v4025 = vsel %vm622, 0.0, %v3935
        %v4026 = vsel %vm623, 0.0, %v3937
        %v4027 = vsel %vm623, 0.0, %v3939
        %v4028 = vsel %vm624, 0.0, %v3941
        %v4029 = vsel %vm624, 0.0, %v3943
        %v4030 = vsel %vm625, 0.0, %v3945
        %v4031 = vsel %vm625, 0.0, %v3947
        %v4032 = vsel %vm626, 0.0, %v3949
        %v4033 = vsel %vm626, 0.0, %v3951
        %v4034 = vsel %vm627, 0.0, %v3953
        %v4035 = vsel %vm627, 0.0, %v3955
        %v4036 = vsel %vm628, 0.0, %v3957
        %v4037 = vsel %vm628, 0.0, %v3959
        %v4038 = vsel %vm629, 0.0, %v3961
        %v4039 = vsel %vm629, 0.0, %v3963
        %v4040 = vsel %vm630, 0.0, %v3965
        %v4041 = vsel %vm630, 0.0, %v3967
        %v4042 = vsel %vm631, 0.0, %v3969
        %v4043 = vsel %vm631, 0.0, %v3971
        %v4044 = vsel %vm632, 0.0, %v3973
        %v4045 = vsel %vm632, 0.0, %v3975
        %v4046 = vsel %vm633, 0.0, %v3977
        %v4047 = vsel %vm633, 0.0, %v3979
        %v4048 = vsel %vm634, 0.0, %v3981
        %v4049 = vsel %vm634, 0.0, %v3983
        %v4050 = vsel %vm635, 0.0, %v3984
        %v4051 = vsel %vm635, 0.0, %v3985
        %vm4084 = vcmask 1046528
        %v4085 = vrot.slane %v3699, 1
        %v4086 = vrot.slane %v3705, 1
        %v4087 = vsel %vm4084, %v4085, %v4086
        %v4088 = vrot.slane %v3701, 1
        %v4089 = vrot.slane %v3707, 1
        %v4090 = vsel %vm4084, %v4088, %v4089
        %v4091 = vrot.slane %v3711, 1
        %v4092 = vsel %vm4084, %v4086, %v4091
        %v4093 = vrot.slane %v3713, 1
        %v4094 = vsel %vm4084, %v4089, %v4093
        %v4095 = vrot.slane %v3717, 1
        %v4096 = vsel %vm4084, %v4091, %v4095
        %v4097 = vrot.slane %v3719, 1
        %v4098 = vsel %vm4084, %v4093, %v4097
        %v4099 = vrot.slane %v3723, 1
        %v4100 = vsel %vm4084, %v4095, %v4099
        %v4101 = vrot.slane %v3725, 1
        %v4102 = vsel %vm4084, %v4097, %v4101
        %v4103 = vrot.slane %v3729, 1
        %v4104 = vsel %vm4084, %v4099, %v4103
        %v4105 = vrot.slane %v3731, 1
        %v4106 = vsel %vm4084, %v4101, %v4105
        %v4107 = vrot.slane %v3735, 1
        %v4108 = vsel %vm4084, %v4103, %v4107
        %v4109 = vrot.slane %v3737, 1
        %v4110 = vsel %vm4084, %v4105, %v4109
        %v4111 = vrot.slane %v3741, 1
        %v4112 = vsel %vm4084, %v4107, %v4111
        %v4113 = vrot.slane %v3743, 1
        %v4114 = vsel %vm4084, %v4109, %v4113
        %v4115 = vrot.slane %v3747, 1
        %v4116 = vsel %vm4084, %v4111, %v4115
        %v4117 = vrot.slane %v3749, 1
        %v4118 = vsel %vm4084, %v4113, %v4117
        %v4119 = vrot.slane %v3753, 1
        %v4120 = vsel %vm4084, %v4115, %v4119
        %v4121 = vrot.slane %v3755, 1
        %v4122 = vsel %vm4084, %v4117, %v4121
        %v4123 = vrot.slane %v3759, 1
        %v4124 = vsel %vm4084, %v4119, %v4123
        %v4125 = vrot.slane %v3761, 1
        %v4126 = vsel %vm4084, %v4121, %v4125
        %v4127 = vrot.slane %v3765, 1
        %v4128 = vsel %vm4084, %v4123, %v4127
        %v4129 = vrot.slane %v3767, 1
        %v4130 = vsel %vm4084, %v4125, %v4129
        %v4131 = vrot.slane %v3771, 1
        %v4132 = vsel %vm4084, %v4127, %v4131
        %v4133 = vrot.slane %v3773, 1
        %v4134 = vsel %vm4084, %v4129, %v4133
        %v4135 = vrot.slane %v3777, 1
        %v4136 = vsel %vm4084, %v4131, %v4135
        %v4137 = vrot.slane %v3779, 1
        %v4138 = vsel %vm4084, %v4133, %v4137
        %v4139 = vrot.slane %v3783, 1
        %v4140 = vsel %vm4084, %v4135, %v4139
        %v4141 = vrot.slane %v3785, 1
        %v4142 = vsel %vm4084, %v4137, %v4141
        %v4143 = vrot.slane %v3789, 1
        %v4144 = vsel %vm4084, %v4139, %v4143
        %v4145 = vrot.slane %v3791, 1
        %v4146 = vsel %vm4084, %v4141, %v4145
        %v4181 = vsel %vm4084, %v4143, %v4085
        %v4182 = vsel %vm4084, %v4145, %v4088
        %v4183 = vsel %vm636, 0.0, %v4087
        %v4184 = vsel %vm636, 0.0, %v4090
        %v4185 = vsel %vm637, 0.0, %v4092
        %v4186 = vsel %vm637, 0.0, %v4094
        %v4187 = vsel %vm638, 0.0, %v4096
        %v4188 = vsel %vm638, 0.0, %v4098
        %v4189 = vsel %vm639, 0.0, %v4100
        %v4190 = vsel %vm639, 0.0, %v4102
        %v4191 = vsel %vm640, 0.0, %v4104
        %v4192 = vsel %vm640, 0.0, %v4106
        %v4193 = vsel %vm641, 0.0, %v4108
        %v4194 = vsel %vm641, 0.0, %v4110
        %v4195 = vsel %vm642, 0.0, %v4112
        %v4196 = vsel %vm642, 0.0, %v4114
        %v4197 = vsel %vm643, 0.0, %v4116
        %v4198 = vsel %vm643, 0.0, %v4118
        %v4199 = vsel %vm644, 0.0, %v4120
        %v4200 = vsel %vm644, 0.0, %v4122
        %v4201 = vsel %vm645, 0.0, %v4124
        %v4202 = vsel %vm645, 0.0, %v4126
        %v4203 = vsel %vm646, 0.0, %v4128
        %v4204 = vsel %vm646, 0.0, %v4130
        %v4205 = vsel %vm647, 0.0, %v4132
        %v4206 = vsel %vm647, 0.0, %v4134
        %v4207 = vsel %vm648, 0.0, %v4136
        %v4208 = vsel %vm648, 0.0, %v4138
        %v4209 = vsel %vm649, 0.0, %v4140
        %v4210 = vsel %vm649, 0.0, %v4142
        %v4211 = vsel %vm650, 0.0, %v4144
        %v4212 = vsel %vm650, 0.0, %v4146
        %v4213 = vsel %vm651, 0.0, %v4181
        %v4214 = vsel %vm651, 0.0, %v4182
        %v4215 = vadd.f32 %v4020, %v3377
        %v4216 = vadd.f32 %v4021, %v3379
        %v4217 = vadd.f32 %v4022, %v3383
        %v4218 = vadd.f32 %v4023, %v3385
        %v4219 = vadd.f32 %v4024, %v3389
        %v4220 = vadd.f32 %v4025, %v3391
        %v4221 = vadd.f32 %v4026, %v3395
        %v4222 = vadd.f32 %v4027, %v3397
        %v4223 = vadd.f32 %v4028, %v3401
        %v4224 = vadd.f32 %v4029, %v3403
        %v4225 = vadd.f32 %v4030, %v3407
        %v4226 = vadd.f32 %v4031, %v3409
        %v4227 = vadd.f32 %v4032, %v3413
        %v4228 = vadd.f32 %v4033, %v3415
        %v4229 = vadd.f32 %v4034, %v3419
        %v4230 = vadd.f32 %v4035, %v3421
        %v4231 = vadd.f32 %v4036, %v3425
        %v4232 = vadd.f32 %v4037, %v3427
        %v4233 = vadd.f32 %v4038, %v3431
        %v4234 = vadd.f32 %v4039, %v3433
        %v4235 = vadd.f32 %v4040, %v3437
        %v4236 = vadd.f32 %v4041, %v3439
        %v4237 = vadd.f32 %v4042, %v3443
        %v4238 = vadd.f32 %v4043, %v3445
        %v4239 = vadd.f32 %v4044, %v3449
        %v4240 = vadd.f32 %v4045, %v3451
        %v4241 = vadd.f32 %v4046, %v3455
        %v4242 = vadd.f32 %v4047, %v3457
        %v4243 = vadd.f32 %v4048, %v3461
        %v4244 = vadd.f32 %v4049, %v3463
        %v4245 = vadd.f32 %v4050, %v3467
        %v4246 = vadd.f32 %v4051, %v3469
        %v4247 = vadd.f32 %v3055, %v3473
        %v4248 = vadd.f32 %v3057, %v3475
        %v4249 = vadd.f32 %v3061, %v3479
        %v4250 = vadd.f32 %v3063, %v3481
        %v4251 = vadd.f32 %v3067, %v3485
        %v4252 = vadd.f32 %v3069, %v3487
        %v4253 = vadd.f32 %v3073, %v3491
        %v4254 = vadd.f32 %v3075, %v3493
        %v4255 = vadd.f32 %v3079, %v3497
        %v4256 = vadd.f32 %v3081, %v3499
        %v4257 = vadd.f32 %v3085, %v3503
        %v4258 = vadd.f32 %v3087, %v3505
        %v4259 = vadd.f32 %v3091, %v3509
        %v4260 = vadd.f32 %v3093, %v3511
        %v4261 = vadd.f32 %v3097, %v3515
        %v4262 = vadd.f32 %v3099, %v3517
        %v4263 = vadd.f32 %v3103, %v3521
        %v4264 = vadd.f32 %v3105, %v3523
        %v4265 = vadd.f32 %v3109, %v3527
        %v4266 = vadd.f32 %v3111, %v3529
        %v4267 = vadd.f32 %v3115, %v3533
        %v4268 = vadd.f32 %v3117, %v3535
        %v4269 = vadd.f32 %v3121, %v3539
        %v4270 = vadd.f32 %v3123, %v3541
        %v4271 = vadd.f32 %v3127, %v3545
        %v4272 = vadd.f32 %v3129, %v3547
        %v4273 = vadd.f32 %v3133, %v3551
        %v4274 = vadd.f32 %v3135, %v3553
        %v4275 = vadd.f32 %v3139, %v3557
        %v4276 = vadd.f32 %v3141, %v3559
        %v4277 = vadd.f32 %v3145, %v3563
        %v4278 = vadd.f32 %v3147, %v3565
        %v4279 = vadd.f32 %v4215, %v3795
        %v4280 = vadd.f32 %v4216, %v3797
        %v4281 = vadd.f32 %v4217, %v3801
        %v4282 = vadd.f32 %v4218, %v3803
        %v4283 = vadd.f32 %v4219, %v3807
        %v4284 = vadd.f32 %v4220, %v3809
        %v4285 = vadd.f32 %v4221, %v3813
        %v4286 = vadd.f32 %v4222, %v3815
        %v4287 = vadd.f32 %v4223, %v3819
        %v4288 = vadd.f32 %v4224, %v3821
        %v4289 = vadd.f32 %v4225, %v3825
        %v4290 = vadd.f32 %v4226, %v3827
        %v4291 = vadd.f32 %v4227, %v3831
        %v4292 = vadd.f32 %v4228, %v3833
        %v4293 = vadd.f32 %v4229, %v3837
        %v4294 = vadd.f32 %v4230, %v3839
        %v4295 = vadd.f32 %v4231, %v3843
        %v4296 = vadd.f32 %v4232, %v3845
        %v4297 = vadd.f32 %v4233, %v3849
        %v4298 = vadd.f32 %v4234, %v3851
        %v4299 = vadd.f32 %v4235, %v3855
        %v4300 = vadd.f32 %v4236, %v3857
        %v4301 = vadd.f32 %v4237, %v3861
        %v4302 = vadd.f32 %v4238, %v3863
        %v4303 = vadd.f32 %v4239, %v3867
        %v4304 = vadd.f32 %v4240, %v3869
        %v4305 = vadd.f32 %v4241, %v3873
        %v4306 = vadd.f32 %v4242, %v3875
        %v4307 = vadd.f32 %v4243, %v3879
        %v4308 = vadd.f32 %v4244, %v3881
        %v4309 = vadd.f32 %v4245, %v3885
        %v4310 = vadd.f32 %v4246, %v3887
        %v4311 = vadd.f32 %v4247, %v4183
        %v4312 = vadd.f32 %v4248, %v4184
        %v4313 = vadd.f32 %v4249, %v4185
        %v4314 = vadd.f32 %v4250, %v4186
        %v4315 = vadd.f32 %v4251, %v4187
        %v4316 = vadd.f32 %v4252, %v4188
        %v4317 = vadd.f32 %v4253, %v4189
        %v4318 = vadd.f32 %v4254, %v4190
        %v4319 = vadd.f32 %v4255, %v4191
        %v4320 = vadd.f32 %v4256, %v4192
        %v4321 = vadd.f32 %v4257, %v4193
        %v4322 = vadd.f32 %v4258, %v4194
        %v4323 = vadd.f32 %v4259, %v4195
        %v4324 = vadd.f32 %v4260, %v4196
        %v4325 = vadd.f32 %v4261, %v4197
        %v4326 = vadd.f32 %v4262, %v4198
        %v4327 = vadd.f32 %v4263, %v4199
        %v4328 = vadd.f32 %v4264, %v4200
        %v4329 = vadd.f32 %v4265, %v4201
        %v4330 = vadd.f32 %v4266, %v4202
        %v4331 = vadd.f32 %v4267, %v4203
        %v4332 = vadd.f32 %v4268, %v4204
        %v4333 = vadd.f32 %v4269, %v4205
        %v4334 = vadd.f32 %v4270, %v4206
        %v4335 = vadd.f32 %v4271, %v4207
        %v4336 = vadd.f32 %v4272, %v4208
        %v4337 = vadd.f32 %v4273, %v4209
        %v4338 = vadd.f32 %v4274, %v4210
        %v4339 = vadd.f32 %v4275, %v4211
        %v4340 = vadd.f32 %v4276, %v4212
        %v4341 = vadd.f32 %v4277, %v4213
        %v4342 = vadd.f32 %v4278, %v4214
        %v4343 = vlaneseq
        %v4344 = vshrl.u32 %v4343, 7
        %v4345 = vsub.s32 3, %v4344
        %v4346 = vrot.slane %v340, %v4345
        %v4347 = vlaneseq
        %v4348 = vshrl.u32 %v4347, 7
        %v4349 = vsub.s32 3, %v4348
        %v4350 = vrot.slane %v341, %v4349
        %v4351 = vadd.f32 %v4279, %v4346
        %v4352 = vadd.f32 %v4280, %v4350
        %v4353 = vadd.f32 %v4281, %v4346
        %v4354 = vadd.f32 %v4282, %v4350
        %v4355 = vadd.f32 %v4283, %v4346
        %v4356 = vadd.f32 %v4284, %v4350
        %v4357 = vadd.f32 %v4285, %v4346
        %v4358 = vadd.f32 %v4286, %v4350
        %v4359 = vadd.f32 %v4287, %v4346
        %v4360 = vadd.f32 %v4288, %v4350
        %v4361 = vadd.f32 %v4289, %v4346
        %v4362 = vadd.f32 %v4290, %v4350
        %v4363 = vadd.f32 %v4291, %v4346
        %v4364 = vadd.f32 %v4292, %v4350
        %v4365 = vadd.f32 %v4293, %v4346
        %v4366 = vadd.f32 %v4294, %v4350
        %v4367 = vadd.f32 %v4295, %v4346
        %v4368 = vadd.f32 %v4296, %v4350
        %v4369 = vadd.f32 %v4297, %v4346
        %v4370 = vadd.f32 %v4298, %v4350
        %v4371 = vadd.f32 %v4299, %v4346
        %v4372 = vadd.f32 %v4300, %v4350
        %v4373 = vadd.f32 %v4301, %v4346
        %v4374 = vadd.f32 %v4302, %v4350
        %v4375 = vadd.f32 %v4303, %v4346
        %v4376 = vadd.f32 %v4304, %v4350
        %v4377 = vadd.f32 %v4305, %v4346
        %v4378 = vadd.f32 %v4306, %v4350
        %v4379 = vadd.f32 %v4307, %v4346
        %v4380 = vadd.f32 %v4308, %v4350
        %v4381 = vadd.f32 %v4309, %v4346
        %v4382 = vadd.f32 %v4310, %v4350
        %v4383 = vadd.f32 %v4311, %v4346
        %v4384 = vadd.f32 %v4312, %v4350
        %v4385 = vadd.f32 %v4313, %v4346
        %v4386 = vadd.f32 %v4314, %v4350
        %v4387 = vadd.f32 %v4315, %v4346
        %v4388 = vadd.f32 %v4316, %v4350
        %v4389 = vadd.f32 %v4317, %v4346
        %v4390 = vadd.f32 %v4318, %v4350
        %v4391 = vadd.f32 %v4319, %v4346
        %v4392 = vadd.f32 %v4320, %v4350
        %v4393 = vadd.f32 %v4321, %v4346
        %v4394 = vadd.f32 %v4322, %v4350
        %v4395 = vadd.f32 %v4323, %v4346
        %v4396 = vadd.f32 %v4324, %v4350
        %v4397 = vadd.f32 %v4325, %v4346
        %v4398 = vadd.f32 %v4326, %v4350
        %v4399 = vadd.f32 %v4327, %v4346
        %v4400 = vadd.f32 %v4328, %v4350
        %v4401 = vadd.f32 %v4329, %v4346
        %v4402 = vadd.f32 %v4330, %v4350
        %v4403 = vadd.f32 %v4331, %v4346
        %v4404 = vadd.f32 %v4332, %v4350
        %v4405 = vadd.f32 %v4333, %v4346
        %v4406 = vadd.f32 %v4334, %v4350
        %v4407 = vadd.f32 %v4335, %v4346
        %v4408 = vadd.f32 %v4336, %v4350
        %v4409 = vadd.f32 %v4337, %v4346
        %v4410 = vadd.f32 %v4338, %v4350
        %v4411 = vadd.f32 %v4339, %v4346
        %v4412 = vadd.f32 %v4340, %v4350
        %v4413 = vadd.f32 %v4341, %v4346
        %v4414 = vadd.f32 %v4342, %v4350
        %4415 = vmatprep.subr.mxu0 %v4382
        %4416 = vmatpush1.msra.mxu0 %v4381
        %4417 = vmatprep.subr.mxu0 %v4380
        %4418 = vmatpush1.msra.mxu0 %v4379
        %4419 = vmatprep.subr.mxu0 %v4378
        %4420 = vmatpush1.msra.mxu0 %v4377
        %4421 = vmatprep.subr.mxu0 %v4376
        %4422 = vmatpush1.msra.mxu0 %v4375
        %4423 = vmatprep.subr.mxu0 %v4374
        %4424 = vmatpush1.msra.mxu0 %v4373
        %4425 = vmatprep.subr.mxu0 %v4372
        %4426 = vmatpush1.msra.mxu0 %v4371
        %4427 = vmatprep.subr.mxu0 %v4370
        %4428 = vmatpush1.msra.mxu0 %v4369
        %4429 = vmatprep.subr.mxu0 %v4368
        %4430 = vmatpush1.msra.mxu0 %v4367
        %4431 = vmatprep.subr.mxu0 %v4366
        %4432 = vmatpush1.msra.mxu0 %v4365
        %4433 = vmatprep.subr.mxu0 %v4364
        %4434 = vmatpush1.msra.mxu0 %v4363
        %4435 = vmatprep.subr.mxu0 %v4362
        %4436 = vmatpush1.msra.mxu0 %v4361
        %4437 = vmatprep.subr.mxu0 %v4360
        %4438 = vmatpush1.msra.mxu0 %v4359
        %4439 = vmatprep.subr.mxu0 %v4358
        %4440 = vmatpush1.msra.mxu0 %v4357
        %4441 = vmatprep.subr.mxu0 %v4356
        %4442 = vmatpush1.msra.mxu0 %v4355
        %4443 = vmatprep.subr.mxu0 %v4354
        %4444 = vmatpush1.msra.mxu0 %v4353
        %4445 = vmatprep.subr.mxu0 %v4352
        %4446 = vmatpush1.msra.mxu0 %v4351
        %4447 = vmatprep.subr.mxu0 %v4414
        %4448 = vmatpush2.msra.mxu0 %v4413
        %4449 = vmatprep.subr.mxu0 %v4412
        %4450 = vmatpush2.msra.mxu0 %v4411
        %4451 = vmatprep.subr.mxu0 %v4410
        %4452 = vmatpush2.msra.mxu0 %v4409
        %4453 = vmatprep.subr.mxu0 %v4408
        %4454 = vmatpush2.msra.mxu0 %v4407
        %4455 = vmatprep.subr.mxu0 %v4406
        %4456 = vmatpush2.msra.mxu0 %v4405
        %4457 = vmatprep.subr.mxu0 %v4404
        %4458 = vmatpush2.msra.mxu0 %v4403
        %4459 = vmatprep.subr.mxu0 %v4402
        %4460 = vmatpush2.msra.mxu0 %v4401
        %4461 = vmatprep.subr.mxu0 %v4400
        %4462 = vmatpush2.msra.mxu0 %v4399
        %4463 = vmatprep.subr.mxu0 %v4398
        %4464 = vmatpush2.msra.mxu0 %v4397
        %4465 = vmatprep.subr.mxu0 %v4396
        %4466 = vmatpush2.msra.mxu0 %v4395
        %4467 = vmatprep.subr.mxu0 %v4394
        %4468 = vmatpush2.msra.mxu0 %v4393
        %4469 = vmatprep.subr.mxu0 %v4392
        %4470 = vmatpush2.msra.mxu0 %v4391
        %4471 = vmatprep.subr.mxu0 %v4390
        %4472 = vmatpush2.msra.mxu0 %v4389
        %4473 = vmatprep.subr.mxu0 %v4388
        %4474 = vmatpush2.msra.mxu0 %v4387
        %4475 = vmatprep.subr.mxu0 %v4386
        %4476 = vmatpush2.msra.mxu0 %v4385
        %4477 = vmatprep.subr.mxu0 %v4384
        %4478 = vmatpush2.msra.mxu0 %v4383
        %4479 = vmatprep.mubr.f32.mxu0 %v378
        %4480 = vmatmul.mubr.f32.gmra.mxu0 %v377
        %v4481 = vpop.f32.mrf.mxu0
        %v4482 = vadd.f32 0.0, %v4481
        %v4483 = vpop.f32.mrf.mxu0
        %v4484 = vadd.f32 0.0, %v4483
        %4485 = vdwg.mxu0
        %4486 = vmatprep.subr.mxu0 0.0
        %4487 = vmatpush1.msra.mxu0 %v360
        %4488 = vmatprep.subr.mxu0 0.0
        %4489 = vmatpush1.msra.mxu0 %v359
        %4490 = vmatprep.subr.mxu0 0.0
        %4491 = vmatpush1.msra.mxu0 %v358
        %4492 = vmatprep.subr.mxu0 0.0
        %4493 = vmatpush1.msra.mxu0 %v357
        %4494 = vmatprep.subr.mxu0 0.0
        %4495 = vmatpush1.msra.mxu0 %v356
        %4496 = vmatprep.subr.mxu0 0.0
        %4497 = vmatpush1.msra.mxu0 %v355
        %4498 = vmatprep.subr.mxu0 0.0
        %4499 = vmatpush1.msra.mxu0 %v354
        %4500 = vmatprep.subr.mxu0 0.0
        %4501 = vmatpush1.msra.mxu0 %v353
        %4502 = vmatprep.subr.mxu0 0.0
        %4503 = vmatpush1.msra.mxu0 %v352
        %4504 = vmatprep.subr.mxu0 0.0
        %4505 = vmatpush1.msra.mxu0 %v351
        %4506 = vmatprep.subr.mxu0 0.0
        %4507 = vmatpush1.msra.mxu0 %v350
        %4508 = vmatprep.subr.mxu0 0.0
        %4509 = vmatpush1.msra.mxu0 %v349
        %4510 = vmatprep.subr.mxu0 0.0
        %4511 = vmatpush1.msra.mxu0 %v348
        %4512 = vmatprep.subr.mxu0 0.0
        %4513 = vmatpush1.msra.mxu0 %v347
        %4514 = vmatprep.subr.mxu0 0.0
        %4515 = vmatpush1.msra.mxu0 %v346
        %4516 = vmatprep.subr.mxu0 0.0
        %4517 = vmatpush1.msra.mxu0 %v345
        %4518 = vmatprep.subr.mxu0 0.0
        %4519 = vmatpush2.msra.mxu0 %v376
        %4520 = vmatprep.subr.mxu0 0.0
        %4521 = vmatpush2.msra.mxu0 %v375
        %4522 = vmatprep.subr.mxu0 0.0
        %4523 = vmatpush2.msra.mxu0 %v374
        %4524 = vmatprep.subr.mxu0 0.0
        %4525 = vmatpush2.msra.mxu0 %v373
        %4526 = vmatprep.subr.mxu0 0.0
        %4527 = vmatpush2.msra.mxu0 %v372
        %4528 = vmatprep.subr.mxu0 0.0
        %4529 = vmatpush2.msra.mxu0 %v371
        %4530 = vmatprep.subr.mxu0 0.0
        %4531 = vmatpush2.msra.mxu0 %v370
        %4532 = vmatprep.subr.mxu0 0.0
        %4533 = vmatpush2.msra.mxu0 %v369
        %4534 = vmatprep.subr.mxu0 0.0
        %4535 = vmatpush2.msra.mxu0 %v368
        %4536 = vmatprep.subr.mxu0 0.0
        %4537 = vmatpush2.msra.mxu0 %v367
        %4538 = vmatprep.subr.mxu0 0.0
        %4539 = vmatpush2.msra.mxu0 %v366
        %4540 = vmatprep.subr.mxu0 0.0
        %4541 = vmatpush2.msra.mxu0 %v365
        %4542 = vmatprep.subr.mxu0 0.0
        %4543 = vmatpush2.msra.mxu0 %v364
        %4544 = vmatprep.subr.mxu0 0.0
        %4545 = vmatpush2.msra.mxu0 %v363
        %4546 = vmatprep.subr.mxu0 0.0
        %4547 = vmatpush2.msra.mxu0 %v362
        %4548 = vmatprep.subr.mxu0 0.0
        %4549 = vmatpush2.msra.mxu0 %v361
        %4550 = vmatprep.mubr.f32.mxu0 %v4484
        %4551 = vmatmul.mubr.f32.gmra.mxu0 %v4482
        %v4552 = vpop.f32.mrf.mxu0
        %v4553 = vadd.f32 0.0, %v4552
        %v4554 = vpop.f32.mrf.mxu0
        %4555 = vdwg.mxu0
        %v4556 = vmul.f32 %v4553, 0.00048828125
        %v4558 = vsel %vm1231, %v4556, 0
        %4560 = vmatprep.subr.mxu0 0.0
        %4561 = vmatpush1.msra.mxu0 0.0
        %4562 = vmatprep.subr.mxu0 0.0
        %4563 = vmatpush1.msra.mxu0 0.0
        %4564 = vmatprep.subr.mxu0 0.0
        %4565 = vmatpush1.msra.mxu0 0.0
        %4566 = vmatprep.subr.mxu0 0.0
        %4567 = vmatpush1.msra.mxu0 0.0
        %4568 = vmatprep.subr.mxu0 0.0
        %4569 = vmatpush1.msra.mxu0 0.0
        %4570 = vmatprep.subr.mxu0 0.0
        %4571 = vmatpush1.msra.mxu0 0.0
        %4572 = vmatprep.subr.mxu0 0.0
        %4573 = vmatpush1.msra.mxu0 0.0
        %4574 = vmatprep.subr.mxu0 0.0
        %4575 = vmatpush1.msra.mxu0 0.0
        %4576 = vmatprep.subr.mxu0 0.0
        %4577 = vmatpush1.msra.mxu0 0.0
        %4578 = vmatprep.subr.mxu0 0.0
        %4579 = vmatpush1.msra.mxu0 0.0
        %4580 = vmatprep.subr.mxu0 0.0
        %4581 = vmatpush1.msra.mxu0 0.0
        %4582 = vmatprep.subr.mxu0 0.0
        %4583 = vmatpush1.msra.mxu0 0.0
        %4584 = vmatprep.subr.mxu0 0.0
        %4585 = vmatpush1.msra.mxu0 0.0
        %4586 = vmatprep.subr.mxu0 0.0
        %4587 = vmatpush1.msra.mxu0 0.0
        %4588 = vmatprep.subr.mxu0 0.0
        %4589 = vmatpush1.msra.mxu0 0.0
        %4590 = vmatprep.subr.mxu0 %v1238
        %4591 = vmatpush1.msra.mxu0 %v1236
        %4592 = vmatprep.subr.mxu0 0.0
        %4593 = vmatpush2.msra.mxu0 0.0
        %4594 = vmatprep.subr.mxu0 0.0
        %4595 = vmatpush2.msra.mxu0 0.0
        %4596 = vmatprep.subr.mxu0 0.0
        %4597 = vmatpush2.msra.mxu0 0.0
        %4598 = vmatprep.subr.mxu0 0.0
        %4599 = vmatpush2.msra.mxu0 0.0
        %4600 = vmatprep.subr.mxu0 0.0
        %4601 = vmatpush2.msra.mxu0 0.0
        %4602 = vmatprep.subr.mxu0 0.0
        %4603 = vmatpush2.msra.mxu0 0.0
        %4604 = vmatprep.subr.mxu0 0.0
        %4605 = vmatpush2.msra.mxu0 0.0
        %4606 = vmatprep.subr.mxu0 0.0
        %4607 = vmatpush2.msra.mxu0 0.0
        %4608 = vmatprep.subr.mxu0 0.0
        %4609 = vmatpush2.msra.mxu0 0.0
        %4610 = vmatprep.subr.mxu0 0.0
        %4611 = vmatpush2.msra.mxu0 0.0
        %4612 = vmatprep.subr.mxu0 0.0
        %4613 = vmatpush2.msra.mxu0 0.0
        %4614 = vmatprep.subr.mxu0 0.0
        %4615 = vmatpush2.msra.mxu0 0.0
        %4616 = vmatprep.subr.mxu0 0.0
        %4617 = vmatpush2.msra.mxu0 0.0
        %4618 = vmatprep.subr.mxu0 0.0
        %4619 = vmatpush2.msra.mxu0 0.0
        %4620 = vmatprep.subr.mxu0 0.0
        %4621 = vmatpush2.msra.mxu0 0.0
        %4622 = vmatprep.subr.mxu0 0.0
        %4623 = vmatpush2.msra.mxu0 0.0
        %4624 = vmatprep.mubr.f32.mxu0 0.0
        %4625 = vmatmul.mubr.f32.gmra.mxu0 %v4558
        %v4626 = vpop.f32.mrf.mxu0
        %v4627 = vadd.f32 0.0, %v4626
        %v4628 = vpop.f32.mrf.mxu0
        %v4629 = vadd.f32 0.0, %v4628
        %4630 = vdwg.mxu0
        %4631 = vmatprep.subr.mxu0 0.0
        %4632 = vmatpush1.msra.mxu0 0.0
        %4633 = vmatprep.subr.mxu0 0.0
        %4634 = vmatpush1.msra.mxu0 0.0
        %4635 = vmatprep.subr.mxu0 0.0
        %4636 = vmatpush1.msra.mxu0 0.0
        %4637 = vmatprep.subr.mxu0 0.0
        %4638 = vmatpush1.msra.mxu0 0.0
        %4639 = vmatprep.subr.mxu0 0.0
        %4640 = vmatpush1.msra.mxu0 0.0
        %4641 = vmatprep.subr.mxu0 0.0
        %4642 = vmatpush1.msra.mxu0 0.0
        %4643 = vmatprep.subr.mxu0 0.0
        %4644 = vmatpush1.msra.mxu0 0.0
        %4645 = vmatprep.subr.mxu0 0.0
        %4646 = vmatpush1.msra.mxu0 0.0
        %4647 = vmatprep.subr.mxu0 0.0
        %4648 = vmatpush1.msra.mxu0 0.0
        %4649 = vmatprep.subr.mxu0 0.0
        %4650 = vmatpush1.msra.mxu0 0.0
        %4651 = vmatprep.subr.mxu0 0.0
        %4652 = vmatpush1.msra.mxu0 0.0
        %4653 = vmatprep.subr.mxu0 0.0
        %4654 = vmatpush1.msra.mxu0 0.0
        %4655 = vmatprep.subr.mxu0 0.0
        %4656 = vmatpush1.msra.mxu0 0.0
        %4657 = vmatprep.subr.mxu0 0.0
        %4658 = vmatpush1.msra.mxu0 0.0
        %4659 = vmatprep.subr.mxu0 0.0
        %4660 = vmatpush1.msra.mxu0 0.0
        %4661 = vmatprep.subr.mxu0 %v4629
        %4662 = vmatpush1.msra.mxu0 %v4627
        %4663 = vmatprep.subr.mxu0 0.0
        %4664 = vmatpush2.msra.mxu0 0.0
        %4665 = vmatprep.subr.mxu0 0.0
        %4666 = vmatpush2.msra.mxu0 0.0
        %4667 = vmatprep.subr.mxu0 0.0
        %4668 = vmatpush2.msra.mxu0 0.0
        %4669 = vmatprep.subr.mxu0 0.0
        %4670 = vmatpush2.msra.mxu0 0.0
        %4671 = vmatprep.subr.mxu0 0.0
        %4672 = vmatpush2.msra.mxu0 0.0
        %4673 = vmatprep.subr.mxu0 0.0
        %4674 = vmatpush2.msra.mxu0 0.0
        %4675 = vmatprep.subr.mxu0 0.0
        %4676 = vmatpush2.msra.mxu0 0.0
        %4677 = vmatprep.subr.mxu0 0.0
        %4678 = vmatpush2.msra.mxu0 0.0
        %4679 = vmatprep.subr.mxu0 0.0
        %4680 = vmatpush2.msra.mxu0 0.0
        %4681 = vmatprep.subr.mxu0 0.0
        %4682 = vmatpush2.msra.mxu0 0.0
        %4683 = vmatprep.subr.mxu0 0.0
        %4684 = vmatpush2.msra.mxu0 0.0
        %4685 = vmatprep.subr.mxu0 0.0
        %4686 = vmatpush2.msra.mxu0 0.0
        %4687 = vmatprep.subr.mxu0 0.0
        %4688 = vmatpush2.msra.mxu0 0.0
        %4689 = vmatprep.subr.mxu0 0.0
        %4690 = vmatpush2.msra.mxu0 0.0
        %4691 = vmatprep.subr.mxu0 0.0
        %4692 = vmatpush2.msra.mxu0 0.0
        %4693 = vmatprep.subr.mxu0 0.0
        %4694 = vmatpush2.msra.mxu0 0.0
        %4695 = vmatprep.mubr.f32.mxu0 0.0
        %4696 = vmatmul.mubr.f32.gmra.mxu0 %v1313
        %v4697 = vpop.f32.mrf.mxu0
        %v4698 = vadd.f32 0.0, %v4697
        %v4699 = vpop.f32.mrf.mxu0
        %v4700 = vadd.f32 0.0, %v4699
        %4701 = vmatprep.mubr.f32.mxu0 0.0
        %4702 = vmatmul.mubr.f32.gmra.mxu0 %v1316
        %v4703 = vpop.f32.mrf.mxu0
        %v4704 = vadd.f32 0.0, %v4703
        %v4705 = vpop.f32.mrf.mxu0
        %v4706 = vadd.f32 0.0, %v4705
        %4707 = vmatprep.mubr.f32.mxu0 0.0
        %4708 = vmatmul.mubr.f32.gmra.mxu0 %v1319
        %v4709 = vpop.f32.mrf.mxu0
        %v4710 = vadd.f32 0.0, %v4709
        %v4711 = vpop.f32.mrf.mxu0
        %v4712 = vadd.f32 0.0, %v4711
        %4713 = vmatprep.mubr.f32.mxu0 0.0
        %4714 = vmatmul.mubr.f32.gmra.mxu0 %v1322
        %v4715 = vpop.f32.mrf.mxu0
        %v4716 = vadd.f32 0.0, %v4715
        %v4717 = vpop.f32.mrf.mxu0
        %v4718 = vadd.f32 0.0, %v4717
        %4719 = vmatprep.mubr.f32.mxu0 0.0
        %4720 = vmatmul.mubr.f32.gmra.mxu0 %v1325
        %v4721 = vpop.f32.mrf.mxu0
        %v4722 = vadd.f32 0.0, %v4721
        %v4723 = vpop.f32.mrf.mxu0
        %v4724 = vadd.f32 0.0, %v4723
        %4725 = vmatprep.mubr.f32.mxu0 0.0
        %4726 = vmatmul.mubr.f32.gmra.mxu0 %v1328
        %v4727 = vpop.f32.mrf.mxu0
        %v4728 = vadd.f32 0.0, %v4727
        %v4729 = vpop.f32.mrf.mxu0
        %v4730 = vadd.f32 0.0, %v4729
        %4731 = vmatprep.mubr.f32.mxu0 0.0
        %4732 = vmatmul.mubr.f32.gmra.mxu0 %v1331
        %v4733 = vpop.f32.mrf.mxu0
        %v4734 = vadd.f32 0.0, %v4733
        %v4735 = vpop.f32.mrf.mxu0
        %v4736 = vadd.f32 0.0, %v4735
        %4737 = vmatprep.mubr.f32.mxu0 0.0
        %4738 = vmatmul.mubr.f32.gmra.mxu0 %v1334
        %v4739 = vpop.f32.mrf.mxu0
        %v4740 = vadd.f32 0.0, %v4739
        %v4741 = vpop.f32.mrf.mxu0
        %v4742 = vadd.f32 0.0, %v4741
        %4743 = vmatprep.mubr.f32.mxu0 0.0
        %4744 = vmatmul.mubr.f32.gmra.mxu0 %v1337
        %v4745 = vpop.f32.mrf.mxu0
        %v4746 = vadd.f32 0.0, %v4745
        %v4747 = vpop.f32.mrf.mxu0
        %v4748 = vadd.f32 0.0, %v4747
        %4749 = vmatprep.mubr.f32.mxu0 0.0
        %4750 = vmatmul.mubr.f32.gmra.mxu0 %v1340
        %v4751 = vpop.f32.mrf.mxu0
        %v4752 = vadd.f32 0.0, %v4751
        %v4753 = vpop.f32.mrf.mxu0
        %v4754 = vadd.f32 0.0, %v4753
        %4755 = vmatprep.mubr.f32.mxu0 0.0
        %4756 = vmatmul.mubr.f32.gmra.mxu0 %v1343
        %v4757 = vpop.f32.mrf.mxu0
        %v4758 = vadd.f32 0.0, %v4757
        %v4759 = vpop.f32.mrf.mxu0
        %v4760 = vadd.f32 0.0, %v4759
        %4761 = vmatprep.mubr.f32.mxu0 0.0
        %4762 = vmatmul.mubr.f32.gmra.mxu0 %v1346
        %v4763 = vpop.f32.mrf.mxu0
        %v4764 = vadd.f32 0.0, %v4763
        %v4765 = vpop.f32.mrf.mxu0
        %v4766 = vadd.f32 0.0, %v4765
        %4767 = vmatprep.mubr.f32.mxu0 0.0
        %4768 = vmatmul.mubr.f32.gmra.mxu0 %v1349
        %v4769 = vpop.f32.mrf.mxu0
        %v4770 = vadd.f32 0.0, %v4769
        %v4771 = vpop.f32.mrf.mxu0
        %v4772 = vadd.f32 0.0, %v4771
        %4773 = vmatprep.mubr.f32.mxu0 0.0
        %4774 = vmatmul.mubr.f32.gmra.mxu0 %v1352
        %v4775 = vpop.f32.mrf.mxu0
        %v4776 = vadd.f32 0.0, %v4775
        %v4777 = vpop.f32.mrf.mxu0
        %v4778 = vadd.f32 0.0, %v4777
        %4779 = vmatprep.mubr.f32.mxu0 0.0
        %4780 = vmatmul.mubr.f32.gmra.mxu0 %v1355
        %v4781 = vpop.f32.mrf.mxu0
        %v4782 = vadd.f32 0.0, %v4781
        %v4783 = vpop.f32.mrf.mxu0
        %v4784 = vadd.f32 0.0, %v4783
        %4785 = vmatprep.mubr.f32.mxu0 0.0
        %4786 = vmatmul.mubr.f32.gmra.mxu0 %v1358
        %v4787 = vpop.f32.mrf.mxu0
        %v4788 = vadd.f32 0.0, %v4787
        %v4789 = vpop.f32.mrf.mxu0
        %v4790 = vadd.f32 0.0, %v4789
        %4791 = vmatprep.mubr.f32.mxu0 0.0
        %4792 = vmatmul.mubr.f32.gmra.mxu0 %v1361
        %v4793 = vpop.f32.mrf.mxu0
        %v4794 = vadd.f32 0.0, %v4793
        %v4795 = vpop.f32.mrf.mxu0
        %v4796 = vadd.f32 0.0, %v4795
        %4797 = vmatprep.mubr.f32.mxu0 0.0
        %4798 = vmatmul.mubr.f32.gmra.mxu0 %v1364
        %v4799 = vpop.f32.mrf.mxu0
        %v4800 = vadd.f32 0.0, %v4799
        %v4801 = vpop.f32.mrf.mxu0
        %v4802 = vadd.f32 0.0, %v4801
        %4803 = vmatprep.mubr.f32.mxu0 0.0
        %4804 = vmatmul.mubr.f32.gmra.mxu0 %v1367
        %v4805 = vpop.f32.mrf.mxu0
        %v4806 = vadd.f32 0.0, %v4805
        %v4807 = vpop.f32.mrf.mxu0
        %v4808 = vadd.f32 0.0, %v4807
        %4809 = vmatprep.mubr.f32.mxu0 0.0
        %4810 = vmatmul.mubr.f32.gmra.mxu0 %v1370
        %v4811 = vpop.f32.mrf.mxu0
        %v4812 = vadd.f32 0.0, %v4811
        %v4813 = vpop.f32.mrf.mxu0
        %v4814 = vadd.f32 0.0, %v4813
        %4815 = vmatprep.mubr.f32.mxu0 0.0
        %4816 = vmatmul.mubr.f32.gmra.mxu0 %v1373
        %v4817 = vpop.f32.mrf.mxu0
        %v4818 = vadd.f32 0.0, %v4817
        %v4819 = vpop.f32.mrf.mxu0
        %v4820 = vadd.f32 0.0, %v4819
        %4821 = vmatprep.mubr.f32.mxu0 0.0
        %4822 = vmatmul.mubr.f32.gmra.mxu0 %v1376
        %v4823 = vpop.f32.mrf.mxu0
        %v4824 = vadd.f32 0.0, %v4823
        %v4825 = vpop.f32.mrf.mxu0
        %v4826 = vadd.f32 0.0, %v4825
        %4827 = vmatprep.mubr.f32.mxu0 0.0
        %4828 = vmatmul.mubr.f32.gmra.mxu0 %v1379
        %v4829 = vpop.f32.mrf.mxu0
        %v4830 = vadd.f32 0.0, %v4829
        %v4831 = vpop.f32.mrf.mxu0
        %v4832 = vadd.f32 0.0, %v4831
        %4833 = vmatprep.mubr.f32.mxu0 0.0
        %4834 = vmatmul.mubr.f32.gmra.mxu0 %v1382
        %v4835 = vpop.f32.mrf.mxu0
        %v4836 = vadd.f32 0.0, %v4835
        %v4837 = vpop.f32.mrf.mxu0
        %v4838 = vadd.f32 0.0, %v4837
        %4839 = vmatprep.mubr.f32.mxu0 0.0
        %4840 = vmatmul.mubr.f32.gmra.mxu0 %v1385
        %v4841 = vpop.f32.mrf.mxu0
        %v4842 = vadd.f32 0.0, %v4841
        %v4843 = vpop.f32.mrf.mxu0
        %v4844 = vadd.f32 0.0, %v4843
        %4845 = vmatprep.mubr.f32.mxu0 0.0
        %4846 = vmatmul.mubr.f32.gmra.mxu0 %v1388
        %v4847 = vpop.f32.mrf.mxu0
        %v4848 = vadd.f32 0.0, %v4847
        %v4849 = vpop.f32.mrf.mxu0
        %v4850 = vadd.f32 0.0, %v4849
        %4851 = vmatprep.mubr.f32.mxu0 0.0
        %4852 = vmatmul.mubr.f32.gmra.mxu0 %v1391
        %v4853 = vpop.f32.mrf.mxu0
        %v4854 = vadd.f32 0.0, %v4853
        %v4855 = vpop.f32.mrf.mxu0
        %v4856 = vadd.f32 0.0, %v4855
        %4857 = vmatprep.mubr.f32.mxu0 0.0
        %4858 = vmatmul.mubr.f32.gmra.mxu0 %v1394
        %v4859 = vpop.f32.mrf.mxu0
        %v4860 = vadd.f32 0.0, %v4859
        %v4861 = vpop.f32.mrf.mxu0
        %v4862 = vadd.f32 0.0, %v4861
        %4863 = vmatprep.mubr.f32.mxu0 0.0
        %4864 = vmatmul.mubr.f32.gmra.mxu0 %v1397
        %v4865 = vpop.f32.mrf.mxu0
        %v4866 = vadd.f32 0.0, %v4865
        %v4867 = vpop.f32.mrf.mxu0
        %v4868 = vadd.f32 0.0, %v4867
        %4869 = vmatprep.mubr.f32.mxu0 0.0
        %4870 = vmatmul.mubr.f32.gmra.mxu0 %v1400
        %v4871 = vpop.f32.mrf.mxu0
        %v4872 = vadd.f32 0.0, %v4871
        %v4873 = vpop.f32.mrf.mxu0
        %v4874 = vadd.f32 0.0, %v4873
        %4875 = vmatprep.mubr.f32.mxu0 0.0
        %4876 = vmatmul.mubr.f32.gmra.mxu0 %v1403
        %v4877 = vpop.f32.mrf.mxu0
        %v4878 = vadd.f32 0.0, %v4877
        %v4879 = vpop.f32.mrf.mxu0
        %v4880 = vadd.f32 0.0, %v4879
        %4881 = vmatprep.mubr.f32.mxu0 0.0
        %4882 = vmatmul.mubr.f32.gmra.mxu0 %v1406
        %v4883 = vpop.f32.mrf.mxu0
        %v4884 = vadd.f32 0.0, %v4883
        %v4885 = vpop.f32.mrf.mxu0
        %v4886 = vadd.f32 0.0, %v4885
        %4887 = vdwg.mxu0
        %v4888 = vsub.f32 %v4351, %v4698
        %v4889 = vsub.f32 %v4352, %v4700
        %v4890 = vsub.f32 %v4353, %v4704
        %v4891 = vsub.f32 %v4354, %v4706
        %v4892 = vsub.f32 %v4355, %v4710
        %v4893 = vsub.f32 %v4356, %v4712
        %v4894 = vsub.f32 %v4357, %v4716
        %v4895 = vsub.f32 %v4358, %v4718
        %v4896 = vsub.f32 %v4359, %v4722
        %v4897 = vsub.f32 %v4360, %v4724
        %v4898 = vsub.f32 %v4361, %v4728
        %v4899 = vsub.f32 %v4362, %v4730
        %v4900 = vsub.f32 %v4363, %v4734
        %v4901 = vsub.f32 %v4364, %v4736
        %v4902 = vsub.f32 %v4365, %v4740
        %v4903 = vsub.f32 %v4366, %v4742
        %v4904 = vsub.f32 %v4367, %v4746
        %v4905 = vsub.f32 %v4368, %v4748
        %v4906 = vsub.f32 %v4369, %v4752
        %v4907 = vsub.f32 %v4370, %v4754
        %v4908 = vsub.f32 %v4371, %v4758
        %v4909 = vsub.f32 %v4372, %v4760
        %v4910 = vsub.f32 %v4373, %v4764
        %v4911 = vsub.f32 %v4374, %v4766
        %v4912 = vsub.f32 %v4375, %v4770
        %v4913 = vsub.f32 %v4376, %v4772
        %v4914 = vsub.f32 %v4377, %v4776
        %v4915 = vsub.f32 %v4378, %v4778
        %v4916 = vsub.f32 %v4379, %v4782
        %v4917 = vsub.f32 %v4380, %v4784
        %v4918 = vsub.f32 %v4381, %v4788
        %v4919 = vsub.f32 %v4382, %v4790
        %v4920 = vsub.f32 %v4383, %v4794
        %v4921 = vsub.f32 %v4384, %v4796
        %v4922 = vsub.f32 %v4385, %v4800
        %v4923 = vsub.f32 %v4386, %v4802
        %v4924 = vsub.f32 %v4387, %v4806
        %v4925 = vsub.f32 %v4388, %v4808
        %v4926 = vsub.f32 %v4389, %v4812
        %v4927 = vsub.f32 %v4390, %v4814
        %v4928 = vsub.f32 %v4391, %v4818
        %v4929 = vsub.f32 %v4392, %v4820
        %v4930 = vsub.f32 %v4393, %v4824
        %v4931 = vsub.f32 %v4394, %v4826
        %v4932 = vsub.f32 %v4395, %v4830
        %v4933 = vsub.f32 %v4396, %v4832
        %v4934 = vsub.f32 %v4397, %v4836
        %v4935 = vsub.f32 %v4398, %v4838
        %v4936 = vsub.f32 %v4399, %v4842
        %v4937 = vsub.f32 %v4400, %v4844
        %v4938 = vsub.f32 %v4401, %v4848
        %v4939 = vsub.f32 %v4402, %v4850
        %v4940 = vsub.f32 %v4403, %v4854
        %v4941 = vsub.f32 %v4404, %v4856
        %v4942 = vsub.f32 %v4405, %v4860
        %v4943 = vsub.f32 %v4406, %v4862
        %v4944 = vsub.f32 %v4407, %v4866
        %v4945 = vsub.f32 %v4408, %v4868
        %v4946 = vsub.f32 %v4409, %v4872
        %v4947 = vsub.f32 %v4410, %v4874
        %v4948 = vsub.f32 %v4411, %v4878
        %v4949 = vsub.f32 %v4412, %v4880
        %v4950 = vsub.f32 %v4413, %v4884
        %v4951 = vsub.f32 %v4414, %v4886
        %v4952 = vmul.f32 %v4888, %v4888
        %v4953 = vmul.f32 %v4889, %v4889
        %v4954 = vmul.f32 %v4890, %v4890
        %v4955 = vmul.f32 %v4891, %v4891
        %v4956 = vmul.f32 %v4892, %v4892
        %v4957 = vmul.f32 %v4893, %v4893
        %v4958 = vmul.f32 %v4894, %v4894
        %v4959 = vmul.f32 %v4895, %v4895
        %v4960 = vmul.f32 %v4896, %v4896
        %v4961 = vmul.f32 %v4897, %v4897
        %v4962 = vmul.f32 %v4898, %v4898
        %v4963 = vmul.f32 %v4899, %v4899
        %v4964 = vmul.f32 %v4900, %v4900
        %v4965 = vmul.f32 %v4901, %v4901
        %v4966 = vmul.f32 %v4902, %v4902
        %v4967 = vmul.f32 %v4903, %v4903
        %v4968 = vmul.f32 %v4904, %v4904
        %v4969 = vmul.f32 %v4905, %v4905
        %v4970 = vmul.f32 %v4906, %v4906
        %v4971 = vmul.f32 %v4907, %v4907
        %v4972 = vmul.f32 %v4908, %v4908
        %v4973 = vmul.f32 %v4909, %v4909
        %v4974 = vmul.f32 %v4910, %v4910
        %v4975 = vmul.f32 %v4911, %v4911
        %v4976 = vmul.f32 %v4912, %v4912
        %v4977 = vmul.f32 %v4913, %v4913
        %v4978 = vmul.f32 %v4914, %v4914
        %v4979 = vmul.f32 %v4915, %v4915
        %v4980 = vmul.f32 %v4916, %v4916
        %v4981 = vmul.f32 %v4917, %v4917
        %v4982 = vmul.f32 %v4918, %v4918
        %v4983 = vmul.f32 %v4919, %v4919
        %v4984 = vmul.f32 %v4920, %v4920
        %v4985 = vmul.f32 %v4921, %v4921
        %v4986 = vmul.f32 %v4922, %v4922
        %v4987 = vmul.f32 %v4923, %v4923
        %v4988 = vmul.f32 %v4924, %v4924
        %v4989 = vmul.f32 %v4925, %v4925
        %v4990 = vmul.f32 %v4926, %v4926
        %v4991 = vmul.f32 %v4927, %v4927
        %v4992 = vmul.f32 %v4928, %v4928
        %v4993 = vmul.f32 %v4929, %v4929
        %v4994 = vmul.f32 %v4930, %v4930
        %v4995 = vmul.f32 %v4931, %v4931
        %v4996 = vmul.f32 %v4932, %v4932
        %v4997 = vmul.f32 %v4933, %v4933
        %v4998 = vmul.f32 %v4934, %v4934
        %v4999 = vmul.f32 %v4935, %v4935
        %v5000 = vmul.f32 %v4936, %v4936
        %v5001 = vmul.f32 %v4937, %v4937
        %v5002 = vmul.f32 %v4938, %v4938
        %v5003 = vmul.f32 %v4939, %v4939
        %v5004 = vmul.f32 %v4940, %v4940
        %v5005 = vmul.f32 %v4941, %v4941
        %v5006 = vmul.f32 %v4942, %v4942
        %v5007 = vmul.f32 %v4943, %v4943
        %v5008 = vmul.f32 %v4944, %v4944
        %v5009 = vmul.f32 %v4945, %v4945
        %v5010 = vmul.f32 %v4946, %v4946
        %v5011 = vmul.f32 %v4947, %v4947
        %v5012 = vmul.f32 %v4948, %v4948
        %v5013 = vmul.f32 %v4949, %v4949
        %v5014 = vmul.f32 %v4950, %v4950
        %v5015 = vmul.f32 %v4951, %v4951
        %5016 = vmatprep.subr.mxu0 %v4983
        %5017 = vmatpush1.msra.mxu0 %v4982
        %5018 = vmatprep.subr.mxu0 %v4981
        %5019 = vmatpush1.msra.mxu0 %v4980
        %5020 = vmatprep.subr.mxu0 %v4979
        %5021 = vmatpush1.msra.mxu0 %v4978
        %5022 = vmatprep.subr.mxu0 %v4977
        %5023 = vmatpush1.msra.mxu0 %v4976
        %5024 = vmatprep.subr.mxu0 %v4975
        %5025 = vmatpush1.msra.mxu0 %v4974
        %5026 = vmatprep.subr.mxu0 %v4973
        %5027 = vmatpush1.msra.mxu0 %v4972
        %5028 = vmatprep.subr.mxu0 %v4971
        %5029 = vmatpush1.msra.mxu0 %v4970
        %5030 = vmatprep.subr.mxu0 %v4969
        %5031 = vmatpush1.msra.mxu0 %v4968
        %5032 = vmatprep.subr.mxu0 %v4967
        %5033 = vmatpush1.msra.mxu0 %v4966
        %5034 = vmatprep.subr.mxu0 %v4965
        %5035 = vmatpush1.msra.mxu0 %v4964
        %5036 = vmatprep.subr.mxu0 %v4963
        %5037 = vmatpush1.msra.mxu0 %v4962
        %5038 = vmatprep.subr.mxu0 %v4961
        %5039 = vmatpush1.msra.mxu0 %v4960
        %5040 = vmatprep.subr.mxu0 %v4959
        %5041 = vmatpush1.msra.mxu0 %v4958
        %5042 = vmatprep.subr.mxu0 %v4957
        %5043 = vmatpush1.msra.mxu0 %v4956
        %5044 = vmatprep.subr.mxu0 %v4955
        %5045 = vmatpush1.msra.mxu0 %v4954
        %5046 = vmatprep.subr.mxu0 %v4953
        %5047 = vmatpush1.msra.mxu0 %v4952
        %5048 = vmatprep.subr.mxu0 %v5015
        %5049 = vmatpush2.msra.mxu0 %v5014
        %5050 = vmatprep.subr.mxu0 %v5013
        %5051 = vmatpush2.msra.mxu0 %v5012
        %5052 = vmatprep.subr.mxu0 %v5011
        %5053 = vmatpush2.msra.mxu0 %v5010
        %5054 = vmatprep.subr.mxu0 %v5009
        %5055 = vmatpush2.msra.mxu0 %v5008
        %5056 = vmatprep.subr.mxu0 %v5007
        %5057 = vmatpush2.msra.mxu0 %v5006
        %5058 = vmatprep.subr.mxu0 %v5005
        %5059 = vmatpush2.msra.mxu0 %v5004
        %5060 = vmatprep.subr.mxu0 %v5003
        %5061 = vmatpush2.msra.mxu0 %v5002
        %5062 = vmatprep.subr.mxu0 %v5001
        %5063 = vmatpush2.msra.mxu0 %v5000
        %5064 = vmatprep.subr.mxu0 %v4999
        %5065 = vmatpush2.msra.mxu0 %v4998
        %5066 = vmatprep.subr.mxu0 %v4997
        %5067 = vmatpush2.msra.mxu0 %v4996
        %5068 = vmatprep.subr.mxu0 %v4995
        %5069 = vmatpush2.msra.mxu0 %v4994
        %5070 = vmatprep.subr.mxu0 %v4993
        %5071 = vmatpush2.msra.mxu0 %v4992
        %5072 = vmatprep.subr.mxu0 %v4991
        %5073 = vmatpush2.msra.mxu0 %v4990
        %5074 = vmatprep.subr.mxu0 %v4989
        %5075 = vmatpush2.msra.mxu0 %v4988
        %5076 = vmatprep.subr.mxu0 %v4987
        %5077 = vmatpush2.msra.mxu0 %v4986
        %5078 = vmatprep.subr.mxu0 %v4985
        %5079 = vmatpush2.msra.mxu0 %v4984
        %5080 = vmatprep.mubr.f32.mxu0 %v378
        %5081 = vmatmul.mubr.f32.gmra.mxu0 %v377
        %v5082 = vpop.f32.mrf.mxu0
        %v5083 = vadd.f32 0.0, %v5082
        %v5084 = vpop.f32.mrf.mxu0
        %v5085 = vadd.f32 0.0, %v5084
        %5086 = vdwg.mxu0
        %5087 = vmatprep.subr.mxu0 0.0
        %5088 = vmatpush1.msra.mxu0 %v360
        %5089 = vmatprep.subr.mxu0 0.0
        %5090 = vmatpush1.msra.mxu0 %v359
        %5091 = vmatprep.subr.mxu0 0.0
        %5092 = vmatpush1.msra.mxu0 %v358
        %5093 = vmatprep.subr.mxu0 0.0
        %5094 = vmatpush1.msra.mxu0 %v357
        %5095 = vmatprep.subr.mxu0 0.0
        %5096 = vmatpush1.msra.mxu0 %v356
        %5097 = vmatprep.subr.mxu0 0.0
        %5098 = vmatpush1.msra.mxu0 %v355
        %5099 = vmatprep.subr.mxu0 0.0
        %5100 = vmatpush1.msra.mxu0 %v354
        %5101 = vmatprep.subr.mxu0 0.0
        %5102 = vmatpush1.msra.mxu0 %v353
        %5103 = vmatprep.subr.mxu0 0.0
        %5104 = vmatpush1.msra.mxu0 %v352
        %5105 = vmatprep.subr.mxu0 0.0
        %5106 = vmatpush1.msra.mxu0 %v351
        %5107 = vmatprep.subr.mxu0 0.0
        %5108 = vmatpush1.msra.mxu0 %v350
        %5109 = vmatprep.subr.mxu0 0.0
        %5110 = vmatpush1.msra.mxu0 %v349
        %5111 = vmatprep.subr.mxu0 0.0
        %5112 = vmatpush1.msra.mxu0 %v348
        %5113 = vmatprep.subr.mxu0 0.0
        %5114 = vmatpush1.msra.mxu0 %v347
        %5115 = vmatprep.subr.mxu0 0.0
        %5116 = vmatpush1.msra.mxu0 %v346
        %5117 = vmatprep.subr.mxu0 0.0
        %5118 = vmatpush1.msra.mxu0 %v345
        %5119 = vmatprep.subr.mxu0 0.0
        %5120 = vmatpush2.msra.mxu0 %v376
        %5121 = vmatprep.subr.mxu0 0.0
        %5122 = vmatpush2.msra.mxu0 %v375
        %5123 = vmatprep.subr.mxu0 0.0
        %5124 = vmatpush2.msra.mxu0 %v374
        %5125 = vmatprep.subr.mxu0 0.0
        %5126 = vmatpush2.msra.mxu0 %v373
        %5127 = vmatprep.subr.mxu0 0.0
        %5128 = vmatpush2.msra.mxu0 %v372
        %5129 = vmatprep.subr.mxu0 0.0
        %5130 = vmatpush2.msra.mxu0 %v371
        %5131 = vmatprep.subr.mxu0 0.0
        %5132 = vmatpush2.msra.mxu0 %v370
        %5133 = vmatprep.subr.mxu0 0.0
        %5134 = vmatpush2.msra.mxu0 %v369
        %5135 = vmatprep.subr.mxu0 0.0
        %5136 = vmatpush2.msra.mxu0 %v368
        %5137 = vmatprep.subr.mxu0 0.0
        %5138 = vmatpush2.msra.mxu0 %v367
        %5139 = vmatprep.subr.mxu0 0.0
        %5140 = vmatpush2.msra.mxu0 %v366
        %5141 = vmatprep.subr.mxu0 0.0
        %5142 = vmatpush2.msra.mxu0 %v365
        %5143 = vmatprep.subr.mxu0 0.0
        %5144 = vmatpush2.msra.mxu0 %v364
        %5145 = vmatprep.subr.mxu0 0.0
        %5146 = vmatpush2.msra.mxu0 %v363
        %5147 = vmatprep.subr.mxu0 0.0
        %5148 = vmatpush2.msra.mxu0 %v362
        %5149 = vmatprep.subr.mxu0 0.0
        %5150 = vmatpush2.msra.mxu0 %v361
        %5151 = vmatprep.mubr.f32.mxu0 %v5085
        %5152 = vmatmul.mubr.f32.gmra.mxu0 %v5083
        %v5153 = vpop.f32.mrf.mxu0
        %v5154 = vadd.f32 0.0, %v5153
        %v5155 = vpop.f32.mrf.mxu0
        %5156 = vdwg.mxu0
        %v5157 = vmul.f32 %v5154, 0.00048828125
        %v5158 = vadd.f32 %v5157, 0.0001
        %v5159 = vrsqrt.pop %v5158
        %v5161 = vsel %vm1231, %v5159, 0
        %5163 = vmatprep.subr.mxu0 0.0
        %5164 = vmatpush1.msra.mxu0 0.0
        %5165 = vmatprep.subr.mxu0 0.0
        %5166 = vmatpush1.msra.mxu0 0.0
        %5167 = vmatprep.subr.mxu0 0.0
        %5168 = vmatpush1.msra.mxu0 0.0
        %5169 = vmatprep.subr.mxu0 0.0
        %5170 = vmatpush1.msra.mxu0 0.0
        %5171 = vmatprep.subr.mxu0 0.0
        %5172 = vmatpush1.msra.mxu0 0.0
        %5173 = vmatprep.subr.mxu0 0.0
        %5174 = vmatpush1.msra.mxu0 0.0
        %5175 = vmatprep.subr.mxu0 0.0
        %5176 = vmatpush1.msra.mxu0 0.0
        %5177 = vmatprep.subr.mxu0 0.0
        %5178 = vmatpush1.msra.mxu0 0.0
        %5179 = vmatprep.subr.mxu0 0.0
        %5180 = vmatpush1.msra.mxu0 0.0
        %5181 = vmatprep.subr.mxu0 0.0
        %5182 = vmatpush1.msra.mxu0 0.0
        %5183 = vmatprep.subr.mxu0 0.0
        %5184 = vmatpush1.msra.mxu0 0.0
        %5185 = vmatprep.subr.mxu0 0.0
        %5186 = vmatpush1.msra.mxu0 0.0
        %5187 = vmatprep.subr.mxu0 0.0
        %5188 = vmatpush1.msra.mxu0 0.0
        %5189 = vmatprep.subr.mxu0 0.0
        %5190 = vmatpush1.msra.mxu0 0.0
        %5191 = vmatprep.subr.mxu0 0.0
        %5192 = vmatpush1.msra.mxu0 0.0
        %5193 = vmatprep.subr.mxu0 %v1238
        %5194 = vmatpush1.msra.mxu0 %v1236
        %5195 = vmatprep.subr.mxu0 0.0
        %5196 = vmatpush2.msra.mxu0 0.0
        %5197 = vmatprep.subr.mxu0 0.0
        %5198 = vmatpush2.msra.mxu0 0.0
        %5199 = vmatprep.subr.mxu0 0.0
        %5200 = vmatpush2.msra.mxu0 0.0
        %5201 = vmatprep.subr.mxu0 0.0
        %5202 = vmatpush2.msra.mxu0 0.0
        %5203 = vmatprep.subr.mxu0 0.0
        %5204 = vmatpush2.msra.mxu0 0.0
        %5205 = vmatprep.subr.mxu0 0.0
        %5206 = vmatpush2.msra.mxu0 0.0
        %5207 = vmatprep.subr.mxu0 0.0
        %5208 = vmatpush2.msra.mxu0 0.0
        %5209 = vmatprep.subr.mxu0 0.0
        %5210 = vmatpush2.msra.mxu0 0.0
        %5211 = vmatprep.subr.mxu0 0.0
        %5212 = vmatpush2.msra.mxu0 0.0
        %5213 = vmatprep.subr.mxu0 0.0
        %5214 = vmatpush2.msra.mxu0 0.0
        %5215 = vmatprep.subr.mxu0 0.0
        %5216 = vmatpush2.msra.mxu0 0.0
        %5217 = vmatprep.subr.mxu0 0.0
        %5218 = vmatpush2.msra.mxu0 0.0
        %5219 = vmatprep.subr.mxu0 0.0
        %5220 = vmatpush2.msra.mxu0 0.0
        %5221 = vmatprep.subr.mxu0 0.0
        %5222 = vmatpush2.msra.mxu0 0.0
        %5223 = vmatprep.subr.mxu0 0.0
        %5224 = vmatpush2.msra.mxu0 0.0
        %5225 = vmatprep.subr.mxu0 0.0
        %5226 = vmatpush2.msra.mxu0 0.0
        %5227 = vmatprep.mubr.f32.mxu0 0.0
        %5228 = vmatmul.mubr.f32.gmra.mxu0 %v5161
        %v5229 = vpop.f32.mrf.mxu0
        %v5230 = vadd.f32 0.0, %v5229
        %v5231 = vpop.f32.mrf.mxu0
        %v5232 = vadd.f32 0.0, %v5231
        %5233 = vdwg.mxu0
        %5234 = vmatprep.subr.mxu0 0.0
        %5235 = vmatpush1.msra.mxu0 0.0
        %5236 = vmatprep.subr.mxu0 0.0
        %5237 = vmatpush1.msra.mxu0 0.0
        %5238 = vmatprep.subr.mxu0 0.0
        %5239 = vmatpush1.msra.mxu0 0.0
        %5240 = vmatprep.subr.mxu0 0.0
        %5241 = vmatpush1.msra.mxu0 0.0
        %5242 = vmatprep.subr.mxu0 0.0
        %5243 = vmatpush1.msra.mxu0 0.0
        %5244 = vmatprep.subr.mxu0 0.0
        %5245 = vmatpush1.msra.mxu0 0.0
        %5246 = vmatprep.subr.mxu0 0.0
        %5247 = vmatpush1.msra.mxu0 0.0
        %5248 = vmatprep.subr.mxu0 0.0
        %5249 = vmatpush1.msra.mxu0 0.0
        %5250 = vmatprep.subr.mxu0 0.0
        %5251 = vmatpush1.msra.mxu0 0.0
        %5252 = vmatprep.subr.mxu0 0.0
        %5253 = vmatpush1.msra.mxu0 0.0
        %5254 = vmatprep.subr.mxu0 0.0
        %5255 = vmatpush1.msra.mxu0 0.0
        %5256 = vmatprep.subr.mxu0 0.0
        %5257 = vmatpush1.msra.mxu0 0.0
        %5258 = vmatprep.subr.mxu0 0.0
        %5259 = vmatpush1.msra.mxu0 0.0
        %5260 = vmatprep.subr.mxu0 0.0
        %5261 = vmatpush1.msra.mxu0 0.0
        %5262 = vmatprep.subr.mxu0 0.0
        %5263 = vmatpush1.msra.mxu0 0.0
        %5264 = vmatprep.subr.mxu0 %v5232
        %5265 = vmatpush1.msra.mxu0 %v5230
        %5266 = vmatprep.subr.mxu0 0.0
        %5267 = vmatpush2.msra.mxu0 0.0
        %5268 = vmatprep.subr.mxu0 0.0
        %5269 = vmatpush2.msra.mxu0 0.0
        %5270 = vmatprep.subr.mxu0 0.0
        %5271 = vmatpush2.msra.mxu0 0.0
        %5272 = vmatprep.subr.mxu0 0.0
        %5273 = vmatpush2.msra.mxu0 0.0
        %5274 = vmatprep.subr.mxu0 0.0
        %5275 = vmatpush2.msra.mxu0 0.0
        %5276 = vmatprep.subr.mxu0 0.0
        %5277 = vmatpush2.msra.mxu0 0.0
        %5278 = vmatprep.subr.mxu0 0.0
        %5279 = vmatpush2.msra.mxu0 0.0
        %5280 = vmatprep.subr.mxu0 0.0
        %5281 = vmatpush2.msra.mxu0 0.0
        %5282 = vmatprep.subr.mxu0 0.0
        %5283 = vmatpush2.msra.mxu0 0.0
        %5284 = vmatprep.subr.mxu0 0.0
        %5285 = vmatpush2.msra.mxu0 0.0
        %5286 = vmatprep.subr.mxu0 0.0
        %5287 = vmatpush2.msra.mxu0 0.0
        %5288 = vmatprep.subr.mxu0 0.0
        %5289 = vmatpush2.msra.mxu0 0.0
        %5290 = vmatprep.subr.mxu0 0.0
        %5291 = vmatpush2.msra.mxu0 0.0
        %5292 = vmatprep.subr.mxu0 0.0
        %5293 = vmatpush2.msra.mxu0 0.0
        %5294 = vmatprep.subr.mxu0 0.0
        %5295 = vmatpush2.msra.mxu0 0.0
        %5296 = vmatprep.subr.mxu0 0.0
        %5297 = vmatpush2.msra.mxu0 0.0
        %5298 = vmatprep.mubr.f32.mxu0 0.0
        %5299 = vmatmul.mubr.f32.gmra.mxu0 %v1313
        %v5300 = vpop.f32.mrf.mxu0
        %v5301 = vadd.f32 0.0, %v5300
        %v5302 = vpop.f32.mrf.mxu0
        %v5303 = vadd.f32 0.0, %v5302
        %5304 = vmatprep.mubr.f32.mxu0 0.0
        %5305 = vmatmul.mubr.f32.gmra.mxu0 %v1316
        %v5306 = vpop.f32.mrf.mxu0
        %v5307 = vadd.f32 0.0, %v5306
        %v5308 = vpop.f32.mrf.mxu0
        %v5309 = vadd.f32 0.0, %v5308
        %5310 = vmatprep.mubr.f32.mxu0 0.0
        %5311 = vmatmul.mubr.f32.gmra.mxu0 %v1319
        %v5312 = vpop.f32.mrf.mxu0
        %v5313 = vadd.f32 0.0, %v5312
        %v5314 = vpop.f32.mrf.mxu0
        %v5315 = vadd.f32 0.0, %v5314
        %5316 = vmatprep.mubr.f32.mxu0 0.0
        %5317 = vmatmul.mubr.f32.gmra.mxu0 %v1322
        %v5318 = vpop.f32.mrf.mxu0
        %v5319 = vadd.f32 0.0, %v5318
        %v5320 = vpop.f32.mrf.mxu0
        %v5321 = vadd.f32 0.0, %v5320
        %5322 = vmatprep.mubr.f32.mxu0 0.0
        %5323 = vmatmul.mubr.f32.gmra.mxu0 %v1325
        %v5324 = vpop.f32.mrf.mxu0
        %v5325 = vadd.f32 0.0, %v5324
        %v5326 = vpop.f32.mrf.mxu0
        %v5327 = vadd.f32 0.0, %v5326
        %5328 = vmatprep.mubr.f32.mxu0 0.0
        %5329 = vmatmul.mubr.f32.gmra.mxu0 %v1328
        %v5330 = vpop.f32.mrf.mxu0
        %v5331 = vadd.f32 0.0, %v5330
        %v5332 = vpop.f32.mrf.mxu0
        %v5333 = vadd.f32 0.0, %v5332
        %5334 = vmatprep.mubr.f32.mxu0 0.0
        %5335 = vmatmul.mubr.f32.gmra.mxu0 %v1331
        %v5336 = vpop.f32.mrf.mxu0
        %v5337 = vadd.f32 0.0, %v5336
        %v5338 = vpop.f32.mrf.mxu0
        %v5339 = vadd.f32 0.0, %v5338
        %5340 = vmatprep.mubr.f32.mxu0 0.0
        %5341 = vmatmul.mubr.f32.gmra.mxu0 %v1334
        %v5342 = vpop.f32.mrf.mxu0
        %v5343 = vadd.f32 0.0, %v5342
        %v5344 = vpop.f32.mrf.mxu0
        %v5345 = vadd.f32 0.0, %v5344
        %5346 = vmatprep.mubr.f32.mxu0 0.0
        %5347 = vmatmul.mubr.f32.gmra.mxu0 %v1337
        %v5348 = vpop.f32.mrf.mxu0
        %v5349 = vadd.f32 0.0, %v5348
        %v5350 = vpop.f32.mrf.mxu0
        %v5351 = vadd.f32 0.0, %v5350
        %5352 = vmatprep.mubr.f32.mxu0 0.0
        %5353 = vmatmul.mubr.f32.gmra.mxu0 %v1340
        %v5354 = vpop.f32.mrf.mxu0
        %v5355 = vadd.f32 0.0, %v5354
        %v5356 = vpop.f32.mrf.mxu0
        %v5357 = vadd.f32 0.0, %v5356
        %5358 = vmatprep.mubr.f32.mxu0 0.0
        %5359 = vmatmul.mubr.f32.gmra.mxu0 %v1343
        %v5360 = vpop.f32.mrf.mxu0
        %v5361 = vadd.f32 0.0, %v5360
        %v5362 = vpop.f32.mrf.mxu0
        %v5363 = vadd.f32 0.0, %v5362
        %5364 = vmatprep.mubr.f32.mxu0 0.0
        %5365 = vmatmul.mubr.f32.gmra.mxu0 %v1346
        %v5366 = vpop.f32.mrf.mxu0
        %v5367 = vadd.f32 0.0, %v5366
        %v5368 = vpop.f32.mrf.mxu0
        %v5369 = vadd.f32 0.0, %v5368
        %5370 = vmatprep.mubr.f32.mxu0 0.0
        %5371 = vmatmul.mubr.f32.gmra.mxu0 %v1349
        %v5372 = vpop.f32.mrf.mxu0
        %v5373 = vadd.f32 0.0, %v5372
        %v5374 = vpop.f32.mrf.mxu0
        %v5375 = vadd.f32 0.0, %v5374
        %5376 = vmatprep.mubr.f32.mxu0 0.0
        %5377 = vmatmul.mubr.f32.gmra.mxu0 %v1352
        %v5378 = vpop.f32.mrf.mxu0
        %v5379 = vadd.f32 0.0, %v5378
        %v5380 = vpop.f32.mrf.mxu0
        %v5381 = vadd.f32 0.0, %v5380
        %5382 = vmatprep.mubr.f32.mxu0 0.0
        %5383 = vmatmul.mubr.f32.gmra.mxu0 %v1355
        %v5384 = vpop.f32.mrf.mxu0
        %v5385 = vadd.f32 0.0, %v5384
        %v5386 = vpop.f32.mrf.mxu0
        %v5387 = vadd.f32 0.0, %v5386
        %5388 = vmatprep.mubr.f32.mxu0 0.0
        %5389 = vmatmul.mubr.f32.gmra.mxu0 %v1358
        %v5390 = vpop.f32.mrf.mxu0
        %v5391 = vadd.f32 0.0, %v5390
        %v5392 = vpop.f32.mrf.mxu0
        %v5393 = vadd.f32 0.0, %v5392
        %5394 = vmatprep.mubr.f32.mxu0 0.0
        %5395 = vmatmul.mubr.f32.gmra.mxu0 %v1361
        %v5396 = vpop.f32.mrf.mxu0
        %v5397 = vadd.f32 0.0, %v5396
        %v5398 = vpop.f32.mrf.mxu0
        %v5399 = vadd.f32 0.0, %v5398
        %5400 = vmatprep.mubr.f32.mxu0 0.0
        %5401 = vmatmul.mubr.f32.gmra.mxu0 %v1364
        %v5402 = vpop.f32.mrf.mxu0
        %v5403 = vadd.f32 0.0, %v5402
        %v5404 = vpop.f32.mrf.mxu0
        %v5405 = vadd.f32 0.0, %v5404
        %5406 = vmatprep.mubr.f32.mxu0 0.0
        %5407 = vmatmul.mubr.f32.gmra.mxu0 %v1367
        %v5408 = vpop.f32.mrf.mxu0
        %v5409 = vadd.f32 0.0, %v5408
        %v5410 = vpop.f32.mrf.mxu0
        %v5411 = vadd.f32 0.0, %v5410
        %5412 = vmatprep.mubr.f32.mxu0 0.0
        %5413 = vmatmul.mubr.f32.gmra.mxu0 %v1370
        %v5414 = vpop.f32.mrf.mxu0
        %v5415 = vadd.f32 0.0, %v5414
        %v5416 = vpop.f32.mrf.mxu0
        %v5417 = vadd.f32 0.0, %v5416
        %5418 = vmatprep.mubr.f32.mxu0 0.0
        %5419 = vmatmul.mubr.f32.gmra.mxu0 %v1373
        %v5420 = vpop.f32.mrf.mxu0
        %v5421 = vadd.f32 0.0, %v5420
        %v5422 = vpop.f32.mrf.mxu0
        %v5423 = vadd.f32 0.0, %v5422
        %5424 = vmatprep.mubr.f32.mxu0 0.0
        %5425 = vmatmul.mubr.f32.gmra.mxu0 %v1376
        %v5426 = vpop.f32.mrf.mxu0
        %v5427 = vadd.f32 0.0, %v5426
        %v5428 = vpop.f32.mrf.mxu0
        %v5429 = vadd.f32 0.0, %v5428
        %5430 = vmatprep.mubr.f32.mxu0 0.0
        %5431 = vmatmul.mubr.f32.gmra.mxu0 %v1379
        %v5432 = vpop.f32.mrf.mxu0
        %v5433 = vadd.f32 0.0, %v5432
        %v5434 = vpop.f32.mrf.mxu0
        %v5435 = vadd.f32 0.0, %v5434
        %5436 = vmatprep.mubr.f32.mxu0 0.0
        %5437 = vmatmul.mubr.f32.gmra.mxu0 %v1382
        %v5438 = vpop.f32.mrf.mxu0
        %v5439 = vadd.f32 0.0, %v5438
        %v5440 = vpop.f32.mrf.mxu0
        %v5441 = vadd.f32 0.0, %v5440
        %5442 = vmatprep.mubr.f32.mxu0 0.0
        %5443 = vmatmul.mubr.f32.gmra.mxu0 %v1385
        %v5444 = vpop.f32.mrf.mxu0
        %v5445 = vadd.f32 0.0, %v5444
        %v5446 = vpop.f32.mrf.mxu0
        %v5447 = vadd.f32 0.0, %v5446
        %5448 = vmatprep.mubr.f32.mxu0 0.0
        %5449 = vmatmul.mubr.f32.gmra.mxu0 %v1388
        %v5450 = vpop.f32.mrf.mxu0
        %v5451 = vadd.f32 0.0, %v5450
        %v5452 = vpop.f32.mrf.mxu0
        %v5453 = vadd.f32 0.0, %v5452
        %5454 = vmatprep.mubr.f32.mxu0 0.0
        %5455 = vmatmul.mubr.f32.gmra.mxu0 %v1391
        %v5456 = vpop.f32.mrf.mxu0
        %v5457 = vadd.f32 0.0, %v5456
        %v5458 = vpop.f32.mrf.mxu0
        %v5459 = vadd.f32 0.0, %v5458
        %5460 = vmatprep.mubr.f32.mxu0 0.0
        %5461 = vmatmul.mubr.f32.gmra.mxu0 %v1394
        %v5462 = vpop.f32.mrf.mxu0
        %v5463 = vadd.f32 0.0, %v5462
        %v5464 = vpop.f32.mrf.mxu0
        %v5465 = vadd.f32 0.0, %v5464
        %5466 = vmatprep.mubr.f32.mxu0 0.0
        %5467 = vmatmul.mubr.f32.gmra.mxu0 %v1397
        %v5468 = vpop.f32.mrf.mxu0
        %v5469 = vadd.f32 0.0, %v5468
        %v5470 = vpop.f32.mrf.mxu0
        %v5471 = vadd.f32 0.0, %v5470
        %5472 = vmatprep.mubr.f32.mxu0 0.0
        %5473 = vmatmul.mubr.f32.gmra.mxu0 %v1400
        %v5474 = vpop.f32.mrf.mxu0
        %v5475 = vadd.f32 0.0, %v5474
        %v5476 = vpop.f32.mrf.mxu0
        %v5477 = vadd.f32 0.0, %v5476
        %5478 = vmatprep.mubr.f32.mxu0 0.0
        %5479 = vmatmul.mubr.f32.gmra.mxu0 %v1403
        %v5480 = vpop.f32.mrf.mxu0
        %v5481 = vadd.f32 0.0, %v5480
        %v5482 = vpop.f32.mrf.mxu0
        %v5483 = vadd.f32 0.0, %v5482
        %5484 = vmatprep.mubr.f32.mxu0 0.0
        %5485 = vmatmul.mubr.f32.gmra.mxu0 %v1406
        %v5486 = vpop.f32.mrf.mxu0
        %v5487 = vadd.f32 0.0, %v5486
        %v5488 = vpop.f32.mrf.mxu0
        %v5489 = vadd.f32 0.0, %v5488
        %5490 = vdwg.mxu0
        %v5491 = vmul.f32 %v4888, %v5301
        %v5492 = vmul.f32 %v4889, %v5303
        %v5493 = vmul.f32 %v4890, %v5307
        %v5494 = vmul.f32 %v4891, %v5309
        %v5495 = vmul.f32 %v4892, %v5313
        %v5496 = vmul.f32 %v4893, %v5315
        %v5497 = vmul.f32 %v4894, %v5319
        %v5498 = vmul.f32 %v4895, %v5321
        %v5499 = vmul.f32 %v4896, %v5325
        %v5500 = vmul.f32 %v4897, %v5327
        %v5501 = vmul.f32 %v4898, %v5331
        %v5502 = vmul.f32 %v4899, %v5333
        %v5503 = vmul.f32 %v4900, %v5337
        %v5504 = vmul.f32 %v4901, %v5339
        %v5505 = vmul.f32 %v4902, %v5343
        %v5506 = vmul.f32 %v4903, %v5345
        %v5507 = vmul.f32 %v4904, %v5349
        %v5508 = vmul.f32 %v4905, %v5351
        %v5509 = vmul.f32 %v4906, %v5355
        %v5510 = vmul.f32 %v4907, %v5357
        %v5511 = vmul.f32 %v4908, %v5361
        %v5512 = vmul.f32 %v4909, %v5363
        %v5513 = vmul.f32 %v4910, %v5367
        %v5514 = vmul.f32 %v4911, %v5369
        %v5515 = vmul.f32 %v4912, %v5373
        %v5516 = vmul.f32 %v4913, %v5375
        %v5517 = vmul.f32 %v4914, %v5379
        %v5518 = vmul.f32 %v4915, %v5381
        %v5519 = vmul.f32 %v4916, %v5385
        %v5520 = vmul.f32 %v4917, %v5387
        %v5521 = vmul.f32 %v4918, %v5391
        %v5522 = vmul.f32 %v4919, %v5393
        %v5523 = vmul.f32 %v4920, %v5397
        %v5524 = vmul.f32 %v4921, %v5399
        %v5525 = vmul.f32 %v4922, %v5403
        %v5526 = vmul.f32 %v4923, %v5405
        %v5527 = vmul.f32 %v4924, %v5409
        %v5528 = vmul.f32 %v4925, %v5411
        %v5529 = vmul.f32 %v4926, %v5415
        %v5530 = vmul.f32 %v4927, %v5417
        %v5531 = vmul.f32 %v4928, %v5421
        %v5532 = vmul.f32 %v4929, %v5423
        %v5533 = vmul.f32 %v4930, %v5427
        %v5534 = vmul.f32 %v4931, %v5429
        %v5535 = vmul.f32 %v4932, %v5433
        %v5536 = vmul.f32 %v4933, %v5435
        %v5537 = vmul.f32 %v4934, %v5439
        %v5538 = vmul.f32 %v4935, %v5441
        %v5539 = vmul.f32 %v4936, %v5445
        %v5540 = vmul.f32 %v4937, %v5447
        %v5541 = vmul.f32 %v4938, %v5451
        %v5542 = vmul.f32 %v4939, %v5453
        %v5543 = vmul.f32 %v4940, %v5457
        %v5544 = vmul.f32 %v4941, %v5459
        %v5545 = vmul.f32 %v4942, %v5463
        %v5546 = vmul.f32 %v4943, %v5465
        %v5547 = vmul.f32 %v4944, %v5469
        %v5548 = vmul.f32 %v4945, %v5471
        %v5549 = vmul.f32 %v4946, %v5475
        %v5550 = vmul.f32 %v4947, %v5477
        %v5551 = vmul.f32 %v4948, %v5481
        %v5552 = vmul.f32 %v4949, %v5483
        %v5553 = vmul.f32 %v4950, %v5487
        %v5554 = vmul.f32 %v4951, %v5489
        %v5555 = vlaneseq
        %v5556 = vshrl.u32 %v5555, 7
        %v5557 = vsub.s32 4, %v5556
        %v5558 = vrot.slane %v340, %v5557
        %v5559 = vlaneseq
        %v5560 = vshrl.u32 %v5559, 7
        %v5561 = vsub.s32 4, %v5560
        %v5562 = vrot.slane %v341, %v5561
        %v5563 = vmul.f32 %v5491, %v5558
        %v5564 = vmul.f32 %v5492, %v5562
        %v5565 = vmul.f32 %v5493, %v5558
        %v5566 = vmul.f32 %v5494, %v5562
        %v5567 = vmul.f32 %v5495, %v5558
        %v5568 = vmul.f32 %v5496, %v5562
        %v5569 = vmul.f32 %v5497, %v5558
        %v5570 = vmul.f32 %v5498, %v5562
        %v5571 = vmul.f32 %v5499, %v5558
        %v5572 = vmul.f32 %v5500, %v5562
        %v5573 = vmul.f32 %v5501, %v5558
        %v5574 = vmul.f32 %v5502, %v5562
        %v5575 = vmul.f32 %v5503, %v5558
        %v5576 = vmul.f32 %v5504, %v5562
        %v5577 = vmul.f32 %v5505, %v5558
        %v5578 = vmul.f32 %v5506, %v5562
        %v5579 = vmul.f32 %v5507, %v5558
        %v5580 = vmul.f32 %v5508, %v5562
        %v5581 = vmul.f32 %v5509, %v5558
        %v5582 = vmul.f32 %v5510, %v5562
        %v5583 = vmul.f32 %v5511, %v5558
        %v5584 = vmul.f32 %v5512, %v5562
        %v5585 = vmul.f32 %v5513, %v5558
        %v5586 = vmul.f32 %v5514, %v5562
        %v5587 = vmul.f32 %v5515, %v5558
        %v5588 = vmul.f32 %v5516, %v5562
        %v5589 = vmul.f32 %v5517, %v5558
        %v5590 = vmul.f32 %v5518, %v5562
        %v5591 = vmul.f32 %v5519, %v5558
        %v5592 = vmul.f32 %v5520, %v5562
        %v5593 = vmul.f32 %v5521, %v5558
        %v5594 = vmul.f32 %v5522, %v5562
        %v5595 = vmul.f32 %v5523, %v5558
        %v5596 = vmul.f32 %v5524, %v5562
        %v5597 = vmul.f32 %v5525, %v5558
        %v5598 = vmul.f32 %v5526, %v5562
        %v5599 = vmul.f32 %v5527, %v5558
        %v5600 = vmul.f32 %v5528, %v5562
        %v5601 = vmul.f32 %v5529, %v5558
        %v5602 = vmul.f32 %v5530, %v5562
        %v5603 = vmul.f32 %v5531, %v5558
        %v5604 = vmul.f32 %v5532, %v5562
        %v5605 = vmul.f32 %v5533, %v5558
        %v5606 = vmul.f32 %v5534, %v5562
        %v5607 = vmul.f32 %v5535, %v5558
        %v5608 = vmul.f32 %v5536, %v5562
        %v5609 = vmul.f32 %v5537, %v5558
        %v5610 = vmul.f32 %v5538, %v5562
        %v5611 = vmul.f32 %v5539, %v5558
        %v5612 = vmul.f32 %v5540, %v5562
        %v5613 = vmul.f32 %v5541, %v5558
        %v5614 = vmul.f32 %v5542, %v5562
        %v5615 = vmul.f32 %v5543, %v5558
        %v5616 = vmul.f32 %v5544, %v5562
        %v5617 = vmul.f32 %v5545, %v5558
        %v5618 = vmul.f32 %v5546, %v5562
        %v5619 = vmul.f32 %v5547, %v5558
        %v5620 = vmul.f32 %v5548, %v5562
        %v5621 = vmul.f32 %v5549, %v5558
        %v5622 = vmul.f32 %v5550, %v5562
        %v5623 = vmul.f32 %v5551, %v5558
        %v5624 = vmul.f32 %v5552, %v5562
        %v5625 = vmul.f32 %v5553, %v5558
        %v5626 = vmul.f32 %v5554, %v5562
        %v5627 = vlaneseq
        %v5628 = vshrl.u32 %v5627, 7
        %v5629 = vsub.s32 5, %v5628
        %v5630 = vrot.slane %v340, %v5629
        %v5631 = vlaneseq
        %v5632 = vshrl.u32 %v5631, 7
        %v5633 = vsub.s32 5, %v5632
        %v5634 = vrot.slane %v341, %v5633
        %v5635 = vadd.f32 %v5563, %v5630
        %v5636 = vadd.f32 %v5564, %v5634
        %v5637 = vadd.f32 %v5565, %v5630
        %v5638 = vadd.f32 %v5566, %v5634
        %v5639 = vadd.f32 %v5567, %v5630
        %v5640 = vadd.f32 %v5568, %v5634
        %v5641 = vadd.f32 %v5569, %v5630
        %v5642 = vadd.f32 %v5570, %v5634
        %v5643 = vadd.f32 %v5571, %v5630
        %v5644 = vadd.f32 %v5572, %v5634
        %v5645 = vadd.f32 %v5573, %v5630
        %v5646 = vadd.f32 %v5574, %v5634
        %v5647 = vadd.f32 %v5575, %v5630
        %v5648 = vadd.f32 %v5576, %v5634
        %v5649 = vadd.f32 %v5577, %v5630
        %v5650 = vadd.f32 %v5578, %v5634
        %v5651 = vadd.f32 %v5579, %v5630
        %v5652 = vadd.f32 %v5580, %v5634
        %v5653 = vadd.f32 %v5581, %v5630
        %v5654 = vadd.f32 %v5582, %v5634
        %v5655 = vadd.f32 %v5583, %v5630
        %v5656 = vadd.f32 %v5584, %v5634
        %v5657 = vadd.f32 %v5585, %v5630
        %v5658 = vadd.f32 %v5586, %v5634
        %v5659 = vadd.f32 %v5587, %v5630
        %v5660 = vadd.f32 %v5588, %v5634
        %v5661 = vadd.f32 %v5589, %v5630
        %v5662 = vadd.f32 %v5590, %v5634
        %v5663 = vadd.f32 %v5591, %v5630
        %v5664 = vadd.f32 %v5592, %v5634
        %v5665 = vadd.f32 %v5593, %v5630
        %v5666 = vadd.f32 %v5594, %v5634
        %v5667 = vadd.f32 %v5595, %v5630
        %v5668 = vadd.f32 %v5596, %v5634
        %v5669 = vadd.f32 %v5597, %v5630
        %v5670 = vadd.f32 %v5598, %v5634
        %v5671 = vadd.f32 %v5599, %v5630
        %v5672 = vadd.f32 %v5600, %v5634
        %v5673 = vadd.f32 %v5601, %v5630
        %v5674 = vadd.f32 %v5602, %v5634
        %v5675 = vadd.f32 %v5603, %v5630
        %v5676 = vadd.f32 %v5604, %v5634
        %v5677 = vadd.f32 %v5605, %v5630
        %v5678 = vadd.f32 %v5606, %v5634
        %v5679 = vadd.f32 %v5607, %v5630
        %v5680 = vadd.f32 %v5608, %v5634
        %v5681 = vadd.f32 %v5609, %v5630
        %v5682 = vadd.f32 %v5610, %v5634
        %v5683 = vadd.f32 %v5611, %v5630
        %v5684 = vadd.f32 %v5612, %v5634
        %v5685 = vadd.f32 %v5613, %v5630
        %v5686 = vadd.f32 %v5614, %v5634
        %v5687 = vadd.f32 %v5615, %v5630
        %v5688 = vadd.f32 %v5616, %v5634
        %v5689 = vadd.f32 %v5617, %v5630
        %v5690 = vadd.f32 %v5618, %v5634
        %v5691 = vadd.f32 %v5619, %v5630
        %v5692 = vadd.f32 %v5620, %v5634
        %v5693 = vadd.f32 %v5621, %v5630
        %v5694 = vadd.f32 %v5622, %v5634
        %v5695 = vadd.f32 %v5623, %v5630
        %v5696 = vadd.f32 %v5624, %v5634
        %v5697 = vadd.f32 %v5625, %v5630
        %v5698 = vadd.f32 %v5626, %v5634
        %v5699 = vxor.u32 %v5635, 2147483648
        %v5700 = vxor.u32 %v5636, 2147483648
        %v5701 = vxor.u32 %v5637, 2147483648
        %v5702 = vxor.u32 %v5638, 2147483648
        %v5703 = vxor.u32 %v5639, 2147483648
        %v5704 = vxor.u32 %v5640, 2147483648
        %v5705 = vxor.u32 %v5641, 2147483648
        %v5706 = vxor.u32 %v5642, 2147483648
        %v5707 = vxor.u32 %v5643, 2147483648
        %v5708 = vxor.u32 %v5644, 2147483648
        %v5709 = vxor.u32 %v5645, 2147483648
        %v5710 = vxor.u32 %v5646, 2147483648
        %v5711 = vxor.u32 %v5647, 2147483648
        %v5712 = vxor.u32 %v5648, 2147483648
        %v5713 = vxor.u32 %v5649, 2147483648
        %v5714 = vxor.u32 %v5650, 2147483648
        %v5715 = vxor.u32 %v5651, 2147483648
        %v5716 = vxor.u32 %v5652, 2147483648
        %v5717 = vxor.u32 %v5653, 2147483648
        %v5718 = vxor.u32 %v5654, 2147483648
        %v5719 = vxor.u32 %v5655, 2147483648
        %v5720 = vxor.u32 %v5656, 2147483648
        %v5721 = vxor.u32 %v5657, 2147483648
        %v5722 = vxor.u32 %v5658, 2147483648
        %v5723 = vxor.u32 %v5659, 2147483648
        %v5724 = vxor.u32 %v5660, 2147483648
        %v5725 = vxor.u32 %v5661, 2147483648
        %v5726 = vxor.u32 %v5662, 2147483648
        %v5727 = vxor.u32 %v5663, 2147483648
        %v5728 = vxor.u32 %v5664, 2147483648
        %v5729 = vxor.u32 %v5665, 2147483648
        %v5730 = vxor.u32 %v5666, 2147483648
        %v5731 = vxor.u32 %v5667, 2147483648
        %v5732 = vxor.u32 %v5668, 2147483648
        %v5733 = vxor.u32 %v5669, 2147483648
        %v5734 = vxor.u32 %v5670, 2147483648
        %v5735 = vxor.u32 %v5671, 2147483648
        %v5736 = vxor.u32 %v5672, 2147483648
        %v5737 = vxor.u32 %v5673, 2147483648
        %v5738 = vxor.u32 %v5674, 2147483648
        %v5739 = vxor.u32 %v5675, 2147483648
        %v5740 = vxor.u32 %v5676, 2147483648
        %v5741 = vxor.u32 %v5677, 2147483648
        %v5742 = vxor.u32 %v5678, 2147483648
        %v5743 = vxor.u32 %v5679, 2147483648
        %v5744 = vxor.u32 %v5680, 2147483648
        %v5745 = vxor.u32 %v5681, 2147483648
        %v5746 = vxor.u32 %v5682, 2147483648
        %v5747 = vxor.u32 %v5683, 2147483648
        %v5748 = vxor.u32 %v5684, 2147483648
        %v5749 = vxor.u32 %v5685, 2147483648
        %v5750 = vxor.u32 %v5686, 2147483648
        %v5751 = vxor.u32 %v5687, 2147483648
        %v5752 = vxor.u32 %v5688, 2147483648
        %v5753 = vxor.u32 %v5689, 2147483648
        %v5754 = vxor.u32 %v5690, 2147483648
        %v5755 = vxor.u32 %v5691, 2147483648
        %v5756 = vxor.u32 %v5692, 2147483648
        %v5757 = vxor.u32 %v5693, 2147483648
        %v5758 = vxor.u32 %v5694, 2147483648
        %v5759 = vxor.u32 %v5695, 2147483648
        %v5760 = vxor.u32 %v5696, 2147483648
        %v5761 = vxor.u32 %v5697, 2147483648
        %v5762 = vxor.u32 %v5698, 2147483648
        %v5763 = vmul.f32 %v5699, 1.442695
        %v5764 = vpow.pop %v5763
        %v5765 = vmul.f32 %v5700, 1.442695
        %v5766 = vpow.pop %v5765
        %v5767 = vmul.f32 %v5701, 1.442695
        %v5768 = vpow.pop %v5767
        %v5769 = vmul.f32 %v5702, 1.442695
        %v5770 = vpow.pop %v5769
        %v5771 = vmul.f32 %v5703, 1.442695
        %v5772 = vpow.pop %v5771
        %v5773 = vmul.f32 %v5704, 1.442695
        %v5774 = vpow.pop %v5773
        %v5775 = vmul.f32 %v5705, 1.442695
        %v5776 = vpow.pop %v5775
        %v5777 = vmul.f32 %v5706, 1.442695
        %v5778 = vpow.pop %v5777
        %v5779 = vmul.f32 %v5707, 1.442695
        %v5780 = vpow.pop %v5779
        %v5781 = vmul.f32 %v5708, 1.442695
        %v5782 = vpow.pop %v5781
        %v5783 = vmul.f32 %v5709, 1.442695
        %v5784 = vpow.pop %v5783
        %v5785 = vmul.f32 %v5710, 1.442695
        %v5786 = vpow.pop %v5785
        %v5787 = vmul.f32 %v5711, 1.442695
        %v5788 = vpow.pop %v5787
        %v5789 = vmul.f32 %v5712, 1.442695
        %v5790 = vpow.pop %v5789
        %v5791 = vmul.f32 %v5713, 1.442695
        %v5792 = vpow.pop %v5791
        %v5793 = vmul.f32 %v5714, 1.442695
        %v5794 = vpow.pop %v5793
        %v5795 = vmul.f32 %v5715, 1.442695
        %v5796 = vpow.pop %v5795
        %v5797 = vmul.f32 %v5716, 1.442695
        %v5798 = vpow.pop %v5797
        %v5799 = vmul.f32 %v5717, 1.442695
        %v5800 = vpow.pop %v5799
        %v5801 = vmul.f32 %v5718, 1.442695
        %v5802 = vpow.pop %v5801
        %v5803 = vmul.f32 %v5719, 1.442695
        %v5804 = vpow.pop %v5803
        %v5805 = vmul.f32 %v5720, 1.442695
        %v5806 = vpow.pop %v5805
        %v5807 = vmul.f32 %v5721, 1.442695
        %v5808 = vpow.pop %v5807
        %v5809 = vmul.f32 %v5722, 1.442695
        %v5810 = vpow.pop %v5809
        %v5811 = vmul.f32 %v5723, 1.442695
        %v5812 = vpow.pop %v5811
        %v5813 = vmul.f32 %v5724, 1.442695
        %v5814 = vpow.pop %v5813
        %v5815 = vmul.f32 %v5725, 1.442695
        %v5816 = vpow.pop %v5815
        %v5817 = vmul.f32 %v5726, 1.442695
        %v5818 = vpow.pop %v5817
        %v5819 = vmul.f32 %v5727, 1.442695
        %v5820 = vpow.pop %v5819
        %v5821 = vmul.f32 %v5728, 1.442695
        %v5822 = vpow.pop %v5821
        %v5823 = vmul.f32 %v5729, 1.442695
        %v5824 = vpow.pop %v5823
        %v5825 = vmul.f32 %v5730, 1.442695
        %v5826 = vpow.pop %v5825
        %v5827 = vmul.f32 %v5731, 1.442695
        %v5828 = vpow.pop %v5827
        %v5829 = vmul.f32 %v5732, 1.442695
        %v5830 = vpow.pop %v5829
        %v5831 = vmul.f32 %v5733, 1.442695
        %v5832 = vpow.pop %v5831
        %v5833 = vmul.f32 %v5734, 1.442695
        %v5834 = vpow.pop %v5833
        %v5835 = vmul.f32 %v5735, 1.442695
        %v5836 = vpow.pop %v5835
        %v5837 = vmul.f32 %v5736, 1.442695
        %v5838 = vpow.pop %v5837
        %v5839 = vmul.f32 %v5737, 1.442695
        %v5840 = vpow.pop %v5839
        %v5841 = vmul.f32 %v5738, 1.442695
        %v5842 = vpow.pop %v5841
        %v5843 = vmul.f32 %v5739, 1.442695
        %v5844 = vpow.pop %v5843
        %v5845 = vmul.f32 %v5740, 1.442695
        %v5846 = vpow.pop %v5845
        %v5847 = vmul.f32 %v5741, 1.442695
        %v5848 = vpow.pop %v5847
        %v5849 = vmul.f32 %v5742, 1.442695
        %v5850 = vpow.pop %v5849
        %v5851 = vmul.f32 %v5743, 1.442695
        %v5852 = vpow.pop %v5851
        %v5853 = vmul.f32 %v5744, 1.442695
        %v5854 = vpow.pop %v5853
        %v5855 = vmul.f32 %v5745, 1.442695
        %v5856 = vpow.pop %v5855
        %v5857 = vmul.f32 %v5746, 1.442695
        %v5858 = vpow.pop %v5857
        %v5859 = vmul.f32 %v5747, 1.442695
        %v5860 = vpow.pop %v5859
        %v5861 = vmul.f32 %v5748, 1.442695
        %v5862 = vpow.pop %v5861
        %v5863 = vmul.f32 %v5749, 1.442695
        %v5864 = vpow.pop %v5863
        %v5865 = vmul.f32 %v5750, 1.442695
        %v5866 = vpow.pop %v5865
        %v5867 = vmul.f32 %v5751, 1.442695
        %v5868 = vpow.pop %v5867
        %v5869 = vmul.f32 %v5752, 1.442695
        %v5870 = vpow.pop %v5869
        %v5871 = vmul.f32 %v5753, 1.442695
        %v5872 = vpow.pop %v5871
        %v5873 = vmul.f32 %v5754, 1.442695
        %v5874 = vpow.pop %v5873
        %v5875 = vmul.f32 %v5755, 1.442695
        %v5876 = vpow.pop %v5875
        %v5877 = vmul.f32 %v5756, 1.442695
        %v5878 = vpow.pop %v5877
        %v5879 = vmul.f32 %v5757, 1.442695
        %v5880 = vpow.pop %v5879
        %v5881 = vmul.f32 %v5758, 1.442695
        %v5882 = vpow.pop %v5881
        %v5883 = vmul.f32 %v5759, 1.442695
        %v5884 = vpow.pop %v5883
        %v5885 = vmul.f32 %v5760, 1.442695
        %v5886 = vpow.pop %v5885
        %v5887 = vmul.f32 %v5761, 1.442695
        %v5888 = vpow.pop %v5887
        %v5889 = vmul.f32 %v5762, 1.442695
        %v5890 = vpow.pop %v5889
        %v5891 = vadd.f32 %v5764, 1.0
        %v5892 = vadd.f32 %v5766, 1.0
        %v5893 = vadd.f32 %v5768, 1.0
        %v5894 = vadd.f32 %v5770, 1.0
        %v5895 = vadd.f32 %v5772, 1.0
        %v5896 = vadd.f32 %v5774, 1.0
        %v5897 = vadd.f32 %v5776, 1.0
        %v5898 = vadd.f32 %v5778, 1.0
        %v5899 = vadd.f32 %v5780, 1.0
        %v5900 = vadd.f32 %v5782, 1.0
        %v5901 = vadd.f32 %v5784, 1.0
        %v5902 = vadd.f32 %v5786, 1.0
        %v5903 = vadd.f32 %v5788, 1.0
        %v5904 = vadd.f32 %v5790, 1.0
        %v5905 = vadd.f32 %v5792, 1.0
        %v5906 = vadd.f32 %v5794, 1.0
        %v5907 = vadd.f32 %v5796, 1.0
        %v5908 = vadd.f32 %v5798, 1.0
        %v5909 = vadd.f32 %v5800, 1.0
        %v5910 = vadd.f32 %v5802, 1.0
        %v5911 = vadd.f32 %v5804, 1.0
        %v5912 = vadd.f32 %v5806, 1.0
        %v5913 = vadd.f32 %v5808, 1.0
        %v5914 = vadd.f32 %v5810, 1.0
        %v5915 = vadd.f32 %v5812, 1.0
        %v5916 = vadd.f32 %v5814, 1.0
        %v5917 = vadd.f32 %v5816, 1.0
        %v5918 = vadd.f32 %v5818, 1.0
        %v5919 = vadd.f32 %v5820, 1.0
        %v5920 = vadd.f32 %v5822, 1.0
        %v5921 = vadd.f32 %v5824, 1.0
        %v5922 = vadd.f32 %v5826, 1.0
        %v5923 = vadd.f32 %v5828, 1.0
        %v5924 = vadd.f32 %v5830, 1.0
        %v5925 = vadd.f32 %v5832, 1.0
        %v5926 = vadd.f32 %v5834, 1.0
        %v5927 = vadd.f32 %v5836, 1.0
        %v5928 = vadd.f32 %v5838, 1.0
        %v5929 = vadd.f32 %v5840, 1.0
        %v5930 = vadd.f32 %v5842, 1.0
        %v5931 = vadd.f32 %v5844, 1.0
        %v5932 = vadd.f32 %v5846, 1.0
        %v5933 = vadd.f32 %v5848, 1.0
        %v5934 = vadd.f32 %v5850, 1.0
        %v5935 = vadd.f32 %v5852, 1.0
        %v5936 = vadd.f32 %v5854, 1.0
        %v5937 = vadd.f32 %v5856, 1.0
        %v5938 = vadd.f32 %v5858, 1.0
        %v5939 = vadd.f32 %v5860, 1.0
        %v5940 = vadd.f32 %v5862, 1.0
        %v5941 = vadd.f32 %v5864, 1.0
        %v5942 = vadd.f32 %v5866, 1.0
        %v5943 = vadd.f32 %v5868, 1.0
        %v5944 = vadd.f32 %v5870, 1.0
        %v5945 = vadd.f32 %v5872, 1.0
        %v5946 = vadd.f32 %v5874, 1.0
        %v5947 = vadd.f32 %v5876, 1.0
        %v5948 = vadd.f32 %v5878, 1.0
        %v5949 = vadd.f32 %v5880, 1.0
        %v5950 = vadd.f32 %v5882, 1.0
        %v5951 = vadd.f32 %v5884, 1.0
        %v5952 = vadd.f32 %v5886, 1.0
        %v5953 = vadd.f32 %v5888, 1.0
        %v5954 = vadd.f32 %v5890, 1.0
        %v5955 = vrcp.pop %v5891
        %v5956 = vmul.f32 1.0, %v5955
        %v5957 = vrcp.pop %v5892
        %v5958 = vmul.f32 1.0, %v5957
        %v5959 = vrcp.pop %v5893
        %v5960 = vmul.f32 1.0, %v5959
        %v5961 = vrcp.pop %v5894
        %v5962 = vmul.f32 1.0, %v5961
        %v5963 = vrcp.pop %v5895
        %v5964 = vmul.f32 1.0, %v5963
        %v5965 = vrcp.pop %v5896
        %v5966 = vmul.f32 1.0, %v5965
        %v5967 = vrcp.pop %v5897
        %v5968 = vmul.f32 1.0, %v5967
        %v5969 = vrcp.pop %v5898
        %v5970 = vmul.f32 1.0, %v5969
        %v5971 = vrcp.pop %v5899
        %v5972 = vmul.f32 1.0, %v5971
        %v5973 = vrcp.pop %v5900
        %v5974 = vmul.f32 1.0, %v5973
        %v5975 = vrcp.pop %v5901
        %v5976 = vmul.f32 1.0, %v5975
        %v5977 = vrcp.pop %v5902
        %v5978 = vmul.f32 1.0, %v5977
        %v5979 = vrcp.pop %v5903
        %v5980 = vmul.f32 1.0, %v5979
        %v5981 = vrcp.pop %v5904
        %v5982 = vmul.f32 1.0, %v5981
        %v5983 = vrcp.pop %v5905
        %v5984 = vmul.f32 1.0, %v5983
        %v5985 = vrcp.pop %v5906
        %v5986 = vmul.f32 1.0, %v5985
        %v5987 = vrcp.pop %v5907
        %v5988 = vmul.f32 1.0, %v5987
        %v5989 = vrcp.pop %v5908
        %v5990 = vmul.f32 1.0, %v5989
        %v5991 = vrcp.pop %v5909
        %v5992 = vmul.f32 1.0, %v5991
        %v5993 = vrcp.pop %v5910
        %v5994 = vmul.f32 1.0, %v5993
        %v5995 = vrcp.pop %v5911
        %v5996 = vmul.f32 1.0, %v5995
        %v5997 = vrcp.pop %v5912
        %v5998 = vmul.f32 1.0, %v5997
        %v5999 = vrcp.pop %v5913
        %v6000 = vmul.f32 1.0, %v5999
        %v6001 = vrcp.pop %v5914
        %v6002 = vmul.f32 1.0, %v6001
        %v6003 = vrcp.pop %v5915
        %v6004 = vmul.f32 1.0, %v6003
        %v6005 = vrcp.pop %v5916
        %v6006 = vmul.f32 1.0, %v6005
        %v6007 = vrcp.pop %v5917
        %v6008 = vmul.f32 1.0, %v6007
        %v6009 = vrcp.pop %v5918
        %v6010 = vmul.f32 1.0, %v6009
        %v6011 = vrcp.pop %v5919
        %v6012 = vmul.f32 1.0, %v6011
        %v6013 = vrcp.pop %v5920
        %v6014 = vmul.f32 1.0, %v6013
        %v6015 = vrcp.pop %v5921
        %v6016 = vmul.f32 1.0, %v6015
        %v6017 = vrcp.pop %v5922
        %v6018 = vmul.f32 1.0, %v6017
        %v6019 = vrcp.pop %v5923
        %v6020 = vmul.f32 1.0, %v6019
        %v6021 = vrcp.pop %v5924
        %v6022 = vmul.f32 1.0, %v6021
        %v6023 = vrcp.pop %v5925
        %v6024 = vmul.f32 1.0, %v6023
        %v6025 = vrcp.pop %v5926
        %v6026 = vmul.f32 1.0, %v6025
        %v6027 = vrcp.pop %v5927
        %v6028 = vmul.f32 1.0, %v6027
        %v6029 = vrcp.pop %v5928
        %v6030 = vmul.f32 1.0, %v6029
        %v6031 = vrcp.pop %v5929
        %v6032 = vmul.f32 1.0, %v6031
        %v6033 = vrcp.pop %v5930
        %v6034 = vmul.f32 1.0, %v6033
        %v6035 = vrcp.pop %v5931
        %v6036 = vmul.f32 1.0, %v6035
        %v6037 = vrcp.pop %v5932
        %v6038 = vmul.f32 1.0, %v6037
        %v6039 = vrcp.pop %v5933
        %v6040 = vmul.f32 1.0, %v6039
        %v6041 = vrcp.pop %v5934
        %v6042 = vmul.f32 1.0, %v6041
        %v6043 = vrcp.pop %v5935
        %v6044 = vmul.f32 1.0, %v6043
        %v6045 = vrcp.pop %v5936
        %v6046 = vmul.f32 1.0, %v6045
        %v6047 = vrcp.pop %v5937
        %v6048 = vmul.f32 1.0, %v6047
        %v6049 = vrcp.pop %v5938
        %v6050 = vmul.f32 1.0, %v6049
        %v6051 = vrcp.pop %v5939
        %v6052 = vmul.f32 1.0, %v6051
        %v6053 = vrcp.pop %v5940
        %v6054 = vmul.f32 1.0, %v6053
        %v6055 = vrcp.pop %v5941
        %v6056 = vmul.f32 1.0, %v6055
        %v6057 = vrcp.pop %v5942
        %v6058 = vmul.f32 1.0, %v6057
        %v6059 = vrcp.pop %v5943
        %v6060 = vmul.f32 1.0, %v6059
        %v6061 = vrcp.pop %v5944
        %v6062 = vmul.f32 1.0, %v6061
        %v6063 = vrcp.pop %v5945
        %v6064 = vmul.f32 1.0, %v6063
        %v6065 = vrcp.pop %v5946
        %v6066 = vmul.f32 1.0, %v6065
        %v6067 = vrcp.pop %v5947
        %v6068 = vmul.f32 1.0, %v6067
        %v6069 = vrcp.pop %v5948
        %v6070 = vmul.f32 1.0, %v6069
        %v6071 = vrcp.pop %v5949
        %v6072 = vmul.f32 1.0, %v6071
        %v6073 = vrcp.pop %v5950
        %v6074 = vmul.f32 1.0, %v6073
        %v6075 = vrcp.pop %v5951
        %v6076 = vmul.f32 1.0, %v6075
        %v6077 = vrcp.pop %v5952
        %v6078 = vmul.f32 1.0, %v6077
        %v6079 = vrcp.pop %v5953
        %v6080 = vmul.f32 1.0, %v6079
        %v6081 = vrcp.pop %v5954
        %v6082 = vmul.f32 1.0, %v6081
        %v6083 = vmul.f32 %v5635, %v5956
        %v6084 = vmul.f32 %v5636, %v5958
        %v6085 = vmul.f32 %v5637, %v5960
        %v6086 = vmul.f32 %v5638, %v5962
        %v6087 = vmul.f32 %v5639, %v5964
        %v6088 = vmul.f32 %v5640, %v5966
        %v6089 = vmul.f32 %v5641, %v5968
        %v6090 = vmul.f32 %v5642, %v5970
        %v6091 = vmul.f32 %v5643, %v5972
        %v6092 = vmul.f32 %v5644, %v5974
        %v6093 = vmul.f32 %v5645, %v5976
        %v6094 = vmul.f32 %v5646, %v5978
        %v6095 = vmul.f32 %v5647, %v5980
        %v6096 = vmul.f32 %v5648, %v5982
        %v6097 = vmul.f32 %v5649, %v5984
        %v6098 = vmul.f32 %v5650, %v5986
        %v6099 = vmul.f32 %v5651, %v5988
        %v6100 = vmul.f32 %v5652, %v5990
        %v6101 = vmul.f32 %v5653, %v5992
        %v6102 = vmul.f32 %v5654, %v5994
        %v6103 = vmul.f32 %v5655, %v5996
        %v6104 = vmul.f32 %v5656, %v5998
        %v6105 = vmul.f32 %v5657, %v6000
        %v6106 = vmul.f32 %v5658, %v6002
        %v6107 = vmul.f32 %v5659, %v6004
        %v6108 = vmul.f32 %v5660, %v6006
        %v6109 = vmul.f32 %v5661, %v6008
        %v6110 = vmul.f32 %v5662, %v6010
        %v6111 = vmul.f32 %v5663, %v6012
        %v6112 = vmul.f32 %v5664, %v6014
        %v6113 = vmul.f32 %v5665, %v6016
        %v6114 = vmul.f32 %v5666, %v6018
        %v6115 = vmul.f32 %v5667, %v6020
        %v6116 = vmul.f32 %v5668, %v6022
        %v6117 = vmul.f32 %v5669, %v6024
        %v6118 = vmul.f32 %v5670, %v6026
        %v6119 = vmul.f32 %v5671, %v6028
        %v6120 = vmul.f32 %v5672, %v6030
        %v6121 = vmul.f32 %v5673, %v6032
        %v6122 = vmul.f32 %v5674, %v6034
        %v6123 = vmul.f32 %v5675, %v6036
        %v6124 = vmul.f32 %v5676, %v6038
        %v6125 = vmul.f32 %v5677, %v6040
        %v6126 = vmul.f32 %v5678, %v6042
        %v6127 = vmul.f32 %v5679, %v6044
        %v6128 = vmul.f32 %v5680, %v6046
        %v6129 = vmul.f32 %v5681, %v6048
        %v6130 = vmul.f32 %v5682, %v6050
        %v6131 = vmul.f32 %v5683, %v6052
        %v6132 = vmul.f32 %v5684, %v6054
        %v6133 = vmul.f32 %v5685, %v6056
        %v6134 = vmul.f32 %v5686, %v6058
        %v6135 = vmul.f32 %v5687, %v6060
        %v6136 = vmul.f32 %v5688, %v6062
        %v6137 = vmul.f32 %v5689, %v6064
        %v6138 = vmul.f32 %v5690, %v6066
        %v6139 = vmul.f32 %v5691, %v6068
        %v6140 = vmul.f32 %v5692, %v6070
        %v6141 = vmul.f32 %v5693, %v6072
        %v6142 = vmul.f32 %v5694, %v6074
        %v6143 = vmul.f32 %v5695, %v6076
        %v6144 = vmul.f32 %v5696, %v6078
        %v6145 = vmul.f32 %v5697, %v6080
        %v6146 = vmul.f32 %v5698, %v6082
        %s6147 = scalar_lea.vmem %s2, 1536
        %v6148 = vld [vmem:[%s6147] sm:$0xff]
        %v6149 = vld [vmem:[%s6147 + $0x8] sm:$0xff]
        %v6150 = vld [vmem:[%s6147 + $0x10] sm:$0xff]
        %v6151 = vld [vmem:[%s6147 + $0x18] sm:$0xff]
        %v6152 = vld [vmem:[%s6147 + $0x20] sm:$0xff]
        %v6153 = vld [vmem:[%s6147 + $0x28] sm:$0xff]
        %v6154 = vld [vmem:[%s6147 + $0x30] sm:$0xff]
        %v6155 = vld [vmem:[%s6147 + $0x38] sm:$0xff]
        %v6156 = vld [vmem:[%s6147 + $0x40] sm:$0xff]
        %v6157 = vld [vmem:[%s6147 + $0x48] sm:$0xff]
        %v6158 = vld [vmem:[%s6147 + $0x50] sm:$0xff]
        %v6159 = vld [vmem:[%s6147 + $0x58] sm:$0xff]
        %v6160 = vld [vmem:[%s6147 + $0x60] sm:$0xff]
        %v6161 = vld [vmem:[%s6147 + $0x68] sm:$0xff]
        %v6162 = vld [vmem:[%s6147 + $0x70] sm:$0xff]
        %v6163 = vld [vmem:[%s6147 + $0x78] sm:$0xff]
        %v6164 = vld [vmem:[%s6147 + $0x80] sm:$0xff]
        %v6165 = vld [vmem:[%s6147 + $0x88] sm:$0xff]
        %v6166 = vld [vmem:[%s6147 + $0x90] sm:$0xff]
        %v6167 = vld [vmem:[%s6147 + $0x98] sm:$0xff]
        %v6168 = vld [vmem:[%s6147 + $0xa0] sm:$0xff]
        %v6169 = vld [vmem:[%s6147 + $0xa8] sm:$0xff]
        %v6170 = vld [vmem:[%s6147 + $0xb0] sm:$0xff]
        %v6171 = vld [vmem:[%s6147 + $0xb8] sm:$0xff]
        %v6172 = vld [vmem:[%s6147 + $0xc0] sm:$0xff]
        %v6173 = vld [vmem:[%s6147 + $0xc8] sm:$0xff]
        %v6174 = vld [vmem:[%s6147 + $0xd0] sm:$0xff]
        %v6175 = vld [vmem:[%s6147 + $0xd8] sm:$0xff]
        %v6176 = vld [vmem:[%s6147 + $0xe0] sm:$0xff]
        %v6177 = vld [vmem:[%s6147 + $0xe8] sm:$0xff]
        %v6178 = vld [vmem:[%s6147 + $0xf0] sm:$0xff]
        %v6179 = vld [vmem:[%s6147 + $0xf8] sm:$0xff]
        %v6180 = vld [vmem:[%s6147 + $0x100] sm:$0xff]
        %v6181 = vld [vmem:[%s6147 + $0x108] sm:$0xff]
        %v6182 = vld [vmem:[%s6147 + $0x110] sm:$0xff]
        %v6183 = vld [vmem:[%s6147 + $0x118] sm:$0xff]
        %v6184 = vld [vmem:[%s6147 + $0x120] sm:$0xff]
        %v6185 = vld [vmem:[%s6147 + $0x128] sm:$0xff]
        %v6186 = vld [vmem:[%s6147 + $0x130] sm:$0xff]
        %v6187 = vld [vmem:[%s6147 + $0x138] sm:$0xff]
        %v6188 = vld [vmem:[%s6147 + $0x140] sm:$0xff]
        %v6189 = vld [vmem:[%s6147 + $0x148] sm:$0xff]
        %v6190 = vld [vmem:[%s6147 + $0x150] sm:$0xff]
        %v6191 = vld [vmem:[%s6147 + $0x158] sm:$0xff]
        %v6192 = vld [vmem:[%s6147 + $0x160] sm:$0xff]
        %v6193 = vld [vmem:[%s6147 + $0x168] sm:$0xff]
        %v6194 = vld [vmem:[%s6147 + $0x170] sm:$0xff]
        %v6195 = vld [vmem:[%s6147 + $0x178] sm:$0xff]
        %v6196 = vld [vmem:[%s6147 + $0x180] sm:$0xff]
        %v6197 = vld [vmem:[%s6147 + $0x188] sm:$0xff]
        %v6198 = vld [vmem:[%s6147 + $0x190] sm:$0xff]
        %v6199 = vld [vmem:[%s6147 + $0x198] sm:$0xff]
        %v6200 = vld [vmem:[%s6147 + $0x1a0] sm:$0xff]
        %v6201 = vld [vmem:[%s6147 + $0x1a8] sm:$0xff]
        %v6202 = vld [vmem:[%s6147 + $0x1b0] sm:$0xff]
        %v6203 = vld [vmem:[%s6147 + $0x1b8] sm:$0xff]
        %v6204 = vld [vmem:[%s6147 + $0x1c0] sm:$0xff]
        %v6205 = vld [vmem:[%s6147 + $0x1c8] sm:$0xff]
        %v6206 = vld [vmem:[%s6147 + $0x1d0] sm:$0xff]
        %v6207 = vld [vmem:[%s6147 + $0x1d8] sm:$0xff]
        %v6208 = vld [vmem:[%s6147 + $0x1e0] sm:$0xff]
        %v6209 = vld [vmem:[%s6147 + $0x1e8] sm:$0xff]
        %v6210 = vld [vmem:[%s6147 + $0x1f0] sm:$0xff]
        %v6211 = vld [vmem:[%s6147 + $0x1f8] sm:$0xff]
        %6212 = vmatprep.subr.mxu0 %v6179
        %6213 = vmatpush1.msra.mxu0 %v6178
        %6214 = vmatprep.subr.mxu0 %v6177
        %6215 = vmatpush1.msra.mxu0 %v6176
        %6216 = vmatprep.subr.mxu0 %v6175
        %6217 = vmatpush1.msra.mxu0 %v6174
        %6218 = vmatprep.subr.mxu0 %v6173
        %6219 = vmatpush1.msra.mxu0 %v6172
        %6220 = vmatprep.subr.mxu0 %v6171
        %6221 = vmatpush1.msra.mxu0 %v6170
        %6222 = vmatprep.subr.mxu0 %v6169
        %6223 = vmatpush1.msra.mxu0 %v6168
        %6224 = vmatprep.subr.mxu0 %v6167
        %6225 = vmatpush1.msra.mxu0 %v6166
        %6226 = vmatprep.subr.mxu0 %v6165
        %6227 = vmatpush1.msra.mxu0 %v6164
        %6228 = vmatprep.subr.mxu0 %v6163
        %6229 = vmatpush1.msra.mxu0 %v6162
        %6230 = vmatprep.subr.mxu0 %v6161
        %6231 = vmatpush1.msra.mxu0 %v6160
        %6232 = vmatprep.subr.mxu0 %v6159
        %6233 = vmatpush1.msra.mxu0 %v6158
        %6234 = vmatprep.subr.mxu0 %v6157
        %6235 = vmatpush1.msra.mxu0 %v6156
        %6236 = vmatprep.subr.mxu0 %v6155
        %6237 = vmatpush1.msra.mxu0 %v6154
        %6238 = vmatprep.subr.mxu0 %v6153
        %6239 = vmatpush1.msra.mxu0 %v6152
        %6240 = vmatprep.subr.mxu0 %v6151
        %6241 = vmatpush1.msra.mxu0 %v6150
        %6242 = vmatprep.subr.mxu0 %v6149
        %6243 = vmatpush1.msra.mxu0 %v6148
        %6244 = vmatprep.subr.mxu0 %v6211
        %6245 = vmatpush2.msra.mxu0 %v6210
        %6246 = vmatprep.subr.mxu0 %v6209
        %6247 = vmatpush2.msra.mxu0 %v6208
        %6248 = vmatprep.subr.mxu0 %v6207
        %6249 = vmatpush2.msra.mxu0 %v6206
        %6250 = vmatprep.subr.mxu0 %v6205
        %6251 = vmatpush2.msra.mxu0 %v6204
        %6252 = vmatprep.subr.mxu0 %v6203
        %6253 = vmatpush2.msra.mxu0 %v6202
        %6254 = vmatprep.subr.mxu0 %v6201
        %6255 = vmatpush2.msra.mxu0 %v6200
        %6256 = vmatprep.subr.mxu0 %v6199
        %6257 = vmatpush2.msra.mxu0 %v6198
        %6258 = vmatprep.subr.mxu0 %v6197
        %6259 = vmatpush2.msra.mxu0 %v6196
        %6260 = vmatprep.subr.mxu0 %v6195
        %6261 = vmatpush2.msra.mxu0 %v6194
        %6262 = vmatprep.subr.mxu0 %v6193
        %6263 = vmatpush2.msra.mxu0 %v6192
        %6264 = vmatprep.subr.mxu0 %v6191
        %6265 = vmatpush2.msra.mxu0 %v6190
        %6266 = vmatprep.subr.mxu0 %v6189
        %6267 = vmatpush2.msra.mxu0 %v6188
        %6268 = vmatprep.subr.mxu0 %v6187
        %6269 = vmatpush2.msra.mxu0 %v6186
        %6270 = vmatprep.subr.mxu0 %v6185
        %6271 = vmatpush2.msra.mxu0 %v6184
        %6272 = vmatprep.subr.mxu0 %v6183
        %6273 = vmatpush2.msra.mxu0 %v6182
        %6274 = vmatprep.subr.mxu0 %v6181
        %6275 = vmatpush2.msra.mxu0 %v6180
        %6276 = vmatprep.mubr.f32.mxu0 %v6084
        %6277 = vmatmul.mubr.f32.gmra.mxu0 %v6083
        %v6278 = vpop.f32.mrf.mxu0
        %v6279 = vadd.f32 0.0, %v6278
        %v6280 = vpop.f32.mrf.mxu0
        %v6281 = vadd.f32 0.0, %v6280
        %6282 = vmatprep.mubr.f32.mxu0 %v6086
        %6283 = vmatmul.mubr.f32.gmra.mxu0 %v6085
        %v6284 = vpop.f32.mrf.mxu0
        %v6285 = vadd.f32 0.0, %v6284
        %v6286 = vpop.f32.mrf.mxu0
        %v6287 = vadd.f32 0.0, %v6286
        %6288 = vmatprep.mubr.f32.mxu0 %v6088
        %6289 = vmatmul.mubr.f32.gmra.mxu0 %v6087
        %v6290 = vpop.f32.mrf.mxu0
        %v6291 = vadd.f32 0.0, %v6290
        %v6292 = vpop.f32.mrf.mxu0
        %v6293 = vadd.f32 0.0, %v6292
        %6294 = vmatprep.mubr.f32.mxu0 %v6090
        %6295 = vmatmul.mubr.f32.gmra.mxu0 %v6089
        %v6296 = vpop.f32.mrf.mxu0
        %v6297 = vadd.f32 0.0, %v6296
        %v6298 = vpop.f32.mrf.mxu0
        %v6299 = vadd.f32 0.0, %v6298
        %6300 = vmatprep.mubr.f32.mxu0 %v6092
        %6301 = vmatmul.mubr.f32.gmra.mxu0 %v6091
        %v6302 = vpop.f32.mrf.mxu0
        %v6303 = vadd.f32 0.0, %v6302
        %v6304 = vpop.f32.mrf.mxu0
        %v6305 = vadd.f32 0.0, %v6304
        %6306 = vmatprep.mubr.f32.mxu0 %v6094
        %6307 = vmatmul.mubr.f32.gmra.mxu0 %v6093
        %v6308 = vpop.f32.mrf.mxu0
        %v6309 = vadd.f32 0.0, %v6308
        %v6310 = vpop.f32.mrf.mxu0
        %v6311 = vadd.f32 0.0, %v6310
        %6312 = vmatprep.mubr.f32.mxu0 %v6096
        %6313 = vmatmul.mubr.f32.gmra.mxu0 %v6095
        %v6314 = vpop.f32.mrf.mxu0
        %v6315 = vadd.f32 0.0, %v6314
        %v6316 = vpop.f32.mrf.mxu0
        %v6317 = vadd.f32 0.0, %v6316
        %6318 = vmatprep.mubr.f32.mxu0 %v6098
        %6319 = vmatmul.mubr.f32.gmra.mxu0 %v6097
        %v6320 = vpop.f32.mrf.mxu0
        %v6321 = vadd.f32 0.0, %v6320
        %v6322 = vpop.f32.mrf.mxu0
        %v6323 = vadd.f32 0.0, %v6322
        %6324 = vmatprep.mubr.f32.mxu0 %v6100
        %6325 = vmatmul.mubr.f32.gmra.mxu0 %v6099
        %v6326 = vpop.f32.mrf.mxu0
        %v6327 = vadd.f32 0.0, %v6326
        %v6328 = vpop.f32.mrf.mxu0
        %v6329 = vadd.f32 0.0, %v6328
        %6330 = vmatprep.mubr.f32.mxu0 %v6102
        %6331 = vmatmul.mubr.f32.gmra.mxu0 %v6101
        %v6332 = vpop.f32.mrf.mxu0
        %v6333 = vadd.f32 0.0, %v6332
        %v6334 = vpop.f32.mrf.mxu0
        %v6335 = vadd.f32 0.0, %v6334
        %6336 = vmatprep.mubr.f32.mxu0 %v6104
        %6337 = vmatmul.mubr.f32.gmra.mxu0 %v6103
        %v6338 = vpop.f32.mrf.mxu0
        %v6339 = vadd.f32 0.0, %v6338
        %v6340 = vpop.f32.mrf.mxu0
        %v6341 = vadd.f32 0.0, %v6340
        %6342 = vmatprep.mubr.f32.mxu0 %v6106
        %6343 = vmatmul.mubr.f32.gmra.mxu0 %v6105
        %v6344 = vpop.f32.mrf.mxu0
        %v6345 = vadd.f32 0.0, %v6344
        %v6346 = vpop.f32.mrf.mxu0
        %v6347 = vadd.f32 0.0, %v6346
        %6348 = vmatprep.mubr.f32.mxu0 %v6108
        %6349 = vmatmul.mubr.f32.gmra.mxu0 %v6107
        %v6350 = vpop.f32.mrf.mxu0
        %v6351 = vadd.f32 0.0, %v6350
        %v6352 = vpop.f32.mrf.mxu0
        %v6353 = vadd.f32 0.0, %v6352
        %6354 = vmatprep.mubr.f32.mxu0 %v6110
        %6355 = vmatmul.mubr.f32.gmra.mxu0 %v6109
        %v6356 = vpop.f32.mrf.mxu0
        %v6357 = vadd.f32 0.0, %v6356
        %v6358 = vpop.f32.mrf.mxu0
        %v6359 = vadd.f32 0.0, %v6358
        %6360 = vmatprep.mubr.f32.mxu0 %v6112
        %6361 = vmatmul.mubr.f32.gmra.mxu0 %v6111
        %v6362 = vpop.f32.mrf.mxu0
        %v6363 = vadd.f32 0.0, %v6362
        %v6364 = vpop.f32.mrf.mxu0
        %v6365 = vadd.f32 0.0, %v6364
        %6366 = vmatprep.mubr.f32.mxu0 %v6114
        %6367 = vmatmul.mubr.f32.gmra.mxu0 %v6113
        %v6368 = vpop.f32.mrf.mxu0
        %v6369 = vadd.f32 0.0, %v6368
        %v6370 = vpop.f32.mrf.mxu0
        %v6371 = vadd.f32 0.0, %v6370
        %6372 = vmatprep.mubr.f32.mxu0 %v6116
        %6373 = vmatmul.mubr.f32.gmra.mxu0 %v6115
        %v6374 = vpop.f32.mrf.mxu0
        %v6375 = vadd.f32 0.0, %v6374
        %v6376 = vpop.f32.mrf.mxu0
        %v6377 = vadd.f32 0.0, %v6376
        %6378 = vmatprep.mubr.f32.mxu0 %v6118
        %6379 = vmatmul.mubr.f32.gmra.mxu0 %v6117
        %v6380 = vpop.f32.mrf.mxu0
        %v6381 = vadd.f32 0.0, %v6380
        %v6382 = vpop.f32.mrf.mxu0
        %v6383 = vadd.f32 0.0, %v6382
        %6384 = vmatprep.mubr.f32.mxu0 %v6120
        %6385 = vmatmul.mubr.f32.gmra.mxu0 %v6119
        %v6386 = vpop.f32.mrf.mxu0
        %v6387 = vadd.f32 0.0, %v6386
        %v6388 = vpop.f32.mrf.mxu0
        %v6389 = vadd.f32 0.0, %v6388
        %6390 = vmatprep.mubr.f32.mxu0 %v6122
        %6391 = vmatmul.mubr.f32.gmra.mxu0 %v6121
        %v6392 = vpop.f32.mrf.mxu0
        %v6393 = vadd.f32 0.0, %v6392
        %v6394 = vpop.f32.mrf.mxu0
        %v6395 = vadd.f32 0.0, %v6394
        %6396 = vmatprep.mubr.f32.mxu0 %v6124
        %6397 = vmatmul.mubr.f32.gmra.mxu0 %v6123
        %v6398 = vpop.f32.mrf.mxu0
        %v6399 = vadd.f32 0.0, %v6398
        %v6400 = vpop.f32.mrf.mxu0
        %v6401 = vadd.f32 0.0, %v6400
        %6402 = vmatprep.mubr.f32.mxu0 %v6126
        %6403 = vmatmul.mubr.f32.gmra.mxu0 %v6125
        %v6404 = vpop.f32.mrf.mxu0
        %v6405 = vadd.f32 0.0, %v6404
        %v6406 = vpop.f32.mrf.mxu0
        %v6407 = vadd.f32 0.0, %v6406
        %6408 = vmatprep.mubr.f32.mxu0 %v6128
        %6409 = vmatmul.mubr.f32.gmra.mxu0 %v6127
        %v6410 = vpop.f32.mrf.mxu0
        %v6411 = vadd.f32 0.0, %v6410
        %v6412 = vpop.f32.mrf.mxu0
        %v6413 = vadd.f32 0.0, %v6412
        %6414 = vmatprep.mubr.f32.mxu0 %v6130
        %6415 = vmatmul.mubr.f32.gmra.mxu0 %v6129
        %v6416 = vpop.f32.mrf.mxu0
        %v6417 = vadd.f32 0.0, %v6416
        %v6418 = vpop.f32.mrf.mxu0
        %v6419 = vadd.f32 0.0, %v6418
        %6420 = vmatprep.mubr.f32.mxu0 %v6132
        %6421 = vmatmul.mubr.f32.gmra.mxu0 %v6131
        %v6422 = vpop.f32.mrf.mxu0
        %v6423 = vadd.f32 0.0, %v6422
        %v6424 = vpop.f32.mrf.mxu0
        %v6425 = vadd.f32 0.0, %v6424
        %6426 = vmatprep.mubr.f32.mxu0 %v6134
        %6427 = vmatmul.mubr.f32.gmra.mxu0 %v6133
        %v6428 = vpop.f32.mrf.mxu0
        %v6429 = vadd.f32 0.0, %v6428
        %v6430 = vpop.f32.mrf.mxu0
        %v6431 = vadd.f32 0.0, %v6430
        %6432 = vmatprep.mubr.f32.mxu0 %v6136
        %6433 = vmatmul.mubr.f32.gmra.mxu0 %v6135
        %v6434 = vpop.f32.mrf.mxu0
        %v6435 = vadd.f32 0.0, %v6434
        %v6436 = vpop.f32.mrf.mxu0
        %v6437 = vadd.f32 0.0, %v6436
        %6438 = vmatprep.mubr.f32.mxu0 %v6138
        %6439 = vmatmul.mubr.f32.gmra.mxu0 %v6137
        %v6440 = vpop.f32.mrf.mxu0
        %v6441 = vadd.f32 0.0, %v6440
        %v6442 = vpop.f32.mrf.mxu0
        %v6443 = vadd.f32 0.0, %v6442
        %6444 = vmatprep.mubr.f32.mxu0 %v6140
        %6445 = vmatmul.mubr.f32.gmra.mxu0 %v6139
        %v6446 = vpop.f32.mrf.mxu0
        %v6447 = vadd.f32 0.0, %v6446
        %v6448 = vpop.f32.mrf.mxu0
        %v6449 = vadd.f32 0.0, %v6448
        %6450 = vmatprep.mubr.f32.mxu0 %v6142
        %6451 = vmatmul.mubr.f32.gmra.mxu0 %v6141
        %v6452 = vpop.f32.mrf.mxu0
        %v6453 = vadd.f32 0.0, %v6452
        %v6454 = vpop.f32.mrf.mxu0
        %v6455 = vadd.f32 0.0, %v6454
        %6456 = vmatprep.mubr.f32.mxu0 %v6144
        %6457 = vmatmul.mubr.f32.gmra.mxu0 %v6143
        %v6458 = vpop.f32.mrf.mxu0
        %v6459 = vadd.f32 0.0, %v6458
        %v6460 = vpop.f32.mrf.mxu0
        %v6461 = vadd.f32 0.0, %v6460
        %6462 = vmatprep.mubr.f32.mxu0 %v6146
        %6463 = vmatmul.mubr.f32.gmra.mxu0 %v6145
        %v6464 = vpop.f32.mrf.mxu0
        %v6465 = vadd.f32 0.0, %v6464
        %v6466 = vpop.f32.mrf.mxu0
        %v6467 = vadd.f32 0.0, %v6466
        %6468 = vdwg.mxu0
        %s6469 = scalar_lea.vmem %s2, 2048
        %v6470 = vld [vmem:[%s6469] sm:$0xff]
        %v6471 = vld [vmem:[%s6469 + $0x8] sm:$0xff]
        %v6472 = vld [vmem:[%s6469 + $0x10] sm:$0xff]
        %v6473 = vld [vmem:[%s6469 + $0x18] sm:$0xff]
        %v6474 = vld [vmem:[%s6469 + $0x20] sm:$0xff]
        %v6475 = vld [vmem:[%s6469 + $0x28] sm:$0xff]
        %v6476 = vld [vmem:[%s6469 + $0x30] sm:$0xff]
        %v6477 = vld [vmem:[%s6469 + $0x38] sm:$0xff]
        %v6478 = vld [vmem:[%s6469 + $0x40] sm:$0xff]
        %v6479 = vld [vmem:[%s6469 + $0x48] sm:$0xff]
        %v6480 = vld [vmem:[%s6469 + $0x50] sm:$0xff]
        %v6481 = vld [vmem:[%s6469 + $0x58] sm:$0xff]
        %v6482 = vld [vmem:[%s6469 + $0x60] sm:$0xff]
        %v6483 = vld [vmem:[%s6469 + $0x68] sm:$0xff]
        %v6484 = vld [vmem:[%s6469 + $0x70] sm:$0xff]
        %v6485 = vld [vmem:[%s6469 + $0x78] sm:$0xff]
        %v6486 = vld [vmem:[%s6469 + $0x80] sm:$0xff]
        %v6487 = vld [vmem:[%s6469 + $0x88] sm:$0xff]
        %v6488 = vld [vmem:[%s6469 + $0x90] sm:$0xff]
        %v6489 = vld [vmem:[%s6469 + $0x98] sm:$0xff]
        %v6490 = vld [vmem:[%s6469 + $0xa0] sm:$0xff]
        %v6491 = vld [vmem:[%s6469 + $0xa8] sm:$0xff]
        %v6492 = vld [vmem:[%s6469 + $0xb0] sm:$0xff]
        %v6493 = vld [vmem:[%s6469 + $0xb8] sm:$0xff]
        %v6494 = vld [vmem:[%s6469 + $0xc0] sm:$0xff]
        %v6495 = vld [vmem:[%s6469 + $0xc8] sm:$0xff]
        %v6496 = vld [vmem:[%s6469 + $0xd0] sm:$0xff]
        %v6497 = vld [vmem:[%s6469 + $0xd8] sm:$0xff]
        %v6498 = vld [vmem:[%s6469 + $0xe0] sm:$0xff]
        %v6499 = vld [vmem:[%s6469 + $0xe8] sm:$0xff]
        %v6500 = vld [vmem:[%s6469 + $0xf0] sm:$0xff]
        %v6501 = vld [vmem:[%s6469 + $0xf8] sm:$0xff]
        %v6502 = vld [vmem:[%s6469 + $0x100] sm:$0xff]
        %v6503 = vld [vmem:[%s6469 + $0x108] sm:$0xff]
        %v6504 = vld [vmem:[%s6469 + $0x110] sm:$0xff]
        %v6505 = vld [vmem:[%s6469 + $0x118] sm:$0xff]
        %v6506 = vld [vmem:[%s6469 + $0x120] sm:$0xff]
        %v6507 = vld [vmem:[%s6469 + $0x128] sm:$0xff]
        %v6508 = vld [vmem:[%s6469 + $0x130] sm:$0xff]
        %v6509 = vld [vmem:[%s6469 + $0x138] sm:$0xff]
        %v6510 = vld [vmem:[%s6469 + $0x140] sm:$0xff]
        %v6511 = vld [vmem:[%s6469 + $0x148] sm:$0xff]
        %v6512 = vld [vmem:[%s6469 + $0x150] sm:$0xff]
        %v6513 = vld [vmem:[%s6469 + $0x158] sm:$0xff]
        %v6514 = vld [vmem:[%s6469 + $0x160] sm:$0xff]
        %v6515 = vld [vmem:[%s6469 + $0x168] sm:$0xff]
        %v6516 = vld [vmem:[%s6469 + $0x170] sm:$0xff]
        %v6517 = vld [vmem:[%s6469 + $0x178] sm:$0xff]
        %v6518 = vld [vmem:[%s6469 + $0x180] sm:$0xff]
        %v6519 = vld [vmem:[%s6469 + $0x188] sm:$0xff]
        %v6520 = vld [vmem:[%s6469 + $0x190] sm:$0xff]
        %v6521 = vld [vmem:[%s6469 + $0x198] sm:$0xff]
        %v6522 = vld [vmem:[%s6469 + $0x1a0] sm:$0xff]
        %v6523 = vld [vmem:[%s6469 + $0x1a8] sm:$0xff]
        %v6524 = vld [vmem:[%s6469 + $0x1b0] sm:$0xff]
        %v6525 = vld [vmem:[%s6469 + $0x1b8] sm:$0xff]
        %v6526 = vld [vmem:[%s6469 + $0x1c0] sm:$0xff]
        %v6527 = vld [vmem:[%s6469 + $0x1c8] sm:$0xff]
        %v6528 = vld [vmem:[%s6469 + $0x1d0] sm:$0xff]
        %v6529 = vld [vmem:[%s6469 + $0x1d8] sm:$0xff]
        %v6530 = vld [vmem:[%s6469 + $0x1e0] sm:$0xff]
        %v6531 = vld [vmem:[%s6469 + $0x1e8] sm:$0xff]
        %v6532 = vld [vmem:[%s6469 + $0x1f0] sm:$0xff]
        %v6533 = vld [vmem:[%s6469 + $0x1f8] sm:$0xff]
        %6534 = vmatprep.subr.mxu0 %v6501
        %6535 = vmatpush1.msra.mxu0 %v6500
        %6536 = vmatprep.subr.mxu0 %v6499
        %6537 = vmatpush1.msra.mxu0 %v6498
        %6538 = vmatprep.subr.mxu0 %v6497
        %6539 = vmatpush1.msra.mxu0 %v6496
        %6540 = vmatprep.subr.mxu0 %v6495
        %6541 = vmatpush1.msra.mxu0 %v6494
        %6542 = vmatprep.subr.mxu0 %v6493
        %6543 = vmatpush1.msra.mxu0 %v6492
        %6544 = vmatprep.subr.mxu0 %v6491
        %6545 = vmatpush1.msra.mxu0 %v6490
        %6546 = vmatprep.subr.mxu0 %v6489
        %6547 = vmatpush1.msra.mxu0 %v6488
        %6548 = vmatprep.subr.mxu0 %v6487
        %6549 = vmatpush1.msra.mxu0 %v6486
        %6550 = vmatprep.subr.mxu0 %v6485
        %6551 = vmatpush1.msra.mxu0 %v6484
        %6552 = vmatprep.subr.mxu0 %v6483
        %6553 = vmatpush1.msra.mxu0 %v6482
        %6554 = vmatprep.subr.mxu0 %v6481
        %6555 = vmatpush1.msra.mxu0 %v6480
        %6556 = vmatprep.subr.mxu0 %v6479
        %6557 = vmatpush1.msra.mxu0 %v6478
        %6558 = vmatprep.subr.mxu0 %v6477
        %6559 = vmatpush1.msra.mxu0 %v6476
        %6560 = vmatprep.subr.mxu0 %v6475
        %6561 = vmatpush1.msra.mxu0 %v6474
        %6562 = vmatprep.subr.mxu0 %v6473
        %6563 = vmatpush1.msra.mxu0 %v6472
        %6564 = vmatprep.subr.mxu0 %v6471
        %6565 = vmatpush1.msra.mxu0 %v6470
        %6566 = vmatprep.subr.mxu0 %v6533
        %6567 = vmatpush2.msra.mxu0 %v6532
        %6568 = vmatprep.subr.mxu0 %v6531
        %6569 = vmatpush2.msra.mxu0 %v6530
        %6570 = vmatprep.subr.mxu0 %v6529
        %6571 = vmatpush2.msra.mxu0 %v6528
        %6572 = vmatprep.subr.mxu0 %v6527
        %6573 = vmatpush2.msra.mxu0 %v6526
        %6574 = vmatprep.subr.mxu0 %v6525
        %6575 = vmatpush2.msra.mxu0 %v6524
        %6576 = vmatprep.subr.mxu0 %v6523
        %6577 = vmatpush2.msra.mxu0 %v6522
        %6578 = vmatprep.subr.mxu0 %v6521
        %6579 = vmatpush2.msra.mxu0 %v6520
        %6580 = vmatprep.subr.mxu0 %v6519
        %6581 = vmatpush2.msra.mxu0 %v6518
        %6582 = vmatprep.subr.mxu0 %v6517
        %6583 = vmatpush2.msra.mxu0 %v6516
        %6584 = vmatprep.subr.mxu0 %v6515
        %6585 = vmatpush2.msra.mxu0 %v6514
        %6586 = vmatprep.subr.mxu0 %v6513
        %6587 = vmatpush2.msra.mxu0 %v6512
        %6588 = vmatprep.subr.mxu0 %v6511
        %6589 = vmatpush2.msra.mxu0 %v6510
        %6590 = vmatprep.subr.mxu0 %v6509
        %6591 = vmatpush2.msra.mxu0 %v6508
        %6592 = vmatprep.subr.mxu0 %v6507
        %6593 = vmatpush2.msra.mxu0 %v6506
        %6594 = vmatprep.subr.mxu0 %v6505
        %6595 = vmatpush2.msra.mxu0 %v6504
        %6596 = vmatprep.subr.mxu0 %v6503
        %6597 = vmatpush2.msra.mxu0 %v6502
        %6598 = vmatprep.mubr.f32.mxu0 %v6084
        %6599 = vmatmul.mubr.f32.gmra.mxu0 %v6083
        %v6600 = vpop.f32.mrf.mxu0
        %v6601 = vadd.f32 0.0, %v6600
        %v6602 = vpop.f32.mrf.mxu0
        %v6603 = vadd.f32 0.0, %v6602
        %6604 = vmatprep.mubr.f32.mxu0 %v6086
        %6605 = vmatmul.mubr.f32.gmra.mxu0 %v6085
        %v6606 = vpop.f32.mrf.mxu0
        %v6607 = vadd.f32 0.0, %v6606
        %v6608 = vpop.f32.mrf.mxu0
        %v6609 = vadd.f32 0.0, %v6608
        %6610 = vmatprep.mubr.f32.mxu0 %v6088
        %6611 = vmatmul.mubr.f32.gmra.mxu0 %v6087
        %v6612 = vpop.f32.mrf.mxu0
        %v6613 = vadd.f32 0.0, %v6612
        %v6614 = vpop.f32.mrf.mxu0
        %v6615 = vadd.f32 0.0, %v6614
        %6616 = vmatprep.mubr.f32.mxu0 %v6090
        %6617 = vmatmul.mubr.f32.gmra.mxu0 %v6089
        %v6618 = vpop.f32.mrf.mxu0
        %v6619 = vadd.f32 0.0, %v6618
        %v6620 = vpop.f32.mrf.mxu0
        %v6621 = vadd.f32 0.0, %v6620
        %6622 = vmatprep.mubr.f32.mxu0 %v6092
        %6623 = vmatmul.mubr.f32.gmra.mxu0 %v6091
        %v6624 = vpop.f32.mrf.mxu0
        %v6625 = vadd.f32 0.0, %v6624
        %v6626 = vpop.f32.mrf.mxu0
        %v6627 = vadd.f32 0.0, %v6626
        %6628 = vmatprep.mubr.f32.mxu0 %v6094
        %6629 = vmatmul.mubr.f32.gmra.mxu0 %v6093
        %v6630 = vpop.f32.mrf.mxu0
        %v6631 = vadd.f32 0.0, %v6630
        %v6632 = vpop.f32.mrf.mxu0
        %v6633 = vadd.f32 0.0, %v6632
        %6634 = vmatprep.mubr.f32.mxu0 %v6096
        %6635 = vmatmul.mubr.f32.gmra.mxu0 %v6095
        %v6636 = vpop.f32.mrf.mxu0
        %v6637 = vadd.f32 0.0, %v6636
        %v6638 = vpop.f32.mrf.mxu0
        %v6639 = vadd.f32 0.0, %v6638
        %6640 = vmatprep.mubr.f32.mxu0 %v6098
        %6641 = vmatmul.mubr.f32.gmra.mxu0 %v6097
        %v6642 = vpop.f32.mrf.mxu0
        %v6643 = vadd.f32 0.0, %v6642
        %v6644 = vpop.f32.mrf.mxu0
        %v6645 = vadd.f32 0.0, %v6644
        %6646 = vmatprep.mubr.f32.mxu0 %v6100
        %6647 = vmatmul.mubr.f32.gmra.mxu0 %v6099
        %v6648 = vpop.f32.mrf.mxu0
        %v6649 = vadd.f32 0.0, %v6648
        %v6650 = vpop.f32.mrf.mxu0
        %v6651 = vadd.f32 0.0, %v6650
        %6652 = vmatprep.mubr.f32.mxu0 %v6102
        %6653 = vmatmul.mubr.f32.gmra.mxu0 %v6101
        %v6654 = vpop.f32.mrf.mxu0
        %v6655 = vadd.f32 0.0, %v6654
        %v6656 = vpop.f32.mrf.mxu0
        %v6657 = vadd.f32 0.0, %v6656
        %6658 = vmatprep.mubr.f32.mxu0 %v6104
        %6659 = vmatmul.mubr.f32.gmra.mxu0 %v6103
        %v6660 = vpop.f32.mrf.mxu0
        %v6661 = vadd.f32 0.0, %v6660
        %v6662 = vpop.f32.mrf.mxu0
        %v6663 = vadd.f32 0.0, %v6662
        %6664 = vmatprep.mubr.f32.mxu0 %v6106
        %6665 = vmatmul.mubr.f32.gmra.mxu0 %v6105
        %v6666 = vpop.f32.mrf.mxu0
        %v6667 = vadd.f32 0.0, %v6666
        %v6668 = vpop.f32.mrf.mxu0
        %v6669 = vadd.f32 0.0, %v6668
        %6670 = vmatprep.mubr.f32.mxu0 %v6108
        %6671 = vmatmul.mubr.f32.gmra.mxu0 %v6107
        %v6672 = vpop.f32.mrf.mxu0
        %v6673 = vadd.f32 0.0, %v6672
        %v6674 = vpop.f32.mrf.mxu0
        %v6675 = vadd.f32 0.0, %v6674
        %6676 = vmatprep.mubr.f32.mxu0 %v6110
        %6677 = vmatmul.mubr.f32.gmra.mxu0 %v6109
        %v6678 = vpop.f32.mrf.mxu0
        %v6679 = vadd.f32 0.0, %v6678
        %v6680 = vpop.f32.mrf.mxu0
        %v6681 = vadd.f32 0.0, %v6680
        %6682 = vmatprep.mubr.f32.mxu0 %v6112
        %6683 = vmatmul.mubr.f32.gmra.mxu0 %v6111
        %v6684 = vpop.f32.mrf.mxu0
        %v6685 = vadd.f32 0.0, %v6684
        %v6686 = vpop.f32.mrf.mxu0
        %v6687 = vadd.f32 0.0, %v6686
        %6688 = vmatprep.mubr.f32.mxu0 %v6114
        %6689 = vmatmul.mubr.f32.gmra.mxu0 %v6113
        %v6690 = vpop.f32.mrf.mxu0
        %v6691 = vadd.f32 0.0, %v6690
        %v6692 = vpop.f32.mrf.mxu0
        %v6693 = vadd.f32 0.0, %v6692
        %6694 = vmatprep.mubr.f32.mxu0 %v6116
        %6695 = vmatmul.mubr.f32.gmra.mxu0 %v6115
        %v6696 = vpop.f32.mrf.mxu0
        %v6697 = vadd.f32 0.0, %v6696
        %v6698 = vpop.f32.mrf.mxu0
        %v6699 = vadd.f32 0.0, %v6698
        %6700 = vmatprep.mubr.f32.mxu0 %v6118
        %6701 = vmatmul.mubr.f32.gmra.mxu0 %v6117
        %v6702 = vpop.f32.mrf.mxu0
        %v6703 = vadd.f32 0.0, %v6702
        %v6704 = vpop.f32.mrf.mxu0
        %v6705 = vadd.f32 0.0, %v6704
        %6706 = vmatprep.mubr.f32.mxu0 %v6120
        %6707 = vmatmul.mubr.f32.gmra.mxu0 %v6119
        %v6708 = vpop.f32.mrf.mxu0
        %v6709 = vadd.f32 0.0, %v6708
        %v6710 = vpop.f32.mrf.mxu0
        %v6711 = vadd.f32 0.0, %v6710
        %6712 = vmatprep.mubr.f32.mxu0 %v6122
        %6713 = vmatmul.mubr.f32.gmra.mxu0 %v6121
        %v6714 = vpop.f32.mrf.mxu0
        %v6715 = vadd.f32 0.0, %v6714
        %v6716 = vpop.f32.mrf.mxu0
        %v6717 = vadd.f32 0.0, %v6716
        %6718 = vmatprep.mubr.f32.mxu0 %v6124
        %6719 = vmatmul.mubr.f32.gmra.mxu0 %v6123
        %v6720 = vpop.f32.mrf.mxu0
        %v6721 = vadd.f32 0.0, %v6720
        %v6722 = vpop.f32.mrf.mxu0
        %v6723 = vadd.f32 0.0, %v6722
        %6724 = vmatprep.mubr.f32.mxu0 %v6126
        %6725 = vmatmul.mubr.f32.gmra.mxu0 %v6125
        %v6726 = vpop.f32.mrf.mxu0
        %v6727 = vadd.f32 0.0, %v6726
        %v6728 = vpop.f32.mrf.mxu0
        %v6729 = vadd.f32 0.0, %v6728
        %6730 = vmatprep.mubr.f32.mxu0 %v6128
        %6731 = vmatmul.mubr.f32.gmra.mxu0 %v6127
        %v6732 = vpop.f32.mrf.mxu0
        %v6733 = vadd.f32 0.0, %v6732
        %v6734 = vpop.f32.mrf.mxu0
        %v6735 = vadd.f32 0.0, %v6734
        %6736 = vmatprep.mubr.f32.mxu0 %v6130
        %6737 = vmatmul.mubr.f32.gmra.mxu0 %v6129
        %v6738 = vpop.f32.mrf.mxu0
        %v6739 = vadd.f32 0.0, %v6738
        %v6740 = vpop.f32.mrf.mxu0
        %v6741 = vadd.f32 0.0, %v6740
        %6742 = vmatprep.mubr.f32.mxu0 %v6132
        %6743 = vmatmul.mubr.f32.gmra.mxu0 %v6131
        %v6744 = vpop.f32.mrf.mxu0
        %v6745 = vadd.f32 0.0, %v6744
        %v6746 = vpop.f32.mrf.mxu0
        %v6747 = vadd.f32 0.0, %v6746
        %6748 = vmatprep.mubr.f32.mxu0 %v6134
        %6749 = vmatmul.mubr.f32.gmra.mxu0 %v6133
        %v6750 = vpop.f32.mrf.mxu0
        %v6751 = vadd.f32 0.0, %v6750
        %v6752 = vpop.f32.mrf.mxu0
        %v6753 = vadd.f32 0.0, %v6752
        %6754 = vmatprep.mubr.f32.mxu0 %v6136
        %6755 = vmatmul.mubr.f32.gmra.mxu0 %v6135
        %v6756 = vpop.f32.mrf.mxu0
        %v6757 = vadd.f32 0.0, %v6756
        %v6758 = vpop.f32.mrf.mxu0
        %v6759 = vadd.f32 0.0, %v6758
        %6760 = vmatprep.mubr.f32.mxu0 %v6138
        %6761 = vmatmul.mubr.f32.gmra.mxu0 %v6137
        %v6762 = vpop.f32.mrf.mxu0
        %v6763 = vadd.f32 0.0, %v6762
        %v6764 = vpop.f32.mrf.mxu0
        %v6765 = vadd.f32 0.0, %v6764
        %6766 = vmatprep.mubr.f32.mxu0 %v6140
        %6767 = vmatmul.mubr.f32.gmra.mxu0 %v6139
        %v6768 = vpop.f32.mrf.mxu0
        %v6769 = vadd.f32 0.0, %v6768
        %v6770 = vpop.f32.mrf.mxu0
        %v6771 = vadd.f32 0.0, %v6770
        %6772 = vmatprep.mubr.f32.mxu0 %v6142
        %6773 = vmatmul.mubr.f32.gmra.mxu0 %v6141
        %v6774 = vpop.f32.mrf.mxu0
        %v6775 = vadd.f32 0.0, %v6774
        %v6776 = vpop.f32.mrf.mxu0
        %v6777 = vadd.f32 0.0, %v6776
        %6778 = vmatprep.mubr.f32.mxu0 %v6144
        %6779 = vmatmul.mubr.f32.gmra.mxu0 %v6143
        %v6780 = vpop.f32.mrf.mxu0
        %v6781 = vadd.f32 0.0, %v6780
        %v6782 = vpop.f32.mrf.mxu0
        %v6783 = vadd.f32 0.0, %v6782
        %6784 = vmatprep.mubr.f32.mxu0 %v6146
        %6785 = vmatmul.mubr.f32.gmra.mxu0 %v6145
        %v6786 = vpop.f32.mrf.mxu0
        %v6787 = vadd.f32 0.0, %v6786
        %v6788 = vpop.f32.mrf.mxu0
        %v6789 = vadd.f32 0.0, %v6788
        %6790 = vdwg.mxu0
        %s6791 = scalar_lea.vmem %s2, 2560
        %v6792 = vld [vmem:[%s6791] sm:$0xff]
        %v6793 = vld [vmem:[%s6791 + $0x8] sm:$0xff]
        %v6794 = vld [vmem:[%s6791 + $0x10] sm:$0xff]
        %v6795 = vld [vmem:[%s6791 + $0x18] sm:$0xff]
        %v6796 = vld [vmem:[%s6791 + $0x20] sm:$0xff]
        %v6797 = vld [vmem:[%s6791 + $0x28] sm:$0xff]
        %v6798 = vld [vmem:[%s6791 + $0x30] sm:$0xff]
        %v6799 = vld [vmem:[%s6791 + $0x38] sm:$0xff]
        %v6800 = vld [vmem:[%s6791 + $0x40] sm:$0xff]
        %v6801 = vld [vmem:[%s6791 + $0x48] sm:$0xff]
        %v6802 = vld [vmem:[%s6791 + $0x50] sm:$0xff]
        %v6803 = vld [vmem:[%s6791 + $0x58] sm:$0xff]
        %v6804 = vld [vmem:[%s6791 + $0x60] sm:$0xff]
        %v6805 = vld [vmem:[%s6791 + $0x68] sm:$0xff]
        %v6806 = vld [vmem:[%s6791 + $0x70] sm:$0xff]
        %v6807 = vld [vmem:[%s6791 + $0x78] sm:$0xff]
        %v6808 = vld [vmem:[%s6791 + $0x80] sm:$0xff]
        %v6809 = vld [vmem:[%s6791 + $0x88] sm:$0xff]
        %v6810 = vld [vmem:[%s6791 + $0x90] sm:$0xff]
        %v6811 = vld [vmem:[%s6791 + $0x98] sm:$0xff]
        %v6812 = vld [vmem:[%s6791 + $0xa0] sm:$0xff]
        %v6813 = vld [vmem:[%s6791 + $0xa8] sm:$0xff]
        %v6814 = vld [vmem:[%s6791 + $0xb0] sm:$0xff]
        %v6815 = vld [vmem:[%s6791 + $0xb8] sm:$0xff]
        %v6816 = vld [vmem:[%s6791 + $0xc0] sm:$0xff]
        %v6817 = vld [vmem:[%s6791 + $0xc8] sm:$0xff]
        %v6818 = vld [vmem:[%s6791 + $0xd0] sm:$0xff]
        %v6819 = vld [vmem:[%s6791 + $0xd8] sm:$0xff]
        %v6820 = vld [vmem:[%s6791 + $0xe0] sm:$0xff]
        %v6821 = vld [vmem:[%s6791 + $0xe8] sm:$0xff]
        %v6822 = vld [vmem:[%s6791 + $0xf0] sm:$0xff]
        %v6823 = vld [vmem:[%s6791 + $0xf8] sm:$0xff]
        %v6824 = vld [vmem:[%s6791 + $0x100] sm:$0xff]
        %v6825 = vld [vmem:[%s6791 + $0x108] sm:$0xff]
        %v6826 = vld [vmem:[%s6791 + $0x110] sm:$0xff]
        %v6827 = vld [vmem:[%s6791 + $0x118] sm:$0xff]
        %v6828 = vld [vmem:[%s6791 + $0x120] sm:$0xff]
        %v6829 = vld [vmem:[%s6791 + $0x128] sm:$0xff]
        %v6830 = vld [vmem:[%s6791 + $0x130] sm:$0xff]
        %v6831 = vld [vmem:[%s6791 + $0x138] sm:$0xff]
        %v6832 = vld [vmem:[%s6791 + $0x140] sm:$0xff]
        %v6833 = vld [vmem:[%s6791 + $0x148] sm:$0xff]
        %v6834 = vld [vmem:[%s6791 + $0x150] sm:$0xff]
        %v6835 = vld [vmem:[%s6791 + $0x158] sm:$0xff]
        %v6836 = vld [vmem:[%s6791 + $0x160] sm:$0xff]
        %v6837 = vld [vmem:[%s6791 + $0x168] sm:$0xff]
        %v6838 = vld [vmem:[%s6791 + $0x170] sm:$0xff]
        %v6839 = vld [vmem:[%s6791 + $0x178] sm:$0xff]
        %v6840 = vld [vmem:[%s6791 + $0x180] sm:$0xff]
        %v6841 = vld [vmem:[%s6791 + $0x188] sm:$0xff]
        %v6842 = vld [vmem:[%s6791 + $0x190] sm:$0xff]
        %v6843 = vld [vmem:[%s6791 + $0x198] sm:$0xff]
        %v6844 = vld [vmem:[%s6791 + $0x1a0] sm:$0xff]
        %v6845 = vld [vmem:[%s6791 + $0x1a8] sm:$0xff]
        %v6846 = vld [vmem:[%s6791 + $0x1b0] sm:$0xff]
        %v6847 = vld [vmem:[%s6791 + $0x1b8] sm:$0xff]
        %v6848 = vld [vmem:[%s6791 + $0x1c0] sm:$0xff]
        %v6849 = vld [vmem:[%s6791 + $0x1c8] sm:$0xff]
        %v6850 = vld [vmem:[%s6791 + $0x1d0] sm:$0xff]
        %v6851 = vld [vmem:[%s6791 + $0x1d8] sm:$0xff]
        %v6852 = vld [vmem:[%s6791 + $0x1e0] sm:$0xff]
        %v6853 = vld [vmem:[%s6791 + $0x1e8] sm:$0xff]
        %v6854 = vld [vmem:[%s6791 + $0x1f0] sm:$0xff]
        %v6855 = vld [vmem:[%s6791 + $0x1f8] sm:$0xff]
        %6856 = vmatprep.subr.mxu0 %v6823
        %6857 = vmatpush1.msra.mxu0 %v6822
        %6858 = vmatprep.subr.mxu0 %v6821
        %6859 = vmatpush1.msra.mxu0 %v6820
        %6860 = vmatprep.subr.mxu0 %v6819
        %6861 = vmatpush1.msra.mxu0 %v6818
        %6862 = vmatprep.subr.mxu0 %v6817
        %6863 = vmatpush1.msra.mxu0 %v6816
        %6864 = vmatprep.subr.mxu0 %v6815
        %6865 = vmatpush1.msra.mxu0 %v6814
        %6866 = vmatprep.subr.mxu0 %v6813
        %6867 = vmatpush1.msra.mxu0 %v6812
        %6868 = vmatprep.subr.mxu0 %v6811
        %6869 = vmatpush1.msra.mxu0 %v6810
        %6870 = vmatprep.subr.mxu0 %v6809
        %6871 = vmatpush1.msra.mxu0 %v6808
        %6872 = vmatprep.subr.mxu0 %v6807
        %6873 = vmatpush1.msra.mxu0 %v6806
        %6874 = vmatprep.subr.mxu0 %v6805
        %6875 = vmatpush1.msra.mxu0 %v6804
        %6876 = vmatprep.subr.mxu0 %v6803
        %6877 = vmatpush1.msra.mxu0 %v6802
        %6878 = vmatprep.subr.mxu0 %v6801
        %6879 = vmatpush1.msra.mxu0 %v6800
        %6880 = vmatprep.subr.mxu0 %v6799
        %6881 = vmatpush1.msra.mxu0 %v6798
        %6882 = vmatprep.subr.mxu0 %v6797
        %6883 = vmatpush1.msra.mxu0 %v6796
        %6884 = vmatprep.subr.mxu0 %v6795
        %6885 = vmatpush1.msra.mxu0 %v6794
        %6886 = vmatprep.subr.mxu0 %v6793
        %6887 = vmatpush1.msra.mxu0 %v6792
        %6888 = vmatprep.subr.mxu0 %v6855
        %6889 = vmatpush2.msra.mxu0 %v6854
        %6890 = vmatprep.subr.mxu0 %v6853
        %6891 = vmatpush2.msra.mxu0 %v6852
        %6892 = vmatprep.subr.mxu0 %v6851
        %6893 = vmatpush2.msra.mxu0 %v6850
        %6894 = vmatprep.subr.mxu0 %v6849
        %6895 = vmatpush2.msra.mxu0 %v6848
        %6896 = vmatprep.subr.mxu0 %v6847
        %6897 = vmatpush2.msra.mxu0 %v6846
        %6898 = vmatprep.subr.mxu0 %v6845
        %6899 = vmatpush2.msra.mxu0 %v6844
        %6900 = vmatprep.subr.mxu0 %v6843
        %6901 = vmatpush2.msra.mxu0 %v6842
        %6902 = vmatprep.subr.mxu0 %v6841
        %6903 = vmatpush2.msra.mxu0 %v6840
        %6904 = vmatprep.subr.mxu0 %v6839
        %6905 = vmatpush2.msra.mxu0 %v6838
        %6906 = vmatprep.subr.mxu0 %v6837
        %6907 = vmatpush2.msra.mxu0 %v6836
        %6908 = vmatprep.subr.mxu0 %v6835
        %6909 = vmatpush2.msra.mxu0 %v6834
        %6910 = vmatprep.subr.mxu0 %v6833
        %6911 = vmatpush2.msra.mxu0 %v6832
        %6912 = vmatprep.subr.mxu0 %v6831
        %6913 = vmatpush2.msra.mxu0 %v6830
        %6914 = vmatprep.subr.mxu0 %v6829
        %6915 = vmatpush2.msra.mxu0 %v6828
        %6916 = vmatprep.subr.mxu0 %v6827
        %6917 = vmatpush2.msra.mxu0 %v6826
        %6918 = vmatprep.subr.mxu0 %v6825
        %6919 = vmatpush2.msra.mxu0 %v6824
        %6920 = vmatprep.mubr.f32.mxu0 %v6084
        %6921 = vmatmul.mubr.f32.gmra.mxu0 %v6083
        %v6922 = vpop.f32.mrf.mxu0
        %v6923 = vadd.f32 0.0, %v6922
        %v6924 = vpop.f32.mrf.mxu0
        %v6925 = vadd.f32 0.0, %v6924
        %6926 = vmatprep.mubr.f32.mxu0 %v6086
        %6927 = vmatmul.mubr.f32.gmra.mxu0 %v6085
        %v6928 = vpop.f32.mrf.mxu0
        %v6929 = vadd.f32 0.0, %v6928
        %v6930 = vpop.f32.mrf.mxu0
        %v6931 = vadd.f32 0.0, %v6930
        %6932 = vmatprep.mubr.f32.mxu0 %v6088
        %6933 = vmatmul.mubr.f32.gmra.mxu0 %v6087
        %v6934 = vpop.f32.mrf.mxu0
        %v6935 = vadd.f32 0.0, %v6934
        %v6936 = vpop.f32.mrf.mxu0
        %v6937 = vadd.f32 0.0, %v6936
        %6938 = vmatprep.mubr.f32.mxu0 %v6090
        %6939 = vmatmul.mubr.f32.gmra.mxu0 %v6089
        %v6940 = vpop.f32.mrf.mxu0
        %v6941 = vadd.f32 0.0, %v6940
        %v6942 = vpop.f32.mrf.mxu0
        %v6943 = vadd.f32 0.0, %v6942
        %6944 = vmatprep.mubr.f32.mxu0 %v6092
        %6945 = vmatmul.mubr.f32.gmra.mxu0 %v6091
        %v6946 = vpop.f32.mrf.mxu0
        %v6947 = vadd.f32 0.0, %v6946
        %v6948 = vpop.f32.mrf.mxu0
        %v6949 = vadd.f32 0.0, %v6948
        %6950 = vmatprep.mubr.f32.mxu0 %v6094
        %6951 = vmatmul.mubr.f32.gmra.mxu0 %v6093
        %v6952 = vpop.f32.mrf.mxu0
        %v6953 = vadd.f32 0.0, %v6952
        %v6954 = vpop.f32.mrf.mxu0
        %v6955 = vadd.f32 0.0, %v6954
        %6956 = vmatprep.mubr.f32.mxu0 %v6096
        %6957 = vmatmul.mubr.f32.gmra.mxu0 %v6095
        %v6958 = vpop.f32.mrf.mxu0
        %v6959 = vadd.f32 0.0, %v6958
        %v6960 = vpop.f32.mrf.mxu0
        %v6961 = vadd.f32 0.0, %v6960
        %6962 = vmatprep.mubr.f32.mxu0 %v6098
        %6963 = vmatmul.mubr.f32.gmra.mxu0 %v6097
        %v6964 = vpop.f32.mrf.mxu0
        %v6965 = vadd.f32 0.0, %v6964
        %v6966 = vpop.f32.mrf.mxu0
        %v6967 = vadd.f32 0.0, %v6966
        %6968 = vmatprep.mubr.f32.mxu0 %v6100
        %6969 = vmatmul.mubr.f32.gmra.mxu0 %v6099
        %v6970 = vpop.f32.mrf.mxu0
        %v6971 = vadd.f32 0.0, %v6970
        %v6972 = vpop.f32.mrf.mxu0
        %v6973 = vadd.f32 0.0, %v6972
        %6974 = vmatprep.mubr.f32.mxu0 %v6102
        %6975 = vmatmul.mubr.f32.gmra.mxu0 %v6101
        %v6976 = vpop.f32.mrf.mxu0
        %v6977 = vadd.f32 0.0, %v6976
        %v6978 = vpop.f32.mrf.mxu0
        %v6979 = vadd.f32 0.0, %v6978
        %6980 = vmatprep.mubr.f32.mxu0 %v6104
        %6981 = vmatmul.mubr.f32.gmra.mxu0 %v6103
        %v6982 = vpop.f32.mrf.mxu0
        %v6983 = vadd.f32 0.0, %v6982
        %v6984 = vpop.f32.mrf.mxu0
        %v6985 = vadd.f32 0.0, %v6984
        %6986 = vmatprep.mubr.f32.mxu0 %v6106
        %6987 = vmatmul.mubr.f32.gmra.mxu0 %v6105
        %v6988 = vpop.f32.mrf.mxu0
        %v6989 = vadd.f32 0.0, %v6988
        %v6990 = vpop.f32.mrf.mxu0
        %v6991 = vadd.f32 0.0, %v6990
        %6992 = vmatprep.mubr.f32.mxu0 %v6108
        %6993 = vmatmul.mubr.f32.gmra.mxu0 %v6107
        %v6994 = vpop.f32.mrf.mxu0
        %v6995 = vadd.f32 0.0, %v6994
        %v6996 = vpop.f32.mrf.mxu0
        %v6997 = vadd.f32 0.0, %v6996
        %6998 = vmatprep.mubr.f32.mxu0 %v6110
        %6999 = vmatmul.mubr.f32.gmra.mxu0 %v6109
        %v7000 = vpop.f32.mrf.mxu0
        %v7001 = vadd.f32 0.0, %v7000
        %v7002 = vpop.f32.mrf.mxu0
        %v7003 = vadd.f32 0.0, %v7002
        %7004 = vmatprep.mubr.f32.mxu0 %v6112
        %7005 = vmatmul.mubr.f32.gmra.mxu0 %v6111
        %v7006 = vpop.f32.mrf.mxu0
        %v7007 = vadd.f32 0.0, %v7006
        %v7008 = vpop.f32.mrf.mxu0
        %v7009 = vadd.f32 0.0, %v7008
        %7010 = vmatprep.mubr.f32.mxu0 %v6114
        %7011 = vmatmul.mubr.f32.gmra.mxu0 %v6113
        %v7012 = vpop.f32.mrf.mxu0
        %v7013 = vadd.f32 0.0, %v7012
        %v7014 = vpop.f32.mrf.mxu0
        %v7015 = vadd.f32 0.0, %v7014
        %7016 = vmatprep.mubr.f32.mxu0 %v6116
        %7017 = vmatmul.mubr.f32.gmra.mxu0 %v6115
        %v7018 = vpop.f32.mrf.mxu0
        %v7019 = vadd.f32 0.0, %v7018
        %v7020 = vpop.f32.mrf.mxu0
        %v7021 = vadd.f32 0.0, %v7020
        %7022 = vmatprep.mubr.f32.mxu0 %v6118
        %7023 = vmatmul.mubr.f32.gmra.mxu0 %v6117
        %v7024 = vpop.f32.mrf.mxu0
        %v7025 = vadd.f32 0.0, %v7024
        %v7026 = vpop.f32.mrf.mxu0
        %v7027 = vadd.f32 0.0, %v7026
        %7028 = vmatprep.mubr.f32.mxu0 %v6120
        %7029 = vmatmul.mubr.f32.gmra.mxu0 %v6119
        %v7030 = vpop.f32.mrf.mxu0
        %v7031 = vadd.f32 0.0, %v7030
        %v7032 = vpop.f32.mrf.mxu0
        %v7033 = vadd.f32 0.0, %v7032
        %7034 = vmatprep.mubr.f32.mxu0 %v6122
        %7035 = vmatmul.mubr.f32.gmra.mxu0 %v6121
        %v7036 = vpop.f32.mrf.mxu0
        %v7037 = vadd.f32 0.0, %v7036
        %v7038 = vpop.f32.mrf.mxu0
        %v7039 = vadd.f32 0.0, %v7038
        %7040 = vmatprep.mubr.f32.mxu0 %v6124
        %7041 = vmatmul.mubr.f32.gmra.mxu0 %v6123
        %v7042 = vpop.f32.mrf.mxu0
        %v7043 = vadd.f32 0.0, %v7042
        %v7044 = vpop.f32.mrf.mxu0
        %v7045 = vadd.f32 0.0, %v7044
        %7046 = vmatprep.mubr.f32.mxu0 %v6126
        %7047 = vmatmul.mubr.f32.gmra.mxu0 %v6125
        %v7048 = vpop.f32.mrf.mxu0
        %v7049 = vadd.f32 0.0, %v7048
        %v7050 = vpop.f32.mrf.mxu0
        %v7051 = vadd.f32 0.0, %v7050
        %7052 = vmatprep.mubr.f32.mxu0 %v6128
        %7053 = vmatmul.mubr.f32.gmra.mxu0 %v6127
        %v7054 = vpop.f32.mrf.mxu0
        %v7055 = vadd.f32 0.0, %v7054
        %v7056 = vpop.f32.mrf.mxu0
        %v7057 = vadd.f32 0.0, %v7056
        %7058 = vmatprep.mubr.f32.mxu0 %v6130
        %7059 = vmatmul.mubr.f32.gmra.mxu0 %v6129
        %v7060 = vpop.f32.mrf.mxu0
        %v7061 = vadd.f32 0.0, %v7060
        %v7062 = vpop.f32.mrf.mxu0
        %v7063 = vadd.f32 0.0, %v7062
        %7064 = vmatprep.mubr.f32.mxu0 %v6132
        %7065 = vmatmul.mubr.f32.gmra.mxu0 %v6131
        %v7066 = vpop.f32.mrf.mxu0
        %v7067 = vadd.f32 0.0, %v7066
        %v7068 = vpop.f32.mrf.mxu0
        %v7069 = vadd.f32 0.0, %v7068
        %7070 = vmatprep.mubr.f32.mxu0 %v6134
        %7071 = vmatmul.mubr.f32.gmra.mxu0 %v6133
        %v7072 = vpop.f32.mrf.mxu0
        %v7073 = vadd.f32 0.0, %v7072
        %v7074 = vpop.f32.mrf.mxu0
        %v7075 = vadd.f32 0.0, %v7074
        %7076 = vmatprep.mubr.f32.mxu0 %v6136
        %7077 = vmatmul.mubr.f32.gmra.mxu0 %v6135
        %v7078 = vpop.f32.mrf.mxu0
        %v7079 = vadd.f32 0.0, %v7078
        %v7080 = vpop.f32.mrf.mxu0
        %v7081 = vadd.f32 0.0, %v7080
        %7082 = vmatprep.mubr.f32.mxu0 %v6138
        %7083 = vmatmul.mubr.f32.gmra.mxu0 %v6137
        %v7084 = vpop.f32.mrf.mxu0
        %v7085 = vadd.f32 0.0, %v7084
        %v7086 = vpop.f32.mrf.mxu0
        %v7087 = vadd.f32 0.0, %v7086
        %7088 = vmatprep.mubr.f32.mxu0 %v6140
        %7089 = vmatmul.mubr.f32.gmra.mxu0 %v6139
        %v7090 = vpop.f32.mrf.mxu0
        %v7091 = vadd.f32 0.0, %v7090
        %v7092 = vpop.f32.mrf.mxu0
        %v7093 = vadd.f32 0.0, %v7092
        %7094 = vmatprep.mubr.f32.mxu0 %v6142
        %7095 = vmatmul.mubr.f32.gmra.mxu0 %v6141
        %v7096 = vpop.f32.mrf.mxu0
        %v7097 = vadd.f32 0.0, %v7096
        %v7098 = vpop.f32.mrf.mxu0
        %v7099 = vadd.f32 0.0, %v7098
        %7100 = vmatprep.mubr.f32.mxu0 %v6144
        %7101 = vmatmul.mubr.f32.gmra.mxu0 %v6143
        %v7102 = vpop.f32.mrf.mxu0
        %v7103 = vadd.f32 0.0, %v7102
        %v7104 = vpop.f32.mrf.mxu0
        %v7105 = vadd.f32 0.0, %v7104
        %7106 = vmatprep.mubr.f32.mxu0 %v6146
        %7107 = vmatmul.mubr.f32.gmra.mxu0 %v6145
        %v7108 = vpop.f32.mrf.mxu0
        %v7109 = vadd.f32 0.0, %v7108
        %v7110 = vpop.f32.mrf.mxu0
        %v7111 = vadd.f32 0.0, %v7110
        %7112 = vdwg.mxu0
        %v7115 = vrot.slane %v6465, 7
        %v7116 = vrot.slane %v6467, 7
        %v7149 = vrot.slane %v6375, 7
        %v7150 = vrot.slane %v6377, 7
        %v7151 = vrot.slane %v6381, 7
        %v7152 = vsel %vm3925, %v7149, %v7151
        %v7153 = vrot.slane %v6383, 7
        %v7154 = vsel %vm3925, %v7150, %v7153
        %v7155 = vrot.slane %v6387, 7
        %v7156 = vsel %vm3925, %v7151, %v7155
        %v7157 = vrot.slane %v6389, 7
        %v7158 = vsel %vm3925, %v7153, %v7157
        %v7159 = vrot.slane %v6393, 7
        %v7160 = vsel %vm3925, %v7155, %v7159
        %v7161 = vrot.slane %v6395, 7
        %v7162 = vsel %vm3925, %v7157, %v7161
        %v7163 = vrot.slane %v6399, 7
        %v7164 = vsel %vm3925, %v7159, %v7163
        %v7165 = vrot.slane %v6401, 7
        %v7166 = vsel %vm3925, %v7161, %v7165
        %v7167 = vrot.slane %v6405, 7
        %v7168 = vsel %vm3925, %v7163, %v7167
        %v7169 = vrot.slane %v6407, 7
        %v7170 = vsel %vm3925, %v7165, %v7169
        %v7171 = vrot.slane %v6411, 7
        %v7172 = vsel %vm3925, %v7167, %v7171
        %v7173 = vrot.slane %v6413, 7
        %v7174 = vsel %vm3925, %v7169, %v7173
        %v7175 = vrot.slane %v6417, 7
        %v7176 = vsel %vm3925, %v7171, %v7175
        %v7177 = vrot.slane %v6419, 7
        %v7178 = vsel %vm3925, %v7173, %v7177
        %v7179 = vrot.slane %v6423, 7
        %v7180 = vsel %vm3925, %v7175, %v7179
        %v7181 = vrot.slane %v6425, 7
        %v7182 = vsel %vm3925, %v7177, %v7181
        %v7183 = vrot.slane %v6429, 7
        %v7184 = vsel %vm3925, %v7179, %v7183
        %v7185 = vrot.slane %v6431, 7
        %v7186 = vsel %vm3925, %v7181, %v7185
        %v7187 = vrot.slane %v6435, 7
        %v7188 = vsel %vm3925, %v7183, %v7187
        %v7189 = vrot.slane %v6437, 7
        %v7190 = vsel %vm3925, %v7185, %v7189
        %v7191 = vrot.slane %v6441, 7
        %v7192 = vsel %vm3925, %v7187, %v7191
        %v7193 = vrot.slane %v6443, 7
        %v7194 = vsel %vm3925, %v7189, %v7193
        %v7195 = vrot.slane %v6447, 7
        %v7196 = vsel %vm3925, %v7191, %v7195
        %v7197 = vrot.slane %v6449, 7
        %v7198 = vsel %vm3925, %v7193, %v7197
        %v7199 = vrot.slane %v6453, 7
        %v7200 = vsel %vm3925, %v7195, %v7199
        %v7201 = vrot.slane %v6455, 7
        %v7202 = vsel %vm3925, %v7197, %v7201
        %v7203 = vrot.slane %v6459, 7
        %v7204 = vsel %vm3925, %v7199, %v7203
        %v7205 = vrot.slane %v6461, 7
        %v7206 = vsel %vm3925, %v7201, %v7205
        %v7207 = vsel %vm3925, %v7203, %v7115
        %v7208 = vsel %vm3925, %v7205, %v7116
        %v7241 = vsel %vm3925, %v7115, %v7149
        %v7242 = vsel %vm3925, %v7116, %v7150
        %v7243 = vsel %vm620, 0.0, %v7241
        %v7244 = vsel %vm620, 0.0, %v7242
        %v7245 = vsel %vm621, 0.0, %v7152
        %v7246 = vsel %vm621, 0.0, %v7154
        %v7247 = vsel %vm622, 0.0, %v7156
        %v7248 = vsel %vm622, 0.0, %v7158
        %v7249 = vsel %vm623, 0.0, %v7160
        %v7250 = vsel %vm623, 0.0, %v7162
        %v7251 = vsel %vm624, 0.0, %v7164
        %v7252 = vsel %vm624, 0.0, %v7166
        %v7253 = vsel %vm625, 0.0, %v7168
        %v7254 = vsel %vm625, 0.0, %v7170
        %v7255 = vsel %vm626, 0.0, %v7172
        %v7256 = vsel %vm626, 0.0, %v7174
        %v7257 = vsel %vm627, 0.0, %v7176
        %v7258 = vsel %vm627, 0.0, %v7178
        %v7259 = vsel %vm628, 0.0, %v7180
        %v7260 = vsel %vm628, 0.0, %v7182
        %v7261 = vsel %vm629, 0.0, %v7184
        %v7262 = vsel %vm629, 0.0, %v7186
        %v7263 = vsel %vm630, 0.0, %v7188
        %v7264 = vsel %vm630, 0.0, %v7190
        %v7265 = vsel %vm631, 0.0, %v7192
        %v7266 = vsel %vm631, 0.0, %v7194
        %v7267 = vsel %vm632, 0.0, %v7196
        %v7268 = vsel %vm632, 0.0, %v7198
        %v7269 = vsel %vm633, 0.0, %v7200
        %v7270 = vsel %vm633, 0.0, %v7202
        %v7271 = vsel %vm634, 0.0, %v7204
        %v7272 = vsel %vm634, 0.0, %v7206
        %v7273 = vsel %vm635, 0.0, %v7207
        %v7274 = vsel %vm635, 0.0, %v7208
        %v7307 = vrot.slane %v6923, 1
        %v7308 = vrot.slane %v6929, 1
        %v7309 = vsel %vm4084, %v7307, %v7308
        %v7310 = vrot.slane %v6925, 1
        %v7311 = vrot.slane %v6931, 1
        %v7312 = vsel %vm4084, %v7310, %v7311
        %v7313 = vrot.slane %v6935, 1
        %v7314 = vsel %vm4084, %v7308, %v7313
        %v7315 = vrot.slane %v6937, 1
        %v7316 = vsel %vm4084, %v7311, %v7315
        %v7317 = vrot.slane %v6941, 1
        %v7318 = vsel %vm4084, %v7313, %v7317
        %v7319 = vrot.slane %v6943, 1
        %v7320 = vsel %vm4084, %v7315, %v7319
        %v7321 = vrot.slane %v6947, 1
        %v7322 = vsel %vm4084, %v7317, %v7321
        %v7323 = vrot.slane %v6949, 1
        %v7324 = vsel %vm4084, %v7319, %v7323
        %v7325 = vrot.slane %v6953, 1
        %v7326 = vsel %vm4084, %v7321, %v7325
        %v7327 = vrot.slane %v6955, 1
        %v7328 = vsel %vm4084, %v7323, %v7327
        %v7329 = vrot.slane %v6959, 1
        %v7330 = vsel %vm4084, %v7325, %v7329
        %v7331 = vrot.slane %v6961, 1
        %v7332 = vsel %vm4084, %v7327, %v7331
        %v7333 = vrot.slane %v6965, 1
        %v7334 = vsel %vm4084, %v7329, %v7333
        %v7335 = vrot.slane %v6967, 1
        %v7336 = vsel %vm4084, %v7331, %v7335
        %v7337 = vrot.slane %v6971, 1
        %v7338 = vsel %vm4084, %v7333, %v7337
        %v7339 = vrot.slane %v6973, 1
        %v7340 = vsel %vm4084, %v7335, %v7339
        %v7341 = vrot.slane %v6977, 1
        %v7342 = vsel %vm4084, %v7337, %v7341
        %v7343 = vrot.slane %v6979, 1
        %v7344 = vsel %vm4084, %v7339, %v7343
        %v7345 = vrot.slane %v6983, 1
        %v7346 = vsel %vm4084, %v7341, %v7345
        %v7347 = vrot.slane %v6985, 1
        %v7348 = vsel %vm4084, %v7343, %v7347
        %v7349 = vrot.slane %v6989, 1
        %v7350 = vsel %vm4084, %v7345, %v7349
        %v7351 = vrot.slane %v6991, 1
        %v7352 = vsel %vm4084, %v7347, %v7351
        %v7353 = vrot.slane %v6995, 1
        %v7354 = vsel %vm4084, %v7349, %v7353
        %v7355 = vrot.slane %v6997, 1
        %v7356 = vsel %vm4084, %v7351, %v7355
        %v7357 = vrot.slane %v7001, 1
        %v7358 = vsel %vm4084, %v7353, %v7357
        %v7359 = vrot.slane %v7003, 1
        %v7360 = vsel %vm4084, %v7355, %v7359
        %v7361 = vrot.slane %v7007, 1
        %v7362 = vsel %vm4084, %v7357, %v7361
        %v7363 = vrot.slane %v7009, 1
        %v7364 = vsel %vm4084, %v7359, %v7363
        %v7365 = vrot.slane %v7013, 1
        %v7366 = vsel %vm4084, %v7361, %v7365
        %v7367 = vrot.slane %v7015, 1
        %v7368 = vsel %vm4084, %v7363, %v7367
        %v7403 = vsel %vm4084, %v7365, %v7307
        %v7404 = vsel %vm4084, %v7367, %v7310
        %v7405 = vsel %vm636, 0.0, %v7309
        %v7406 = vsel %vm636, 0.0, %v7312
        %v7407 = vsel %vm637, 0.0, %v7314
        %v7408 = vsel %vm637, 0.0, %v7316
        %v7409 = vsel %vm638, 0.0, %v7318
        %v7410 = vsel %vm638, 0.0, %v7320
        %v7411 = vsel %vm639, 0.0, %v7322
        %v7412 = vsel %vm639, 0.0, %v7324
        %v7413 = vsel %vm640, 0.0, %v7326
        %v7414 = vsel %vm640, 0.0, %v7328
        %v7415 = vsel %vm641, 0.0, %v7330
        %v7416 = vsel %vm641, 0.0, %v7332
        %v7417 = vsel %vm642, 0.0, %v7334
        %v7418 = vsel %vm642, 0.0, %v7336
        %v7419 = vsel %vm643, 0.0, %v7338
        %v7420 = vsel %vm643, 0.0, %v7340
        %v7421 = vsel %vm644, 0.0, %v7342
        %v7422 = vsel %vm644, 0.0, %v7344
        %v7423 = vsel %vm645, 0.0, %v7346
        %v7424 = vsel %vm645, 0.0, %v7348
        %v7425 = vsel %vm646, 0.0, %v7350
        %v7426 = vsel %vm646, 0.0, %v7352
        %v7427 = vsel %vm647, 0.0, %v7354
        %v7428 = vsel %vm647, 0.0, %v7356
        %v7429 = vsel %vm648, 0.0, %v7358
        %v7430 = vsel %vm648, 0.0, %v7360
        %v7431 = vsel %vm649, 0.0, %v7362
        %v7432 = vsel %vm649, 0.0, %v7364
        %v7433 = vsel %vm650, 0.0, %v7366
        %v7434 = vsel %vm650, 0.0, %v7368
        %v7435 = vsel %vm651, 0.0, %v7403
        %v7436 = vsel %vm651, 0.0, %v7404
        %v7437 = vadd.f32 %v7243, %v6601
        %v7438 = vadd.f32 %v7244, %v6603
        %v7439 = vadd.f32 %v7245, %v6607
        %v7440 = vadd.f32 %v7246, %v6609
        %v7441 = vadd.f32 %v7247, %v6613
        %v7442 = vadd.f32 %v7248, %v6615
        %v7443 = vadd.f32 %v7249, %v6619
        %v7444 = vadd.f32 %v7250, %v6621
        %v7445 = vadd.f32 %v7251, %v6625
        %v7446 = vadd.f32 %v7252, %v6627
        %v7447 = vadd.f32 %v7253, %v6631
        %v7448 = vadd.f32 %v7254, %v6633
        %v7449 = vadd.f32 %v7255, %v6637
        %v7450 = vadd.f32 %v7256, %v6639
        %v7451 = vadd.f32 %v7257, %v6643
        %v7452 = vadd.f32 %v7258, %v6645
        %v7453 = vadd.f32 %v7259, %v6649
        %v7454 = vadd.f32 %v7260, %v6651
        %v7455 = vadd.f32 %v7261, %v6655
        %v7456 = vadd.f32 %v7262, %v6657
        %v7457 = vadd.f32 %v7263, %v6661
        %v7458 = vadd.f32 %v7264, %v6663
        %v7459 = vadd.f32 %v7265, %v6667
        %v7460 = vadd.f32 %v7266, %v6669
        %v7461 = vadd.f32 %v7267, %v6673
        %v7462 = vadd.f32 %v7268, %v6675
        %v7463 = vadd.f32 %v7269, %v6679
        %v7464 = vadd.f32 %v7270, %v6681
        %v7465 = vadd.f32 %v7271, %v6685
        %v7466 = vadd.f32 %v7272, %v6687
        %v7467 = vadd.f32 %v7273, %v6691
        %v7468 = vadd.f32 %v7274, %v6693
        %v7469 = vadd.f32 %v6279, %v6697
        %v7470 = vadd.f32 %v6281, %v6699
        %v7471 = vadd.f32 %v6285, %v6703
        %v7472 = vadd.f32 %v6287, %v6705
        %v7473 = vadd.f32 %v6291, %v6709
        %v7474 = vadd.f32 %v6293, %v6711
        %v7475 = vadd.f32 %v6297, %v6715
        %v7476 = vadd.f32 %v6299, %v6717
        %v7477 = vadd.f32 %v6303, %v6721
        %v7478 = vadd.f32 %v6305, %v6723
        %v7479 = vadd.f32 %v6309, %v6727
        %v7480 = vadd.f32 %v6311, %v6729
        %v7481 = vadd.f32 %v6315, %v6733
        %v7482 = vadd.f32 %v6317, %v6735
        %v7483 = vadd.f32 %v6321, %v6739
        %v7484 = vadd.f32 %v6323, %v6741
        %v7485 = vadd.f32 %v6327, %v6745
        %v7486 = vadd.f32 %v6329, %v6747
        %v7487 = vadd.f32 %v6333, %v6751
        %v7488 = vadd.f32 %v6335, %v6753
        %v7489 = vadd.f32 %v6339, %v6757
        %v7490 = vadd.f32 %v6341, %v6759
        %v7491 = vadd.f32 %v6345, %v6763
        %v7492 = vadd.f32 %v6347, %v6765
        %v7493 = vadd.f32 %v6351, %v6769
        %v7494 = vadd.f32 %v6353, %v6771
        %v7495 = vadd.f32 %v6357, %v6775
        %v7496 = vadd.f32 %v6359, %v6777
        %v7497 = vadd.f32 %v6363, %v6781
        %v7498 = vadd.f32 %v6365, %v6783
        %v7499 = vadd.f32 %v6369, %v6787
        %v7500 = vadd.f32 %v6371, %v6789
        %v7501 = vadd.f32 %v7437, %v7019
        %v7502 = vadd.f32 %v7438, %v7021
        %v7503 = vadd.f32 %v7439, %v7025
        %v7504 = vadd.f32 %v7440, %v7027
        %v7505 = vadd.f32 %v7441, %v7031
        %v7506 = vadd.f32 %v7442, %v7033
        %v7507 = vadd.f32 %v7443, %v7037
        %v7508 = vadd.f32 %v7444, %v7039
        %v7509 = vadd.f32 %v7445, %v7043
        %v7510 = vadd.f32 %v7446, %v7045
        %v7511 = vadd.f32 %v7447, %v7049
        %v7512 = vadd.f32 %v7448, %v7051
        %v7513 = vadd.f32 %v7449, %v7055
        %v7514 = vadd.f32 %v7450, %v7057
        %v7515 = vadd.f32 %v7451, %v7061
        %v7516 = vadd.f32 %v7452, %v7063
        %v7517 = vadd.f32 %v7453, %v7067
        %v7518 = vadd.f32 %v7454, %v7069
        %v7519 = vadd.f32 %v7455, %v7073
        %v7520 = vadd.f32 %v7456, %v7075
        %v7521 = vadd.f32 %v7457, %v7079
        %v7522 = vadd.f32 %v7458, %v7081
        %v7523 = vadd.f32 %v7459, %v7085
        %v7524 = vadd.f32 %v7460, %v7087
        %v7525 = vadd.f32 %v7461, %v7091
        %v7526 = vadd.f32 %v7462, %v7093
        %v7527 = vadd.f32 %v7463, %v7097
        %v7528 = vadd.f32 %v7464, %v7099
        %v7529 = vadd.f32 %v7465, %v7103
        %v7530 = vadd.f32 %v7466, %v7105
        %v7531 = vadd.f32 %v7467, %v7109
        %v7532 = vadd.f32 %v7468, %v7111
        %v7533 = vadd.f32 %v7469, %v7405
        %v7534 = vadd.f32 %v7470, %v7406
        %v7535 = vadd.f32 %v7471, %v7407
        %v7536 = vadd.f32 %v7472, %v7408
        %v7537 = vadd.f32 %v7473, %v7409
        %v7538 = vadd.f32 %v7474, %v7410
        %v7539 = vadd.f32 %v7475, %v7411
        %v7540 = vadd.f32 %v7476, %v7412
        %v7541 = vadd.f32 %v7477, %v7413
        %v7542 = vadd.f32 %v7478, %v7414
        %v7543 = vadd.f32 %v7479, %v7415
        %v7544 = vadd.f32 %v7480, %v7416
        %v7545 = vadd.f32 %v7481, %v7417
        %v7546 = vadd.f32 %v7482, %v7418
        %v7547 = vadd.f32 %v7483, %v7419
        %v7548 = vadd.f32 %v7484, %v7420
        %v7549 = vadd.f32 %v7485, %v7421
        %v7550 = vadd.f32 %v7486, %v7422
        %v7551 = vadd.f32 %v7487, %v7423
        %v7552 = vadd.f32 %v7488, %v7424
        %v7553 = vadd.f32 %v7489, %v7425
        %v7554 = vadd.f32 %v7490, %v7426
        %v7555 = vadd.f32 %v7491, %v7427
        %v7556 = vadd.f32 %v7492, %v7428
        %v7557 = vadd.f32 %v7493, %v7429
        %v7558 = vadd.f32 %v7494, %v7430
        %v7559 = vadd.f32 %v7495, %v7431
        %v7560 = vadd.f32 %v7496, %v7432
        %v7561 = vadd.f32 %v7497, %v7433
        %v7562 = vadd.f32 %v7498, %v7434
        %v7563 = vadd.f32 %v7499, %v7435
        %v7564 = vadd.f32 %v7500, %v7436
        %v7565 = vlaneseq
        %v7566 = vshrl.u32 %v7565, 7
        %v7567 = vsub.s32 6, %v7566
        %v7568 = vrot.slane %v340, %v7567
        %v7569 = vlaneseq
        %v7570 = vshrl.u32 %v7569, 7
        %v7571 = vsub.s32 6, %v7570
        %v7572 = vrot.slane %v341, %v7571
        %v7573 = vadd.f32 %v7501, %v7568
        %v7574 = vadd.f32 %v7502, %v7572
        %v7575 = vadd.f32 %v7503, %v7568
        %v7576 = vadd.f32 %v7504, %v7572
        %v7577 = vadd.f32 %v7505, %v7568
        %v7578 = vadd.f32 %v7506, %v7572
        %v7579 = vadd.f32 %v7507, %v7568
        %v7580 = vadd.f32 %v7508, %v7572
        %v7581 = vadd.f32 %v7509, %v7568
        %v7582 = vadd.f32 %v7510, %v7572
        %v7583 = vadd.f32 %v7511, %v7568
        %v7584 = vadd.f32 %v7512, %v7572
        %v7585 = vadd.f32 %v7513, %v7568
        %v7586 = vadd.f32 %v7514, %v7572
        %v7587 = vadd.f32 %v7515, %v7568
        %v7588 = vadd.f32 %v7516, %v7572
        %v7589 = vadd.f32 %v7517, %v7568
        %v7590 = vadd.f32 %v7518, %v7572
        %v7591 = vadd.f32 %v7519, %v7568
        %v7592 = vadd.f32 %v7520, %v7572
        %v7593 = vadd.f32 %v7521, %v7568
        %v7594 = vadd.f32 %v7522, %v7572
        %v7595 = vadd.f32 %v7523, %v7568
        %v7596 = vadd.f32 %v7524, %v7572
        %v7597 = vadd.f32 %v7525, %v7568
        %v7598 = vadd.f32 %v7526, %v7572
        %v7599 = vadd.f32 %v7527, %v7568
        %v7600 = vadd.f32 %v7528, %v7572
        %v7601 = vadd.f32 %v7529, %v7568
        %v7602 = vadd.f32 %v7530, %v7572
        %v7603 = vadd.f32 %v7531, %v7568
        %v7604 = vadd.f32 %v7532, %v7572
        %v7605 = vadd.f32 %v7533, %v7568
        %v7606 = vadd.f32 %v7534, %v7572
        %v7607 = vadd.f32 %v7535, %v7568
        %v7608 = vadd.f32 %v7536, %v7572
        %v7609 = vadd.f32 %v7537, %v7568
        %v7610 = vadd.f32 %v7538, %v7572
        %v7611 = vadd.f32 %v7539, %v7568
        %v7612 = vadd.f32 %v7540, %v7572
        %v7613 = vadd.f32 %v7541, %v7568
        %v7614 = vadd.f32 %v7542, %v7572
        %v7615 = vadd.f32 %v7543, %v7568
        %v7616 = vadd.f32 %v7544, %v7572
        %v7617 = vadd.f32 %v7545, %v7568
        %v7618 = vadd.f32 %v7546, %v7572
        %v7619 = vadd.f32 %v7547, %v7568
        %v7620 = vadd.f32 %v7548, %v7572
        %v7621 = vadd.f32 %v7549, %v7568
        %v7622 = vadd.f32 %v7550, %v7572
        %v7623 = vadd.f32 %v7551, %v7568
        %v7624 = vadd.f32 %v7552, %v7572
        %v7625 = vadd.f32 %v7553, %v7568
        %v7626 = vadd.f32 %v7554, %v7572
        %v7627 = vadd.f32 %v7555, %v7568
        %v7628 = vadd.f32 %v7556, %v7572
        %v7629 = vadd.f32 %v7557, %v7568
        %v7630 = vadd.f32 %v7558, %v7572
        %v7631 = vadd.f32 %v7559, %v7568
        %v7632 = vadd.f32 %v7560, %v7572
        %v7633 = vadd.f32 %v7561, %v7568
        %v7634 = vadd.f32 %v7562, %v7572
        %v7635 = vadd.f32 %v7563, %v7568
        %v7636 = vadd.f32 %v7564, %v7572
        %v7637 = vadd.f32 %v832, %v7573
        %v7638 = vadd.f32 %v834, %v7574
        %v7639 = vadd.f32 %v838, %v7575
        %v7640 = vadd.f32 %v840, %v7576
        %v7641 = vadd.f32 %v844, %v7577
        %v7642 = vadd.f32 %v846, %v7578
        %v7643 = vadd.f32 %v850, %v7579
        %v7644 = vadd.f32 %v852, %v7580
        %v7645 = vadd.f32 %v856, %v7581
        %v7646 = vadd.f32 %v858, %v7582
        %v7647 = vadd.f32 %v862, %v7583
        %v7648 = vadd.f32 %v864, %v7584
        %v7649 = vadd.f32 %v868, %v7585
        %v7650 = vadd.f32 %v870, %v7586
        %v7651 = vadd.f32 %v874, %v7587
        %v7652 = vadd.f32 %v876, %v7588
        %v7653 = vadd.f32 %v880, %v7589
        %v7654 = vadd.f32 %v882, %v7590
        %v7655 = vadd.f32 %v886, %v7591
        %v7656 = vadd.f32 %v888, %v7592
        %v7657 = vadd.f32 %v892, %v7593
        %v7658 = vadd.f32 %v894, %v7594
        %v7659 = vadd.f32 %v898, %v7595
        %v7660 = vadd.f32 %v900, %v7596
        %v7661 = vadd.f32 %v904, %v7597
        %v7662 = vadd.f32 %v906, %v7598
        %v7663 = vadd.f32 %v910, %v7599
        %v7664 = vadd.f32 %v912, %v7600
        %v7665 = vadd.f32 %v916, %v7601
        %v7666 = vadd.f32 %v918, %v7602
        %v7667 = vadd.f32 %v922, %v7603
        %v7668 = vadd.f32 %v924, %v7604
        %v7669 = vadd.f32 %v993, %v7605
        %v7670 = vadd.f32 %v995, %v7606
        %v7671 = vadd.f32 %v999, %v7607
        %v7672 = vadd.f32 %v1001, %v7608
        %v7673 = vadd.f32 %v1005, %v7609
        %v7674 = vadd.f32 %v1007, %v7610
        %v7675 = vadd.f32 %v1011, %v7611
        %v7676 = vadd.f32 %v1013, %v7612
        %v7677 = vadd.f32 %v1017, %v7613
        %v7678 = vadd.f32 %v1019, %v7614
        %v7679 = vadd.f32 %v1023, %v7615
        %v7680 = vadd.f32 %v1025, %v7616
        %v7681 = vadd.f32 %v1029, %v7617
        %v7682 = vadd.f32 %v1031, %v7618
        %v7683 = vadd.f32 %v1035, %v7619
        %v7684 = vadd.f32 %v1037, %v7620
        %v7685 = vadd.f32 %v1041, %v7621
        %v7686 = vadd.f32 %v1043, %v7622
        %v7687 = vadd.f32 %v1047, %v7623
        %v7688 = vadd.f32 %v1049, %v7624
        %v7689 = vadd.f32 %v1053, %v7625
        %v7690 = vadd.f32 %v1055, %v7626
        %v7691 = vadd.f32 %v1059, %v7627
        %v7692 = vadd.f32 %v1061, %v7628
        %v7693 = vadd.f32 %v1065, %v7629
        %v7694 = vadd.f32 %v1067, %v7630
        %v7695 = vadd.f32 %v1071, %v7631
        %v7696 = vadd.f32 %v1073, %v7632
        %v7697 = vadd.f32 %v1077, %v7633
        %v7698 = vadd.f32 %v1079, %v7634
        %v7699 = vadd.f32 %v1083, %v7635
        %v7700 = vadd.f32 %v1085, %v7636
        %7701 = vst [vmem:[%s338] sm:$0xff] %v7637
        %7702 = vst [vmem:[%s338 + $0x8] sm:$0xff] %v7638
        %7703 = vst [vmem:[%s338 + $0x10] sm:$0xff] %v7669
        %7704 = vst [vmem:[%s338 + $0x18] sm:$0xff] %v7670
        %7705 = vst [vmem:[%s338 + $0x20] sm:$0xff] %v7639
        %7706 = vst [vmem:[%s338 + $0x28] sm:$0xff] %v7640
        %7707 = vst [vmem:[%s338 + $0x30] sm:$0xff] %v7671
        %7708 = vst [vmem:[%s338 + $0x38] sm:$0xff] %v7672
        %7709 = vst [vmem:[%s338 + $0x40] sm:$0xff] %v7641
        %7710 = vst [vmem:[%s338 + $0x48] sm:$0xff] %v7642
        %7711 = vst [vmem:[%s338 + $0x50] sm:$0xff] %v7673
        %7712 = vst [vmem:[%s338 + $0x58] sm:$0xff] %v7674
        %7713 = vst [vmem:[%s338 + $0x60] sm:$0xff] %v7643
        %7714 = vst [vmem:[%s338 + $0x68] sm:$0xff] %v7644
        %7715 = vst [vmem:[%s338 + $0x70] sm:$0xff] %v7675
        %7716 = vst [vmem:[%s338 + $0x78] sm:$0xff] %v7676
        %7717 = vst [vmem:[%s338 + $0x80] sm:$0xff] %v7645
        %7718 = vst [vmem:[%s338 + $0x88] sm:$0xff] %v7646
        %7719 = vst [vmem:[%s338 + $0x90] sm:$0xff] %v7677
        %7720 = vst [vmem:[%s338 + $0x98] sm:$0xff] %v7678
        %7721 = vst [vmem:[%s338 + $0xa0] sm:$0xff] %v7647
        %7722 = vst [vmem:[%s338 + $0xa8] sm:$0xff] %v7648
        %7723 = vst [vmem:[%s338 + $0xb0] sm:$0xff] %v7679
        %7724 = vst [vmem:[%s338 + $0xb8] sm:$0xff] %v7680
        %7725 = vst [vmem:[%s338 + $0xc0] sm:$0xff] %v7649
        %7726 = vst [vmem:[%s338 + $0xc8] sm:$0xff] %v7650
        %7727 = vst [vmem:[%s338 + $0xd0] sm:$0xff] %v7681
        %7728 = vst [vmem:[%s338 + $0xd8] sm:$0xff] %v7682
        %7729 = vst [vmem:[%s338 + $0xe0] sm:$0xff] %v7651
        %7730 = vst [vmem:[%s338 + $0xe8] sm:$0xff] %v7652
        %7731 = vst [vmem:[%s338 + $0xf0] sm:$0xff] %v7683
        %7732 = vst [vmem:[%s338 + $0xf8] sm:$0xff] %v7684
        %7733 = vst [vmem:[%s338 + $0x100] sm:$0xff] %v7653
        %7734 = vst [vmem:[%s338 + $0x108] sm:$0xff] %v7654
        %7735 = vst [vmem:[%s338 + $0x110] sm:$0xff] %v7685
        %7736 = vst [vmem:[%s338 + $0x118] sm:$0xff] %v7686
        %7737 = vst [vmem:[%s338 + $0x120] sm:$0xff] %v7655
        %7738 = vst [vmem:[%s338 + $0x128] sm:$0xff] %v7656
        %7739 = vst [vmem:[%s338 + $0x130] sm:$0xff] %v7687
        %7740 = vst [vmem:[%s338 + $0x138] sm:$0xff] %v7688
        %7741 = vst [vmem:[%s338 + $0x140] sm:$0xff] %v7657
        %7742 = vst [vmem:[%s338 + $0x148] sm:$0xff] %v7658
        %7743 = vst [vmem:[%s338 + $0x150] sm:$0xff] %v7689
        %7744 = vst [vmem:[%s338 + $0x158] sm:$0xff] %v7690
        %7745 = vst [vmem:[%s338 + $0x160] sm:$0xff] %v7659
        %7746 = vst [vmem:[%s338 + $0x168] sm:$0xff] %v7660
        %7747 = vst [vmem:[%s338 + $0x170] sm:$0xff] %v7691
        %7748 = vst [vmem:[%s338 + $0x178] sm:$0xff] %v7692
        %7749 = vst [vmem:[%s338 + $0x180] sm:$0xff] %v7661
        %7750 = vst [vmem:[%s338 + $0x188] sm:$0xff] %v7662
        %7751 = vst [vmem:[%s338 + $0x190] sm:$0xff] %v7693
        %7752 = vst [vmem:[%s338 + $0x198] sm:$0xff] %v7694
        %7753 = vst [vmem:[%s338 + $0x1a0] sm:$0xff] %v7663
        %7754 = vst [vmem:[%s338 + $0x1a8] sm:$0xff] %v7664
        %7755 = vst [vmem:[%s338 + $0x1b0] sm:$0xff] %v7695
        %7756 = vst [vmem:[%s338 + $0x1b8] sm:$0xff] %v7696
        %7757 = vst [vmem:[%s338 + $0x1c0] sm:$0xff] %v7665
        %7758 = vst [vmem:[%s338 + $0x1c8] sm:$0xff] %v7666
        %7759 = vst [vmem:[%s338 + $0x1d0] sm:$0xff] %v7697
        %7760 = vst [vmem:[%s338 + $0x1d8] sm:$0xff] %v7698
        %7761 = vst [vmem:[%s338 + $0x1e0] sm:$0xff] %v7667
        %7762 = vst [vmem:[%s338 + $0x1e8] sm:$0xff] %v7668
        %7763 = vst [vmem:[%s338 + $0x1f0] sm:$0xff] %v7699
        %7764 = vst [vmem:[%s338 + $0x1f8] sm:$0xff] %v7700
        %s7765 = smul.u32 8, %s21
        %p7766 = scmp.lt.s32.totalorder %s7765, 15
        %s7767 = scalar_select %p7766, %s7765, 15
        %s7768 = smul.addr %s7767, 8
        %s7769 = smul.addr %s7768, 8
        %s7770 = scalar_lea.vmem %s8, %s7769
        // Predicated region
        $region61: #{conv_up_forward.1} parent=51 // pred_check
          %p7771 = pneg %p212
        $region62: #{conv_up_forward.1} parent=51 // pred_check_branch
          %7773 = sbr.rel (%p7771) target = $region64
        $region63: #{conv_up_forward.1} parent=51 // pred_region
          %s7774 = smul.u32 8, %s21
        $region64: #{conv_up_forward.1} parent=51 // pred_fallthru
          _
      $region52: #{conv_up_forward.1} parent=5 // pred_fallthru
        _
      %p7775 = scmp.le.s32.totalorder 2, %s16
      // Predicated region
      $region65: #{conv_up_forward.1} parent=5 // pred_check
        %p7776 = pneg %p7775
      $region66: #{conv_up_forward.1} parent=5 // pred_check_branch
        %7778 = sbr.rel (%p7776) target = $region68
      $region67: #{conv_up_forward.1} parent=5 // pred_region
        %s7779 = ssub.s32 %s16, 2
        // Predicated region
        $region69: #{conv_up_forward.1} parent=67 // pred_check
          %p7780 = pneg %p218
        $region70: #{conv_up_forward.1} parent=67 // pred_check_branch
          %7782 = sbr.rel (%p7780) target = $region72
        $region71: #{conv_up_forward.1} parent=67 // pred_region
          %s7783 = smul.u32 8, %s22
          %p7784 = scmp.lt.s32.totalorder %s7783, 15
          %s7785 = scalar_select %p7784, %s7783, 15
          %s7786 = smul.addr %s7785, 8
          %s7787 = smul.addr %s7786, 8
          %s7788 = scalar_lea.vmem %s8, %s7787
        $region72: #{conv_up_forward.1} parent=67 // pred_fallthru
          _
      $region68: #{conv_up_forward.1} parent=5 // pred_fallthru
        _
    $region6: #{conv_up_forward.1} parent=1 // loop_footer
      %s20 = sadd.s32 1, %s16
    $region7: #{conv_up_forward.1} parent=1 // loop_footer_branch
      %15 = sbr.rel target = $region3
    $region8: #{conv_up_forward.1} parent=1 // loop_exit
      _
    %7789 = vsyncpa [#allocation3], 1
    %s7790 = scalar_lea.sflag [#allocation3], 1
    %7791 = vsyncpa %s7790, 1
    %7792 = vsyncpa [#allocation5], 1

</llo_original>
